<compile_context>
chip_gen: v7x
topology: tpu7x:2x2x1
jax: 0.10.0
libtpu: 0.0.40
codegen_flags: <defaults>
</compile_context>

<pallas_src>
import functools

import jax
import jax.numpy as jnp
from jax.experimental import pallas as pl
from jax.experimental.pallas import tpu as pltpu

BN_EPS = 1e-5
EXPANSION = 4


def _ru(x, m):
    return ((x + m - 1) // m) * m


# ----------------------------------------------------------------------------
# Pallas kernels: single-full-K-tile fused matmuls (no accumulator scratch)
# ----------------------------------------------------------------------------

def _mm_kernel(a_ref, w_ref, b_ref, o_ref, *, relu):
    y = jnp.dot(a_ref[...], w_ref[...],
                preferred_element_type=jnp.float32) + b_ref[...]
    if relu:
        y = jnp.maximum(y, 0.0)
    o_ref[...] = y.astype(o_ref.dtype)


def _mm_res_kernel(a_ref, w_ref, b_ref, r_ref, o_ref, *, relu):
    y = (jnp.dot(a_ref[...], w_ref[...], preferred_element_type=jnp.float32)
         + b_ref[...] + r_ref[...].astype(jnp.float32))
    if relu:
        y = jnp.maximum(y, 0.0)
    o_ref[...] = y.astype(o_ref.dtype)


def _mm_down_kernel(a_ref, w_ref, b_ref, xs_ref, wd_ref, bd_ref, o_ref, *, relu):
    # main branch: conv3 + BN3
    y = (jnp.dot(a_ref[...], w_ref[...], preferred_element_type=jnp.float32)
         + b_ref[...])
    # fused downsample residual: 1x1 conv (input already strided) + BN
    y = y + (jnp.dot(xs_ref[...], wd_ref[...],
                     preferred_element_type=jnp.float32) + bd_ref[...])
    if relu:
        y = jnp.maximum(y, 0.0)
    o_ref[...] = y.astype(o_ref.dtype)


def matmul_fused(a, w, bias, *, relu, residual=None, down=None,
                 out_dtype=jnp.bfloat16):
    """out = act(a @ w + bias [+ residual] [+ xs @ wd + bd]), fully fused.

    `w` is bf16 with N a multiple of 128 (BN scale folded, padded at prep time);
    `bias` is f32 (1, N).  `residual` is an (M, N) tile added in the epilogue.
    `down=(xs, wd, bd)` fuses the 1x1 downsample conv + BN of the residual branch
    as a second matmul inside the same kernel.
    """
    M, K = a.shape
    K2, Np = w.shape
    assert K == K2 and Np % 128 == 0
    # TODO(synk): K-tiled accumulating kernel for very large K; every BottleNeck
    #             conv has K <= 9*width so a single full-K tile is used.
    assert K <= 4096

    tm = min(_ru(M, 8), 256)
    Mp = _ru(M, tm)
    tn = 128                       # lane-exact stores; v5e-native MXU width

    a_p = a.astype(jnp.bfloat16)
    if Mp != M:
        a_p = jnp.pad(a_p, ((0, Mp - M), (0, 0)))

    in_specs = [
        pl.BlockSpec((tm, K), lambda i, j: (i, 0)),
        pl.BlockSpec((K, tn), lambda i, j: (0, j)),
        pl.BlockSpec((1, tn), lambda i, j: (0, j)),   # bias: block row 0
    ]
    args = [a_p, w, bias]
    flops = 2 * Mp * K * Np
    bytes_acc = (a_p.size + w.size) * 2 + bias.size * 4 \
        + Mp * Np * jnp.dtype(out_dtype).itemsize

    if residual is not None:
        assert down is None
        r = residual.astype(jnp.bfloat16)
        if Mp != M:
            r = jnp.pad(r, ((0, Mp - M), (0, 0)))
        assert r.shape == (Mp, Np), r.shape
        in_specs.append(pl.BlockSpec((tm, tn), lambda i, j: (i, j)))
        args.append(r)
        kernel = functools.partial(_mm_res_kernel, relu=relu)
        bytes_acc += r.size * 2
    elif down is not None:
        xs, wd, bd = down
        Kd = xs.shape[1]
        assert xs.shape[0] == M and wd.shape == (Kd, Np) and Kd <= 4096
        xs_p = xs.astype(jnp.bfloat16)
        if Mp != M:
            xs_p = jnp.pad(xs_p, ((0, Mp - M), (0, 0)))
        in_specs += [
            pl.BlockSpec((tm, Kd), lambda i, j: (i, 0)),
            pl.BlockSpec((Kd, tn), lambda i, j: (0, j)),
            pl.BlockSpec((1, tn), lambda i, j: (0, j)),
        ]
        args += [xs_p, wd, bd]
        kernel = functools.partial(_mm_down_kernel, relu=relu)
        flops += 2 * Mp * Kd * Np
        bytes_acc += (xs_p.size + wd.size) * 2 + bd.size * 4
    else:
        kernel = functools.partial(_mm_kernel, relu=relu)

    out = pl.pallas_call(
        kernel,
        out_shape=jax.ShapeDtypeStruct((Mp, Np), out_dtype),
        grid_spec=pltpu.PrefetchScalarGridSpec(
            num_scalar_prefetch=0,
            grid=(Mp // tm, Np // tn),
            in_specs=in_specs,
            out_specs=pl.BlockSpec((tm, tn), lambda i, j: (i, j)),
        ),
        compiler_params=pltpu.CompilerParams(
            dimension_semantics=("parallel", "parallel")),
        cost_estimate=pl.CostEstimate(flops=int(flops), transcendentals=0,
                                      bytes_accessed=int(bytes_acc)),
    )(*args)
    return out if Mp == M else out[:M]


# ----------------------------------------------------------------------------
# Fused conv1(1x1)+BN+ReLU + conv2(3x3, stride 1, pad 1)+BN+ReLU  (no im2col)
# ----------------------------------------------------------------------------

def _conv1_conv2_kernel(x_ref, w1_ref, b1_ref, w2_ref, b2_ref, o_ref, hp_ref):
    """One batch image per grid step.  conv2 = 9 tap-shifted matmuls from a
    halo-padded VMEM scratch copy of h (no HBM im2col slab)."""
    _, H, W, Cin = x_ref.shape
    Cw = w1_ref.shape[1]

    # conv1 (1x1) + BN1 + ReLU
    x = x_ref[...].reshape(H * W, Cin)
    h = jnp.dot(x, w1_ref[...], preferred_element_type=jnp.float32) + b1_ref[...]
    h = jnp.maximum(h, 0.0).astype(jnp.bfloat16)

    # write h into the interior of a zero-halo VMEM scratch
    hp_ref[...] = jnp.zeros_like(hp_ref)
    hp_ref[1:H + 1, 1:W + 1, :] = h.reshape(H, W, Cw)

    # conv2 (3x3, stride 1, pad 1) as 9 shifted matmuls, accumulated in f32.
    # Tap ordering (di-major, dj, channel-minor) matches _prep_conv's reshape.
    acc = jnp.zeros((H * W, Cw), jnp.float32)
    for t in range(9):
        di, dj = t // 3, t % 3
        a_t = hp_ref[di:di + H, dj:dj + W, :].reshape(H * W, Cw)
        acc = acc + jnp.dot(a_t, w2_ref[t * Cw:(t + 1) * Cw, :],
                            preferred_element_type=jnp.float32)
    y = jnp.maximum(acc + b2_ref[...], 0.0)
    o_ref[...] = y.reshape(1, H, W, Cw).astype(o_ref.dtype)


def conv1_conv2_fused(x_nhwc, w1, b1, w2, b2):
    B, H, W, Cin = x_nhwc.shape
    Cw = w1.shape[1]
    assert w2.shape == (9 * Cw, Cw)
    flops = 2 * B * H * W * Cw * (Cin + 9 * Cw)
    bytes_acc = (x_nhwc.size + w1.size + w2.size + B * H * W * Cw) * 2 \
        + (b1.size + b2.size) * 4
    return pl.pallas_call(
        _conv1_conv2_kernel,
        out_shape=jax.ShapeDtypeStruct((B, H, W, Cw), jnp.bfloat16),
        grid_spec=pltpu.PrefetchScalarGridSpec(
            num_scalar_prefetch=0,
            grid=(B,),
            in_specs=[
                pl.BlockSpec((1, H, W, Cin), lambda b: (b, 0, 0, 0)),
                pl.BlockSpec((Cin, Cw), lambda b: (0, 0)),
                pl.BlockSpec((1, Cw), lambda b: (0, 0)),
                pl.BlockSpec((9 * Cw, Cw), lambda b: (0, 0)),
                pl.BlockSpec((1, Cw), lambda b: (0, 0)),
            ],
            out_specs=pl.BlockSpec((1, H, W, Cw), lambda b: (b, 0, 0, 0)),
            scratch_shapes=[pltpu.VMEM((H + 2, W + 2, Cw), jnp.bfloat16)],
        ),
        compiler_params=pltpu.CompilerParams(
            dimension_semantics=("parallel",)),
        cost_estimate=pl.CostEstimate(flops=int(flops), transcendentals=0,
                                      bytes_accessed=int(bytes_acc)),
    )(x_nhwc, w1, b1, w2, b2)


# ------------------------------ glue (layout only) ---------------------------

def _im2col_3x3(x_nhwc, stride):
    """3x3/pad=1 patch extraction (bf16), fallback for stride > 1."""
    B, H, W, C = x_nhwc.shape
    xp = jnp.pad(x_nhwc, ((0, 0), (1, 1), (1, 1), (0, 0)))
    Ho = (H - 1) // stride + 1
    Wo = (W - 1) // stride + 1
    taps = []
    for di in range(3):
        for dj in range(3):
            taps.append(xp[:, di:di + (Ho - 1) * stride + 1:stride,
                           dj:dj + (Wo - 1) * stride + 1:stride, :])
    a = jnp.stack(taps, axis=3).reshape(B * Ho * Wo, 9 * C)
    return a, Ho, Wo


# --------------------------- weight / BN preparation -------------------------

def _prep_conv(w_oihw, bn, cin_pad, cout_pad):
    """Fold BN into conv weights; return matmul-ready bf16 weights + f32 bias."""
    scale = bn["gamma"] / jnp.sqrt(bn["var"] + BN_EPS)           # (O,)
    bias = bn["beta"] - bn["mean"] * scale                       # (O,)
    O, I, kh, kw = w_oihw.shape
    w = w_oihw * scale[:, None, None, None]                      # fold scale
    w = jnp.transpose(w, (2, 3, 1, 0))                           # (kh, kw, I, O)
    w = jnp.pad(w, ((0, 0), (0, 0), (0, cin_pad - I), (0, cout_pad - O)))
    w2 = w.reshape(kh * kw * cin_pad, cout_pad).astype(jnp.bfloat16)
    b2 = jnp.pad(bias, (0, cout_pad - O)).reshape(1, cout_pad).astype(jnp.float32)
    return w2, b2


def prepare_params(p, in_channels, out_channels, groups=1, width_per_group=64):
    assert groups == 1  # TODO(synk): grouped conv not implemented
    width = int(out_channels * (width_per_group / 64)) * groups
    wp = _ru(width, 128)                       # lane-dense padded intermediate C
    op = _ru(out_channels * EXPANSION, 128)    # lane-dense padded output C
    prep = {}
    prep["w1"], prep["b1"] = _prep_conv(p["conv1_w"], p["bn1"], in_channels, wp)
    prep["w2"], prep["b2"] = _prep_conv(p["conv2_w"], p["bn2"], wp, wp)
    prep["w3"], prep["b3"] = _prep_conv(p["conv3_w"], p["bn3"], wp, op)
    if "down_conv_w" in p:
        prep["wd"], prep["bd"] = _prep_conv(p["down_conv_w"], p["down_bn"],
                                            in_channels, op)
    return prep


# ------------------------------ BottleNeck forward ---------------------------

def bottleneck_forward(x_nchw, prep, *, stride, out_channels):
    # single bf16 cast, fused with the NCHW -> NHWC transpose
    x = jnp.transpose(x_nchw, (0, 2, 3, 1)).astype(jnp.bfloat16)
    B, H, W, Cin = x.shape
    Ho = (H - 1) // stride + 1
    Wo = (W - 1) // stride + 1

    if stride == 1:
        # conv1+BN1+ReLU+conv2+BN2+ReLU fused in one pallas_call (no im2col slab)
        h = conv1_conv2_fused(x, prep["w1"], prep["b1"], prep["w2"], prep["b2"])
        Cw = h.shape[-1]
        h2 = h.reshape(B * Ho * Wo, Cw)
    else:
        # TODO(synk): stride>1 conv2 still uses the HBM im2col slab (cold path).
        h1 = matmul_fused(x.reshape(B * H * W, Cin), prep["w1"], prep["b1"],
                          relu=True)
        Cw = h1.shape[-1]
        a2, Ho, Wo = _im2col_3x3(h1.reshape(B, H, W, Cw), stride)
        h2 = matmul_fused(a2, prep["w2"], prep["b2"], relu=True)

    # conv3 + BN3 + residual + ReLU, all in one kernel epilogue
    if "wd" in prep:
        xs = x[:, ::stride, ::stride, :].reshape(B * Ho * Wo, Cin)
        y = matmul_fused(h2, prep["w3"], prep["b3"], relu=True,
                         down=(xs, prep["wd"], prep["bd"]))
    else:
        # identity residual (standard ResNet: stride==1, in_channels == 4*out)
        assert stride == 1 and Cin == prep["w3"].shape[1], \
            "identity residual requires stride=1 and in==expansion*out channels"
        y = matmul_fused(h2, prep["w3"], prep["b3"], relu=True,
                         residual=x.reshape(B * H * W, Cin))

    C4 = out_channels * EXPANSION
    y = y[:, :C4].reshape(B, Ho, Wo, C4)
    # widen to f32 only at the module boundary (fused with the final transpose)
    return jnp.transpose(y, (0, 3, 1, 2)).astype(jnp.float32)


# ------------------------------ pure-JAX reference ---------------------------

def _conv_ref(x_nhwc, w_oihw, stride, padding):
    w = jnp.transpose(w_oihw, (2, 3, 1, 0))  # HWIO
    return jax.lax.conv_general_dilated(
        x_nhwc, w, window_strides=(stride, stride),
        padding=((padding, padding), (padding, padding)),
        dimension_numbers=("NHWC", "HWIO", "NHWC"))


def _bn_ref(x, bn, relu):
    scale = bn["gamma"] / jnp.sqrt(bn["var"] + BN_EPS)
    y = (x - bn["mean"]) * scale + bn["beta"]
    return jnp.maximum(y, 0.0) if relu else y


def bottleneck_ref(x_nchw, p, *, stride):
    x = jnp.transpose(x_nchw, (0, 2, 3, 1))
    if "down_conv_w" in p:
        res = _bn_ref(_conv_ref(x, p["down_conv_w"], stride, 0), p["down_bn"], False)
    else:
        res = x
    h = _bn_ref(_conv_ref(x, p["conv1_w"], 1, 0), p["bn1"], True)
    h = _bn_ref(_conv_ref(h, p["conv2_w"], stride, 1), p["bn2"], True)
    h = _bn_ref(_conv_ref(h, p["conv3_w"], 1, 0), p["bn3"], False)
    y = jnp.maximum(h + res, 0.0)
    return jnp.transpose(y, (0, 3, 1, 2))


# ------------------------------ parameter init -------------------------------

class _KeyGen:
    def __init__(self, key):
        self.key = key

    def __call__(self):
        self.key, sub = jax.random.split(self.key)
        return sub


def _make_conv(key, cin, cout, k):
    fan_out = cout * k * k
    std = (2.0 / fan_out) ** 0.5
    return std * jax.random.normal(key, (cout, cin, k, k), jnp.float32)


def _make_bn(key, c):
    k1, k2, k3, k4 = jax.random.split(key, 4)
    return dict(
        gamma=jax.random.uniform(k1, (c,), jnp.float32, 0.5, 1.5),
        beta=0.1 * jax.random.normal(k2, (c,), jnp.float32),
        mean=0.1 * jax.random.normal(k3, (c,), jnp.float32),
        var=jax.random.uniform(k4, (c,), jnp.float32, 0.5, 1.5),
    )


def init_params(key, in_channels, out_channels, stride=1, groups=1,
                width_per_group=64):
    width = int(out_channels * (width_per_group / 64)) * groups
    kg = _KeyGen(key)
    p = dict(
        conv1_w=_make_conv(kg(), in_channels, width, 1),
        bn1=_make_bn(kg(), width),
        conv2_w=_make_conv(kg(), width, width, 3),
        bn2=_make_bn(kg(), width),
        conv3_w=_make_conv(kg(), width, out_channels * EXPANSION, 1),
        bn3=_make_bn(kg(), out_channels * EXPANSION),
    )
    if stride != 1 or in_channels != out_channels * EXPANSION:
        # standard ResNet downsample: 1x1 conv (stride) + BN
        p["down_conv_w"] = _make_conv(kg(), in_channels, out_channels * EXPANSION, 1)
        p["down_bn"] = _make_bn(kg(), out_channels * EXPANSION)
    return p


# ----------------------------------- main ------------------------------------

if __name__ == "__main__":
    configs = [
        # identity-residual block: stride 1, in == expansion*out  (fused conv1+conv2)
        dict(in_channels=256, out_channels=64, stride=1),
        # downsample block: stride 2, 1x1-conv+BN residual fused into conv3
        dict(in_channels=64, out_channels=64, stride=2),
    ]
    B, H, W = 2, 16, 16
    key = jax.random.PRNGKey(0)

    for cfg in configs:
        cin, cout, stride = cfg["in_channels"], cfg["out_channels"], cfg["stride"]
        key, kp, kx = jax.random.split(key, 3)
        params = init_params(kp, cin, cout, stride=stride)
        prep = prepare_params(params, cin, cout)
        x = jax.random.normal(kx, (B, cin, H, W), jnp.float32)

        fwd = jax.jit(functools.partial(bottleneck_forward, stride=stride,
                                        out_channels=cout))
        y = jax.block_until_ready(fwd(x, prep))

        Ho, Wo = (H - 1) // stride + 1, (W - 1) // stride + 1
        assert y.shape == (B, cout * EXPANSION, Ho, Wo), y.shape
        assert bool(jnp.all(jnp.isfinite(y)))

        y_ref = jax.block_until_ready(
            jax.jit(functools.partial(bottleneck_ref, stride=stride))(x, params))
        err = float(jnp.max(jnp.abs(y - y_ref)) / (jnp.max(jnp.abs(y_ref)) + 1e-6))
        assert err < 8e-2, f"cfg={cfg}: mismatch vs reference, rel err {err}"

    print("KERNEL_OK")
</pallas_src>

<mosaic_0001>
module attributes {stable_mosaic.version = 11 : i64} {
  func.func @_mm_res_kernel(%arg0: i32, %arg1: i32, %arg2: memref<256x128xbf16, #tpu.memory_space<vmem>>, %arg3: memref<128x128xbf16, #tpu.memory_space<vmem>>, %arg4: memref<1x128xf32, #tpu.memory_space<vmem>>, %arg5: memref<256x128xbf16, #tpu.memory_space<vmem>>, %arg6: memref<256x128xbf16, #tpu.memory_space<vmem>>) attributes {dimension_semantics = [#tpu.dimension_semantics<parallel>, #tpu.dimension_semantics<parallel>], iteration_bounds = array<i64: 2, 2>, scalar_prefetch = 0 : i64, scratch_operands = 0 : i64, tpu.core_type = #tpu.core_type<tc>, window_params = [{transform_indices = @transform_0, window_bounds = array<i64: 256, 128>}, {transform_indices = @transform_1, window_bounds = array<i64: 128, 128>}, {transform_indices = @transform_2, window_bounds = array<i64: 1, 128>}, {transform_indices = @transform_3, window_bounds = array<i64: 256, 128>}, {transform_indices = @transform_4, window_bounds = array<i64: 256, 128>}]} {
    %c0 = arith.constant 0 : index
    %c0_0 = arith.constant 0 : index
    %0 = vector.load %arg2[%c0, %c0_0] : memref<256x128xbf16, #tpu.memory_space<vmem>>, vector<256x128xbf16>
    %c0_1 = arith.constant 0 : index
    %c0_2 = arith.constant 0 : index
    %1 = vector.load %arg3[%c0_1, %c0_2] : memref<128x128xbf16, #tpu.memory_space<vmem>>, vector<128x128xbf16>
    %cst = arith.constant dense<0.000000e+00> : vector<256x128xf32>
    %2 = tpu.matmul %0, %1, %cst {dimension_numbers = #tpu.dot_dimension_numbers<[1], [0], [0], [1], [0, 0, 1, 1], [], []>} : vector<256x128xbf16>, vector<128x128xbf16>, vector<256x128xf32> -> vector<256x128xf32>
    %c0_3 = arith.constant 0 : index
    %c0_4 = arith.constant 0 : index
    %3 = vector.load %arg4[%c0_3, %c0_4] : memref<1x128xf32, #tpu.memory_space<vmem>>, vector<1x128xf32>
    %4 = vector.broadcast %3 : vector<1x128xf32> to vector<256x128xf32>
    %5 = arith.addf %2, %4 : vector<256x128xf32>
    %c0_5 = arith.constant 0 : index
    %c0_6 = arith.constant 0 : index
    %6 = vector.load %arg5[%c0_5, %c0_6] : memref<256x128xbf16, #tpu.memory_space<vmem>>, vector<256x128xbf16>
    %7 = arith.extf %6 : vector<256x128xbf16> to vector<256x128xf32>
    %8 = arith.addf %5, %7 : vector<256x128xf32>
    %cst_7 = arith.constant 0.000000e+00 : f32
    %9 = vector.broadcast %cst_7 : f32 to vector<256x128xf32>
    %10 = arith.maximumf %8, %9 : vector<256x128xf32>
    %11 = arith.truncf %10 : vector<256x128xf32> to vector<256x128xbf16>
    %c0_8 = arith.constant 0 : index
    %c0_9 = arith.constant 0 : index
    %12 = vector.load %arg6[%c0_8, %c0_9] : memref<256x128xbf16, #tpu.memory_space<vmem>>, vector<256x128xbf16>
    tpu.vector_store %arg6[%c0_8, %c0_9], %11 {strides = array<i32>} : memref<256x128xbf16, #tpu.memory_space<vmem>>, vector<256x128xbf16>,
    return
  }
  func.func @transform_0(%arg0: i32, %arg1: i32) -> (i32, i32) {
    %c0_i32 = arith.constant 0 : i32
    %c0_i32_0 = arith.constant 0 : i32
    return %arg0, %c0_i32 : i32, i32
  }
  func.func @transform_1(%arg0: i32, %arg1: i32) -> (i32, i32) {
    %c0_i32 = arith.constant 0 : i32
    %c0_i32_0 = arith.constant 0 : i32
    return %c0_i32, %arg1 : i32, i32
  }
  func.func @transform_2(%arg0: i32, %arg1: i32) -> (i32, i32) {
    %c0_i32 = arith.constant 0 : i32
    %c0_i32_0 = arith.constant 0 : i32
    return %c0_i32, %arg1 : i32, i32
  }
  func.func @transform_3(%arg0: i32, %arg1: i32) -> (i32, i32) {
    %c0_i32 = arith.constant 0 : i32
    return %arg0, %arg1 : i32, i32
  }
  func.func @transform_4(%arg0: i32, %arg1: i32) -> (i32, i32) {
    %c0_i32 = arith.constant 0 : i32
    return %arg0, %arg1 : i32, i32
  }
}

module attributes {stable_mosaic.version = 11 : i64} {
  func.func @_conv1_conv2_kernel(%arg0: i32, %arg1: memref<1x16x16x256xbf16, #tpu.memory_space<vmem>>, %arg2: memref<256x128xbf16, #tpu.memory_space<vmem>>, %arg3: memref<1x128xf32, #tpu.memory_space<vmem>>, %arg4: memref<1152x128xbf16, #tpu.memory_space<vmem>>, %arg5: memref<1x128xf32, #tpu.memory_space<vmem>>, %arg6: memref<1x16x16x128xbf16, #tpu.memory_space<vmem>>, %arg7: memref<18x18x128xbf16, #tpu.memory_space<vmem>>) attributes {dimension_semantics = [#tpu.dimension_semantics<parallel>], iteration_bounds = array<i64: 2>, scalar_prefetch = 0 : i64, scratch_operands = 1 : i64, tpu.core_type = #tpu.core_type<tc>, window_params = [{transform_indices = @transform_0, window_bounds = array<i64: 1, 16, 16, 256>}, {pipeline_mode = #tpu.pipeline_mode<synchronous>, transform_indices = @transform_1, window_bounds = array<i64: 256, 128>}, {pipeline_mode = #tpu.pipeline_mode<synchronous>, transform_indices = @transform_2, window_bounds = array<i64: 1, 128>}, {pipeline_mode = #tpu.pipeline_mode<synchronous>, transform_indices = @transform_3, window_bounds = array<i64: 1152, 128>}, {pipeline_mode = #tpu.pipeline_mode<synchronous>, transform_indices = @transform_4, window_bounds = array<i64: 1, 128>}, {transform_indices = @transform_5, window_bounds = array<i64: 1, 16, 16, 128>}]} {
    %c0 = arith.constant 0 : index
    %c0_0 = arith.constant 0 : index
    %c0_1 = arith.constant 0 : index
    %c0_2 = arith.constant 0 : index
    %0 = vector.load %arg1[%c0, %c0_0, %c0_1, %c0_2] : memref<1x16x16x256xbf16, #tpu.memory_space<vmem>>, vector<1x16x16x256xbf16>
    %1 = vector.shape_cast %0 : vector<1x16x16x256xbf16> to vector<256x256xbf16>
    %c0_3 = arith.constant 0 : index
    %c0_4 = arith.constant 0 : index
    %2 = vector.load %arg2[%c0_3, %c0_4] : memref<256x128xbf16, #tpu.memory_space<vmem>>, vector<256x128xbf16>
    %cst = arith.constant dense<0.000000e+00> : vector<256x128xf32>
    %3 = tpu.matmul %1, %2, %cst {dimension_numbers = #tpu.dot_dimension_numbers<[1], [0], [0], [1], [0, 0, 1, 1], [], []>} : vector<256x256xbf16>, vector<256x128xbf16>, vector<256x128xf32> -> vector<256x128xf32>
    %c0_5 = arith.constant 0 : index
    %c0_6 = arith.constant 0 : index
    %4 = vector.load %arg3[%c0_5, %c0_6] : memref<1x128xf32, #tpu.memory_space<vmem>>, vector<1x128xf32>
    %5 = vector.broadcast %4 : vector<1x128xf32> to vector<256x128xf32>
    %6 = arith.addf %3, %5 : vector<256x128xf32>
    %cst_7 = arith.constant 0.000000e+00 : f32
    %7 = vector.broadcast %cst_7 : f32 to vector<256x128xf32>
    %8 = arith.maximumf %6, %7 : vector<256x128xf32>
    %9 = arith.truncf %8 : vector<256x128xf32> to vector<256x128xbf16>
    %cst_8 = arith.constant 0.000000e+00 : bf16
    %10 = vector.broadcast %cst_8 : bf16 to vector<18x18x128xbf16>
    %c0_9 = arith.constant 0 : index
    %c0_10 = arith.constant 0 : index
    %c0_11 = arith.constant 0 : index
    %11 = vector.load %arg7[%c0_9, %c0_10, %c0_11] : memref<18x18x128xbf16, #tpu.memory_space<vmem>>, vector<18x18x128xbf16>
    tpu.vector_store %arg7[%c0_9, %c0_10, %c0_11], %10 {strides = array<i32>} : memref<18x18x128xbf16, #tpu.memory_space<vmem>>, vector<18x18x128xbf16>,
    %12 = vector.shape_cast %9 : vector<256x128xbf16> to vector<16x16x128xbf16>
    %c1 = arith.constant 1 : index
    %c1_12 = arith.constant 1 : index
    %c0_13 = arith.constant 0 : index
    %13 = vector.load %arg7[%c1, %c1_12, %c0_13] : memref<18x18x128xbf16, #tpu.memory_space<vmem>>, vector<16x16x128xbf16>
    tpu.vector_store %arg7[%c1, %c1_12, %c0_13], %12 {strides = array<i32>} : memref<18x18x128xbf16, #tpu.memory_space<vmem>>, vector<16x16x128xbf16>,
    %cst_14 = arith.constant 0.000000e+00 : f32
    %14 = vector.broadcast %cst_14 : f32 to vector<256x128xf32>
    %c0_15 = arith.constant 0 : index
    %c0_16 = arith.constant 0 : index
    %c0_17 = arith.constant 0 : index
    %15 = vector.load %arg7[%c0_15, %c0_16, %c0_17] : memref<18x18x128xbf16, #tpu.memory_space<vmem>>, vector<16x16x128xbf16>
    %16 = vector.shape_cast %15 : vector<16x16x128xbf16> to vector<256x128xbf16>
    %c0_18 = arith.constant 0 : index
    %c0_19 = arith.constant 0 : index
    %17 = vector.load %arg4[%c0_18, %c0_19] : memref<1152x128xbf16, #tpu.memory_space<vmem>>, vector<128x128xbf16>
    %cst_20 = arith.constant dense<0.000000e+00> : vector<256x128xf32>
    %18 = tpu.matmul %16, %17, %cst_20 {dimension_numbers = #tpu.dot_dimension_numbers<[1], [0], [0], [1], [0, 0, 1, 1], [], []>} : vector<256x128xbf16>, vector<128x128xbf16>, vector<256x128xf32> -> vector<256x128xf32>
    %19 = arith.addf %14, %18 : vector<256x128xf32>
    %c0_21 = arith.constant 0 : index
    %c1_22 = arith.constant 1 : index
    %c0_23 = arith.constant 0 : index
    %20 = vector.load %arg7[%c0_21, %c1_22, %c0_23] : memref<18x18x128xbf16, #tpu.memory_space<vmem>>, vector<16x16x128xbf16>
    %21 = vector.shape_cast %20 : vector<16x16x128xbf16> to vector<256x128xbf16>
    %c128 = arith.constant 128 : index
    %c0_24 = arith.constant 0 : index
    %22 = vector.load %arg4[%c128, %c0_24] : memref<1152x128xbf16, #tpu.memory_space<vmem>>, vector<128x128xbf16>
    %cst_25 = arith.constant dense<0.000000e+00> : vector<256x128xf32>
    %23 = tpu.matmul %21, %22, %cst_25 {dimension_numbers = #tpu.dot_dimension_numbers<[1], [0], [0], [1], [0, 0, 1, 1], [], []>} : vector<256x128xbf16>, vector<128x128xbf16>, vector<256x128xf32> -> vector<256x128xf32>
    %24 = arith.addf %19, %23 : vector<256x128xf32>
    %c0_26 = arith.constant 0 : index
    %c2 = arith.constant 2 : index
    %c0_27 = arith.constant 0 : index
    %25 = vector.load %arg7[%c0_26, %c2, %c0_27] : memref<18x18x128xbf16, #tpu.memory_space<vmem>>, vector<16x16x128xbf16>
    %26 = vector.shape_cast %25 : vector<16x16x128xbf16> to vector<256x128xbf16>
    %c256 = arith.constant 256 : index
    %c0_28 = arith.constant 0 : index
    %27 = vector.load %arg4[%c256, %c0_28] : memref<1152x128xbf16, #tpu.memory_space<vmem>>, vector<128x128xbf16>
    %cst_29 = arith.constant dense<0.000000e+00> : vector<256x128xf32>
    %28 = tpu.matmul %26, %27, %cst_29 {dimension_numbers = #tpu.dot_dimension_numbers<[1], [0], [0], [1], [0, 0, 1, 1], [], []>} : vector<256x128xbf16>, vector<128x128xbf16>, vector<256x128xf32> -> vector<256x128xf32>
    %29 = arith.addf %24, %28 : vector<256x128xf32>
    %c1_30 = arith.constant 1 : index
    %c0_31 = arith.constant 0 : index
    %c0_32 = arith.constant 0 : index
    %30 = vector.load %arg7[%c1_30, %c0_31, %c0_32] : memref<18x18x128xbf16, #tpu.memory_space<vmem>>, vector<16x16x128xbf16>
    %31 = vector.shape_cast %30 : vector<16x16x128xbf16> to vector<256x128xbf16>
    %c384 = arith.constant 384 : index
    %c0_33 = arith.constant 0 : index
    %32 = vector.load %arg4[%c384, %c0_33] : memref<1152x128xbf16, #tpu.memory_space<vmem>>, vector<128x128xbf16>
    %cst_34 = arith.constant dense<0.000000e+00> : vector<256x128xf32>
    %33 = tpu.matmul %31, %32, %cst_34 {dimension_numbers = #tpu.dot_dimension_numbers<[1], [0], [0], [1], [0, 0, 1, 1], [], []>} : vector<256x128xbf16>, vector<128x128xbf16>, vector<256x128xf32> -> vector<256x128xf32>
    %34 = arith.addf %29, %33 : vector<256x128xf32>
    %c1_35 = arith.constant 1 : index
    %c1_36 = arith.constant 1 : index
    %c0_37 = arith.constant 0 : index
    %35 = vector.load %arg7[%c1_35, %c1_36, %c0_37] : memref<18x18x128xbf16, #tpu.memory_space<vmem>>, vector<16x16x128xbf16>
    %36 = vector.shape_cast %35 : vector<16x16x128xbf16> to vector<256x128xbf16>
    %c512 = arith.constant 512 : index
    %c0_38 = arith.constant 0 : index
    %37 = vector.load %arg4[%c512, %c0_38] : memref<1152x128xbf16, #tpu.memory_space<vmem>>, vector<128x128xbf16>
    %cst_39 = arith.constant dense<0.000000e+00> : vector<256x128xf32>
    %38 = tpu.matmul %36, %37, %cst_39 {dimension_numbers = #tpu.dot_dimension_numbers<[1], [0], [0], [1], [0, 0, 1, 1], [], []>} : vector<256x128xbf16>, vector<128x128xbf16>, vector<256x128xf32> -> vector<256x128xf32>
    %39 = arith.addf %34, %38 : vector<256x128xf32>
    %c1_40 = arith.constant 1 : index
    %c2_41 = arith.constant 2 : index
    %c0_42 = arith.constant 0 : index
    %40 = vector.load %arg7[%c1_40, %c2_41, %c0_42] : memref<18x18x128xbf16, #tpu.memory_space<vmem>>, vector<16x16x128xbf16>
    %41 = vector.shape_cast %40 : vector<16x16x128xbf16> to vector<256x128xbf16>
    %c640 = arith.constant 640 : index
    %c0_43 = arith.constant 0 : index
    %42 = vector.load %arg4[%c640, %c0_43] : memref<1152x128xbf16, #tpu.memory_space<vmem>>, vector<128x128xbf16>
    %cst_44 = arith.constant dense<0.000000e+00> : vector<256x128xf32>
    %43 = tpu.matmul %41, %42, %cst_44 {dimension_numbers = #tpu.dot_dimension_numbers<[1], [0], [0], [1], [0, 0, 1, 1], [], []>} : vector<256x128xbf16>, vector<128x128xbf16>, vector<256x128xf32> -> vector<256x128xf32>
    %44 = arith.addf %39, %43 : vector<256x128xf32>
    %c2_45 = arith.constant 2 : index
    %c0_46 = arith.constant 0 : index
    %c0_47 = arith.constant 0 : index
    %45 = vector.load %arg7[%c2_45, %c0_46, %c0_47] : memref<18x18x128xbf16, #tpu.memory_space<vmem>>, vector<16x16x128xbf16>
    %46 = vector.shape_cast %45 : vector<16x16x128xbf16> to vector<256x128xbf16>
    %c768 = arith.constant 768 : index
    %c0_48 = arith.constant 0 : index
    %47 = vector.load %arg4[%c768, %c0_48] : memref<1152x128xbf16, #tpu.memory_space<vmem>>, vector<128x128xbf16>
    %cst_49 = arith.constant dense<0.000000e+00> : vector<256x128xf32>
    %48 = tpu.matmul %46, %47, %cst_49 {dimension_numbers = #tpu.dot_dimension_numbers<[1], [0], [0], [1], [0, 0, 1, 1], [], []>} : vector<256x128xbf16>, vector<128x128xbf16>, vector<256x128xf32> -> vector<256x128xf32>
    %49 = arith.addf %44, %48 : vector<256x128xf32>
    %c2_50 = arith.constant 2 : index
    %c1_51 = arith.constant 1 : index
    %c0_52 = arith.constant 0 : index
    %50 = vector.load %arg7[%c2_50, %c1_51, %c0_52] : memref<18x18x128xbf16, #tpu.memory_space<vmem>>, vector<16x16x128xbf16>
    %51 = vector.shape_cast %50 : vector<16x16x128xbf16> to vector<256x128xbf16>
    %c896 = arith.constant 896 : index
    %c0_53 = arith.constant 0 : index
    %52 = vector.load %arg4[%c896, %c0_53] : memref<1152x128xbf16, #tpu.memory_space<vmem>>, vector<128x128xbf16>
    %cst_54 = arith.constant dense<0.000000e+00> : vector<256x128xf32>
    %53 = tpu.matmul %51, %52, %cst_54 {dimension_numbers = #tpu.dot_dimension_numbers<[1], [0], [0], [1], [0, 0, 1, 1], [], []>} : vector<256x128xbf16>, vector<128x128xbf16>, vector<256x128xf32> -> vector<256x128xf32>
    %54 = arith.addf %49, %53 : vector<256x128xf32>
    %c2_55 = arith.constant 2 : index
    %c2_56 = arith.constant 2 : index
    %c0_57 = arith.constant 0 : index
    %55 = vector.load %arg7[%c2_55, %c2_56, %c0_57] : memref<18x18x128xbf16, #tpu.memory_space<vmem>>, vector<16x16x128xbf16>
    %56 = vector.shape_cast %55 : vector<16x16x128xbf16> to vector<256x128xbf16>
    %c1024 = arith.constant 1024 : index
    %c0_58 = arith.constant 0 : index
    %57 = vector.load %arg4[%c1024, %c0_58] : memref<1152x128xbf16, #tpu.memory_space<vmem>>, vector<128x128xbf16>
    %cst_59 = arith.constant dense<0.000000e+00> : vector<256x128xf32>
    %58 = tpu.matmul %56, %57, %cst_59 {dimension_numbers = #tpu.dot_dimension_numbers<[1], [0], [0], [1], [0, 0, 1, 1], [], []>} : vector<256x128xbf16>, vector<128x128xbf16>, vector<256x128xf32> -> vector<256x128xf32>
    %59 = arith.addf %54, %58 : vector<256x128xf32>
    %c0_60 = arith.constant 0 : index
    %c0_61 = arith.constant 0 : index
    %60 = vector.load %arg5[%c0_60, %c0_61] : memref<1x128xf32, #tpu.memory_space<vmem>>, vector<1x128xf32>
    %61 = vector.broadcast %60 : vector<1x128xf32> to vector<256x128xf32>
    %62 = arith.addf %59, %61 : vector<256x128xf32>
    %cst_62 = arith.constant 0.000000e+00 : f32
    %63 = vector.broadcast %cst_62 : f32 to vector<256x128xf32>
    %64 = arith.maximumf %62, %63 : vector<256x128xf32>
    %65 = vector.shape_cast %64 : vector<256x128xf32> to vector<1x16x16x128xf32>
    %66 = arith.truncf %65 : vector<1x16x16x128xf32> to vector<1x16x16x128xbf16>
    %c0_63 = arith.constant 0 : index
    %c0_64 = arith.constant 0 : index
    %c0_65 = arith.constant 0 : index
    %c0_66 = arith.constant 0 : index
    %67 = vector.load %arg6[%c0_63, %c0_64, %c0_65, %c0_66] : memref<1x16x16x128xbf16, #tpu.memory_space<vmem>>, vector<1x16x16x128xbf16>
    tpu.vector_store %arg6[%c0_63, %c0_64, %c0_65, %c0_66], %66 {strides = array<i32>} : memref<1x16x16x128xbf16, #tpu.memory_space<vmem>>, vector<1x16x16x128xbf16>,
    return
  }
  func.func @transform_0(%arg0: i32) -> (i32, i32, i32, i32) {
    %c0_i32 = arith.constant 0 : i32
    %c0_i32_0 = arith.constant 0 : i32
    %c0_i32_1 = arith.constant 0 : i32
    %c0_i32_2 = arith.constant 0 : i32
    return %arg0, %c0_i32, %c0_i32_0, %c0_i32_1 : i32, i32, i32, i32
  }
  func.func @transform_1(%arg0: i32) -> (i32, i32) {
    %c0_i32 = arith.constant 0 : i32
    %c0_i32_0 = arith.constant 0 : i32
    %c0_i32_1 = arith.constant 0 : i32
    return %c0_i32, %c0_i32_0 : i32, i32
  }
  func.func @transform_2(%arg0: i32) -> (i32, i32) {
    %c0_i32 = arith.constant 0 : i32
    %c0_i32_0 = arith.constant 0 : i32
    %c0_i32_1 = arith.constant 0 : i32
    return %c0_i32, %c0_i32_0 : i32, i32
  }
  func.func @transform_3(%arg0: i32) -> (i32, i32) {
    %c0_i32 = arith.constant 0 : i32
    %c0_i32_0 = arith.constant 0 : i32
    %c0_i32_1 = arith.constant 0 : i32
    return %c0_i32, %c0_i32_0 : i32, i32
  }
  func.func @transform_4(%arg0: i32) -> (i32, i32) {
    %c0_i32 = arith.constant 0 : i32
    %c0_i32_0 = arith.constant 0 : i32
    %c0_i32_1 = arith.constant 0 : i32
    return %c0_i32, %c0_i32_0 : i32, i32
  }
  func.func @transform_5(%arg0: i32) -> (i32, i32, i32, i32) {
    %c0_i32 = arith.constant 0 : i32
    %c0_i32_0 = arith.constant 0 : i32
    %c0_i32_1 = arith.constant 0 : i32
    %c0_i32_2 = arith.constant 0 : i32
    return %arg0, %c0_i32, %c0_i32_0, %c0_i32_1 : i32, i32, i32, i32
  }
}

</mosaic_0001>

<llo_original>
// kernel: bottleneck_forward.3
$region0: #{bottleneck_forward.3}
  #allocation0 [shape = 'u32[]', space=smem, size = 0x4, offset = 0x4, fixed_abs, tag = 'smem constant byte address 0x4 - core index']
  #allocation1 [shape = 'u32[144,128]{1,0:T(1,128)}', space=vmem, size = 0x12000, scoped, tag = 'internal scratch']
  %s0 = inlined_call_operand.vmem [shape: bf16[512,128], index: 0, kind: input, shape index: {}]
  %s1 = inlined_call_operand.vmem [shape: bf16[128,256], index: 1, kind: input, shape index: {}]
  %s2 = inlined_call_operand.vmem [shape: f32[1,256], index: 2, kind: input, shape index: {}]
  %s3 = inlined_call_operand.vmem [shape: bf16[512,256], index: 3, kind: input, shape index: {}]
  %s4 = inlined_call_operand.vmem [shape: bf16[512,256], index: 4, kind: output, shape index: {}]
  %s5 = sld [smem:[#allocation0]]
  $region168: #{bottleneck_forward.3} parent=0
    _
  %s7 = ssub.s32 1, %s5
  %s8 = scalar_select 0, %s7, %s5
  $region1: #{bottleneck_forward.3} parent=0
    #allocation2 [shape = 'u8[65536]{0}', space=vmem, size = 0x10000, scoped, tag = 'input window, operand 1']
    #allocation3 [shape = 'u8[131072]{0}', space=vmem, size = 0x20000, scoped, tag = 'input window, operand 3']
    #allocation4 [shape = 'u8[131072]{0}', space=vmem, size = 0x20000, scoped, tag = 'output window, operand 0']
    loop: start=0, step=1, limit=6
    $region2: #{bottleneck_forward.3} parent=1 // loop_pre_header
      _
    $region3: #{bottleneck_forward.3} parent=1 // loop_header
      %s10 = sphi 0, %s14
      %p11 = scmp.ge.s32.totalorder %s10, 6
      %s17 = sphi 0, %s29
      %s18 = sphi 0, %s25
      %s19 = sphi 0, %s17
      %s20 = sphi 0, %s18
      %s21 = sphi 0, %s19
      %s22 = sphi 0, %s20
      %s32 = sphi 0, %s34
      %s35 = sphi 0, %s32
      %s36 = sphi 0, %s35
      %s52 = sphi 0, %s36
      %s58 = sphi 0, %s60
      %s61 = sphi 0, %s58
      %s62 = sphi 0, %s61
      %s78 = sphi 0, %s62
      %s84 = sphi 0, %s86
      %s87 = sphi 0, %s84
      %s88 = sphi 0, %s87
      %s104 = sphi 0, %s88
      %s112 = sphi 0, %s114
      %s115 = sphi 0, %s112
      %s116 = sphi 0, %s115
      %s132 = sphi 0, %s116
      %s140 = sphi 0, %s142
      %s143 = sphi 0, %s140
      %s144 = sphi 0, %s143
      %s160 = sphi 0, %s144
    $region4: #{bottleneck_forward.3} parent=1 // loop_header_branch
      %13 = sbr.rel (%p11) target = $region8
    $region5: #{bottleneck_forward.3} parent=1 // loop_body
      %s15 = ssub.s32 %s10, 1
      %s16 = ssub.s32 %s10, 2
      %s23 = sadd.s32 1, %s18
      %p24 = scmp.ge.s32.totalorder %s23, 2
      %s25 = scalar_select %p24, 0, %s23
      %s26 = sadd.s32 1, %s17
      %s27 = scalar_select %p24, %s26, %s17
      %p28 = scmp.ge.s32.totalorder %s27, 2
      %s29 = scalar_select %p28, 0, %s27
      %s30 = ssub.s32 %s17, %s29
      %p31 = scmp.eq.s32.totalorder %s30, 0
      %s33 = sadd.s32 %s32, 1
      %s34 = scalar_select %p31, %s32, %s33
      %p37 = pneg %p31
      %p38 = scmp.eq.s32.totalorder %s10, 3
      %p39 = por %p37, %p38
      %p40 = scmp.ne.s32.totalorder %s32, %s35
      %p41 = scmp.eq.s32.totalorder %s10, 0
      %p42 = por %p40, %p41
      %p43 = scmp.ne.s32.totalorder %s32, %s35
      %p44 = scmp.eq.s32.totalorder %s15, 3
      %p45 = por %p43, %p44
      %p46 = scmp.ne.s32.totalorder %s35, %s36
      %p47 = scmp.eq.s32.totalorder %s15, 0
      %p48 = por %p46, %p47
      %p49 = scmp.ne.s32.totalorder %s35, %s36
      %p50 = scmp.eq.s32.totalorder %s16, 3
      %p51 = por %p49, %p50
      %p53 = scmp.ne.s32.totalorder %s36, %s52
      %p54 = scmp.eq.s32.totalorder %s16, 0
      %p55 = por %p53, %p54
      %s56 = ssub.s32 %s18, %s25
      %p57 = scmp.eq.s32.totalorder %s56, 0
      %s59 = sadd.s32 %s58, 1
      %s60 = scalar_select %p57, %s58, %s59
      %p63 = pneg %p57
      %p64 = scmp.eq.s32.totalorder %s10, 3
      %p65 = por %p63, %p64
      %p66 = scmp.ne.s32.totalorder %s58, %s61
      %p67 = scmp.eq.s32.totalorder %s10, 0
      %p68 = por %p66, %p67
      %p69 = scmp.ne.s32.totalorder %s58, %s61
      %p70 = scmp.eq.s32.totalorder %s15, 3
      %p71 = por %p69, %p70
      %p72 = scmp.ne.s32.totalorder %s61, %s62
      %p73 = scmp.eq.s32.totalorder %s15, 0
      %p74 = por %p72, %p73
      %p75 = scmp.ne.s32.totalorder %s61, %s62
      %p76 = scmp.eq.s32.totalorder %s16, 3
      %p77 = por %p75, %p76
      %p79 = scmp.ne.s32.totalorder %s62, %s78
      %p80 = scmp.eq.s32.totalorder %s16, 0
      %p81 = por %p79, %p80
      %s82 = ssub.s32 %s18, %s25
      %p83 = scmp.eq.s32.totalorder %s82, 0
      %s85 = sadd.s32 %s84, 1
      %s86 = scalar_select %p83, %s84, %s85
      %p89 = pneg %p83
      %p90 = scmp.eq.s32.totalorder %s10, 3
      %p91 = por %p89, %p90
      %p92 = scmp.ne.s32.totalorder %s84, %s87
      %p93 = scmp.eq.s32.totalorder %s10, 0
      %p94 = por %p92, %p93
      %p95 = scmp.ne.s32.totalorder %s84, %s87
      %p96 = scmp.eq.s32.totalorder %s15, 3
      %p97 = por %p95, %p96
      %p98 = scmp.ne.s32.totalorder %s87, %s88
      %p99 = scmp.eq.s32.totalorder %s15, 0
      %p100 = por %p98, %p99
      %p101 = scmp.ne.s32.totalorder %s87, %s88
      %p102 = scmp.eq.s32.totalorder %s16, 3
      %p103 = por %p101, %p102
      %p105 = scmp.ne.s32.totalorder %s88, %s104
      %p106 = scmp.eq.s32.totalorder %s16, 0
      %p107 = por %p105, %p106
      %s108 = ssub.s32 %s17, %s29
      %s109 = ssub.s32 %s18, %s25
      %s110 = sor.u32 %s108, %s109
      %p111 = scmp.eq.s32.totalorder %s110, 0
      %s113 = sadd.s32 %s112, 1
      %s114 = scalar_select %p111, %s112, %s113
      %p117 = pneg %p111
      %p118 = scmp.eq.s32.totalorder %s10, 3
      %p119 = por %p117, %p118
      %p120 = scmp.ne.s32.totalorder %s112, %s115
      %p121 = scmp.eq.s32.totalorder %s10, 0
      %p122 = por %p120, %p121
      %p123 = scmp.ne.s32.totalorder %s112, %s115
      %p124 = scmp.eq.s32.totalorder %s15, 3
      %p125 = por %p123, %p124
      %p126 = scmp.ne.s32.totalorder %s115, %s116
      %p127 = scmp.eq.s32.totalorder %s15, 0
      %p128 = por %p126, %p127
      %p129 = scmp.ne.s32.totalorder %s115, %s116
      %p130 = scmp.eq.s32.totalorder %s16, 3
      %p131 = por %p129, %p130
      %p133 = scmp.ne.s32.totalorder %s116, %s132
      %p134 = scmp.eq.s32.totalorder %s16, 0
      %p135 = por %p133, %p134
      %s136 = ssub.s32 %s17, %s29
      %s137 = ssub.s32 %s18, %s25
      %s138 = sor.u32 %s136, %s137
      %p139 = scmp.eq.s32.totalorder %s138, 0
      %s141 = sadd.s32 %s140, 1
      %s142 = scalar_select %p139, %s140, %s141
      %p145 = pneg %p139
      %p146 = scmp.eq.s32.totalorder %s10, 3
      %p147 = por %p145, %p146
      %p148 = scmp.ne.s32.totalorder %s140, %s143
      %p149 = scmp.eq.s32.totalorder %s10, 0
      %p150 = por %p148, %p149
      %p151 = scmp.ne.s32.totalorder %s140, %s143
      %p152 = scmp.eq.s32.totalorder %s15, 3
      %p153 = por %p151, %p152
      %p154 = scmp.ne.s32.totalorder %s143, %s144
      %p155 = scmp.eq.s32.totalorder %s15, 0
      %p156 = por %p154, %p155
      %p157 = scmp.ne.s32.totalorder %s143, %s144
      %p158 = scmp.eq.s32.totalorder %s16, 3
      %p159 = por %p157, %p158
      %p161 = scmp.ne.s32.totalorder %s144, %s160
      %p162 = scmp.eq.s32.totalorder %s16, 0
      %p163 = por %p161, %p162
      %p164 = scmp.le.s32.totalorder 1, %s10
      %p165 = scmp.lt.s32.totalorder %s10, 5
      %p166 = pnand %p164, %p165
      %p167 = pneg %p166
      // Predicated region
      $region9: #{bottleneck_forward.3} parent=5 // pred_check
        _
      $region10: #{bottleneck_forward.3} parent=5 // pred_check_branch
        %169 = sbr.rel (%p166) target = $region12
      $region11: #{bottleneck_forward.3} parent=5 // pred_region
        %s170 = ssub.s32 %s10, 1
      $region12: #{bottleneck_forward.3} parent=5 // pred_fallthru
        _
      %p171 = scmp.lt.s32.totalorder %s10, 4
      // Predicated region
      $region13: #{bottleneck_forward.3} parent=5 // pred_check
        %p172 = pneg %p171
      $region14: #{bottleneck_forward.3} parent=5 // pred_check_branch
        %174 = sbr.rel (%p172) target = $region16
      $region15: #{bottleneck_forward.3} parent=5 // pred_region
        // Predicated region
        $region17: #{bottleneck_forward.3} parent=15 // pred_check
          %p175 = pneg %p42
        $region18: #{bottleneck_forward.3} parent=15 // pred_check_branch
          %177 = sbr.rel (%p175) target = $region20
        $region19: #{bottleneck_forward.3} parent=15 // pred_region
          %s178 = smul.u32 32, %s17
          %p179 = scmp.lt.s32.totalorder %s178, 63
          %s180 = scalar_select %p179, %s178, 63
          %s181 = smul.addr %s180, 4
          %s182 = scalar_lea.vmem %s0, %s181
          %s183 = smul.u32 32, %s17
        $region20: #{bottleneck_forward.3} parent=15 // pred_fallthru
          _
        // Predicated region
        $region21: #{bottleneck_forward.3} parent=15 // pred_check
          %p184 = pneg %p68
        $region22: #{bottleneck_forward.3} parent=15 // pred_check_branch
          %186 = sbr.rel (%p184) target = $region24
        $region23: #{bottleneck_forward.3} parent=15 // pred_region
          %s187 = sand.u32 %s58, 1
          %s188 = sand.u32 %s58, 1
          %s189 = smul.addr %s188, 64
          %s190 = scalar_lea.vmem [#allocation2], %s189
          %s191 = smul.addr %s18, 4
          %s192 = scalar_lea.vmem %s1, %s191
          // Predicated region
          $region25: #{bottleneck_forward.3} parent=23 // pred_check
            _
          $region26: #{bottleneck_forward.3} parent=23 // pred_check_branch
            %194 = sbr.rel (0) target = $region28
          $region27: #{bottleneck_forward.3} parent=23 // pred_region
            // Predicated region
            $region29: #{bottleneck_forward.3} parent=27 // pred_check
              _
            $region30: #{bottleneck_forward.3} parent=27 // pred_check_branch
              %196 = sbr.rel target = $region32
            $region31: #{bottleneck_forward.3} parent=27 // pred_region
              // Predicated region
              $region44: #{bottleneck_forward.3} parent=31 // pred_check
                _
              $region45: #{bottleneck_forward.3} parent=31 // pred_check_branch
                %241 = sbr.rel (0) target = $region47
              $region46: #{bottleneck_forward.3} parent=31 // pred_region
                loop: start=0, step=1, limit=1
                $region48: #{bottleneck_forward.3} parent=46 // loop_pre_header
                  _
                $region49: #{bottleneck_forward.3} parent=46 // loop_header
                  %s243 = sphi 0, %s247
                  %p244 = scmp.ge.s32.totalorder %s243, 1
                  %s248 = sphi %s192, %s192
                  %s249 = sphi %s190, %s190
                $region50: #{bottleneck_forward.3} parent=46 // loop_header_branch
                  %246 = sbr.rel (%p244) target = $region54
                $region51: #{bottleneck_forward.3} parent=46 // loop_body
                  _
                $region52: #{bottleneck_forward.3} parent=46 // loop_footer
                  %s247 = sadd.s32 1, %s243
                $region53: #{bottleneck_forward.3} parent=46 // loop_footer_branch
                  %242 = sbr.rel target = $region49
                $region54: #{bottleneck_forward.3} parent=46 // loop_exit
                  _
                loop: start=0, step=1, limit=1
                $region55: #{bottleneck_forward.3} parent=46 // loop_pre_header
                  _
                $region56: #{bottleneck_forward.3} parent=46 // loop_header
                  %s252 = sphi 0, %s256
                  %p253 = scmp.ge.s32.totalorder %s252, 1
                  %s257 = sphi %s192, %s192
                  %s258 = sphi %s190, %s190
                $region57: #{bottleneck_forward.3} parent=46 // loop_header_branch
                  %255 = sbr.rel (%p253) target = $region61
                $region58: #{bottleneck_forward.3} parent=46 // loop_body
                  %v259 = vld [vmem:[%s257] sm:$0xf]
                  %260 = vst [vmem:[%s258] sm:$0xf] %v259
                  %v261 = vld [vmem:[%s257 + $0x8] sm:$0xf]
                  %262 = vst [vmem:[%s258 + $0x4] sm:$0xf] %v261
                  %v263 = vld [vmem:[%s257 + $0x10] sm:$0xf]
                  %264 = vst [vmem:[%s258 + $0x8] sm:$0xf] %v263
                  %v265 = vld [vmem:[%s257 + $0x18] sm:$0xf]
                  %266 = vst [vmem:[%s258 + $0xc] sm:$0xf] %v265
                  %v267 = vld [vmem:[%s257 + $0x20] sm:$0xf]
                  %268 = vst [vmem:[%s258 + $0x10] sm:$0xf] %v267
                  %v269 = vld [vmem:[%s257 + $0x28] sm:$0xf]
                  %270 = vst [vmem:[%s258 + $0x14] sm:$0xf] %v269
                  %v271 = vld [vmem:[%s257 + $0x30] sm:$0xf]
                  %272 = vst [vmem:[%s258 + $0x18] sm:$0xf] %v271
                  %v273 = vld [vmem:[%s257 + $0x38] sm:$0xf]
                  %274 = vst [vmem:[%s258 + $0x1c] sm:$0xf] %v273
                  %v275 = vld [vmem:[%s257 + $0x40] sm:$0xf]
                  %276 = vst [vmem:[%s258 + $0x20] sm:$0xf] %v275
                  %v277 = vld [vmem:[%s257 + $0x48] sm:$0xf]
                  %278 = vst [vmem:[%s258 + $0x24] sm:$0xf] %v277
                  %v279 = vld [vmem:[%s257 + $0x50] sm:$0xf]
                  %280 = vst [vmem:[%s258 + $0x28] sm:$0xf] %v279
                  %v281 = vld [vmem:[%s257 + $0x58] sm:$0xf]
                  %282 = vst [vmem:[%s258 + $0x2c] sm:$0xf] %v281
                  %v283 = vld [vmem:[%s257 + $0x60] sm:$0xf]
                  %284 = vst [vmem:[%s258 + $0x30] sm:$0xf] %v283
                  %v285 = vld [vmem:[%s257 + $0x68] sm:$0xf]
                  %286 = vst [vmem:[%s258 + $0x34] sm:$0xf] %v285
                  %v287 = vld [vmem:[%s257 + $0x70] sm:$0xf]
                  %288 = vst [vmem:[%s258 + $0x38] sm:$0xf] %v287
                  %v289 = vld [vmem:[%s257 + $0x78] sm:$0xf]
                  %290 = vst [vmem:[%s258 + $0x3c] sm:$0xf] %v289
                $region59: #{bottleneck_forward.3} parent=46 // loop_footer
                  %s256 = sadd.s32 1, %s252
                $region60: #{bottleneck_forward.3} parent=46 // loop_footer_branch
                  %251 = sbr.rel target = $region56
                $region61: #{bottleneck_forward.3} parent=46 // loop_exit
                  _
              $region47: #{bottleneck_forward.3} parent=31 // pred_fallthru
                _
            $region32: #{bottleneck_forward.3} parent=27 // pred_fallthru
              _
            // Predicated region
            $region33: #{bottleneck_forward.3} parent=27 // pred_check
              _
            $region34: #{bottleneck_forward.3} parent=27 // pred_check_branch
              %198 = sbr.rel (0) target = $region36
            $region35: #{bottleneck_forward.3} parent=27 // pred_region
              loop: start=0, step=1, limit=1
              $region37: #{bottleneck_forward.3} parent=35 // loop_pre_header
                _
              $region38: #{bottleneck_forward.3} parent=35 // loop_header
                %s201 = sphi 0, %s205
                %p202 = scmp.ge.s32.totalorder %s201, 1
                %s206 = sphi %s192, %s192
                %s207 = sphi %s190, %s190
              $region39: #{bottleneck_forward.3} parent=35 // loop_header_branch
                %204 = sbr.rel (%p202) target = $region43
              $region40: #{bottleneck_forward.3} parent=35 // loop_body
                %v208 = vld [vmem:[%s206] sm:$0xf]
                %209 = vst [vmem:[%s207] sm:$0xf] %v208
                %v210 = vld [vmem:[%s206 + $0x8] sm:$0xf]
                %211 = vst [vmem:[%s207 + $0x4] sm:$0xf] %v210
                %v212 = vld [vmem:[%s206 + $0x10] sm:$0xf]
                %213 = vst [vmem:[%s207 + $0x8] sm:$0xf] %v212
                %v214 = vld [vmem:[%s206 + $0x18] sm:$0xf]
                %215 = vst [vmem:[%s207 + $0xc] sm:$0xf] %v214
                %v216 = vld [vmem:[%s206 + $0x20] sm:$0xf]
                %217 = vst [vmem:[%s207 + $0x10] sm:$0xf] %v216
                %v218 = vld [vmem:[%s206 + $0x28] sm:$0xf]
                %219 = vst [vmem:[%s207 + $0x14] sm:$0xf] %v218
                %v220 = vld [vmem:[%s206 + $0x30] sm:$0xf]
                %221 = vst [vmem:[%s207 + $0x18] sm:$0xf] %v220
                %v222 = vld [vmem:[%s206 + $0x38] sm:$0xf]
                %223 = vst [vmem:[%s207 + $0x1c] sm:$0xf] %v222
                %v224 = vld [vmem:[%s206 + $0x40] sm:$0xf]
                %225 = vst [vmem:[%s207 + $0x20] sm:$0xf] %v224
                %v226 = vld [vmem:[%s206 + $0x48] sm:$0xf]
                %227 = vst [vmem:[%s207 + $0x24] sm:$0xf] %v226
                %v228 = vld [vmem:[%s206 + $0x50] sm:$0xf]
                %229 = vst [vmem:[%s207 + $0x28] sm:$0xf] %v228
                %v230 = vld [vmem:[%s206 + $0x58] sm:$0xf]
                %231 = vst [vmem:[%s207 + $0x2c] sm:$0xf] %v230
                %v232 = vld [vmem:[%s206 + $0x60] sm:$0xf]
                %233 = vst [vmem:[%s207 + $0x30] sm:$0xf] %v232
                %v234 = vld [vmem:[%s206 + $0x68] sm:$0xf]
                %235 = vst [vmem:[%s207 + $0x34] sm:$0xf] %v234
                %v236 = vld [vmem:[%s206 + $0x70] sm:$0xf]
                %237 = vst [vmem:[%s207 + $0x38] sm:$0xf] %v236
                %v238 = vld [vmem:[%s206 + $0x78] sm:$0xf]
                %239 = vst [vmem:[%s207 + $0x3c] sm:$0xf] %v238
              $region41: #{bottleneck_forward.3} parent=35 // loop_footer
                %s205 = sadd.s32 1, %s201
              $region42: #{bottleneck_forward.3} parent=35 // loop_footer_branch
                %200 = sbr.rel target = $region38
              $region43: #{bottleneck_forward.3} parent=35 // loop_exit
                _
            $region36: #{bottleneck_forward.3} parent=27 // pred_fallthru
              _
          $region28: #{bottleneck_forward.3} parent=23 // pred_fallthru
            _
          %291 = vnop
        $region24: #{bottleneck_forward.3} parent=15 // pred_fallthru
          _
        // Predicated region
        $region62: #{bottleneck_forward.3} parent=15 // pred_check
          %p292 = pneg %p94
        $region63: #{bottleneck_forward.3} parent=15 // pred_check_branch
          %294 = sbr.rel (%p292) target = $region65
        $region64: #{bottleneck_forward.3} parent=15 // pred_region
          %p295 = scmp.lt.s32.totalorder %s18, 1
          %s296 = scalar_select %p295, %s18, 1
          %s297 = scalar_lea.vmem %s2, %s296
        $region65: #{bottleneck_forward.3} parent=15 // pred_fallthru
          _
        // Predicated region
        $region66: #{bottleneck_forward.3} parent=15 // pred_check
          %p298 = pneg %p122
        $region67: #{bottleneck_forward.3} parent=15 // pred_check_branch
          %300 = sbr.rel (%p298) target = $region69
        $region68: #{bottleneck_forward.3} parent=15 // pred_region
          %s301 = sand.u32 %s112, 1
          %s302 = sand.u32 %s112, 1
          %s303 = smul.addr %s302, 128
          %s304 = scalar_lea.vmem [#allocation3], %s303
          %s305 = smul.u32 32, %s17
          %s306 = smul.addr %s305, 2
          %s307 = sadd.s32 %s18, %s306
          %s308 = smul.addr %s307, 4
          %s309 = scalar_lea.vmem %s3, %s308
          // Predicated region
          $region70: #{bottleneck_forward.3} parent=68 // pred_check
            _
          $region71: #{bottleneck_forward.3} parent=68 // pred_check_branch
            %311 = sbr.rel (0) target = $region73
          $region72: #{bottleneck_forward.3} parent=68 // pred_region
            // Predicated region
            $region74: #{bottleneck_forward.3} parent=72 // pred_check
              _
            $region75: #{bottleneck_forward.3} parent=72 // pred_check_branch
              %313 = sbr.rel target = $region77
            $region76: #{bottleneck_forward.3} parent=72 // pred_region
              // Predicated region
              $region89: #{bottleneck_forward.3} parent=76 // pred_check
                _
              $region90: #{bottleneck_forward.3} parent=76 // pred_check_branch
                %390 = sbr.rel (0) target = $region92
              $region91: #{bottleneck_forward.3} parent=76 // pred_region
                loop: start=0, step=1, limit=1
                $region93: #{bottleneck_forward.3} parent=91 // loop_pre_header
                  _
                $region94: #{bottleneck_forward.3} parent=91 // loop_header
                  %s392 = sphi 0, %s396
                  %p393 = scmp.ge.s32.totalorder %s392, 1
                  %s397 = sphi %s309, %s309
                  %s398 = sphi %s304, %s304
                $region95: #{bottleneck_forward.3} parent=91 // loop_header_branch
                  %395 = sbr.rel (%p393) target = $region99
                $region96: #{bottleneck_forward.3} parent=91 // loop_body
                  _
                $region97: #{bottleneck_forward.3} parent=91 // loop_footer
                  %s396 = sadd.s32 1, %s392
                $region98: #{bottleneck_forward.3} parent=91 // loop_footer_branch
                  %391 = sbr.rel target = $region94
                $region99: #{bottleneck_forward.3} parent=91 // loop_exit
                  _
                loop: start=0, step=1, limit=1
                $region100: #{bottleneck_forward.3} parent=91 // loop_pre_header
                  _
                $region101: #{bottleneck_forward.3} parent=91 // loop_header
                  %s401 = sphi 0, %s405
                  %p402 = scmp.ge.s32.totalorder %s401, 1
                  %s406 = sphi %s309, %s309
                  %s407 = sphi %s304, %s304
                $region102: #{bottleneck_forward.3} parent=91 // loop_header_branch
                  %404 = sbr.rel (%p402) target = $region106
                $region103: #{bottleneck_forward.3} parent=91 // loop_body
                  %v408 = vld [vmem:[%s406] sm:$0xf]
                  %409 = vst [vmem:[%s407] sm:$0xf] %v408
                  %v410 = vld [vmem:[%s406 + $0x8] sm:$0xf]
                  %411 = vst [vmem:[%s407 + $0x4] sm:$0xf] %v410
                  %v412 = vld [vmem:[%s406 + $0x10] sm:$0xf]
                  %413 = vst [vmem:[%s407 + $0x8] sm:$0xf] %v412
                  %v414 = vld [vmem:[%s406 + $0x18] sm:$0xf]
                  %415 = vst [vmem:[%s407 + $0xc] sm:$0xf] %v414
                  %v416 = vld [vmem:[%s406 + $0x20] sm:$0xf]
                  %417 = vst [vmem:[%s407 + $0x10] sm:$0xf] %v416
                  %v418 = vld [vmem:[%s406 + $0x28] sm:$0xf]
                  %419 = vst [vmem:[%s407 + $0x14] sm:$0xf] %v418
                  %v420 = vld [vmem:[%s406 + $0x30] sm:$0xf]
                  %421 = vst [vmem:[%s407 + $0x18] sm:$0xf] %v420
                  %v422 = vld [vmem:[%s406 + $0x38] sm:$0xf]
                  %423 = vst [vmem:[%s407 + $0x1c] sm:$0xf] %v422
                  %v424 = vld [vmem:[%s406 + $0x40] sm:$0xf]
                  %425 = vst [vmem:[%s407 + $0x20] sm:$0xf] %v424
                  %v426 = vld [vmem:[%s406 + $0x48] sm:$0xf]
                  %427 = vst [vmem:[%s407 + $0x24] sm:$0xf] %v426
                  %v428 = vld [vmem:[%s406 + $0x50] sm:$0xf]
                  %429 = vst [vmem:[%s407 + $0x28] sm:$0xf] %v428
                  %v430 = vld [vmem:[%s406 + $0x58] sm:$0xf]
                  %431 = vst [vmem:[%s407 + $0x2c] sm:$0xf] %v430
                  %v432 = vld [vmem:[%s406 + $0x60] sm:$0xf]
                  %433 = vst [vmem:[%s407 + $0x30] sm:$0xf] %v432
                  %v434 = vld [vmem:[%s406 + $0x68] sm:$0xf]
                  %435 = vst [vmem:[%s407 + $0x34] sm:$0xf] %v434
                  %v436 = vld [vmem:[%s406 + $0x70] sm:$0xf]
                  %437 = vst [vmem:[%s407 + $0x38] sm:$0xf] %v436
                  %v438 = vld [vmem:[%s406 + $0x78] sm:$0xf]
                  %439 = vst [vmem:[%s407 + $0x3c] sm:$0xf] %v438
                  %v440 = vld [vmem:[%s406 + $0x80] sm:$0xf]
                  %441 = vst [vmem:[%s407 + $0x40] sm:$0xf] %v440
                  %v442 = vld [vmem:[%s406 + $0x88] sm:$0xf]
                  %443 = vst [vmem:[%s407 + $0x44] sm:$0xf] %v442
                  %v444 = vld [vmem:[%s406 + $0x90] sm:$0xf]
                  %445 = vst [vmem:[%s407 + $0x48] sm:$0xf] %v444
                  %v446 = vld [vmem:[%s406 + $0x98] sm:$0xf]
                  %447 = vst [vmem:[%s407 + $0x4c] sm:$0xf] %v446
                  %v448 = vld [vmem:[%s406 + $0xa0] sm:$0xf]
                  %449 = vst [vmem:[%s407 + $0x50] sm:$0xf] %v448
                  %v450 = vld [vmem:[%s406 + $0xa8] sm:$0xf]
                  %451 = vst [vmem:[%s407 + $0x54] sm:$0xf] %v450
                  %v452 = vld [vmem:[%s406 + $0xb0] sm:$0xf]
                  %453 = vst [vmem:[%s407 + $0x58] sm:$0xf] %v452
                  %v454 = vld [vmem:[%s406 + $0xb8] sm:$0xf]
                  %455 = vst [vmem:[%s407 + $0x5c] sm:$0xf] %v454
                  %v456 = vld [vmem:[%s406 + $0xc0] sm:$0xf]
                  %457 = vst [vmem:[%s407 + $0x60] sm:$0xf] %v456
                  %v458 = vld [vmem:[%s406 + $0xc8] sm:$0xf]
                  %459 = vst [vmem:[%s407 + $0x64] sm:$0xf] %v458
                  %v460 = vld [vmem:[%s406 + $0xd0] sm:$0xf]
                  %461 = vst [vmem:[%s407 + $0x68] sm:$0xf] %v460
                  %v462 = vld [vmem:[%s406 + $0xd8] sm:$0xf]
                  %463 = vst [vmem:[%s407 + $0x6c] sm:$0xf] %v462
                  %v464 = vld [vmem:[%s406 + $0xe0] sm:$0xf]
                  %465 = vst [vmem:[%s407 + $0x70] sm:$0xf] %v464
                  %v466 = vld [vmem:[%s406 + $0xe8] sm:$0xf]
                  %467 = vst [vmem:[%s407 + $0x74] sm:$0xf] %v466
                  %v468 = vld [vmem:[%s406 + $0xf0] sm:$0xf]
                  %469 = vst [vmem:[%s407 + $0x78] sm:$0xf] %v468
                  %v470 = vld [vmem:[%s406 + $0xf8] sm:$0xf]
                  %471 = vst [vmem:[%s407 + $0x7c] sm:$0xf] %v470
                $region104: #{bottleneck_forward.3} parent=91 // loop_footer
                  %s405 = sadd.s32 1, %s401
                $region105: #{bottleneck_forward.3} parent=91 // loop_footer_branch
                  %400 = sbr.rel target = $region101
                $region106: #{bottleneck_forward.3} parent=91 // loop_exit
                  _
              $region92: #{bottleneck_forward.3} parent=76 // pred_fallthru
                _
            $region77: #{bottleneck_forward.3} parent=72 // pred_fallthru
              _
            // Predicated region
            $region78: #{bottleneck_forward.3} parent=72 // pred_check
              _
            $region79: #{bottleneck_forward.3} parent=72 // pred_check_branch
              %315 = sbr.rel (0) target = $region81
            $region80: #{bottleneck_forward.3} parent=72 // pred_region
              loop: start=0, step=1, limit=1
              $region82: #{bottleneck_forward.3} parent=80 // loop_pre_header
                _
              $region83: #{bottleneck_forward.3} parent=80 // loop_header
                %s318 = sphi 0, %s322
                %p319 = scmp.ge.s32.totalorder %s318, 1
                %s323 = sphi %s309, %s309
                %s324 = sphi %s304, %s304
              $region84: #{bottleneck_forward.3} parent=80 // loop_header_branch
                %321 = sbr.rel (%p319) target = $region88
              $region85: #{bottleneck_forward.3} parent=80 // loop_body
                %v325 = vld [vmem:[%s323] sm:$0xf]
                %326 = vst [vmem:[%s324] sm:$0xf] %v325
                %v327 = vld [vmem:[%s323 + $0x8] sm:$0xf]
                %328 = vst [vmem:[%s324 + $0x4] sm:$0xf] %v327
                %v329 = vld [vmem:[%s323 + $0x10] sm:$0xf]
                %330 = vst [vmem:[%s324 + $0x8] sm:$0xf] %v329
                %v331 = vld [vmem:[%s323 + $0x18] sm:$0xf]
                %332 = vst [vmem:[%s324 + $0xc] sm:$0xf] %v331
                %v333 = vld [vmem:[%s323 + $0x20] sm:$0xf]
                %334 = vst [vmem:[%s324 + $0x10] sm:$0xf] %v333
                %v335 = vld [vmem:[%s323 + $0x28] sm:$0xf]
                %336 = vst [vmem:[%s324 + $0x14] sm:$0xf] %v335
                %v337 = vld [vmem:[%s323 + $0x30] sm:$0xf]
                %338 = vst [vmem:[%s324 + $0x18] sm:$0xf] %v337
                %v339 = vld [vmem:[%s323 + $0x38] sm:$0xf]
                %340 = vst [vmem:[%s324 + $0x1c] sm:$0xf] %v339
                %v341 = vld [vmem:[%s323 + $0x40] sm:$0xf]
                %342 = vst [vmem:[%s324 + $0x20] sm:$0xf] %v341
                %v343 = vld [vmem:[%s323 + $0x48] sm:$0xf]
                %344 = vst [vmem:[%s324 + $0x24] sm:$0xf] %v343
                %v345 = vld [vmem:[%s323 + $0x50] sm:$0xf]
                %346 = vst [vmem:[%s324 + $0x28] sm:$0xf] %v345
                %v347 = vld [vmem:[%s323 + $0x58] sm:$0xf]
                %348 = vst [vmem:[%s324 + $0x2c] sm:$0xf] %v347
                %v349 = vld [vmem:[%s323 + $0x60] sm:$0xf]
                %350 = vst [vmem:[%s324 + $0x30] sm:$0xf] %v349
                %v351 = vld [vmem:[%s323 + $0x68] sm:$0xf]
                %352 = vst [vmem:[%s324 + $0x34] sm:$0xf] %v351
                %v353 = vld [vmem:[%s323 + $0x70] sm:$0xf]
                %354 = vst [vmem:[%s324 + $0x38] sm:$0xf] %v353
                %v355 = vld [vmem:[%s323 + $0x78] sm:$0xf]
                %356 = vst [vmem:[%s324 + $0x3c] sm:$0xf] %v355
                %v357 = vld [vmem:[%s323 + $0x80] sm:$0xf]
                %358 = vst [vmem:[%s324 + $0x40] sm:$0xf] %v357
                %v359 = vld [vmem:[%s323 + $0x88] sm:$0xf]
                %360 = vst [vmem:[%s324 + $0x44] sm:$0xf] %v359
                %v361 = vld [vmem:[%s323 + $0x90] sm:$0xf]
                %362 = vst [vmem:[%s324 + $0x48] sm:$0xf] %v361
                %v363 = vld [vmem:[%s323 + $0x98] sm:$0xf]
                %364 = vst [vmem:[%s324 + $0x4c] sm:$0xf] %v363
                %v365 = vld [vmem:[%s323 + $0xa0] sm:$0xf]
                %366 = vst [vmem:[%s324 + $0x50] sm:$0xf] %v365
                %v367 = vld [vmem:[%s323 + $0xa8] sm:$0xf]
                %368 = vst [vmem:[%s324 + $0x54] sm:$0xf] %v367
                %v369 = vld [vmem:[%s323 + $0xb0] sm:$0xf]
                %370 = vst [vmem:[%s324 + $0x58] sm:$0xf] %v369
                %v371 = vld [vmem:[%s323 + $0xb8] sm:$0xf]
                %372 = vst [vmem:[%s324 + $0x5c] sm:$0xf] %v371
                %v373 = vld [vmem:[%s323 + $0xc0] sm:$0xf]
                %374 = vst [vmem:[%s324 + $0x60] sm:$0xf] %v373
                %v375 = vld [vmem:[%s323 + $0xc8] sm:$0xf]
                %376 = vst [vmem:[%s324 + $0x64] sm:$0xf] %v375
                %v377 = vld [vmem:[%s323 + $0xd0] sm:$0xf]
                %378 = vst [vmem:[%s324 + $0x68] sm:$0xf] %v377
                %v379 = vld [vmem:[%s323 + $0xd8] sm:$0xf]
                %380 = vst [vmem:[%s324 + $0x6c] sm:$0xf] %v379
                %v381 = vld [vmem:[%s323 + $0xe0] sm:$0xf]
                %382 = vst [vmem:[%s324 + $0x70] sm:$0xf] %v381
                %v383 = vld [vmem:[%s323 + $0xe8] sm:$0xf]
                %384 = vst [vmem:[%s324 + $0x74] sm:$0xf] %v383
                %v385 = vld [vmem:[%s323 + $0xf0] sm:$0xf]
                %386 = vst [vmem:[%s324 + $0x78] sm:$0xf] %v385
                %v387 = vld [vmem:[%s323 + $0xf8] sm:$0xf]
                %388 = vst [vmem:[%s324 + $0x7c] sm:$0xf] %v387
              $region86: #{bottleneck_forward.3} parent=80 // loop_footer
                %s322 = sadd.s32 1, %s318
              $region87: #{bottleneck_forward.3} parent=80 // loop_footer_branch
                %317 = sbr.rel target = $region83
              $region88: #{bottleneck_forward.3} parent=80 // loop_exit
                _
            $region81: #{bottleneck_forward.3} parent=72 // pred_fallthru
              _
          $region73: #{bottleneck_forward.3} parent=68 // pred_fallthru
            _
          %472 = vnop
        $region69: #{bottleneck_forward.3} parent=15 // pred_fallthru
          _
      $region16: #{bottleneck_forward.3} parent=5 // pred_fallthru
        _
      %p473 = scmp.le.s32.totalorder 1, %s10
      %p474 = scmp.lt.s32.totalorder %s10, 5
      %p475 = pnand %p473, %p474
      %p476 = pneg %p475
      // Predicated region
      $region107: #{bottleneck_forward.3} parent=5 // pred_check
        _
      $region108: #{bottleneck_forward.3} parent=5 // pred_check_branch
        %478 = sbr.rel (%p475) target = $region110
      $region109: #{bottleneck_forward.3} parent=5 // pred_region
        %s479 = ssub.s32 %s10, 1
        %s480 = sand.u32 %s61, 1
        %s481 = sand.u32 %s61, 1
        %s482 = smul.addr %s481, 64
        %s483 = scalar_lea.vmem [#allocation2], %s482
        // Predicated region
        $region111: #{bottleneck_forward.3} parent=109 // pred_check
          %p484 = pneg %p74
        $region112: #{bottleneck_forward.3} parent=109 // pred_check_branch
          %486 = sbr.rel (%p484) target = $region114
        $region113: #{bottleneck_forward.3} parent=109 // pred_region
          _
        $region114: #{bottleneck_forward.3} parent=109 // pred_fallthru
          _
        %s487 = sand.u32 %s115, 1
        %s488 = sand.u32 %s115, 1
        %s489 = smul.addr %s488, 128
        %s490 = scalar_lea.vmem [#allocation3], %s489
        // Predicated region
        $region115: #{bottleneck_forward.3} parent=109 // pred_check
          %p491 = pneg %p128
        $region116: #{bottleneck_forward.3} parent=109 // pred_check_branch
          %493 = sbr.rel (%p491) target = $region118
        $region117: #{bottleneck_forward.3} parent=109 // pred_region
          _
        $region118: #{bottleneck_forward.3} parent=109 // pred_fallthru
          _
        %s494 = smul.u32 32, %s19
        %p495 = scmp.lt.s32.totalorder %s494, 63
        %s496 = scalar_select %p495, %s494, 63
        %s497 = smul.addr %s496, 4
        %s498 = scalar_lea.vmem %s0, %s497
        %p499 = pneg %p48
        %p500 = pneg %p45
        %s501 = sand.u32 %s61, 1
        %s502 = sand.u32 %s61, 1
        %s503 = smul.addr %s502, 64
        %s504 = scalar_lea.vmem [#allocation2], %s503
        %p505 = pneg %p74
        %p506 = pneg %p71
        %p507 = scmp.lt.s32.totalorder %s20, 1
        %s508 = scalar_select %p507, %s20, 1
        %s509 = scalar_lea.vmem %s2, %s508
        %p510 = pneg %p100
        %p511 = pneg %p97
        %s512 = sand.u32 %s115, 1
        %s513 = sand.u32 %s115, 1
        %s514 = smul.addr %s513, 128
        %s515 = scalar_lea.vmem [#allocation3], %s514
        %p516 = pneg %p128
        %p517 = pneg %p125
        %p518 = pneg %p156
        %p519 = pneg %p153
        %s520 = sand.u32 %s143, 1
        %s521 = sand.u32 %s143, 1
        %s522 = smul.addr %s521, 128
        %s523 = scalar_lea.vmem [#allocation4], %s522
        %s524 = smul.u32 32, %s19
        %p525 = scmp.lt.s32.totalorder %s524, 63
        %s526 = scalar_select %p525, %s524, 63
        %s527 = smul.addr %s526, 4
        %s528 = scalar_lea.vmem %s0, %s527
        %s529 = smul.u32 32, %s19
        %p530 = scmp.lt.s32.totalorder %s20, 1
        %s531 = scalar_select %p530, %s20, 1
        %s532 = scalar_lea.vmem %s2, %s531
        %s533 = smul.u32 32, %s19
        %s534 = smul.u32 32, %s19
        %v536 = vld [vmem:[%s528] sm:$0xf]
        %v537 = vld [vmem:[%s528 + $0x4] sm:$0xf]
        %v538 = vld [vmem:[%s528 + $0x8] sm:$0xf]
        %v539 = vld [vmem:[%s528 + $0xc] sm:$0xf]
        %v540 = vld [vmem:[%s528 + $0x10] sm:$0xf]
        %v541 = vld [vmem:[%s528 + $0x14] sm:$0xf]
        %v542 = vld [vmem:[%s528 + $0x18] sm:$0xf]
        %v543 = vld [vmem:[%s528 + $0x1c] sm:$0xf]
        %v544 = vld [vmem:[%s528 + $0x20] sm:$0xf]
        %v545 = vld [vmem:[%s528 + $0x24] sm:$0xf]
        %v546 = vld [vmem:[%s528 + $0x28] sm:$0xf]
        %v547 = vld [vmem:[%s528 + $0x2c] sm:$0xf]
        %v548 = vld [vmem:[%s528 + $0x30] sm:$0xf]
        %v549 = vld [vmem:[%s528 + $0x34] sm:$0xf]
        %v550 = vld [vmem:[%s528 + $0x38] sm:$0xf]
        %v551 = vld [vmem:[%s528 + $0x3c] sm:$0xf]
        %v552 = vld [vmem:[%s528 + $0x40] sm:$0xf]
        %v553 = vld [vmem:[%s528 + $0x44] sm:$0xf]
        %v554 = vld [vmem:[%s528 + $0x48] sm:$0xf]
        %v555 = vld [vmem:[%s528 + $0x4c] sm:$0xf]
        %v556 = vld [vmem:[%s528 + $0x50] sm:$0xf]
        %v557 = vld [vmem:[%s528 + $0x54] sm:$0xf]
        %v558 = vld [vmem:[%s528 + $0x58] sm:$0xf]
        %v559 = vld [vmem:[%s528 + $0x5c] sm:$0xf]
        %v560 = vld [vmem:[%s528 + $0x60] sm:$0xf]
        %v561 = vld [vmem:[%s528 + $0x64] sm:$0xf]
        %v562 = vld [vmem:[%s528 + $0x68] sm:$0xf]
        %v563 = vld [vmem:[%s528 + $0x6c] sm:$0xf]
        %v564 = vld [vmem:[%s528 + $0x70] sm:$0xf]
        %v565 = vld [vmem:[%s528 + $0x74] sm:$0xf]
        %v566 = vld [vmem:[%s528 + $0x78] sm:$0xf]
        %v567 = vld [vmem:[%s528 + $0x7c] sm:$0xf]
        %v568 = vld [vmem:[%s483] sm:$0xf]
        %v569 = vld [vmem:[%s483 + $0x4] sm:$0xf]
        %v570 = vld [vmem:[%s483 + $0x8] sm:$0xf]
        %v571 = vld [vmem:[%s483 + $0xc] sm:$0xf]
        %v572 = vld [vmem:[%s483 + $0x10] sm:$0xf]
        %v573 = vld [vmem:[%s483 + $0x14] sm:$0xf]
        %v574 = vld [vmem:[%s483 + $0x18] sm:$0xf]
        %v575 = vld [vmem:[%s483 + $0x1c] sm:$0xf]
        %v576 = vld [vmem:[%s483 + $0x20] sm:$0xf]
        %v577 = vld [vmem:[%s483 + $0x24] sm:$0xf]
        %v578 = vld [vmem:[%s483 + $0x28] sm:$0xf]
        %v579 = vld [vmem:[%s483 + $0x2c] sm:$0xf]
        %v580 = vld [vmem:[%s483 + $0x30] sm:$0xf]
        %v581 = vld [vmem:[%s483 + $0x34] sm:$0xf]
        %v582 = vld [vmem:[%s483 + $0x38] sm:$0xf]
        %v583 = vld [vmem:[%s483 + $0x3c] sm:$0xf]
        %v584 = vld [vmem:[%s532] sm:$0x1]
        %v586 = vlaneseq
        %v587 = vshrl.u32 %v586, 7
        %v588 = vsub.s32 0, %v587
        %v589 = vrot.slane %v584, %v588
        %v623 = vunpack.c.l.b16 %v536
        %v624 = vunpack.c.l.b16 %v537
        %v625 = vunpack.c.l.b16 %v538
        %v626 = vunpack.c.l.b16 %v539
        %v627 = vunpack.c.l.b16 %v540
        %v628 = vunpack.c.l.b16 %v541
        %v629 = vunpack.c.l.b16 %v542
        %v630 = vunpack.c.l.b16 %v543
        %v631 = vunpack.c.l.b16 %v544
        %v632 = vunpack.c.l.b16 %v545
        %v633 = vunpack.c.l.b16 %v546
        %v634 = vunpack.c.l.b16 %v547
        %v635 = vunpack.c.l.b16 %v548
        %v636 = vunpack.c.l.b16 %v549
        %v637 = vunpack.c.l.b16 %v550
        %v638 = vunpack.c.l.b16 %v551
        %v639 = vunpack.c.l.b16 %v552
        %v640 = vunpack.c.l.b16 %v553
        %v641 = vunpack.c.l.b16 %v554
        %v642 = vunpack.c.l.b16 %v555
        %v643 = vunpack.c.l.b16 %v556
        %v644 = vunpack.c.l.b16 %v557
        %v645 = vunpack.c.l.b16 %v558
        %v646 = vunpack.c.l.b16 %v559
        %v647 = vunpack.c.l.b16 %v560
        %v648 = vunpack.c.l.b16 %v561
        %v649 = vunpack.c.l.b16 %v562
        %v650 = vunpack.c.l.b16 %v563
        %v651 = vunpack.c.l.b16 %v564
        %v652 = vunpack.c.l.b16 %v565
        %v653 = vunpack.c.l.b16 %v566
        %v654 = vunpack.c.l.b16 %v567
        %v655 = vpack.c.b16 %v624, %v623
        %v656 = vpack.c.b16 %v626, %v625
        %v657 = vpack.c.b16 %v628, %v627
        %v658 = vpack.c.b16 %v630, %v629
        %v659 = vpack.c.b16 %v632, %v631
        %v660 = vpack.c.b16 %v634, %v633
        %v661 = vpack.c.b16 %v636, %v635
        %v662 = vpack.c.b16 %v638, %v637
        %v663 = vpack.c.b16 %v640, %v639
        %v664 = vpack.c.b16 %v642, %v641
        %v665 = vpack.c.b16 %v644, %v643
        %v666 = vpack.c.b16 %v646, %v645
        %v667 = vpack.c.b16 %v648, %v647
        %v668 = vpack.c.b16 %v650, %v649
        %v669 = vpack.c.b16 %v652, %v651
        %v670 = vpack.c.b16 %v654, %v653
        %v703 = vunpack.c.l.b16 %v568
        %v704 = vunpack.c.l.b16 %v569
        %v705 = vunpack.c.l.b16 %v570
        %v706 = vunpack.c.l.b16 %v571
        %v707 = vunpack.c.l.b16 %v572
        %v708 = vunpack.c.l.b16 %v573
        %v709 = vunpack.c.l.b16 %v574
        %v710 = vunpack.c.l.b16 %v575
        %v711 = vunpack.c.l.b16 %v576
        %v712 = vunpack.c.l.b16 %v577
        %v713 = vunpack.c.l.b16 %v578
        %v714 = vunpack.c.l.b16 %v579
        %v715 = vunpack.c.l.b16 %v580
        %v716 = vunpack.c.l.b16 %v581
        %v717 = vunpack.c.l.b16 %v582
        %v718 = vunpack.c.l.b16 %v583
        %v719 = vpack.c.b16 %v704, %v703
        %v720 = vpack.c.b16 %v706, %v705
        %v721 = vpack.c.b16 %v708, %v707
        %v722 = vpack.c.b16 %v710, %v709
        %v723 = vpack.c.b16 %v712, %v711
        %v724 = vpack.c.b16 %v714, %v713
        %v725 = vpack.c.b16 %v716, %v715
        %v726 = vpack.c.b16 %v718, %v717
        %735 = vmatprep.subr.bf16.mxu0 0
        %736 = vmatpush1.bf16.msra.mxu0 %v719
        %737 = vmatprep.subr.bf16.mxu0 0
        %738 = vmatpush1.bf16.msra.mxu0 %v720
        %739 = vmatprep.subr.bf16.mxu0 0
        %740 = vmatpush1.bf16.msra.mxu0 %v721
        %741 = vmatprep.subr.bf16.mxu0 0
        %742 = vmatpush1.bf16.msra.mxu0 %v722
        %743 = vmatprep.subr.bf16.mxu0 0
        %744 = vmatpush1.bf16.msra.mxu0 %v723
        %745 = vmatprep.subr.bf16.mxu0 0
        %746 = vmatpush1.bf16.msra.mxu0 %v724
        %747 = vmatprep.subr.bf16.mxu0 0
        %748 = vmatpush1.bf16.msra.mxu0 %v725
        %749 = vmatprep.subr.bf16.mxu0 0
        %750 = vmatpush1.bf16.msra.mxu0 %v726
        %751 = vmatprep.subr.bf16.mxu0 0
        %752 = vmatpush1.bf16.msra.mxu0 0
        %753 = vmatprep.subr.bf16.mxu0 0
        %754 = vmatpush1.bf16.msra.mxu0 0
        %755 = vmatprep.subr.bf16.mxu0 0
        %756 = vmatpush1.bf16.msra.mxu0 0
        %757 = vmatprep.subr.bf16.mxu0 0
        %758 = vmatpush1.bf16.msra.mxu0 0
        %759 = vmatprep.subr.bf16.mxu0 0
        %760 = vmatpush1.bf16.msra.mxu0 0
        %761 = vmatprep.subr.bf16.mxu0 0
        %762 = vmatpush1.bf16.msra.mxu0 0
        %763 = vmatprep.subr.bf16.mxu0 0
        %764 = vmatpush1.bf16.msra.mxu0 0
        %765 = vmatprep.subr.bf16.mxu0 0
        %766 = vmatpush1.bf16.msra.mxu0 0
        %767 = vmatprep.mubr.bf16.mxu0 0
        %768 = vmatmul.mubr.bf16.gmra.mrb[0].mxu0 %v655
        %v769 = vpop.f32.mrb[0].mxu0
        %v770 = vadd.f32 %v589, %v769
        %v771 = vpop.f32.mrb[0].mxu0
        %v772 = vpop.f32.mrb[0].mxu0
        %v773 = vadd.f32 %v589, %v772
        %v774 = vpop.f32.mrb[0].mxu0
        %775 = vmatprep.mubr.bf16.mxu0 0
        %776 = vmatmul.mubr.bf16.gmra.mrb[0].mxu0 %v656
        %v777 = vpop.f32.mrb[0].mxu0
        %v778 = vadd.f32 %v589, %v777
        %v779 = vpop.f32.mrb[0].mxu0
        %v780 = vpop.f32.mrb[0].mxu0
        %v781 = vadd.f32 %v589, %v780
        %v782 = vpop.f32.mrb[0].mxu0
        %783 = vmatprep.mubr.bf16.mxu0 0
        %784 = vmatmul.mubr.bf16.gmra.mrb[0].mxu0 %v657
        %v785 = vpop.f32.mrb[0].mxu0
        %v786 = vadd.f32 %v589, %v785
        %v787 = vpop.f32.mrb[0].mxu0
        %v788 = vpop.f32.mrb[0].mxu0
        %v789 = vadd.f32 %v589, %v788
        %v790 = vpop.f32.mrb[0].mxu0
        %791 = vmatprep.mubr.bf16.mxu0 0
        %792 = vmatmul.mubr.bf16.gmra.mrb[0].mxu0 %v658
        %v793 = vpop.f32.mrb[0].mxu0
        %v794 = vadd.f32 %v589, %v793
        %v795 = vpop.f32.mrb[0].mxu0
        %v796 = vpop.f32.mrb[0].mxu0
        %v797 = vadd.f32 %v589, %v796
        %v798 = vpop.f32.mrb[0].mxu0
        %799 = vmatprep.mubr.bf16.mxu0 0
        %800 = vmatmul.mubr.bf16.gmra.mrb[0].mxu0 %v659
        %v801 = vpop.f32.mrb[0].mxu0
        %v802 = vadd.f32 %v589, %v801
        %v803 = vpop.f32.mrb[0].mxu0
        %v804 = vpop.f32.mrb[0].mxu0
        %v805 = vadd.f32 %v589, %v804
        %v806 = vpop.f32.mrb[0].mxu0
        %807 = vmatprep.mubr.bf16.mxu0 0
        %808 = vmatmul.mubr.bf16.gmra.mrb[0].mxu0 %v660
        %v809 = vpop.f32.mrb[0].mxu0
        %v810 = vadd.f32 %v589, %v809
        %v811 = vpop.f32.mrb[0].mxu0
        %v812 = vpop.f32.mrb[0].mxu0
        %v813 = vadd.f32 %v589, %v812
        %v814 = vpop.f32.mrb[0].mxu0
        %815 = vmatprep.mubr.bf16.mxu0 0
        %816 = vmatmul.mubr.bf16.gmra.mrb[0].mxu0 %v661
        %v817 = vpop.f32.mrb[0].mxu0
        %v818 = vadd.f32 %v589, %v817
        %v819 = vpop.f32.mrb[0].mxu0
        %v820 = vpop.f32.mrb[0].mxu0
        %v821 = vadd.f32 %v589, %v820
        %v822 = vpop.f32.mrb[0].mxu0
        %823 = vmatprep.mubr.bf16.mxu0 0
        %824 = vmatmul.mubr.bf16.gmra.mrb[0].mxu0 %v662
        %v825 = vpop.f32.mrb[0].mxu0
        %v826 = vadd.f32 %v589, %v825
        %v827 = vpop.f32.mrb[0].mxu0
        %v828 = vpop.f32.mrb[0].mxu0
        %v829 = vadd.f32 %v589, %v828
        %v830 = vpop.f32.mrb[0].mxu0
        %831 = vmatprep.mubr.bf16.mxu0 0
        %832 = vmatmul.mubr.bf16.gmra.mrb[0].mxu0 %v663
        %v833 = vpop.f32.mrb[0].mxu0
        %v834 = vadd.f32 %v589, %v833
        %v835 = vpop.f32.mrb[0].mxu0
        %v836 = vpop.f32.mrb[0].mxu0
        %v837 = vadd.f32 %v589, %v836
        %v838 = vpop.f32.mrb[0].mxu0
        %839 = vmatprep.mubr.bf16.mxu0 0
        %840 = vmatmul.mubr.bf16.gmra.mrb[0].mxu0 %v664
        %v841 = vpop.f32.mrb[0].mxu0
        %v842 = vadd.f32 %v589, %v841
        %v843 = vpop.f32.mrb[0].mxu0
        %v844 = vpop.f32.mrb[0].mxu0
        %v845 = vadd.f32 %v589, %v844
        %v846 = vpop.f32.mrb[0].mxu0
        %847 = vmatprep.mubr.bf16.mxu0 0
        %848 = vmatmul.mubr.bf16.gmra.mrb[0].mxu0 %v665
        %v849 = vpop.f32.mrb[0].mxu0
        %v850 = vadd.f32 %v589, %v849
        %v851 = vpop.f32.mrb[0].mxu0
        %v852 = vpop.f32.mrb[0].mxu0
        %v853 = vadd.f32 %v589, %v852
        %v854 = vpop.f32.mrb[0].mxu0
        %855 = vmatprep.mubr.bf16.mxu0 0
        %856 = vmatmul.mubr.bf16.gmra.mrb[0].mxu0 %v666
        %v857 = vpop.f32.mrb[0].mxu0
        %v858 = vadd.f32 %v589, %v857
        %v859 = vpop.f32.mrb[0].mxu0
        %v860 = vpop.f32.mrb[0].mxu0
        %v861 = vadd.f32 %v589, %v860
        %v862 = vpop.f32.mrb[0].mxu0
        %863 = vmatprep.mubr.bf16.mxu0 0
        %864 = vmatmul.mubr.bf16.gmra.mrb[0].mxu0 %v667
        %v865 = vpop.f32.mrb[0].mxu0
        %v866 = vadd.f32 %v589, %v865
        %v867 = vpop.f32.mrb[0].mxu0
        %v868 = vpop.f32.mrb[0].mxu0
        %v869 = vadd.f32 %v589, %v868
        %v870 = vpop.f32.mrb[0].mxu0
        %871 = vmatprep.mubr.bf16.mxu0 0
        %872 = vmatmul.mubr.bf16.gmra.mrb[0].mxu0 %v668
        %v873 = vpop.f32.mrb[0].mxu0
        %v874 = vadd.f32 %v589, %v873
        %v875 = vpop.f32.mrb[0].mxu0
        %v876 = vpop.f32.mrb[0].mxu0
        %v877 = vadd.f32 %v589, %v876
        %v878 = vpop.f32.mrb[0].mxu0
        %879 = vmatprep.mubr.bf16.mxu0 0
        %880 = vmatmul.mubr.bf16.gmra.mrb[0].mxu0 %v669
        %v881 = vpop.f32.mrb[0].mxu0
        %v882 = vadd.f32 %v589, %v881
        %v883 = vpop.f32.mrb[0].mxu0
        %v884 = vpop.f32.mrb[0].mxu0
        %v885 = vadd.f32 %v589, %v884
        %v886 = vpop.f32.mrb[0].mxu0
        %887 = vmatprep.mubr.bf16.mxu0 0
        %888 = vmatmul.mubr.bf16.gmra.mrb[0].mxu0 %v670
        %v889 = vpop.f32.mrb[0].mxu0
        %v890 = vadd.f32 %v589, %v889
        %v891 = vpop.f32.mrb[0].mxu0
        %v892 = vpop.f32.mrb[0].mxu0
        %v893 = vadd.f32 %v589, %v892
        %v894 = vpop.f32.mrb[0].mxu0
        %895 = vdwg.mxu0
        %v896 = vld [vmem:[%s490] sm:$0xf]
        %v897 = vld [vmem:[%s490 + $0x4] sm:$0xf]
        %v898 = vld [vmem:[%s490 + $0x8] sm:$0xf]
        %v899 = vld [vmem:[%s490 + $0xc] sm:$0xf]
        %v900 = vld [vmem:[%s490 + $0x10] sm:$0xf]
        %v901 = vld [vmem:[%s490 + $0x14] sm:$0xf]
        %v902 = vld [vmem:[%s490 + $0x18] sm:$0xf]
        %v903 = vld [vmem:[%s490 + $0x1c] sm:$0xf]
        %v904 = vld [vmem:[%s490 + $0x20] sm:$0xf]
        %v905 = vld [vmem:[%s490 + $0x24] sm:$0xf]
        %v906 = vld [vmem:[%s490 + $0x28] sm:$0xf]
        %v907 = vld [vmem:[%s490 + $0x2c] sm:$0xf]
        %v908 = vld [vmem:[%s490 + $0x30] sm:$0xf]
        %v909 = vld [vmem:[%s490 + $0x34] sm:$0xf]
        %v910 = vld [vmem:[%s490 + $0x38] sm:$0xf]
        %v911 = vld [vmem:[%s490 + $0x3c] sm:$0xf]
        %v912 = vld [vmem:[%s490 + $0x40] sm:$0xf]
        %v913 = vld [vmem:[%s490 + $0x44] sm:$0xf]
        %v914 = vld [vmem:[%s490 + $0x48] sm:$0xf]
        %v915 = vld [vmem:[%s490 + $0x4c] sm:$0xf]
        %v916 = vld [vmem:[%s490 + $0x50] sm:$0xf]
        %v917 = vld [vmem:[%s490 + $0x54] sm:$0xf]
        %v918 = vld [vmem:[%s490 + $0x58] sm:$0xf]
        %v919 = vld [vmem:[%s490 + $0x5c] sm:$0xf]
        %v920 = vld [vmem:[%s490 + $0x60] sm:$0xf]
        %v921 = vld [vmem:[%s490 + $0x64] sm:$0xf]
        %v922 = vld [vmem:[%s490 + $0x68] sm:$0xf]
        %v923 = vld [vmem:[%s490 + $0x6c] sm:$0xf]
        %v924 = vld [vmem:[%s490 + $0x70] sm:$0xf]
        %v925 = vld [vmem:[%s490 + $0x74] sm:$0xf]
        %v926 = vld [vmem:[%s490 + $0x78] sm:$0xf]
        %v927 = vld [vmem:[%s490 + $0x7c] sm:$0xf]
        %v928 = vunpack.c.l.bf16 %v896
        %v929 = vunpack.c.l.bf16 %v897
        %v930 = vunpack.c.l.bf16 %v898
        %v931 = vunpack.c.l.bf16 %v899
        %v932 = vunpack.c.l.bf16 %v900
        %v933 = vunpack.c.l.bf16 %v901
        %v934 = vunpack.c.l.bf16 %v902
        %v935 = vunpack.c.l.bf16 %v903
        %v936 = vunpack.c.l.bf16 %v904
        %v937 = vunpack.c.l.bf16 %v905
        %v938 = vunpack.c.l.bf16 %v906
        %v939 = vunpack.c.l.bf16 %v907
        %v940 = vunpack.c.l.bf16 %v908
        %v941 = vunpack.c.l.bf16 %v909
        %v942 = vunpack.c.l.bf16 %v910
        %v943 = vunpack.c.l.bf16 %v911
        %v944 = vunpack.c.l.bf16 %v912
        %v945 = vunpack.c.l.bf16 %v913
        %v946 = vunpack.c.l.bf16 %v914
        %v947 = vunpack.c.l.bf16 %v915
        %v948 = vunpack.c.l.bf16 %v916
        %v949 = vunpack.c.l.bf16 %v917
        %v950 = vunpack.c.l.bf16 %v918
        %v951 = vunpack.c.l.bf16 %v919
        %v952 = vunpack.c.l.bf16 %v920
        %v953 = vunpack.c.l.bf16 %v921
        %v954 = vunpack.c.l.bf16 %v922
        %v955 = vunpack.c.l.bf16 %v923
        %v956 = vunpack.c.l.bf16 %v924
        %v957 = vunpack.c.l.bf16 %v925
        %v958 = vunpack.c.l.bf16 %v926
        %v959 = vunpack.c.l.bf16 %v927
        %v960 = vadd.f32 %v770, %v928
        %v961 = vadd.f32 %v773, %v929
        %v962 = vadd.f32 %v778, %v930
        %v963 = vadd.f32 %v781, %v931
        %v964 = vadd.f32 %v786, %v932
        %v965 = vadd.f32 %v789, %v933
        %v966 = vadd.f32 %v794, %v934
        %v967 = vadd.f32 %v797, %v935
        %v968 = vadd.f32 %v802, %v936
        %v969 = vadd.f32 %v805, %v937
        %v970 = vadd.f32 %v810, %v938
        %v971 = vadd.f32 %v813, %v939
        %v972 = vadd.f32 %v818, %v940
        %v973 = vadd.f32 %v821, %v941
        %v974 = vadd.f32 %v826, %v942
        %v975 = vadd.f32 %v829, %v943
        %v976 = vadd.f32 %v834, %v944
        %v977 = vadd.f32 %v837, %v945
        %v978 = vadd.f32 %v842, %v946
        %v979 = vadd.f32 %v845, %v947
        %v980 = vadd.f32 %v850, %v948
        %v981 = vadd.f32 %v853, %v949
        %v982 = vadd.f32 %v858, %v950
        %v983 = vadd.f32 %v861, %v951
        %v984 = vadd.f32 %v866, %v952
        %v985 = vadd.f32 %v869, %v953
        %v986 = vadd.f32 %v874, %v954
        %v987 = vadd.f32 %v877, %v955
        %v988 = vadd.f32 %v882, %v956
        %v989 = vadd.f32 %v885, %v957
        %v990 = vadd.f32 %v890, %v958
        %v991 = vadd.f32 %v893, %v959
        %v992 = vmax.f32 %v960, 0.0
        %v993 = vmax.f32 %v961, 0.0
        %v994 = vmax.f32 %v962, 0.0
        %v995 = vmax.f32 %v963, 0.0
        %v996 = vmax.f32 %v964, 0.0
        %v997 = vmax.f32 %v965, 0.0
        %v998 = vmax.f32 %v966, 0.0
        %v999 = vmax.f32 %v967, 0.0
        %v1000 = vmax.f32 %v968, 0.0
        %v1001 = vmax.f32 %v969, 0.0
        %v1002 = vmax.f32 %v970, 0.0
        %v1003 = vmax.f32 %v971, 0.0
        %v1004 = vmax.f32 %v972, 0.0
        %v1005 = vmax.f32 %v973, 0.0
        %v1006 = vmax.f32 %v974, 0.0
        %v1007 = vmax.f32 %v975, 0.0
        %v1008 = vmax.f32 %v976, 0.0
        %v1009 = vmax.f32 %v977, 0.0
        %v1010 = vmax.f32 %v978, 0.0
        %v1011 = vmax.f32 %v979, 0.0
        %v1012 = vmax.f32 %v980, 0.0
        %v1013 = vmax.f32 %v981, 0.0
        %v1014 = vmax.f32 %v982, 0.0
        %v1015 = vmax.f32 %v983, 0.0
        %v1016 = vmax.f32 %v984, 0.0
        %v1017 = vmax.f32 %v985, 0.0
        %v1018 = vmax.f32 %v986, 0.0
        %v1019 = vmax.f32 %v987, 0.0
        %v1020 = vmax.f32 %v988, 0.0
        %v1021 = vmax.f32 %v989, 0.0
        %v1022 = vmax.f32 %v990, 0.0
        %v1023 = vmax.f32 %v991, 0.0
        %v1024 = vpack.c.bf16 %v993, %v992
        %v1025 = vpack.c.bf16 %v995, %v994
        %v1026 = vpack.c.bf16 %v997, %v996
        %v1027 = vpack.c.bf16 %v999, %v998
        %v1028 = vpack.c.bf16 %v1001, %v1000
        %v1029 = vpack.c.bf16 %v1003, %v1002
        %v1030 = vpack.c.bf16 %v1005, %v1004
        %v1031 = vpack.c.bf16 %v1007, %v1006
        %v1032 = vpack.c.bf16 %v1009, %v1008
        %v1033 = vpack.c.bf16 %v1011, %v1010
        %v1034 = vpack.c.bf16 %v1013, %v1012
        %v1035 = vpack.c.bf16 %v1015, %v1014
        %v1036 = vpack.c.bf16 %v1017, %v1016
        %v1037 = vpack.c.bf16 %v1019, %v1018
        %v1038 = vpack.c.bf16 %v1021, %v1020
        %v1039 = vpack.c.bf16 %v1023, %v1022
        %v1056 = vunpack.c.l.b16 %v1024
        %v1057 = vunpack.c.h.b16 %v1024
        %v1058 = vunpack.c.l.b16 %v1025
        %v1059 = vunpack.c.h.b16 %v1025
        %v1060 = vunpack.c.l.b16 %v1026
        %v1061 = vunpack.c.h.b16 %v1026
        %v1062 = vunpack.c.l.b16 %v1027
        %v1063 = vunpack.c.h.b16 %v1027
        %v1064 = vunpack.c.l.b16 %v1028
        %v1065 = vunpack.c.h.b16 %v1028
        %v1066 = vunpack.c.l.b16 %v1029
        %v1067 = vunpack.c.h.b16 %v1029
        %v1068 = vunpack.c.l.b16 %v1030
        %v1069 = vunpack.c.h.b16 %v1030
        %v1070 = vunpack.c.l.b16 %v1031
        %v1071 = vunpack.c.h.b16 %v1031
        %v1072 = vunpack.c.l.b16 %v1032
        %v1073 = vunpack.c.h.b16 %v1032
        %v1074 = vunpack.c.l.b16 %v1033
        %v1075 = vunpack.c.h.b16 %v1033
        %v1076 = vunpack.c.l.b16 %v1034
        %v1077 = vunpack.c.h.b16 %v1034
        %v1078 = vunpack.c.l.b16 %v1035
        %v1079 = vunpack.c.h.b16 %v1035
        %v1080 = vunpack.c.l.b16 %v1036
        %v1081 = vunpack.c.h.b16 %v1036
        %v1082 = vunpack.c.l.b16 %v1037
        %v1083 = vunpack.c.h.b16 %v1037
        %v1084 = vunpack.c.l.b16 %v1038
        %v1085 = vunpack.c.h.b16 %v1038
        %v1086 = vunpack.c.l.b16 %v1039
        %v1087 = vunpack.c.h.b16 %v1039
        %v1088 = vpack.c.b16 %v1056, %v1056
        %v1089 = vpack.c.b16 %v1057, %v1057
        %v1090 = vpack.c.b16 %v1058, %v1058
        %v1091 = vpack.c.b16 %v1059, %v1059
        %v1092 = vpack.c.b16 %v1060, %v1060
        %v1093 = vpack.c.b16 %v1061, %v1061
        %v1094 = vpack.c.b16 %v1062, %v1062
        %v1095 = vpack.c.b16 %v1063, %v1063
        %v1096 = vpack.c.b16 %v1064, %v1064
        %v1097 = vpack.c.b16 %v1065, %v1065
        %v1098 = vpack.c.b16 %v1066, %v1066
        %v1099 = vpack.c.b16 %v1067, %v1067
        %v1100 = vpack.c.b16 %v1068, %v1068
        %v1101 = vpack.c.b16 %v1069, %v1069
        %v1102 = vpack.c.b16 %v1070, %v1070
        %v1103 = vpack.c.b16 %v1071, %v1071
        %v1104 = vpack.c.b16 %v1072, %v1072
        %v1105 = vpack.c.b16 %v1073, %v1073
        %v1106 = vpack.c.b16 %v1074, %v1074
        %v1107 = vpack.c.b16 %v1075, %v1075
        %v1108 = vpack.c.b16 %v1076, %v1076
        %v1109 = vpack.c.b16 %v1077, %v1077
        %v1110 = vpack.c.b16 %v1078, %v1078
        %v1111 = vpack.c.b16 %v1079, %v1079
        %v1112 = vpack.c.b16 %v1080, %v1080
        %v1113 = vpack.c.b16 %v1081, %v1081
        %v1114 = vpack.c.b16 %v1082, %v1082
        %v1115 = vpack.c.b16 %v1083, %v1083
        %v1116 = vpack.c.b16 %v1084, %v1084
        %v1117 = vpack.c.b16 %v1085, %v1085
        %v1118 = vpack.c.b16 %v1086, %v1086
        %v1119 = vpack.c.b16 %v1087, %v1087
        %1152 = vst [vmem:[%s523] sm:$0xf] %v1088
        %1153 = vst [vmem:[%s523 + $0x4] sm:$0xf] %v1089
        %1154 = vst [vmem:[%s523 + $0x8] sm:$0xf] %v1090
        %1155 = vst [vmem:[%s523 + $0xc] sm:$0xf] %v1091
        %1156 = vst [vmem:[%s523 + $0x10] sm:$0xf] %v1092
        %1157 = vst [vmem:[%s523 + $0x14] sm:$0xf] %v1093
        %1158 = vst [vmem:[%s523 + $0x18] sm:$0xf] %v1094
        %1159 = vst [vmem:[%s523 + $0x1c] sm:$0xf] %v1095
        %1160 = vst [vmem:[%s523 + $0x20] sm:$0xf] %v1096
        %1161 = vst [vmem:[%s523 + $0x24] sm:$0xf] %v1097
        %1162 = vst [vmem:[%s523 + $0x28] sm:$0xf] %v1098
        %1163 = vst [vmem:[%s523 + $0x2c] sm:$0xf] %v1099
        %1164 = vst [vmem:[%s523 + $0x30] sm:$0xf] %v1100
        %1165 = vst [vmem:[%s523 + $0x34] sm:$0xf] %v1101
        %1166 = vst [vmem:[%s523 + $0x38] sm:$0xf] %v1102
        %1167 = vst [vmem:[%s523 + $0x3c] sm:$0xf] %v1103
        %1168 = vst [vmem:[%s523 + $0x40] sm:$0xf] %v1104
        %1169 = vst [vmem:[%s523 + $0x44] sm:$0xf] %v1105
        %1170 = vst [vmem:[%s523 + $0x48] sm:$0xf] %v1106
        %1171 = vst [vmem:[%s523 + $0x4c] sm:$0xf] %v1107
        %1172 = vst [vmem:[%s523 + $0x50] sm:$0xf] %v1108
        %1173 = vst [vmem:[%s523 + $0x54] sm:$0xf] %v1109
        %1174 = vst [vmem:[%s523 + $0x58] sm:$0xf] %v1110
        %1175 = vst [vmem:[%s523 + $0x5c] sm:$0xf] %v1111
        %1176 = vst [vmem:[%s523 + $0x60] sm:$0xf] %v1112
        %1177 = vst [vmem:[%s523 + $0x64] sm:$0xf] %v1113
        %1178 = vst [vmem:[%s523 + $0x68] sm:$0xf] %v1114
        %1179 = vst [vmem:[%s523 + $0x6c] sm:$0xf] %v1115
        %1180 = vst [vmem:[%s523 + $0x70] sm:$0xf] %v1116
        %1181 = vst [vmem:[%s523 + $0x74] sm:$0xf] %v1117
        %1182 = vst [vmem:[%s523 + $0x78] sm:$0xf] %v1118
        %1183 = vst [vmem:[%s523 + $0x7c] sm:$0xf] %v1119
        %s1184 = sand.u32 %s143, 1
        %s1185 = sand.u32 %s143, 1
        %s1186 = smul.addr %s1185, 128
        %s1187 = scalar_lea.vmem [#allocation4], %s1186
        // Predicated region
        $region119: #{bottleneck_forward.3} parent=109 // pred_check
          %p1188 = pneg %p153
        $region120: #{bottleneck_forward.3} parent=109 // pred_check_branch
          %1190 = sbr.rel (%p1188) target = $region122
        $region121: #{bottleneck_forward.3} parent=109 // pred_region
          %s1191 = smul.u32 32, %s19
          %s1192 = smul.addr %s1191, 2
          %s1193 = sadd.s32 %s20, %s1192
          %s1194 = smul.addr %s1193, 4
          %s1195 = scalar_lea.vmem %s4, %s1194
          // Predicated region
          $region123: #{bottleneck_forward.3} parent=121 // pred_check
            _
          $region124: #{bottleneck_forward.3} parent=121 // pred_check_branch
            %1197 = sbr.rel (0) target = $region126
          $region125: #{bottleneck_forward.3} parent=121 // pred_region
            // Predicated region
            $region127: #{bottleneck_forward.3} parent=125 // pred_check
              _
            $region128: #{bottleneck_forward.3} parent=125 // pred_check_branch
              %1199 = sbr.rel target = $region130
            $region129: #{bottleneck_forward.3} parent=125 // pred_region
              // Predicated region
              $region142: #{bottleneck_forward.3} parent=129 // pred_check
                _
              $region143: #{bottleneck_forward.3} parent=129 // pred_check_branch
                %1276 = sbr.rel (0) target = $region145
              $region144: #{bottleneck_forward.3} parent=129 // pred_region
                loop: start=0, step=1, limit=1
                $region146: #{bottleneck_forward.3} parent=144 // loop_pre_header
                  _
                $region147: #{bottleneck_forward.3} parent=144 // loop_header
                  %s1278 = sphi 0, %s1282
                  %p1279 = scmp.ge.s32.totalorder %s1278, 1
                  %s1283 = sphi %s1187, %s1187
                  %s1284 = sphi %s1195, %s1195
                $region148: #{bottleneck_forward.3} parent=144 // loop_header_branch
                  %1281 = sbr.rel (%p1279) target = $region152
                $region149: #{bottleneck_forward.3} parent=144 // loop_body
                  _
                $region150: #{bottleneck_forward.3} parent=144 // loop_footer
                  %s1282 = sadd.s32 1, %s1278
                $region151: #{bottleneck_forward.3} parent=144 // loop_footer_branch
                  %1277 = sbr.rel target = $region147
                $region152: #{bottleneck_forward.3} parent=144 // loop_exit
                  _
                loop: start=0, step=1, limit=1
                $region153: #{bottleneck_forward.3} parent=144 // loop_pre_header
                  _
                $region154: #{bottleneck_forward.3} parent=144 // loop_header
                  %s1287 = sphi 0, %s1291
                  %p1288 = scmp.ge.s32.totalorder %s1287, 1
                  %s1292 = sphi %s1187, %s1187
                  %s1293 = sphi %s1195, %s1195
                $region155: #{bottleneck_forward.3} parent=144 // loop_header_branch
                  %1290 = sbr.rel (%p1288) target = $region159
                $region156: #{bottleneck_forward.3} parent=144 // loop_body
                  %v1294 = vld [vmem:[%s1292] sm:$0xf]
                  %1295 = vst [vmem:[%s1293] sm:$0xf] %v1294
                  %v1296 = vld [vmem:[%s1292 + $0x4] sm:$0xf]
                  %1297 = vst [vmem:[%s1293 + $0x8] sm:$0xf] %v1296
                  %v1298 = vld [vmem:[%s1292 + $0x8] sm:$0xf]
                  %1299 = vst [vmem:[%s1293 + $0x10] sm:$0xf] %v1298
                  %v1300 = vld [vmem:[%s1292 + $0xc] sm:$0xf]
                  %1301 = vst [vmem:[%s1293 + $0x18] sm:$0xf] %v1300
                  %v1302 = vld [vmem:[%s1292 + $0x10] sm:$0xf]
                  %1303 = vst [vmem:[%s1293 + $0x20] sm:$0xf] %v1302
                  %v1304 = vld [vmem:[%s1292 + $0x14] sm:$0xf]
                  %1305 = vst [vmem:[%s1293 + $0x28] sm:$0xf] %v1304
                  %v1306 = vld [vmem:[%s1292 + $0x18] sm:$0xf]
                  %1307 = vst [vmem:[%s1293 + $0x30] sm:$0xf] %v1306
                  %v1308 = vld [vmem:[%s1292 + $0x1c] sm:$0xf]
                  %1309 = vst [vmem:[%s1293 + $0x38] sm:$0xf] %v1308
                  %v1310 = vld [vmem:[%s1292 + $0x20] sm:$0xf]
                  %1311 = vst [vmem:[%s1293 + $0x40] sm:$0xf] %v1310
                  %v1312 = vld [vmem:[%s1292 + $0x24] sm:$0xf]
                  %1313 = vst [vmem:[%s1293 + $0x48] sm:$0xf] %v1312
                  %v1314 = vld [vmem:[%s1292 + $0x28] sm:$0xf]
                  %1315 = vst [vmem:[%s1293 + $0x50] sm:$0xf] %v1314
                  %v1316 = vld [vmem:[%s1292 + $0x2c] sm:$0xf]
                  %1317 = vst [vmem:[%s1293 + $0x58] sm:$0xf] %v1316
                  %v1318 = vld [vmem:[%s1292 + $0x30] sm:$0xf]
                  %1319 = vst [vmem:[%s1293 + $0x60] sm:$0xf] %v1318
                  %v1320 = vld [vmem:[%s1292 + $0x34] sm:$0xf]
                  %1321 = vst [vmem:[%s1293 + $0x68] sm:$0xf] %v1320
                  %v1322 = vld [vmem:[%s1292 + $0x38] sm:$0xf]
                  %1323 = vst [vmem:[%s1293 + $0x70] sm:$0xf] %v1322
                  %v1324 = vld [vmem:[%s1292 + $0x3c] sm:$0xf]
                  %1325 = vst [vmem:[%s1293 + $0x78] sm:$0xf] %v1324
                  %v1326 = vld [vmem:[%s1292 + $0x40] sm:$0xf]
                  %1327 = vst [vmem:[%s1293 + $0x80] sm:$0xf] %v1326
                  %v1328 = vld [vmem:[%s1292 + $0x44] sm:$0xf]
                  %1329 = vst [vmem:[%s1293 + $0x88] sm:$0xf] %v1328
                  %v1330 = vld [vmem:[%s1292 + $0x48] sm:$0xf]
                  %1331 = vst [vmem:[%s1293 + $0x90] sm:$0xf] %v1330
                  %v1332 = vld [vmem:[%s1292 + $0x4c] sm:$0xf]
                  %1333 = vst [vmem:[%s1293 + $0x98] sm:$0xf] %v1332
                  %v1334 = vld [vmem:[%s1292 + $0x50] sm:$0xf]
                  %1335 = vst [vmem:[%s1293 + $0xa0] sm:$0xf] %v1334
                  %v1336 = vld [vmem:[%s1292 + $0x54] sm:$0xf]
                  %1337 = vst [vmem:[%s1293 + $0xa8] sm:$0xf] %v1336
                  %v1338 = vld [vmem:[%s1292 + $0x58] sm:$0xf]
                  %1339 = vst [vmem:[%s1293 + $0xb0] sm:$0xf] %v1338
                  %v1340 = vld [vmem:[%s1292 + $0x5c] sm:$0xf]
                  %1341 = vst [vmem:[%s1293 + $0xb8] sm:$0xf] %v1340
                  %v1342 = vld [vmem:[%s1292 + $0x60] sm:$0xf]
                  %1343 = vst [vmem:[%s1293 + $0xc0] sm:$0xf] %v1342
                  %v1344 = vld [vmem:[%s1292 + $0x64] sm:$0xf]
                  %1345 = vst [vmem:[%s1293 + $0xc8] sm:$0xf] %v1344
                  %v1346 = vld [vmem:[%s1292 + $0x68] sm:$0xf]
                  %1347 = vst [vmem:[%s1293 + $0xd0] sm:$0xf] %v1346
                  %v1348 = vld [vmem:[%s1292 + $0x6c] sm:$0xf]
                  %1349 = vst [vmem:[%s1293 + $0xd8] sm:$0xf] %v1348
                  %v1350 = vld [vmem:[%s1292 + $0x70] sm:$0xf]
                  %1351 = vst [vmem:[%s1293 + $0xe0] sm:$0xf] %v1350
                  %v1352 = vld [vmem:[%s1292 + $0x74] sm:$0xf]
                  %1353 = vst [vmem:[%s1293 + $0xe8] sm:$0xf] %v1352
                  %v1354 = vld [vmem:[%s1292 + $0x78] sm:$0xf]
                  %1355 = vst [vmem:[%s1293 + $0xf0] sm:$0xf] %v1354
                  %v1356 = vld [vmem:[%s1292 + $0x7c] sm:$0xf]
                  %1357 = vst [vmem:[%s1293 + $0xf8] sm:$0xf] %v1356
                $region157: #{bottleneck_forward.3} parent=144 // loop_footer
                  %s1291 = sadd.s32 1, %s1287
                $region158: #{bottleneck_forward.3} parent=144 // loop_footer_branch
                  %1286 = sbr.rel target = $region154
                $region159: #{bottleneck_forward.3} parent=144 // loop_exit
                  _
              $region145: #{bottleneck_forward.3} parent=129 // pred_fallthru
                _
            $region130: #{bottleneck_forward.3} parent=125 // pred_fallthru
              _
            // Predicated region
            $region131: #{bottleneck_forward.3} parent=125 // pred_check
              _
            $region132: #{bottleneck_forward.3} parent=125 // pred_check_branch
              %1201 = sbr.rel (0) target = $region134
            $region133: #{bottleneck_forward.3} parent=125 // pred_region
              loop: start=0, step=1, limit=1
              $region135: #{bottleneck_forward.3} parent=133 // loop_pre_header
                _
              $region136: #{bottleneck_forward.3} parent=133 // loop_header
                %s1204 = sphi 0, %s1208
                %p1205 = scmp.ge.s32.totalorder %s1204, 1
                %s1209 = sphi %s1187, %s1187
                %s1210 = sphi %s1195, %s1195
              $region137: #{bottleneck_forward.3} parent=133 // loop_header_branch
                %1207 = sbr.rel (%p1205) target = $region141
              $region138: #{bottleneck_forward.3} parent=133 // loop_body
                %v1211 = vld [vmem:[%s1209] sm:$0xf]
                %1212 = vst [vmem:[%s1210] sm:$0xf] %v1211
                %v1213 = vld [vmem:[%s1209 + $0x4] sm:$0xf]
                %1214 = vst [vmem:[%s1210 + $0x8] sm:$0xf] %v1213
                %v1215 = vld [vmem:[%s1209 + $0x8] sm:$0xf]
                %1216 = vst [vmem:[%s1210 + $0x10] sm:$0xf] %v1215
                %v1217 = vld [vmem:[%s1209 + $0xc] sm:$0xf]
                %1218 = vst [vmem:[%s1210 + $0x18] sm:$0xf] %v1217
                %v1219 = vld [vmem:[%s1209 + $0x10] sm:$0xf]
                %1220 = vst [vmem:[%s1210 + $0x20] sm:$0xf] %v1219
                %v1221 = vld [vmem:[%s1209 + $0x14] sm:$0xf]
                %1222 = vst [vmem:[%s1210 + $0x28] sm:$0xf] %v1221
                %v1223 = vld [vmem:[%s1209 + $0x18] sm:$0xf]
                %1224 = vst [vmem:[%s1210 + $0x30] sm:$0xf] %v1223
                %v1225 = vld [vmem:[%s1209 + $0x1c] sm:$0xf]
                %1226 = vst [vmem:[%s1210 + $0x38] sm:$0xf] %v1225
                %v1227 = vld [vmem:[%s1209 + $0x20] sm:$0xf]
                %1228 = vst [vmem:[%s1210 + $0x40] sm:$0xf] %v1227
                %v1229 = vld [vmem:[%s1209 + $0x24] sm:$0xf]
                %1230 = vst [vmem:[%s1210 + $0x48] sm:$0xf] %v1229
                %v1231 = vld [vmem:[%s1209 + $0x28] sm:$0xf]
                %1232 = vst [vmem:[%s1210 + $0x50] sm:$0xf] %v1231
                %v1233 = vld [vmem:[%s1209 + $0x2c] sm:$0xf]
                %1234 = vst [vmem:[%s1210 + $0x58] sm:$0xf] %v1233
                %v1235 = vld [vmem:[%s1209 + $0x30] sm:$0xf]
                %1236 = vst [vmem:[%s1210 + $0x60] sm:$0xf] %v1235
                %v1237 = vld [vmem:[%s1209 + $0x34] sm:$0xf]
                %1238 = vst [vmem:[%s1210 + $0x68] sm:$0xf] %v1237
                %v1239 = vld [vmem:[%s1209 + $0x38] sm:$0xf]
                %1240 = vst [vmem:[%s1210 + $0x70] sm:$0xf] %v1239
                %v1241 = vld [vmem:[%s1209 + $0x3c] sm:$0xf]
                %1242 = vst [vmem:[%s1210 + $0x78] sm:$0xf] %v1241
                %v1243 = vld [vmem:[%s1209 + $0x40] sm:$0xf]
                %1244 = vst [vmem:[%s1210 + $0x80] sm:$0xf] %v1243
                %v1245 = vld [vmem:[%s1209 + $0x44] sm:$0xf]
                %1246 = vst [vmem:[%s1210 + $0x88] sm:$0xf] %v1245
                %v1247 = vld [vmem:[%s1209 + $0x48] sm:$0xf]
                %1248 = vst [vmem:[%s1210 + $0x90] sm:$0xf] %v1247
                %v1249 = vld [vmem:[%s1209 + $0x4c] sm:$0xf]
                %1250 = vst [vmem:[%s1210 + $0x98] sm:$0xf] %v1249
                %v1251 = vld [vmem:[%s1209 + $0x50] sm:$0xf]
                %1252 = vst [vmem:[%s1210 + $0xa0] sm:$0xf] %v1251
                %v1253 = vld [vmem:[%s1209 + $0x54] sm:$0xf]
                %1254 = vst [vmem:[%s1210 + $0xa8] sm:$0xf] %v1253
                %v1255 = vld [vmem:[%s1209 + $0x58] sm:$0xf]
                %1256 = vst [vmem:[%s1210 + $0xb0] sm:$0xf] %v1255
                %v1257 = vld [vmem:[%s1209 + $0x5c] sm:$0xf]
                %1258 = vst [vmem:[%s1210 + $0xb8] sm:$0xf] %v1257
                %v1259 = vld [vmem:[%s1209 + $0x60] sm:$0xf]
                %1260 = vst [vmem:[%s1210 + $0xc0] sm:$0xf] %v1259
                %v1261 = vld [vmem:[%s1209 + $0x64] sm:$0xf]
                %1262 = vst [vmem:[%s1210 + $0xc8] sm:$0xf] %v1261
                %v1263 = vld [vmem:[%s1209 + $0x68] sm:$0xf]
                %1264 = vst [vmem:[%s1210 + $0xd0] sm:$0xf] %v1263
                %v1265 = vld [vmem:[%s1209 + $0x6c] sm:$0xf]
                %1266 = vst [vmem:[%s1210 + $0xd8] sm:$0xf] %v1265
                %v1267 = vld [vmem:[%s1209 + $0x70] sm:$0xf]
                %1268 = vst [vmem:[%s1210 + $0xe0] sm:$0xf] %v1267
                %v1269 = vld [vmem:[%s1209 + $0x74] sm:$0xf]
                %1270 = vst [vmem:[%s1210 + $0xe8] sm:$0xf] %v1269
                %v1271 = vld [vmem:[%s1209 + $0x78] sm:$0xf]
                %1272 = vst [vmem:[%s1210 + $0xf0] sm:$0xf] %v1271
                %v1273 = vld [vmem:[%s1209 + $0x7c] sm:$0xf]
                %1274 = vst [vmem:[%s1210 + $0xf8] sm:$0xf] %v1273
              $region139: #{bottleneck_forward.3} parent=133 // loop_footer
                %s1208 = sadd.s32 1, %s1204
              $region140: #{bottleneck_forward.3} parent=133 // loop_footer_branch
                %1203 = sbr.rel target = $region136
              $region141: #{bottleneck_forward.3} parent=133 // loop_exit
                _
            $region134: #{bottleneck_forward.3} parent=125 // pred_fallthru
              _
          $region126: #{bottleneck_forward.3} parent=121 // pred_fallthru
            _
          %1358 = vnop
        $region122: #{bottleneck_forward.3} parent=109 // pred_fallthru
          _
      $region110: #{bottleneck_forward.3} parent=5 // pred_fallthru
        _
      %p1359 = scmp.le.s32.totalorder 2, %s10
      // Predicated region
      $region160: #{bottleneck_forward.3} parent=5 // pred_check
        %p1360 = pneg %p1359
      $region161: #{bottleneck_forward.3} parent=5 // pred_check_branch
        %1362 = sbr.rel (%p1360) target = $region163
      $region162: #{bottleneck_forward.3} parent=5 // pred_region
        %s1363 = ssub.s32 %s10, 2
        // Predicated region
        $region164: #{bottleneck_forward.3} parent=162 // pred_check
          %p1364 = pneg %p159
        $region165: #{bottleneck_forward.3} parent=162 // pred_check_branch
          %1366 = sbr.rel (%p1364) target = $region167
        $region166: #{bottleneck_forward.3} parent=162 // pred_region
          %s1367 = sand.u32 %s144, 1
          %s1368 = sand.u32 %s144, 1
          %s1369 = smul.addr %s1368, 128
          %s1370 = scalar_lea.vmem [#allocation4], %s1369
        $region167: #{bottleneck_forward.3} parent=162 // pred_fallthru
          _
      $region163: #{bottleneck_forward.3} parent=5 // pred_fallthru
        _
    $region6: #{bottleneck_forward.3} parent=1 // loop_footer
      %s14 = sadd.s32 1, %s10
    $region7: #{bottleneck_forward.3} parent=1 // loop_footer_branch
      %9 = sbr.rel target = $region3
    $region8: #{bottleneck_forward.3} parent=1 // loop_exit
      _

// kernel: bottleneck_forward.2
$region0: #{bottleneck_forward.2}
  #allocation0 [shape = 'u32[]', space=smem, size = 0x4, offset = 0x4, fixed_abs, tag = 'smem constant byte address 0x4 - core index']
  #allocation1 [shape = 'u32[144,128]{1,0:T(1,128)}', space=vmem, size = 0x12000, scoped, tag = 'internal scratch']
  #allocation2 [shape = 'bf16[18,18,128]{2,1,0:T(8,128)(2,1)}', space=vmem, size = 0x1b000, scoped, tag = 'scratch operand']
  %s0 = inlined_call_operand.vmem [shape: bf16[2,16,16,256], index: 0, kind: input, shape index: {}]
  %s1 = inlined_call_operand.vmem [shape: bf16[256,128], index: 1, kind: input, shape index: {}]
  %s2 = inlined_call_operand.vmem [shape: f32[1,128], index: 2, kind: input, shape index: {}]
  %s3 = inlined_call_operand.vmem [shape: bf16[1152,128], index: 3, kind: input, shape index: {}]
  %s4 = inlined_call_operand.vmem [shape: f32[1,128], index: 4, kind: input, shape index: {}]
  %s5 = inlined_call_operand.vmem [shape: bf16[2,16,16,128], index: 5, kind: output, shape index: {}]
  %s6 = sld [smem:[#allocation0]]
  $region53: #{bottleneck_forward.2} parent=0
    _
  %s8 = ssub.s32 1, %s6
  %s9 = scalar_select 0, %s8, %s6
  loop: start=0, step=1, limit=4
  $region2: #{bottleneck_forward.2} parent=0 // loop_pre_header
    _
  $region3: #{bottleneck_forward.2} parent=0 // loop_header
    %s11 = sphi 0, %s15
    %p12 = scmp.ge.s32.totalorder %s11, 4
    %s21 = sphi 0, %s23
    %s24 = sphi 0, %s21
    %s25 = sphi 0, %s24
    %s41 = sphi 0, %s25
    %s45 = sphi 0, %s45
    %s47 = sphi 0, %s45
    %s48 = sphi 0, %s47
    %s62 = sphi 0, %s48
    %s66 = sphi 0, %s66
    %s68 = sphi 0, %s66
    %s69 = sphi 0, %s68
    %s83 = sphi 0, %s69
    %s87 = sphi 0, %s87
    %s89 = sphi 0, %s87
    %s90 = sphi 0, %s89
    %s104 = sphi 0, %s90
    %s108 = sphi 0, %s108
    %s110 = sphi 0, %s108
    %s111 = sphi 0, %s110
    %s125 = sphi 0, %s111
    %s131 = sphi 0, %s133
    %s134 = sphi 0, %s131
    %s135 = sphi 0, %s134
    %s151 = sphi 0, %s135
  $region4: #{bottleneck_forward.2} parent=0 // loop_header_branch
    %14 = sbr.rel (%p12) target = $region8
  $region5: #{bottleneck_forward.2} parent=0 // loop_body
    %s16 = ssub.s32 %s11, 1
    %s17 = ssub.s32 %s11, 2
    %s18 = sadd.s32 %s11, 1
    %s19 = ssub.s32 %s11, %s18
    %p20 = scmp.eq.s32.totalorder %s19, 0
    %s22 = sadd.s32 %s21, 1
    %s23 = scalar_select %p20, %s21, %s22
    %p26 = pneg %p20
    %p27 = scmp.eq.s32.totalorder %s11, 1
    %p28 = por %p26, %p27
    %p29 = scmp.ne.s32.totalorder %s21, %s24
    %p30 = scmp.eq.s32.totalorder %s11, 0
    %p31 = por %p29, %p30
    %p32 = scmp.ne.s32.totalorder %s21, %s24
    %p33 = scmp.eq.s32.totalorder %s16, 1
    %p34 = por %p32, %p33
    %p35 = scmp.ne.s32.totalorder %s24, %s25
    %p36 = scmp.eq.s32.totalorder %s16, 0
    %p37 = por %p35, %p36
    %p38 = scmp.ne.s32.totalorder %s24, %s25
    %p39 = scmp.eq.s32.totalorder %s17, 1
    %p40 = por %p38, %p39
    %p42 = scmp.ne.s32.totalorder %s25, %s41
    %p43 = scmp.eq.s32.totalorder %s17, 0
    %p44 = por %p42, %p43
    %s46 = sadd.s32 %s45, 1
    %p49 = scmp.eq.s32.totalorder %s11, 1
    %p50 = scmp.ne.s32.totalorder %s45, %s47
    %p51 = scmp.eq.s32.totalorder %s11, 0
    %p52 = por %p50, %p51
    %p53 = scmp.ne.s32.totalorder %s45, %s47
    %p54 = scmp.eq.s32.totalorder %s16, 1
    %p55 = por %p53, %p54
    %p56 = scmp.ne.s32.totalorder %s47, %s48
    %p57 = scmp.eq.s32.totalorder %s16, 0
    %p58 = por %p56, %p57
    %p59 = scmp.ne.s32.totalorder %s47, %s48
    %p60 = scmp.eq.s32.totalorder %s17, 1
    %p61 = por %p59, %p60
    %p63 = scmp.ne.s32.totalorder %s48, %s62
    %p64 = scmp.eq.s32.totalorder %s17, 0
    %p65 = por %p63, %p64
    %s67 = sadd.s32 %s66, 1
    %p70 = scmp.eq.s32.totalorder %s11, 1
    %p71 = scmp.ne.s32.totalorder %s66, %s68
    %p72 = scmp.eq.s32.totalorder %s11, 0
    %p73 = por %p71, %p72
    %p74 = scmp.ne.s32.totalorder %s66, %s68
    %p75 = scmp.eq.s32.totalorder %s16, 1
    %p76 = por %p74, %p75
    %p77 = scmp.ne.s32.totalorder %s68, %s69
    %p78 = scmp.eq.s32.totalorder %s16, 0
    %p79 = por %p77, %p78
    %p80 = scmp.ne.s32.totalorder %s68, %s69
    %p81 = scmp.eq.s32.totalorder %s17, 1
    %p82 = por %p80, %p81
    %p84 = scmp.ne.s32.totalorder %s69, %s83
    %p85 = scmp.eq.s32.totalorder %s17, 0
    %p86 = por %p84, %p85
    %s88 = sadd.s32 %s87, 1
    %p91 = scmp.eq.s32.totalorder %s11, 1
    %p92 = scmp.ne.s32.totalorder %s87, %s89
    %p93 = scmp.eq.s32.totalorder %s11, 0
    %p94 = por %p92, %p93
    %p95 = scmp.ne.s32.totalorder %s87, %s89
    %p96 = scmp.eq.s32.totalorder %s16, 1
    %p97 = por %p95, %p96
    %p98 = scmp.ne.s32.totalorder %s89, %s90
    %p99 = scmp.eq.s32.totalorder %s16, 0
    %p100 = por %p98, %p99
    %p101 = scmp.ne.s32.totalorder %s89, %s90
    %p102 = scmp.eq.s32.totalorder %s17, 1
    %p103 = por %p101, %p102
    %p105 = scmp.ne.s32.totalorder %s90, %s104
    %p106 = scmp.eq.s32.totalorder %s17, 0
    %p107 = por %p105, %p106
    %s109 = sadd.s32 %s108, 1
    %p112 = scmp.eq.s32.totalorder %s11, 1
    %p113 = scmp.ne.s32.totalorder %s108, %s110
    %p114 = scmp.eq.s32.totalorder %s11, 0
    %p115 = por %p113, %p114
    %p116 = scmp.ne.s32.totalorder %s108, %s110
    %p117 = scmp.eq.s32.totalorder %s16, 1
    %p118 = por %p116, %p117
    %p119 = scmp.ne.s32.totalorder %s110, %s111
    %p120 = scmp.eq.s32.totalorder %s16, 0
    %p121 = por %p119, %p120
    %p122 = scmp.ne.s32.totalorder %s110, %s111
    %p123 = scmp.eq.s32.totalorder %s17, 1
    %p124 = por %p122, %p123
    %p126 = scmp.ne.s32.totalorder %s111, %s125
    %p127 = scmp.eq.s32.totalorder %s17, 0
    %p128 = por %p126, %p127
    %s129 = ssub.s32 %s11, %s18
    %p130 = scmp.eq.s32.totalorder %s129, 0
    %s132 = sadd.s32 %s131, 1
    %s133 = scalar_select %p130, %s131, %s132
    %p136 = pneg %p130
    %p137 = scmp.eq.s32.totalorder %s11, 1
    %p138 = por %p136, %p137
    %p139 = scmp.ne.s32.totalorder %s131, %s134
    %p140 = scmp.eq.s32.totalorder %s11, 0
    %p141 = por %p139, %p140
    %p142 = scmp.ne.s32.totalorder %s131, %s134
    %p143 = scmp.eq.s32.totalorder %s16, 1
    %p144 = por %p142, %p143
    %p145 = scmp.ne.s32.totalorder %s134, %s135
    %p146 = scmp.eq.s32.totalorder %s16, 0
    %p147 = por %p145, %p146
    %p148 = scmp.ne.s32.totalorder %s134, %s135
    %p149 = scmp.eq.s32.totalorder %s17, 1
    %p150 = por %p148, %p149
    %p152 = scmp.ne.s32.totalorder %s135, %s151
    %p153 = scmp.eq.s32.totalorder %s17, 0
    %p154 = por %p152, %p153
    %p155 = scmp.le.s32.totalorder 1, %s11
    %p156 = scmp.lt.s32.totalorder %s11, 3
    %p157 = pnand %p155, %p156
    %p158 = pneg %p157
    // Predicated region
    $region9: #{bottleneck_forward.2} parent=5 // pred_check
      _
    $region10: #{bottleneck_forward.2} parent=5 // pred_check_branch
      %160 = sbr.rel (%p157) target = $region12
    $region11: #{bottleneck_forward.2} parent=5 // pred_region
      %s161 = ssub.s32 %s11, 1
      // Predicated region
      $region13: #{bottleneck_forward.2} parent=11 // pred_check
        %p162 = pneg %p58
      $region14: #{bottleneck_forward.2} parent=11 // pred_check_branch
        %164 = sbr.rel (%p162) target = $region16
      $region15: #{bottleneck_forward.2} parent=11 // pred_region
        _
      $region16: #{bottleneck_forward.2} parent=11 // pred_fallthru
        _
      // Predicated region
      $region17: #{bottleneck_forward.2} parent=11 // pred_check
        %p165 = pneg %p79
      $region18: #{bottleneck_forward.2} parent=11 // pred_check_branch
        %167 = sbr.rel (%p165) target = $region20
      $region19: #{bottleneck_forward.2} parent=11 // pred_region
        _
      $region20: #{bottleneck_forward.2} parent=11 // pred_fallthru
        _
      // Predicated region
      $region21: #{bottleneck_forward.2} parent=11 // pred_check
        %p168 = pneg %p100
      $region22: #{bottleneck_forward.2} parent=11 // pred_check_branch
        %170 = sbr.rel (%p168) target = $region24
      $region23: #{bottleneck_forward.2} parent=11 // pred_region
        _
      $region24: #{bottleneck_forward.2} parent=11 // pred_fallthru
        _
      // Predicated region
      $region25: #{bottleneck_forward.2} parent=11 // pred_check
        %p171 = pneg %p121
      $region26: #{bottleneck_forward.2} parent=11 // pred_check_branch
        %173 = sbr.rel (%p171) target = $region28
      $region27: #{bottleneck_forward.2} parent=11 // pred_region
        _
      $region28: #{bottleneck_forward.2} parent=11 // pred_fallthru
        _
    $region12: #{bottleneck_forward.2} parent=5 // pred_fallthru
      _
    %p174 = scmp.lt.s32.totalorder %s11, 2
    // Predicated region
    $region29: #{bottleneck_forward.2} parent=5 // pred_check
      %p175 = pneg %p174
    $region30: #{bottleneck_forward.2} parent=5 // pred_check_branch
      %177 = sbr.rel (%p175) target = $region32
    $region31: #{bottleneck_forward.2} parent=5 // pred_region
      // Predicated region
      $region33: #{bottleneck_forward.2} parent=31 // pred_check
        %p178 = pneg %p31
      $region34: #{bottleneck_forward.2} parent=31 // pred_check_branch
        %180 = sbr.rel (%p178) target = $region36
      $region35: #{bottleneck_forward.2} parent=31 // pred_region
        %p181 = scmp.lt.s32.totalorder %s11, 1
        %s182 = scalar_select %p181, %s11, 1
        %s183 = smul.addr %s182, 64
        %s184 = smul.addr %s183, 4
        %s185 = scalar_lea.vmem %s0, %s184
      $region36: #{bottleneck_forward.2} parent=31 // pred_fallthru
        _
    $region32: #{bottleneck_forward.2} parent=5 // pred_fallthru
      _
    %p186 = scmp.le.s32.totalorder 1, %s11
    %p187 = scmp.lt.s32.totalorder %s11, 3
    %p188 = pnand %p186, %p187
    %p189 = pneg %p188
    // Predicated region
    $region37: #{bottleneck_forward.2} parent=5 // pred_check
      _
    $region38: #{bottleneck_forward.2} parent=5 // pred_check_branch
      %191 = sbr.rel (%p188) target = $region40
    $region39: #{bottleneck_forward.2} parent=5 // pred_region
      %s192 = ssub.s32 %s11, 1
      %p193 = scmp.lt.s32.totalorder %s16, 1
      %s194 = scalar_select %p193, %s16, 1
      %s195 = smul.addr %s194, 64
      %s196 = smul.addr %s195, 4
      %s197 = scalar_lea.vmem %s0, %s196
      %p198 = pneg %p37
      %p199 = pneg %p34
      %p200 = pneg %p58
      %p201 = pneg %p55
      %p202 = pneg %p79
      %p203 = pneg %p76
      %p204 = pneg %p100
      %p205 = pneg %p97
      %p206 = pneg %p121
      %p207 = pneg %p118
      %p208 = pneg %p147
      %p209 = pneg %p144
      %p210 = scmp.lt.s32.totalorder %s16, 1
      %s211 = scalar_select %p210, %s16, 1
      %s212 = smul.addr %s211, 32
      %s213 = smul.addr %s212, 4
      %s214 = scalar_lea.vmem %s5, %s213
      %p215 = scmp.lt.s32.totalorder %s16, 1
      %s216 = scalar_select %p215, %s16, 1
      %s217 = smul.addr %s216, 64
      %s218 = smul.addr %s217, 4
      %s219 = scalar_lea.vmem %s0, %s218
      %p220 = scmp.lt.s32.totalorder %s16, 1
      %s221 = scalar_select %p220, %s16, 1
      %s222 = smul.addr %s221, 32
      %s223 = smul.addr %s222, 4
      %s224 = scalar_lea.vmem %s5, %s223
      %v226 = vld [vmem:[%s219] sm:$0xff]
      %v227 = vld [vmem:[%s219 + $0x8] sm:$0xff]
      %v228 = vld [vmem:[%s219 + $0x10] sm:$0xff]
      %v229 = vld [vmem:[%s219 + $0x18] sm:$0xff]
      %v230 = vld [vmem:[%s219 + $0x20] sm:$0xff]
      %v231 = vld [vmem:[%s219 + $0x28] sm:$0xff]
      %v232 = vld [vmem:[%s219 + $0x30] sm:$0xff]
      %v233 = vld [vmem:[%s219 + $0x38] sm:$0xff]
      %v234 = vld [vmem:[%s219 + $0x40] sm:$0xff]
      %v235 = vld [vmem:[%s219 + $0x48] sm:$0xff]
      %v236 = vld [vmem:[%s219 + $0x50] sm:$0xff]
      %v237 = vld [vmem:[%s219 + $0x58] sm:$0xff]
      %v238 = vld [vmem:[%s219 + $0x60] sm:$0xff]
      %v239 = vld [vmem:[%s219 + $0x68] sm:$0xff]
      %v240 = vld [vmem:[%s219 + $0x70] sm:$0xff]
      %v241 = vld [vmem:[%s219 + $0x78] sm:$0xff]
      %v242 = vld [vmem:[%s219 + $0x80] sm:$0xff]
      %v243 = vld [vmem:[%s219 + $0x88] sm:$0xff]
      %v244 = vld [vmem:[%s219 + $0x90] sm:$0xff]
      %v245 = vld [vmem:[%s219 + $0x98] sm:$0xff]
      %v246 = vld [vmem:[%s219 + $0xa0] sm:$0xff]
      %v247 = vld [vmem:[%s219 + $0xa8] sm:$0xff]
      %v248 = vld [vmem:[%s219 + $0xb0] sm:$0xff]
      %v249 = vld [vmem:[%s219 + $0xb8] sm:$0xff]
      %v250 = vld [vmem:[%s219 + $0xc0] sm:$0xff]
      %v251 = vld [vmem:[%s219 + $0xc8] sm:$0xff]
      %v252 = vld [vmem:[%s219 + $0xd0] sm:$0xff]
      %v253 = vld [vmem:[%s219 + $0xd8] sm:$0xff]
      %v254 = vld [vmem:[%s219 + $0xe0] sm:$0xff]
      %v255 = vld [vmem:[%s219 + $0xe8] sm:$0xff]
      %v256 = vld [vmem:[%s219 + $0xf0] sm:$0xff]
      %v257 = vld [vmem:[%s219 + $0xf8] sm:$0xff]
      %v258 = vld [vmem:[%s1] sm:$0xf]
      %v259 = vld [vmem:[%s1 + $0x4] sm:$0xf]
      %v260 = vld [vmem:[%s1 + $0x8] sm:$0xf]
      %v261 = vld [vmem:[%s1 + $0xc] sm:$0xf]
      %v262 = vld [vmem:[%s1 + $0x10] sm:$0xf]
      %v263 = vld [vmem:[%s1 + $0x14] sm:$0xf]
      %v264 = vld [vmem:[%s1 + $0x18] sm:$0xf]
      %v265 = vld [vmem:[%s1 + $0x1c] sm:$0xf]
      %v266 = vld [vmem:[%s1 + $0x20] sm:$0xf]
      %v267 = vld [vmem:[%s1 + $0x24] sm:$0xf]
      %v268 = vld [vmem:[%s1 + $0x28] sm:$0xf]
      %v269 = vld [vmem:[%s1 + $0x2c] sm:$0xf]
      %v270 = vld [vmem:[%s1 + $0x30] sm:$0xf]
      %v271 = vld [vmem:[%s1 + $0x34] sm:$0xf]
      %v272 = vld [vmem:[%s1 + $0x38] sm:$0xf]
      %v273 = vld [vmem:[%s1 + $0x3c] sm:$0xf]
      %v274 = vld [vmem:[%s1 + $0x40] sm:$0xf]
      %v275 = vld [vmem:[%s1 + $0x44] sm:$0xf]
      %v276 = vld [vmem:[%s1 + $0x48] sm:$0xf]
      %v277 = vld [vmem:[%s1 + $0x4c] sm:$0xf]
      %v278 = vld [vmem:[%s1 + $0x50] sm:$0xf]
      %v279 = vld [vmem:[%s1 + $0x54] sm:$0xf]
      %v280 = vld [vmem:[%s1 + $0x58] sm:$0xf]
      %v281 = vld [vmem:[%s1 + $0x5c] sm:$0xf]
      %v282 = vld [vmem:[%s1 + $0x60] sm:$0xf]
      %v283 = vld [vmem:[%s1 + $0x64] sm:$0xf]
      %v284 = vld [vmem:[%s1 + $0x68] sm:$0xf]
      %v285 = vld [vmem:[%s1 + $0x6c] sm:$0xf]
      %v286 = vld [vmem:[%s1 + $0x70] sm:$0xf]
      %v287 = vld [vmem:[%s1 + $0x74] sm:$0xf]
      %v288 = vld [vmem:[%s1 + $0x78] sm:$0xf]
      %v289 = vld [vmem:[%s1 + $0x7c] sm:$0xf]
      %v290 = vld [vmem:[%s2] sm:$0x1]
      %v292 = vlaneseq
      %v293 = vshrl.u32 %v292, 7
      %v294 = vsub.s32 0, %v293
      %v295 = vrot.slane %v290, %v294
      %v329 = vunpack.c.l.b16 %v226
      %v330 = vunpack.c.h.b16 %v226
      %v331 = vunpack.c.l.b16 %v227
      %v332 = vunpack.c.h.b16 %v227
      %v333 = vunpack.c.l.b16 %v228
      %v334 = vunpack.c.h.b16 %v228
      %v335 = vunpack.c.l.b16 %v229
      %v336 = vunpack.c.h.b16 %v229
      %v337 = vunpack.c.l.b16 %v230
      %v338 = vunpack.c.h.b16 %v230
      %v339 = vunpack.c.l.b16 %v231
      %v340 = vunpack.c.h.b16 %v231
      %v341 = vunpack.c.l.b16 %v232
      %v342 = vunpack.c.h.b16 %v232
      %v343 = vunpack.c.l.b16 %v233
      %v344 = vunpack.c.h.b16 %v233
      %v345 = vunpack.c.l.b16 %v234
      %v346 = vunpack.c.h.b16 %v234
      %v347 = vunpack.c.l.b16 %v235
      %v348 = vunpack.c.h.b16 %v235
      %v349 = vunpack.c.l.b16 %v236
      %v350 = vunpack.c.h.b16 %v236
      %v351 = vunpack.c.l.b16 %v237
      %v352 = vunpack.c.h.b16 %v237
      %v353 = vunpack.c.l.b16 %v238
      %v354 = vunpack.c.h.b16 %v238
      %v355 = vunpack.c.l.b16 %v239
      %v356 = vunpack.c.h.b16 %v239
      %v357 = vunpack.c.l.b16 %v240
      %v358 = vunpack.c.h.b16 %v240
      %v359 = vunpack.c.l.b16 %v241
      %v360 = vunpack.c.h.b16 %v241
      %v361 = vunpack.c.l.b16 %v242
      %v362 = vunpack.c.h.b16 %v242
      %v363 = vunpack.c.l.b16 %v243
      %v364 = vunpack.c.h.b16 %v243
      %v365 = vunpack.c.l.b16 %v244
      %v366 = vunpack.c.h.b16 %v244
      %v367 = vunpack.c.l.b16 %v245
      %v368 = vunpack.c.h.b16 %v245
      %v369 = vunpack.c.l.b16 %v246
      %v370 = vunpack.c.h.b16 %v246
      %v371 = vunpack.c.l.b16 %v247
      %v372 = vunpack.c.h.b16 %v247
      %v373 = vunpack.c.l.b16 %v248
      %v374 = vunpack.c.h.b16 %v248
      %v375 = vunpack.c.l.b16 %v249
      %v376 = vunpack.c.h.b16 %v249
      %v377 = vunpack.c.l.b16 %v250
      %v378 = vunpack.c.h.b16 %v250
      %v379 = vunpack.c.l.b16 %v251
      %v380 = vunpack.c.h.b16 %v251
      %v381 = vunpack.c.l.b16 %v252
      %v382 = vunpack.c.h.b16 %v252
      %v383 = vunpack.c.l.b16 %v253
      %v384 = vunpack.c.h.b16 %v253
      %v385 = vunpack.c.l.b16 %v254
      %v386 = vunpack.c.h.b16 %v254
      %v387 = vunpack.c.l.b16 %v255
      %v388 = vunpack.c.h.b16 %v255
      %v389 = vunpack.c.l.b16 %v256
      %v390 = vunpack.c.h.b16 %v256
      %v391 = vunpack.c.l.b16 %v257
      %v392 = vunpack.c.h.b16 %v257
      %v393 = vpack.c.b16 %v331, %v329
      %v394 = vpack.c.b16 %v332, %v330
      %v395 = vpack.c.b16 %v335, %v333
      %v396 = vpack.c.b16 %v336, %v334
      %v397 = vpack.c.b16 %v339, %v337
      %v398 = vpack.c.b16 %v340, %v338
      %v399 = vpack.c.b16 %v343, %v341
      %v400 = vpack.c.b16 %v344, %v342
      %v401 = vpack.c.b16 %v347, %v345
      %v402 = vpack.c.b16 %v348, %v346
      %v403 = vpack.c.b16 %v351, %v349
      %v404 = vpack.c.b16 %v352, %v350
      %v405 = vpack.c.b16 %v355, %v353
      %v406 = vpack.c.b16 %v356, %v354
      %v407 = vpack.c.b16 %v359, %v357
      %v408 = vpack.c.b16 %v360, %v358
      %v409 = vpack.c.b16 %v363, %v361
      %v410 = vpack.c.b16 %v364, %v362
      %v411 = vpack.c.b16 %v367, %v365
      %v412 = vpack.c.b16 %v368, %v366
      %v413 = vpack.c.b16 %v371, %v369
      %v414 = vpack.c.b16 %v372, %v370
      %v415 = vpack.c.b16 %v375, %v373
      %v416 = vpack.c.b16 %v376, %v374
      %v417 = vpack.c.b16 %v379, %v377
      %v418 = vpack.c.b16 %v380, %v378
      %v419 = vpack.c.b16 %v383, %v381
      %v420 = vpack.c.b16 %v384, %v382
      %v421 = vpack.c.b16 %v387, %v385
      %v422 = vpack.c.b16 %v388, %v386
      %v423 = vpack.c.b16 %v391, %v389
      %v424 = vpack.c.b16 %v392, %v390
      %v489 = vunpack.c.l.b16 %v258
      %v490 = vunpack.c.l.b16 %v259
      %v491 = vunpack.c.l.b16 %v260
      %v492 = vunpack.c.l.b16 %v261
      %v493 = vunpack.c.l.b16 %v262
      %v494 = vunpack.c.l.b16 %v263
      %v495 = vunpack.c.l.b16 %v264
      %v496 = vunpack.c.l.b16 %v265
      %v497 = vunpack.c.l.b16 %v266
      %v498 = vunpack.c.l.b16 %v267
      %v499 = vunpack.c.l.b16 %v268
      %v500 = vunpack.c.l.b16 %v269
      %v501 = vunpack.c.l.b16 %v270
      %v502 = vunpack.c.l.b16 %v271
      %v503 = vunpack.c.l.b16 %v272
      %v504 = vunpack.c.l.b16 %v273
      %v505 = vunpack.c.l.b16 %v274
      %v506 = vunpack.c.l.b16 %v275
      %v507 = vunpack.c.l.b16 %v276
      %v508 = vunpack.c.l.b16 %v277
      %v509 = vunpack.c.l.b16 %v278
      %v510 = vunpack.c.l.b16 %v279
      %v511 = vunpack.c.l.b16 %v280
      %v512 = vunpack.c.l.b16 %v281
      %v513 = vunpack.c.l.b16 %v282
      %v514 = vunpack.c.l.b16 %v283
      %v515 = vunpack.c.l.b16 %v284
      %v516 = vunpack.c.l.b16 %v285
      %v517 = vunpack.c.l.b16 %v286
      %v518 = vunpack.c.l.b16 %v287
      %v519 = vunpack.c.l.b16 %v288
      %v520 = vunpack.c.l.b16 %v289
      %v521 = vpack.c.b16 %v490, %v489
      %v522 = vpack.c.b16 %v492, %v491
      %v523 = vpack.c.b16 %v494, %v493
      %v524 = vpack.c.b16 %v496, %v495
      %v525 = vpack.c.b16 %v498, %v497
      %v526 = vpack.c.b16 %v500, %v499
      %v527 = vpack.c.b16 %v502, %v501
      %v528 = vpack.c.b16 %v504, %v503
      %v529 = vpack.c.b16 %v506, %v505
      %v530 = vpack.c.b16 %v508, %v507
      %v531 = vpack.c.b16 %v510, %v509
      %v532 = vpack.c.b16 %v512, %v511
      %v533 = vpack.c.b16 %v514, %v513
      %v534 = vpack.c.b16 %v516, %v515
      %v535 = vpack.c.b16 %v518, %v517
      %v536 = vpack.c.b16 %v520, %v519
      %553 = vmatprep.subr.bf16.mxu0 0
      %554 = vmatpush1.bf16.msra.mxu0 %v521
      %555 = vmatprep.subr.bf16.mxu0 0
      %556 = vmatpush1.bf16.msra.mxu0 %v522
      %557 = vmatprep.subr.bf16.mxu0 0
      %558 = vmatpush1.bf16.msra.mxu0 %v523
      %559 = vmatprep.subr.bf16.mxu0 0
      %560 = vmatpush1.bf16.msra.mxu0 %v524
      %561 = vmatprep.subr.bf16.mxu0 0
      %562 = vmatpush1.bf16.msra.mxu0 %v525
      %563 = vmatprep.subr.bf16.mxu0 0
      %564 = vmatpush1.bf16.msra.mxu0 %v526
      %565 = vmatprep.subr.bf16.mxu0 0
      %566 = vmatpush1.bf16.msra.mxu0 %v527
      %567 = vmatprep.subr.bf16.mxu0 0
      %568 = vmatpush1.bf16.msra.mxu0 %v528
      %569 = vmatprep.subr.bf16.mxu0 0
      %570 = vmatpush1.bf16.msra.mxu0 %v529
      %571 = vmatprep.subr.bf16.mxu0 0
      %572 = vmatpush1.bf16.msra.mxu0 %v530
      %573 = vmatprep.subr.bf16.mxu0 0
      %574 = vmatpush1.bf16.msra.mxu0 %v531
      %575 = vmatprep.subr.bf16.mxu0 0
      %576 = vmatpush1.bf16.msra.mxu0 %v532
      %577 = vmatprep.subr.bf16.mxu0 0
      %578 = vmatpush1.bf16.msra.mxu0 %v533
      %579 = vmatprep.subr.bf16.mxu0 0
      %580 = vmatpush1.bf16.msra.mxu0 %v534
      %581 = vmatprep.subr.bf16.mxu0 0
      %582 = vmatpush1.bf16.msra.mxu0 %v535
      %583 = vmatprep.subr.bf16.mxu0 0
      %584 = vmatpush1.bf16.msra.mxu0 %v536
      %585 = vmatprep.mubr.bf16.mxu0 %v394
      %586 = vmatmul.mubr.bf16.gmra.mrb[0].mxu0 %v393
      %v587 = vpop.f32.mrb[0].mxu0
      %v588 = vadd.f32 %v295, %v587
      %v589 = vpop.f32.mrb[0].mxu0
      %v590 = vpop.f32.mrb[0].mxu0
      %v591 = vadd.f32 %v295, %v590
      %v592 = vpop.f32.mrb[0].mxu0
      %593 = vmatprep.mubr.bf16.mxu0 %v396
      %594 = vmatmul.mubr.bf16.gmra.mrb[0].mxu0 %v395
      %v595 = vpop.f32.mrb[0].mxu0
      %v596 = vadd.f32 %v295, %v595
      %v597 = vpop.f32.mrb[0].mxu0
      %v598 = vpop.f32.mrb[0].mxu0
      %v599 = vadd.f32 %v295, %v598
      %v600 = vpop.f32.mrb[0].mxu0
      %601 = vmatprep.mubr.bf16.mxu0 %v398
      %602 = vmatmul.mubr.bf16.gmra.mrb[0].mxu0 %v397
      %v603 = vpop.f32.mrb[0].mxu0
      %v604 = vadd.f32 %v295, %v603
      %v605 = vpop.f32.mrb[0].mxu0
      %v606 = vpop.f32.mrb[0].mxu0
      %v607 = vadd.f32 %v295, %v606
      %v608 = vpop.f32.mrb[0].mxu0
      %609 = vmatprep.mubr.bf16.mxu0 %v400
      %610 = vmatmul.mubr.bf16.gmra.mrb[0].mxu0 %v399
      %v611 = vpop.f32.mrb[0].mxu0
      %v612 = vadd.f32 %v295, %v611
      %v613 = vpop.f32.mrb[0].mxu0
      %v614 = vpop.f32.mrb[0].mxu0
      %v615 = vadd.f32 %v295, %v614
      %v616 = vpop.f32.mrb[0].mxu0
      %617 = vmatprep.mubr.bf16.mxu0 %v402
      %618 = vmatmul.mubr.bf16.gmra.mrb[0].mxu0 %v401
      %v619 = vpop.f32.mrb[0].mxu0
      %v620 = vadd.f32 %v295, %v619
      %v621 = vpop.f32.mrb[0].mxu0
      %v622 = vpop.f32.mrb[0].mxu0
      %v623 = vadd.f32 %v295, %v622
      %v624 = vpop.f32.mrb[0].mxu0
      %625 = vmatprep.mubr.bf16.mxu0 %v404
      %626 = vmatmul.mubr.bf16.gmra.mrb[0].mxu0 %v403
      %v627 = vpop.f32.mrb[0].mxu0
      %v628 = vadd.f32 %v295, %v627
      %v629 = vpop.f32.mrb[0].mxu0
      %v630 = vpop.f32.mrb[0].mxu0
      %v631 = vadd.f32 %v295, %v630
      %v632 = vpop.f32.mrb[0].mxu0
      %633 = vmatprep.mubr.bf16.mxu0 %v406
      %634 = vmatmul.mubr.bf16.gmra.mrb[0].mxu0 %v405
      %v635 = vpop.f32.mrb[0].mxu0
      %v636 = vadd.f32 %v295, %v635
      %v637 = vpop.f32.mrb[0].mxu0
      %v638 = vpop.f32.mrb[0].mxu0
      %v639 = vadd.f32 %v295, %v638
      %v640 = vpop.f32.mrb[0].mxu0
      %641 = vmatprep.mubr.bf16.mxu0 %v408
      %642 = vmatmul.mubr.bf16.gmra.mrb[0].mxu0 %v407
      %v643 = vpop.f32.mrb[0].mxu0
      %v644 = vadd.f32 %v295, %v643
      %v645 = vpop.f32.mrb[0].mxu0
      %v646 = vpop.f32.mrb[0].mxu0
      %v647 = vadd.f32 %v295, %v646
      %v648 = vpop.f32.mrb[0].mxu0
      %649 = vmatprep.mubr.bf16.mxu0 %v410
      %650 = vmatmul.mubr.bf16.gmra.mrb[0].mxu0 %v409
      %v651 = vpop.f32.mrb[0].mxu0
      %v652 = vadd.f32 %v295, %v651
      %v653 = vpop.f32.mrb[0].mxu0
      %v654 = vpop.f32.mrb[0].mxu0
      %v655 = vadd.f32 %v295, %v654
      %v656 = vpop.f32.mrb[0].mxu0
      %657 = vmatprep.mubr.bf16.mxu0 %v412
      %658 = vmatmul.mubr.bf16.gmra.mrb[0].mxu0 %v411
      %v659 = vpop.f32.mrb[0].mxu0
      %v660 = vadd.f32 %v295, %v659
      %v661 = vpop.f32.mrb[0].mxu0
      %v662 = vpop.f32.mrb[0].mxu0
      %v663 = vadd.f32 %v295, %v662
      %v664 = vpop.f32.mrb[0].mxu0
      %665 = vmatprep.mubr.bf16.mxu0 %v414
      %666 = vmatmul.mubr.bf16.gmra.mrb[0].mxu0 %v413
      %v667 = vpop.f32.mrb[0].mxu0
      %v668 = vadd.f32 %v295, %v667
      %v669 = vpop.f32.mrb[0].mxu0
      %v670 = vpop.f32.mrb[0].mxu0
      %v671 = vadd.f32 %v295, %v670
      %v672 = vpop.f32.mrb[0].mxu0
      %673 = vmatprep.mubr.bf16.mxu0 %v416
      %674 = vmatmul.mubr.bf16.gmra.mrb[0].mxu0 %v415
      %v675 = vpop.f32.mrb[0].mxu0
      %v676 = vadd.f32 %v295, %v675
      %v677 = vpop.f32.mrb[0].mxu0
      %v678 = vpop.f32.mrb[0].mxu0
      %v679 = vadd.f32 %v295, %v678
      %v680 = vpop.f32.mrb[0].mxu0
      %681 = vmatprep.mubr.bf16.mxu0 %v418
      %682 = vmatmul.mubr.bf16.gmra.mrb[0].mxu0 %v417
      %v683 = vpop.f32.mrb[0].mxu0
      %v684 = vadd.f32 %v295, %v683
      %v685 = vpop.f32.mrb[0].mxu0
      %v686 = vpop.f32.mrb[0].mxu0
      %v687 = vadd.f32 %v295, %v686
      %v688 = vpop.f32.mrb[0].mxu0
      %689 = vmatprep.mubr.bf16.mxu0 %v420
      %690 = vmatmul.mubr.bf16.gmra.mrb[0].mxu0 %v419
      %v691 = vpop.f32.mrb[0].mxu0
      %v692 = vadd.f32 %v295, %v691
      %v693 = vpop.f32.mrb[0].mxu0
      %v694 = vpop.f32.mrb[0].mxu0
      %v695 = vadd.f32 %v295, %v694
      %v696 = vpop.f32.mrb[0].mxu0
      %697 = vmatprep.mubr.bf16.mxu0 %v422
      %698 = vmatmul.mubr.bf16.gmra.mrb[0].mxu0 %v421
      %v699 = vpop.f32.mrb[0].mxu0
      %v700 = vadd.f32 %v295, %v699
      %v701 = vpop.f32.mrb[0].mxu0
      %v702 = vpop.f32.mrb[0].mxu0
      %v703 = vadd.f32 %v295, %v702
      %v704 = vpop.f32.mrb[0].mxu0
      %705 = vmatprep.mubr.bf16.mxu0 %v424
      %706 = vmatmul.mubr.bf16.gmra.mrb[0].mxu0 %v423
      %v707 = vpop.f32.mrb[0].mxu0
      %v708 = vadd.f32 %v295, %v707
      %v709 = vpop.f32.mrb[0].mxu0
      %v710 = vpop.f32.mrb[0].mxu0
      %v711 = vadd.f32 %v295, %v710
      %v712 = vpop.f32.mrb[0].mxu0
      %713 = vdwg.mxu0
      %v714 = vmax.f32 %v588, 0.0
      %v715 = vmax.f32 %v591, 0.0
      %v716 = vmax.f32 %v596, 0.0
      %v717 = vmax.f32 %v599, 0.0
      %v718 = vmax.f32 %v604, 0.0
      %v719 = vmax.f32 %v607, 0.0
      %v720 = vmax.f32 %v612, 0.0
      %v721 = vmax.f32 %v615, 0.0
      %v722 = vmax.f32 %v620, 0.0
      %v723 = vmax.f32 %v623, 0.0
      %v724 = vmax.f32 %v628, 0.0
      %v725 = vmax.f32 %v631, 0.0
      %v726 = vmax.f32 %v636, 0.0
      %v727 = vmax.f32 %v639, 0.0
      %v728 = vmax.f32 %v644, 0.0
      %v729 = vmax.f32 %v647, 0.0
      %v730 = vmax.f32 %v652, 0.0
      %v731 = vmax.f32 %v655, 0.0
      %v732 = vmax.f32 %v660, 0.0
      %v733 = vmax.f32 %v663, 0.0
      %v734 = vmax.f32 %v668, 0.0
      %v735 = vmax.f32 %v671, 0.0
      %v736 = vmax.f32 %v676, 0.0
      %v737 = vmax.f32 %v679, 0.0
      %v738 = vmax.f32 %v684, 0.0
      %v739 = vmax.f32 %v687, 0.0
      %v740 = vmax.f32 %v692, 0.0
      %v741 = vmax.f32 %v695, 0.0
      %v742 = vmax.f32 %v700, 0.0
      %v743 = vmax.f32 %v703, 0.0
      %v744 = vmax.f32 %v708, 0.0
      %v745 = vmax.f32 %v711, 0.0
      %v746 = vpack.c.bf16 %v715, %v714
      %v747 = vpack.c.bf16 %v717, %v716
      %v748 = vpack.c.bf16 %v719, %v718
      %v749 = vpack.c.bf16 %v721, %v720
      %v750 = vpack.c.bf16 %v723, %v722
      %v751 = vpack.c.bf16 %v725, %v724
      %v752 = vpack.c.bf16 %v727, %v726
      %v753 = vpack.c.bf16 %v729, %v728
      %v754 = vpack.c.bf16 %v731, %v730
      %v755 = vpack.c.bf16 %v733, %v732
      %v756 = vpack.c.bf16 %v735, %v734
      %v757 = vpack.c.bf16 %v737, %v736
      %v758 = vpack.c.bf16 %v739, %v738
      %v759 = vpack.c.bf16 %v741, %v740
      %v760 = vpack.c.bf16 %v743, %v742
      %v761 = vpack.c.bf16 %v745, %v744
      %762 = vst [vmem:[#allocation2] sm:$0xf] 0
      %763 = vst [vmem:[#allocation2 + $0x4] sm:$0xf] 0
      %764 = vst [vmem:[#allocation2 + $0x8] sm:$0x1] 0
      %765 = vst [vmem:[#allocation2 + $0xc] sm:$0xf] 0
      %766 = vst [vmem:[#allocation2 + $0x10] sm:$0xf] 0
      %767 = vst [vmem:[#allocation2 + $0x14] sm:$0x1] 0
      %768 = vst [vmem:[#allocation2 + $0x18] sm:$0xf] 0
      %769 = vst [vmem:[#allocation2 + $0x1c] sm:$0xf] 0
      %770 = vst [vmem:[#allocation2 + $0x20] sm:$0x1] 0
      %771 = vst [vmem:[#allocation2 + $0x24] sm:$0xf] 0
      %772 = vst [vmem:[#allocation2 + $0x28] sm:$0xf] 0
      %773 = vst [vmem:[#allocation2 + $0x2c] sm:$0x1] 0
      %774 = vst [vmem:[#allocation2 + $0x30] sm:$0xf] 0
      %775 = vst [vmem:[#allocation2 + $0x34] sm:$0xf] 0
      %776 = vst [vmem:[#allocation2 + $0x38] sm:$0x1] 0
      %777 = vst [vmem:[#allocation2 + $0x3c] sm:$0xf] 0
      %778 = vst [vmem:[#allocation2 + $0x40] sm:$0xf] 0
      %779 = vst [vmem:[#allocation2 + $0x44] sm:$0x1] 0
      %780 = vst [vmem:[#allocation2 + $0x48] sm:$0xf] 0
      %781 = vst [vmem:[#allocation2 + $0x4c] sm:$0xf] 0
      %782 = vst [vmem:[#allocation2 + $0x50] sm:$0x1] 0
      %783 = vst [vmem:[#allocation2 + $0x54] sm:$0xf] 0
      %784 = vst [vmem:[#allocation2 + $0x58] sm:$0xf] 0
      %785 = vst [vmem:[#allocation2 + $0x5c] sm:$0x1] 0
      %786 = vst [vmem:[#allocation2 + $0x60] sm:$0xf] 0
      %787 = vst [vmem:[#allocation2 + $0x64] sm:$0xf] 0
      %788 = vst [vmem:[#allocation2 + $0x68] sm:$0x1] 0
      %789 = vst [vmem:[#allocation2 + $0x6c] sm:$0xf] 0
      %790 = vst [vmem:[#allocation2 + $0x70] sm:$0xf] 0
      %791 = vst [vmem:[#allocation2 + $0x74] sm:$0x1] 0
      %792 = vst [vmem:[#allocation2 + $0x78] sm:$0xf] 0
      %793 = vst [vmem:[#allocation2 + $0x7c] sm:$0xf] 0
      %794 = vst [vmem:[#allocation2 + $0x80] sm:$0x1] 0
      %795 = vst [vmem:[#allocation2 + $0x84] sm:$0xf] 0
      %796 = vst [vmem:[#allocation2 + $0x88] sm:$0xf] 0
      %797 = vst [vmem:[#allocation2 + $0x8c] sm:$0x1] 0
      %798 = vst [vmem:[#allocation2 + $0x90] sm:$0xf] 0
      %799 = vst [vmem:[#allocation2 + $0x94] sm:$0xf] 0
      %800 = vst [vmem:[#allocation2 + $0x98] sm:$0x1] 0
      %801 = vst [vmem:[#allocation2 + $0x9c] sm:$0xf] 0
      %802 = vst [vmem:[#allocation2 + $0xa0] sm:$0xf] 0
      %803 = vst [vmem:[#allocation2 + $0xa4] sm:$0x1] 0
      %804 = vst [vmem:[#allocation2 + $0xa8] sm:$0xf] 0
      %805 = vst [vmem:[#allocation2 + $0xac] sm:$0xf] 0
      %806 = vst [vmem:[#allocation2 + $0xb0] sm:$0x1] 0
      %807 = vst [vmem:[#allocation2 + $0xb4] sm:$0xf] 0
      %808 = vst [vmem:[#allocation2 + $0xb8] sm:$0xf] 0
      %809 = vst [vmem:[#allocation2 + $0xbc] sm:$0x1] 0
      %810 = vst [vmem:[#allocation2 + $0xc0] sm:$0xf] 0
      %811 = vst [vmem:[#allocation2 + $0xc4] sm:$0xf] 0
      %812 = vst [vmem:[#allocation2 + $0xc8] sm:$0x1] 0
      %813 = vst [vmem:[#allocation2 + $0xcc] sm:$0xf] 0
      %814 = vst [vmem:[#allocation2 + $0xd0] sm:$0xf] 0
      %815 = vst [vmem:[#allocation2 + $0xd4] sm:$0x1] 0
      %v832 = vunpack.c.l.b16 %v746
      %v833 = vunpack.c.h.b16 %v746
      %v834 = vunpack.c.l.b16 %v747
      %v835 = vunpack.c.h.b16 %v747
      %v836 = vunpack.c.l.b16 %v748
      %v837 = vunpack.c.h.b16 %v748
      %v838 = vunpack.c.l.b16 %v749
      %v839 = vunpack.c.h.b16 %v749
      %v840 = vunpack.c.l.b16 %v750
      %v841 = vunpack.c.h.b16 %v750
      %v842 = vunpack.c.l.b16 %v751
      %v843 = vunpack.c.h.b16 %v751
      %v844 = vunpack.c.l.b16 %v752
      %v845 = vunpack.c.h.b16 %v752
      %v846 = vunpack.c.l.b16 %v753
      %v847 = vunpack.c.h.b16 %v753
      %v848 = vunpack.c.l.b16 %v754
      %v849 = vunpack.c.h.b16 %v754
      %v850 = vunpack.c.l.b16 %v755
      %v851 = vunpack.c.h.b16 %v755
      %v852 = vunpack.c.l.b16 %v756
      %v853 = vunpack.c.h.b16 %v756
      %v854 = vunpack.c.l.b16 %v757
      %v855 = vunpack.c.h.b16 %v757
      %v856 = vunpack.c.l.b16 %v758
      %v857 = vunpack.c.h.b16 %v758
      %v858 = vunpack.c.l.b16 %v759
      %v859 = vunpack.c.h.b16 %v759
      %v860 = vunpack.c.l.b16 %v760
      %v861 = vunpack.c.h.b16 %v760
      %v862 = vunpack.c.l.b16 %v761
      %v863 = vunpack.c.h.b16 %v761
      %v864 = vpack.c.b16 %v832, %v832
      %v865 = vpack.c.b16 %v833, %v833
      %v866 = vpack.c.b16 %v834, %v834
      %v867 = vpack.c.b16 %v835, %v835
      %v868 = vpack.c.b16 %v836, %v836
      %v869 = vpack.c.b16 %v837, %v837
      %v870 = vpack.c.b16 %v838, %v838
      %v871 = vpack.c.b16 %v839, %v839
      %v872 = vpack.c.b16 %v840, %v840
      %v873 = vpack.c.b16 %v841, %v841
      %v874 = vpack.c.b16 %v842, %v842
      %v875 = vpack.c.b16 %v843, %v843
      %v876 = vpack.c.b16 %v844, %v844
      %v877 = vpack.c.b16 %v845, %v845
      %v878 = vpack.c.b16 %v846, %v846
      %v879 = vpack.c.b16 %v847, %v847
      %v880 = vpack.c.b16 %v848, %v848
      %v881 = vpack.c.b16 %v849, %v849
      %v882 = vpack.c.b16 %v850, %v850
      %v883 = vpack.c.b16 %v851, %v851
      %v884 = vpack.c.b16 %v852, %v852
      %v885 = vpack.c.b16 %v853, %v853
      %v886 = vpack.c.b16 %v854, %v854
      %v887 = vpack.c.b16 %v855, %v855
      %v888 = vpack.c.b16 %v856, %v856
      %v889 = vpack.c.b16 %v857, %v857
      %v890 = vpack.c.b16 %v858, %v858
      %v891 = vpack.c.b16 %v859, %v859
      %v892 = vpack.c.b16 %v860, %v860
      %v893 = vpack.c.b16 %v861, %v861
      %v894 = vpack.c.b16 %v862, %v862
      %v895 = vpack.c.b16 %v863, %v863
      %vm896 = vsmask.f32 256
      %vm897 = vsmask.f32 4368
      %vm898 = vmor %vm896, %vm897
      %v900 = vshrl.u32 %v864, 16
      %v902 = vrot.slane %v900, 7
      %v903 = vshll.u32 %v864, 16
      %v905 = vor.u32 %v902, %v903
      %v906 = vrot.slane %v902, 4
      %v908 = vshrl.u32 %v865, 16
      %v910 = vrot.slane %v908, 7
      %v911 = vshll.u32 %v865, 16
      %v913 = vor.u32 %v910, %v911
      %v914 = vsel %vm898, %v906, %v913
      %v915 = vrot.slane %v910, 4
      %v917 = vshrl.u32 %v866, 16
      %v919 = vrot.slane %v917, 7
      %v920 = vshll.u32 %v866, 16
      %v922 = vor.u32 %v919, %v920
      %v923 = vrot.slane %v919, 4
      %v925 = vshrl.u32 %v867, 16
      %v927 = vrot.slane %v925, 7
      %v928 = vshll.u32 %v867, 16
      %v930 = vor.u32 %v927, %v928
      %v931 = vsel %vm898, %v923, %v930
      %v932 = vrot.slane %v927, 4
      %v934 = vshrl.u32 %v868, 16
      %v936 = vrot.slane %v934, 7
      %v937 = vshll.u32 %v868, 16
      %v939 = vor.u32 %v936, %v937
      %v940 = vrot.slane %v936, 4
      %v942 = vshrl.u32 %v869, 16
      %v944 = vrot.slane %v942, 7
      %v945 = vshll.u32 %v869, 16
      %v947 = vor.u32 %v944, %v945
      %v948 = vsel %vm898, %v940, %v947
      %v949 = vrot.slane %v944, 4
      %v951 = vshrl.u32 %v870, 16
      %v953 = vrot.slane %v951, 7
      %v954 = vshll.u32 %v870, 16
      %v956 = vor.u32 %v953, %v954
      %v957 = vrot.slane %v953, 4
      %v959 = vshrl.u32 %v871, 16
      %v961 = vrot.slane %v959, 7
      %v962 = vshll.u32 %v871, 16
      %v964 = vor.u32 %v961, %v962
      %v965 = vsel %vm898, %v957, %v964
      %v966 = vrot.slane %v961, 4
      %v968 = vshrl.u32 %v872, 16
      %v970 = vrot.slane %v968, 7
      %v971 = vshll.u32 %v872, 16
      %v973 = vor.u32 %v970, %v971
      %v974 = vrot.slane %v970, 4
      %v976 = vshrl.u32 %v873, 16
      %v978 = vrot.slane %v976, 7
      %v979 = vshll.u32 %v873, 16
      %v981 = vor.u32 %v978, %v979
      %v982 = vsel %vm898, %v974, %v981
      %v983 = vrot.slane %v978, 4
      %v985 = vshrl.u32 %v874, 16
      %v987 = vrot.slane %v985, 7
      %v988 = vshll.u32 %v874, 16
      %v990 = vor.u32 %v987, %v988
      %v991 = vrot.slane %v987, 4
      %v993 = vshrl.u32 %v875, 16
      %v995 = vrot.slane %v993, 7
      %v996 = vshll.u32 %v875, 16
      %v998 = vor.u32 %v995, %v996
      %v999 = vsel %vm898, %v991, %v998
      %v1000 = vrot.slane %v995, 4
      %v1002 = vshrl.u32 %v876, 16
      %v1004 = vrot.slane %v1002, 7
      %v1005 = vshll.u32 %v876, 16
      %v1007 = vor.u32 %v1004, %v1005
      %v1008 = vrot.slane %v1004, 4
      %v1010 = vshrl.u32 %v877, 16
      %v1012 = vrot.slane %v1010, 7
      %v1013 = vshll.u32 %v877, 16
      %v1015 = vor.u32 %v1012, %v1013
      %v1016 = vsel %vm898, %v1008, %v1015
      %v1017 = vrot.slane %v1012, 4
      %v1019 = vshrl.u32 %v878, 16
      %v1021 = vrot.slane %v1019, 7
      %v1022 = vshll.u32 %v878, 16
      %v1024 = vor.u32 %v1021, %v1022
      %v1025 = vrot.slane %v1021, 4
      %v1027 = vshrl.u32 %v879, 16
      %v1029 = vrot.slane %v1027, 7
      %v1030 = vshll.u32 %v879, 16
      %v1032 = vor.u32 %v1029, %v1030
      %v1033 = vsel %vm898, %v1025, %v1032
      %v1034 = vrot.slane %v1029, 4
      %v1036 = vshrl.u32 %v880, 16
      %v1038 = vrot.slane %v1036, 7
      %v1039 = vshll.u32 %v880, 16
      %v1041 = vor.u32 %v1038, %v1039
      %v1042 = vrot.slane %v1038, 4
      %v1044 = vshrl.u32 %v881, 16
      %v1046 = vrot.slane %v1044, 7
      %v1047 = vshll.u32 %v881, 16
      %v1049 = vor.u32 %v1046, %v1047
      %v1050 = vsel %vm898, %v1042, %v1049
      %v1051 = vrot.slane %v1046, 4
      %v1053 = vshrl.u32 %v882, 16
      %v1055 = vrot.slane %v1053, 7
      %v1056 = vshll.u32 %v882, 16
      %v1058 = vor.u32 %v1055, %v1056
      %v1059 = vrot.slane %v1055, 4
      %v1061 = vshrl.u32 %v883, 16
      %v1063 = vrot.slane %v1061, 7
      %v1064 = vshll.u32 %v883, 16
      %v1066 = vor.u32 %v1063, %v1064
      %v1067 = vsel %vm898, %v1059, %v1066
      %v1068 = vrot.slane %v1063, 4
      %v1070 = vshrl.u32 %v884, 16
      %v1072 = vrot.slane %v1070, 7
      %v1073 = vshll.u32 %v884, 16
      %v1075 = vor.u32 %v1072, %v1073
      %v1076 = vrot.slane %v1072, 4
      %v1078 = vshrl.u32 %v885, 16
      %v1080 = vrot.slane %v1078, 7
      %v1081 = vshll.u32 %v885, 16
      %v1083 = vor.u32 %v1080, %v1081
      %v1084 = vsel %vm898, %v1076, %v1083
      %v1085 = vrot.slane %v1080, 4
      %v1087 = vshrl.u32 %v886, 16
      %v1089 = vrot.slane %v1087, 7
      %v1090 = vshll.u32 %v886, 16
      %v1092 = vor.u32 %v1089, %v1090
      %v1093 = vrot.slane %v1089, 4
      %v1095 = vshrl.u32 %v887, 16
      %v1097 = vrot.slane %v1095, 7
      %v1098 = vshll.u32 %v887, 16
      %v1100 = vor.u32 %v1097, %v1098
      %v1101 = vsel %vm898, %v1093, %v1100
      %v1102 = vrot.slane %v1097, 4
      %v1104 = vshrl.u32 %v888, 16
      %v1106 = vrot.slane %v1104, 7
      %v1107 = vshll.u32 %v888, 16
      %v1109 = vor.u32 %v1106, %v1107
      %v1110 = vrot.slane %v1106, 4
      %v1112 = vshrl.u32 %v889, 16
      %v1114 = vrot.slane %v1112, 7
      %v1115 = vshll.u32 %v889, 16
      %v1117 = vor.u32 %v1114, %v1115
      %v1118 = vsel %vm898, %v1110, %v1117
      %v1119 = vrot.slane %v1114, 4
      %v1121 = vshrl.u32 %v890, 16
      %v1123 = vrot.slane %v1121, 7
      %v1124 = vshll.u32 %v890, 16
      %v1126 = vor.u32 %v1123, %v1124
      %v1127 = vrot.slane %v1123, 4
      %v1129 = vshrl.u32 %v891, 16
      %v1131 = vrot.slane %v1129, 7
      %v1132 = vshll.u32 %v891, 16
      %v1134 = vor.u32 %v1131, %v1132
      %v1135 = vsel %vm898, %v1127, %v1134
      %v1136 = vrot.slane %v1131, 4
      %v1138 = vshrl.u32 %v892, 16
      %v1140 = vrot.slane %v1138, 7
      %v1141 = vshll.u32 %v892, 16
      %v1143 = vor.u32 %v1140, %v1141
      %v1144 = vrot.slane %v1140, 4
      %v1146 = vshrl.u32 %v893, 16
      %v1148 = vrot.slane %v1146, 7
      %v1149 = vshll.u32 %v893, 16
      %v1151 = vor.u32 %v1148, %v1149
      %v1152 = vsel %vm898, %v1144, %v1151
      %v1153 = vrot.slane %v1148, 4
      %v1155 = vshrl.u32 %v894, 16
      %v1157 = vrot.slane %v1155, 7
      %v1158 = vshll.u32 %v894, 16
      %v1160 = vor.u32 %v1157, %v1158
      %v1161 = vrot.slane %v1157, 4
      %v1163 = vshrl.u32 %v895, 16
      %v1165 = vrot.slane %v1163, 7
      %v1166 = vshll.u32 %v895, 16
      %v1168 = vor.u32 %v1165, %v1166
      %v1169 = vsel %vm898, %v1161, %v1168
      %v1170 = vrot.slane %v1165, 4
      %s1219 = scalar_lea.vmem [#allocation2], 12
      %vm1220 = vcmask 1043456
      %vm1221 = vsmask.f32 7938
      %vm1222 = vmand %vm1220, %vm1221
      %v1223 = vld [vmem:[%s1219] sm:$0xf]
      %v1224 = vsel %vm1222, %v905, %v1223
      %1225 = vst [vmem:[%s1219] sm:$0xf] %v1224
      %1226 = vst [vmem:[%s1219 + $0x4] sm:$0xf] %v914
      %vm1227 = vcmask 1040384
      %vm1228 = vmand %vm1227, %vm896
      %v1229 = vld [vmem:[%s1219 + $0x8] sm:$0x1]
      %v1230 = vsel %vm1228, %v915, %v1229
      %1231 = vst [vmem:[%s1219 + $0x8] sm:$0x1] %v1230
      %v1232 = vld [vmem:[%s1219 + $0xc] sm:$0xf]
      %v1233 = vsel %vm1222, %v922, %v1232
      %1234 = vst [vmem:[%s1219 + $0xc] sm:$0xf] %v1233
      %1235 = vst [vmem:[%s1219 + $0x10] sm:$0xf] %v931
      %v1236 = vld [vmem:[%s1219 + $0x14] sm:$0x1]
      %v1237 = vsel %vm1228, %v932, %v1236
      %1238 = vst [vmem:[%s1219 + $0x14] sm:$0x1] %v1237
      %v1239 = vld [vmem:[%s1219 + $0x18] sm:$0xf]
      %v1240 = vsel %vm1222, %v939, %v1239
      %1241 = vst [vmem:[%s1219 + $0x18] sm:$0xf] %v1240
      %1242 = vst [vmem:[%s1219 + $0x1c] sm:$0xf] %v948
      %v1243 = vld [vmem:[%s1219 + $0x20] sm:$0x1]
      %v1244 = vsel %vm1228, %v949, %v1243
      %1245 = vst [vmem:[%s1219 + $0x20] sm:$0x1] %v1244
      %v1246 = vld [vmem:[%s1219 + $0x24] sm:$0xf]
      %v1247 = vsel %vm1222, %v956, %v1246
      %1248 = vst [vmem:[%s1219 + $0x24] sm:$0xf] %v1247
      %1249 = vst [vmem:[%s1219 + $0x28] sm:$0xf] %v965
      %v1250 = vld [vmem:[%s1219 + $0x2c] sm:$0x1]
      %v1251 = vsel %vm1228, %v966, %v1250
      %1252 = vst [vmem:[%s1219 + $0x2c] sm:$0x1] %v1251
      %v1253 = vld [vmem:[%s1219 + $0x30] sm:$0xf]
      %v1254 = vsel %vm1222, %v973, %v1253
      %1255 = vst [vmem:[%s1219 + $0x30] sm:$0xf] %v1254
      %1256 = vst [vmem:[%s1219 + $0x34] sm:$0xf] %v982
      %v1257 = vld [vmem:[%s1219 + $0x38] sm:$0x1]
      %v1258 = vsel %vm1228, %v983, %v1257
      %1259 = vst [vmem:[%s1219 + $0x38] sm:$0x1] %v1258
      %v1260 = vld [vmem:[%s1219 + $0x3c] sm:$0xf]
      %v1261 = vsel %vm1222, %v990, %v1260
      %1262 = vst [vmem:[%s1219 + $0x3c] sm:$0xf] %v1261
      %1263 = vst [vmem:[%s1219 + $0x40] sm:$0xf] %v999
      %v1264 = vld [vmem:[%s1219 + $0x44] sm:$0x1]
      %v1265 = vsel %vm1228, %v1000, %v1264
      %1266 = vst [vmem:[%s1219 + $0x44] sm:$0x1] %v1265
      %v1267 = vld [vmem:[%s1219 + $0x48] sm:$0xf]
      %v1268 = vsel %vm1222, %v1007, %v1267
      %1269 = vst [vmem:[%s1219 + $0x48] sm:$0xf] %v1268
      %1270 = vst [vmem:[%s1219 + $0x4c] sm:$0xf] %v1016
      %v1271 = vld [vmem:[%s1219 + $0x50] sm:$0x1]
      %v1272 = vsel %vm1228, %v1017, %v1271
      %1273 = vst [vmem:[%s1219 + $0x50] sm:$0x1] %v1272
      %v1274 = vld [vmem:[%s1219 + $0x54] sm:$0xf]
      %v1275 = vsel %vm1222, %v1024, %v1274
      %1276 = vst [vmem:[%s1219 + $0x54] sm:$0xf] %v1275
      %1277 = vst [vmem:[%s1219 + $0x58] sm:$0xf] %v1033
      %v1278 = vld [vmem:[%s1219 + $0x5c] sm:$0x1]
      %v1279 = vsel %vm1228, %v1034, %v1278
      %1280 = vst [vmem:[%s1219 + $0x5c] sm:$0x1] %v1279
      %v1281 = vld [vmem:[%s1219 + $0x60] sm:$0xf]
      %v1282 = vsel %vm1222, %v1041, %v1281
      %1283 = vst [vmem:[%s1219 + $0x60] sm:$0xf] %v1282
      %1284 = vst [vmem:[%s1219 + $0x64] sm:$0xf] %v1050
      %v1285 = vld [vmem:[%s1219 + $0x68] sm:$0x1]
      %v1286 = vsel %vm1228, %v1051, %v1285
      %1287 = vst [vmem:[%s1219 + $0x68] sm:$0x1] %v1286
      %v1288 = vld [vmem:[%s1219 + $0x6c] sm:$0xf]
      %v1289 = vsel %vm1222, %v1058, %v1288
      %1290 = vst [vmem:[%s1219 + $0x6c] sm:$0xf] %v1289
      %1291 = vst [vmem:[%s1219 + $0x70] sm:$0xf] %v1067
      %v1292 = vld [vmem:[%s1219 + $0x74] sm:$0x1]
      %v1293 = vsel %vm1228, %v1068, %v1292
      %1294 = vst [vmem:[%s1219 + $0x74] sm:$0x1] %v1293
      %v1295 = vld [vmem:[%s1219 + $0x78] sm:$0xf]
      %v1296 = vsel %vm1222, %v1075, %v1295
      %1297 = vst [vmem:[%s1219 + $0x78] sm:$0xf] %v1296
      %1298 = vst [vmem:[%s1219 + $0x7c] sm:$0xf] %v1084
      %v1299 = vld [vmem:[%s1219 + $0x80] sm:$0x1]
      %v1300 = vsel %vm1228, %v1085, %v1299
      %1301 = vst [vmem:[%s1219 + $0x80] sm:$0x1] %v1300
      %v1302 = vld [vmem:[%s1219 + $0x84] sm:$0xf]
      %v1303 = vsel %vm1222, %v1092, %v1302
      %1304 = vst [vmem:[%s1219 + $0x84] sm:$0xf] %v1303
      %1305 = vst [vmem:[%s1219 + $0x88] sm:$0xf] %v1101
      %v1306 = vld [vmem:[%s1219 + $0x8c] sm:$0x1]
      %v1307 = vsel %vm1228, %v1102, %v1306
      %1308 = vst [vmem:[%s1219 + $0x8c] sm:$0x1] %v1307
      %v1309 = vld [vmem:[%s1219 + $0x90] sm:$0xf]
      %v1310 = vsel %vm1222, %v1109, %v1309
      %1311 = vst [vmem:[%s1219 + $0x90] sm:$0xf] %v1310
      %1312 = vst [vmem:[%s1219 + $0x94] sm:$0xf] %v1118
      %v1313 = vld [vmem:[%s1219 + $0x98] sm:$0x1]
      %v1314 = vsel %vm1228, %v1119, %v1313
      %1315 = vst [vmem:[%s1219 + $0x98] sm:$0x1] %v1314
      %v1316 = vld [vmem:[%s1219 + $0x9c] sm:$0xf]
      %v1317 = vsel %vm1222, %v1126, %v1316
      %1318 = vst [vmem:[%s1219 + $0x9c] sm:$0xf] %v1317
      %1319 = vst [vmem:[%s1219 + $0xa0] sm:$0xf] %v1135
      %v1320 = vld [vmem:[%s1219 + $0xa4] sm:$0x1]
      %v1321 = vsel %vm1228, %v1136, %v1320
      %1322 = vst [vmem:[%s1219 + $0xa4] sm:$0x1] %v1321
      %v1323 = vld [vmem:[%s1219 + $0xa8] sm:$0xf]
      %v1324 = vsel %vm1222, %v1143, %v1323
      %1325 = vst [vmem:[%s1219 + $0xa8] sm:$0xf] %v1324
      %1326 = vst [vmem:[%s1219 + $0xac] sm:$0xf] %v1152
      %v1327 = vld [vmem:[%s1219 + $0xb0] sm:$0x1]
      %v1328 = vsel %vm1228, %v1153, %v1327
      %1329 = vst [vmem:[%s1219 + $0xb0] sm:$0x1] %v1328
      %v1330 = vld [vmem:[%s1219 + $0xb4] sm:$0xf]
      %v1331 = vsel %vm1222, %v1160, %v1330
      %1332 = vst [vmem:[%s1219 + $0xb4] sm:$0xf] %v1331
      %1333 = vst [vmem:[%s1219 + $0xb8] sm:$0xf] %v1169
      %v1334 = vld [vmem:[%s1219 + $0xbc] sm:$0x1]
      %v1335 = vsel %vm1228, %v1170, %v1334
      %1336 = vst [vmem:[%s1219 + $0xbc] sm:$0x1] %v1335
      %v1337 = vld [vmem:[#allocation2] sm:$0xf]
      %v1338 = vld [vmem:[#allocation2 + $0x4] sm:$0xf]
      %v1339 = vld [vmem:[#allocation2 + $0xc] sm:$0xf]
      %v1340 = vld [vmem:[#allocation2 + $0x10] sm:$0xf]
      %v1341 = vld [vmem:[#allocation2 + $0x18] sm:$0xf]
      %v1342 = vld [vmem:[#allocation2 + $0x1c] sm:$0xf]
      %v1343 = vld [vmem:[#allocation2 + $0x24] sm:$0xf]
      %v1344 = vld [vmem:[#allocation2 + $0x28] sm:$0xf]
      %v1345 = vld [vmem:[#allocation2 + $0x30] sm:$0xf]
      %v1346 = vld [vmem:[#allocation2 + $0x34] sm:$0xf]
      %v1347 = vld [vmem:[#allocation2 + $0x3c] sm:$0xf]
      %v1348 = vld [vmem:[#allocation2 + $0x40] sm:$0xf]
      %v1349 = vld [vmem:[#allocation2 + $0x48] sm:$0xf]
      %v1350 = vld [vmem:[#allocation2 + $0x4c] sm:$0xf]
      %v1351 = vld [vmem:[#allocation2 + $0x54] sm:$0xf]
      %v1352 = vld [vmem:[#allocation2 + $0x58] sm:$0xf]
      %v1353 = vld [vmem:[#allocation2 + $0x60] sm:$0xf]
      %v1354 = vld [vmem:[#allocation2 + $0x64] sm:$0xf]
      %v1355 = vld [vmem:[#allocation2 + $0x6c] sm:$0xf]
      %v1356 = vld [vmem:[#allocation2 + $0x70] sm:$0xf]
      %v1357 = vld [vmem:[#allocation2 + $0x78] sm:$0xf]
      %v1358 = vld [vmem:[#allocation2 + $0x7c] sm:$0xf]
      %v1359 = vld [vmem:[#allocation2 + $0x84] sm:$0xf]
      %v1360 = vld [vmem:[#allocation2 + $0x88] sm:$0xf]
      %v1361 = vld [vmem:[#allocation2 + $0x90] sm:$0xf]
      %v1362 = vld [vmem:[#allocation2 + $0x94] sm:$0xf]
      %v1363 = vld [vmem:[#allocation2 + $0x9c] sm:$0xf]
      %v1364 = vld [vmem:[#allocation2 + $0xa0] sm:$0xf]
      %v1365 = vld [vmem:[#allocation2 + $0xa8] sm:$0xf]
      %v1366 = vld [vmem:[#allocation2 + $0xac] sm:$0xf]
      %v1367 = vld [vmem:[#allocation2 + $0xb4] sm:$0xf]
      %v1368 = vld [vmem:[#allocation2 + $0xb8] sm:$0xf]
      %v1369 = vld [vmem:[%s3] sm:$0xf]
      %v1370 = vld [vmem:[%s3 + $0x4] sm:$0xf]
      %v1371 = vld [vmem:[%s3 + $0x8] sm:$0xf]
      %v1372 = vld [vmem:[%s3 + $0xc] sm:$0xf]
      %v1373 = vld [vmem:[%s3 + $0x10] sm:$0xf]
      %v1374 = vld [vmem:[%s3 + $0x14] sm:$0xf]
      %v1375 = vld [vmem:[%s3 + $0x18] sm:$0xf]
      %v1376 = vld [vmem:[%s3 + $0x1c] sm:$0xf]
      %v1377 = vld [vmem:[%s3 + $0x20] sm:$0xf]
      %v1378 = vld [vmem:[%s3 + $0x24] sm:$0xf]
      %v1379 = vld [vmem:[%s3 + $0x28] sm:$0xf]
      %v1380 = vld [vmem:[%s3 + $0x2c] sm:$0xf]
      %v1381 = vld [vmem:[%s3 + $0x30] sm:$0xf]
      %v1382 = vld [vmem:[%s3 + $0x34] sm:$0xf]
      %v1383 = vld [vmem:[%s3 + $0x38] sm:$0xf]
      %v1384 = vld [vmem:[%s3 + $0x3c] sm:$0xf]
      %v1385 = vld [vmem:[#allocation2 + $0x8] sm:$0x1]
      %v1386 = vld [vmem:[#allocation2 + $0x14] sm:$0x1]
      %v1387 = vld [vmem:[#allocation2 + $0x20] sm:$0x1]
      %v1388 = vld [vmem:[#allocation2 + $0x2c] sm:$0x1]
      %v1389 = vld [vmem:[#allocation2 + $0x38] sm:$0x1]
      %v1390 = vld [vmem:[#allocation2 + $0x44] sm:$0x1]
      %v1391 = vld [vmem:[#allocation2 + $0x50] sm:$0x1]
      %v1392 = vld [vmem:[#allocation2 + $0x5c] sm:$0x1]
      %v1393 = vld [vmem:[#allocation2 + $0x68] sm:$0x1]
      %v1394 = vld [vmem:[#allocation2 + $0x74] sm:$0x1]
      %v1395 = vld [vmem:[#allocation2 + $0x80] sm:$0x1]
      %v1396 = vld [vmem:[#allocation2 + $0x8c] sm:$0x1]
      %v1397 = vld [vmem:[#allocation2 + $0x98] sm:$0x1]
      %v1398 = vld [vmem:[#allocation2 + $0xa4] sm:$0x1]
      %v1399 = vld [vmem:[#allocation2 + $0xb0] sm:$0x1]
      %v1400 = vld [vmem:[#allocation2 + $0xbc] sm:$0x1]
      %vm1401 = vsmask.f32 3328
      %vm1402 = vsmask.f32 7440
      %vm1403 = vmor %vm1401, %vm1402
      %v1405 = vshrl.u32 %v1337, 16
      %v1407 = vrot.slane %v1405, 4
      %v1408 = vshll.u32 %v1337, 16
      %v1410 = vrot.slane %v1408, 5
      %v1411 = vor.u32 %v1407, %v1410
      %v1412 = vrot.slane %v1411, 4
      %v1414 = vshll.u32 %v1338, 16
      %v1416 = vrot.slane %v1414, 5
      %v1417 = vsel %vm1403, %v1412, %v1416
      %v1418 = vshrl.u32 %v1338, 16
      %v1420 = vrot.slane %v1418, 4
      %v1421 = vor.u32 %v1420, %v1416
      %v1422 = vrot.slane %v1421, 4
      %v1424 = vshll.u32 %v1385, 16
      %v1426 = vrot.slane %v1424, 5
      %v1427 = vsel %vm1403, %v1422, %v1426
      %v1429 = vshrl.u32 %v1339, 16
      %v1431 = vrot.slane %v1429, 4
      %v1432 = vshll.u32 %v1339, 16
      %v1434 = vrot.slane %v1432, 5
      %v1435 = vor.u32 %v1431, %v1434
      %v1436 = vrot.slane %v1435, 4
      %v1438 = vshll.u32 %v1340, 16
      %v1440 = vrot.slane %v1438, 5
      %v1441 = vsel %vm1403, %v1436, %v1440
      %v1442 = vshrl.u32 %v1340, 16
      %v1444 = vrot.slane %v1442, 4
      %v1445 = vor.u32 %v1444, %v1440
      %v1446 = vrot.slane %v1445, 4
      %v1448 = vshll.u32 %v1386, 16
      %v1450 = vrot.slane %v1448, 5
      %v1451 = vsel %vm1403, %v1446, %v1450
      %v1453 = vshrl.u32 %v1341, 16
      %v1455 = vrot.slane %v1453, 4
      %v1456 = vshll.u32 %v1341, 16
      %v1458 = vrot.slane %v1456, 5
      %v1459 = vor.u32 %v1455, %v1458
      %v1460 = vrot.slane %v1459, 4
      %v1462 = vshll.u32 %v1342, 16
      %v1464 = vrot.slane %v1462, 5
      %v1465 = vsel %vm1403, %v1460, %v1464
      %v1466 = vshrl.u32 %v1342, 16
      %v1468 = vrot.slane %v1466, 4
      %v1469 = vor.u32 %v1468, %v1464
      %v1470 = vrot.slane %v1469, 4
      %v1472 = vshll.u32 %v1387, 16
      %v1474 = vrot.slane %v1472, 5
      %v1475 = vsel %vm1403, %v1470, %v1474
      %v1477 = vshrl.u32 %v1343, 16
      %v1479 = vrot.slane %v1477, 4
      %v1480 = vshll.u32 %v1343, 16
      %v1482 = vrot.slane %v1480, 5
      %v1483 = vor.u32 %v1479, %v1482
      %v1484 = vrot.slane %v1483, 4
      %v1486 = vshll.u32 %v1344, 16
      %v1488 = vrot.slane %v1486, 5
      %v1489 = vsel %vm1403, %v1484, %v1488
      %v1490 = vshrl.u32 %v1344, 16
      %v1492 = vrot.slane %v1490, 4
      %v1493 = vor.u32 %v1492, %v1488
      %v1494 = vrot.slane %v1493, 4
      %v1496 = vshll.u32 %v1388, 16
      %v1498 = vrot.slane %v1496, 5
      %v1499 = vsel %vm1403, %v1494, %v1498
      %v1501 = vshrl.u32 %v1345, 16
      %v1503 = vrot.slane %v1501, 4
      %v1504 = vshll.u32 %v1345, 16
      %v1506 = vrot.slane %v1504, 5
      %v1507 = vor.u32 %v1503, %v1506
      %v1508 = vrot.slane %v1507, 4
      %v1510 = vshll.u32 %v1346, 16
      %v1512 = vrot.slane %v1510, 5
      %v1513 = vsel %vm1403, %v1508, %v1512
      %v1514 = vshrl.u32 %v1346, 16
      %v1516 = vrot.slane %v1514, 4
      %v1517 = vor.u32 %v1516, %v1512
      %v1518 = vrot.slane %v1517, 4
      %v1520 = vshll.u32 %v1389, 16
      %v1522 = vrot.slane %v1520, 5
      %v1523 = vsel %vm1403, %v1518, %v1522
      %v1525 = vshrl.u32 %v1347, 16
      %v1527 = vrot.slane %v1525, 4
      %v1528 = vshll.u32 %v1347, 16
      %v1530 = vrot.slane %v1528, 5
      %v1531 = vor.u32 %v1527, %v1530
      %v1532 = vrot.slane %v1531, 4
      %v1534 = vshll.u32 %v1348, 16
      %v1536 = vrot.slane %v1534, 5
      %v1537 = vsel %vm1403, %v1532, %v1536
      %v1538 = vshrl.u32 %v1348, 16
      %v1540 = vrot.slane %v1538, 4
      %v1541 = vor.u32 %v1540, %v1536
      %v1542 = vrot.slane %v1541, 4
      %v1544 = vshll.u32 %v1390, 16
      %v1546 = vrot.slane %v1544, 5
      %v1547 = vsel %vm1403, %v1542, %v1546
      %v1549 = vshrl.u32 %v1349, 16
      %v1551 = vrot.slane %v1549, 4
      %v1552 = vshll.u32 %v1349, 16
      %v1554 = vrot.slane %v1552, 5
      %v1555 = vor.u32 %v1551, %v1554
      %v1556 = vrot.slane %v1555, 4
      %v1558 = vshll.u32 %v1350, 16
      %v1560 = vrot.slane %v1558, 5
      %v1561 = vsel %vm1403, %v1556, %v1560
      %v1562 = vshrl.u32 %v1350, 16
      %v1564 = vrot.slane %v1562, 4
      %v1565 = vor.u32 %v1564, %v1560
      %v1566 = vrot.slane %v1565, 4
      %v1568 = vshll.u32 %v1391, 16
      %v1570 = vrot.slane %v1568, 5
      %v1571 = vsel %vm1403, %v1566, %v1570
      %v1573 = vshrl.u32 %v1351, 16
      %v1575 = vrot.slane %v1573, 4
      %v1576 = vshll.u32 %v1351, 16
      %v1578 = vrot.slane %v1576, 5
      %v1579 = vor.u32 %v1575, %v1578
      %v1580 = vrot.slane %v1579, 4
      %v1582 = vshll.u32 %v1352, 16
      %v1584 = vrot.slane %v1582, 5
      %v1585 = vsel %vm1403, %v1580, %v1584
      %v1586 = vshrl.u32 %v1352, 16
      %v1588 = vrot.slane %v1586, 4
      %v1589 = vor.u32 %v1588, %v1584
      %v1590 = vrot.slane %v1589, 4
      %v1592 = vshll.u32 %v1392, 16
      %v1594 = vrot.slane %v1592, 5
      %v1595 = vsel %vm1403, %v1590, %v1594
      %v1597 = vshrl.u32 %v1353, 16
      %v1599 = vrot.slane %v1597, 4
      %v1600 = vshll.u32 %v1353, 16
      %v1602 = vrot.slane %v1600, 5
      %v1603 = vor.u32 %v1599, %v1602
      %v1604 = vrot.slane %v1603, 4
      %v1606 = vshll.u32 %v1354, 16
      %v1608 = vrot.slane %v1606, 5
      %v1609 = vsel %vm1403, %v1604, %v1608
      %v1610 = vshrl.u32 %v1354, 16
      %v1612 = vrot.slane %v1610, 4
      %v1613 = vor.u32 %v1612, %v1608
      %v1614 = vrot.slane %v1613, 4
      %v1616 = vshll.u32 %v1393, 16
      %v1618 = vrot.slane %v1616, 5
      %v1619 = vsel %vm1403, %v1614, %v1618
      %v1621 = vshrl.u32 %v1355, 16
      %v1623 = vrot.slane %v1621, 4
      %v1624 = vshll.u32 %v1355, 16
      %v1626 = vrot.slane %v1624, 5
      %v1627 = vor.u32 %v1623, %v1626
      %v1628 = vrot.slane %v1627, 4
      %v1630 = vshll.u32 %v1356, 16
      %v1632 = vrot.slane %v1630, 5
      %v1633 = vsel %vm1403, %v1628, %v1632
      %v1634 = vshrl.u32 %v1356, 16
      %v1636 = vrot.slane %v1634, 4
      %v1637 = vor.u32 %v1636, %v1632
      %v1638 = vrot.slane %v1637, 4
      %v1640 = vshll.u32 %v1394, 16
      %v1642 = vrot.slane %v1640, 5
      %v1643 = vsel %vm1403, %v1638, %v1642
      %v1645 = vshrl.u32 %v1357, 16
      %v1647 = vrot.slane %v1645, 4
      %v1648 = vshll.u32 %v1357, 16
      %v1650 = vrot.slane %v1648, 5
      %v1651 = vor.u32 %v1647, %v1650
      %v1652 = vrot.slane %v1651, 4
      %v1654 = vshll.u32 %v1358, 16
      %v1656 = vrot.slane %v1654, 5
      %v1657 = vsel %vm1403, %v1652, %v1656
      %v1658 = vshrl.u32 %v1358, 16
      %v1660 = vrot.slane %v1658, 4
      %v1661 = vor.u32 %v1660, %v1656
      %v1662 = vrot.slane %v1661, 4
      %v1664 = vshll.u32 %v1395, 16
      %v1666 = vrot.slane %v1664, 5
      %v1667 = vsel %vm1403, %v1662, %v1666
      %v1669 = vshrl.u32 %v1359, 16
      %v1671 = vrot.slane %v1669, 4
      %v1672 = vshll.u32 %v1359, 16
      %v1674 = vrot.slane %v1672, 5
      %v1675 = vor.u32 %v1671, %v1674
      %v1676 = vrot.slane %v1675, 4
      %v1678 = vshll.u32 %v1360, 16
      %v1680 = vrot.slane %v1678, 5
      %v1681 = vsel %vm1403, %v1676, %v1680
      %v1682 = vshrl.u32 %v1360, 16
      %v1684 = vrot.slane %v1682, 4
      %v1685 = vor.u32 %v1684, %v1680
      %v1686 = vrot.slane %v1685, 4
      %v1688 = vshll.u32 %v1396, 16
      %v1690 = vrot.slane %v1688, 5
      %v1691 = vsel %vm1403, %v1686, %v1690
      %v1693 = vshrl.u32 %v1361, 16
      %v1695 = vrot.slane %v1693, 4
      %v1696 = vshll.u32 %v1361, 16
      %v1698 = vrot.slane %v1696, 5
      %v1699 = vor.u32 %v1695, %v1698
      %v1700 = vrot.slane %v1699, 4
      %v1702 = vshll.u32 %v1362, 16
      %v1704 = vrot.slane %v1702, 5
      %v1705 = vsel %vm1403, %v1700, %v1704
      %v1706 = vshrl.u32 %v1362, 16
      %v1708 = vrot.slane %v1706, 4
      %v1709 = vor.u32 %v1708, %v1704
      %v1710 = vrot.slane %v1709, 4
      %v1712 = vshll.u32 %v1397, 16
      %v1714 = vrot.slane %v1712, 5
      %v1715 = vsel %vm1403, %v1710, %v1714
      %v1717 = vshrl.u32 %v1363, 16
      %v1719 = vrot.slane %v1717, 4
      %v1720 = vshll.u32 %v1363, 16
      %v1722 = vrot.slane %v1720, 5
      %v1723 = vor.u32 %v1719, %v1722
      %v1724 = vrot.slane %v1723, 4
      %v1726 = vshll.u32 %v1364, 16
      %v1728 = vrot.slane %v1726, 5
      %v1729 = vsel %vm1403, %v1724, %v1728
      %v1730 = vshrl.u32 %v1364, 16
      %v1732 = vrot.slane %v1730, 4
      %v1733 = vor.u32 %v1732, %v1728
      %v1734 = vrot.slane %v1733, 4
      %v1736 = vshll.u32 %v1398, 16
      %v1738 = vrot.slane %v1736, 5
      %v1739 = vsel %vm1403, %v1734, %v1738
      %v1741 = vshrl.u32 %v1365, 16
      %v1743 = vrot.slane %v1741, 4
      %v1744 = vshll.u32 %v1365, 16
      %v1746 = vrot.slane %v1744, 5
      %v1747 = vor.u32 %v1743, %v1746
      %v1748 = vrot.slane %v1747, 4
      %v1750 = vshll.u32 %v1366, 16
      %v1752 = vrot.slane %v1750, 5
      %v1753 = vsel %vm1403, %v1748, %v1752
      %v1754 = vshrl.u32 %v1366, 16
      %v1756 = vrot.slane %v1754, 4
      %v1757 = vor.u32 %v1756, %v1752
      %v1758 = vrot.slane %v1757, 4
      %v1760 = vshll.u32 %v1399, 16
      %v1762 = vrot.slane %v1760, 5
      %v1763 = vsel %vm1403, %v1758, %v1762
      %v1765 = vshrl.u32 %v1367, 16
      %v1767 = vrot.slane %v1765, 4
      %v1768 = vshll.u32 %v1367, 16
      %v1770 = vrot.slane %v1768, 5
      %v1771 = vor.u32 %v1767, %v1770
      %v1772 = vrot.slane %v1771, 4
      %v1774 = vshll.u32 %v1368, 16
      %v1776 = vrot.slane %v1774, 5
      %v1777 = vsel %vm1403, %v1772, %v1776
      %v1778 = vshrl.u32 %v1368, 16
      %v1780 = vrot.slane %v1778, 4
      %v1781 = vor.u32 %v1780, %v1776
      %v1782 = vrot.slane %v1781, 4
      %v1784 = vshll.u32 %v1400, 16
      %v1786 = vrot.slane %v1784, 5
      %v1787 = vsel %vm1403, %v1782, %v1786
      %v1788 = vld [vmem:[%s3 + $0x40] sm:$0xf]
      %v1789 = vld [vmem:[%s3 + $0x44] sm:$0xf]
      %v1790 = vld [vmem:[%s3 + $0x48] sm:$0xf]
      %v1791 = vld [vmem:[%s3 + $0x4c] sm:$0xf]
      %v1792 = vld [vmem:[%s3 + $0x50] sm:$0xf]
      %v1793 = vld [vmem:[%s3 + $0x54] sm:$0xf]
      %v1794 = vld [vmem:[%s3 + $0x58] sm:$0xf]
      %v1795 = vld [vmem:[%s3 + $0x5c] sm:$0xf]
      %v1796 = vld [vmem:[%s3 + $0x60] sm:$0xf]
      %v1797 = vld [vmem:[%s3 + $0x64] sm:$0xf]
      %v1798 = vld [vmem:[%s3 + $0x68] sm:$0xf]
      %v1799 = vld [vmem:[%s3 + $0x6c] sm:$0xf]
      %v1800 = vld [vmem:[%s3 + $0x70] sm:$0xf]
      %v1801 = vld [vmem:[%s3 + $0x74] sm:$0xf]
      %v1802 = vld [vmem:[%s3 + $0x78] sm:$0xf]
      %v1803 = vld [vmem:[%s3 + $0x7c] sm:$0xf]
      %v1804 = vunpack.c.l.b16 %v1417
      %v1805 = vunpack.c.l.b16 %v1427
      %v1806 = vunpack.c.l.b16 %v1441
      %v1807 = vunpack.c.l.b16 %v1451
      %v1808 = vunpack.c.l.b16 %v1465
      %v1809 = vunpack.c.l.b16 %v1475
      %v1810 = vunpack.c.l.b16 %v1489
      %v1811 = vunpack.c.l.b16 %v1499
      %v1812 = vunpack.c.l.b16 %v1513
      %v1813 = vunpack.c.l.b16 %v1523
      %v1814 = vunpack.c.l.b16 %v1537
      %v1815 = vunpack.c.l.b16 %v1547
      %v1816 = vunpack.c.l.b16 %v1561
      %v1817 = vunpack.c.l.b16 %v1571
      %v1818 = vunpack.c.l.b16 %v1585
      %v1819 = vunpack.c.l.b16 %v1595
      %v1820 = vunpack.c.l.b16 %v1609
      %v1821 = vunpack.c.l.b16 %v1619
      %v1822 = vunpack.c.l.b16 %v1633
      %v1823 = vunpack.c.l.b16 %v1643
      %v1824 = vunpack.c.l.b16 %v1657
      %v1825 = vunpack.c.l.b16 %v1667
      %v1826 = vunpack.c.l.b16 %v1681
      %v1827 = vunpack.c.l.b16 %v1691
      %v1828 = vunpack.c.l.b16 %v1705
      %v1829 = vunpack.c.l.b16 %v1715
      %v1830 = vunpack.c.l.b16 %v1729
      %v1831 = vunpack.c.l.b16 %v1739
      %v1832 = vunpack.c.l.b16 %v1753
      %v1833 = vunpack.c.l.b16 %v1763
      %v1834 = vunpack.c.l.b16 %v1777
      %v1835 = vunpack.c.l.b16 %v1787
      %v1836 = vpack.c.b16 %v1805, %v1804
      %v1837 = vpack.c.b16 %v1807, %v1806
      %v1838 = vpack.c.b16 %v1809, %v1808
      %v1839 = vpack.c.b16 %v1811, %v1810
      %v1840 = vpack.c.b16 %v1813, %v1812
      %v1841 = vpack.c.b16 %v1815, %v1814
      %v1842 = vpack.c.b16 %v1817, %v1816
      %v1843 = vpack.c.b16 %v1819, %v1818
      %v1844 = vpack.c.b16 %v1821, %v1820
      %v1845 = vpack.c.b16 %v1823, %v1822
      %v1846 = vpack.c.b16 %v1825, %v1824
      %v1847 = vpack.c.b16 %v1827, %v1826
      %v1848 = vpack.c.b16 %v1829, %v1828
      %v1849 = vpack.c.b16 %v1831, %v1830
      %v1850 = vpack.c.b16 %v1833, %v1832
      %v1851 = vpack.c.b16 %v1835, %v1834
      %v1884 = vunpack.c.l.b16 %v1788
      %v1885 = vunpack.c.l.b16 %v1789
      %v1886 = vunpack.c.l.b16 %v1790
      %v1887 = vunpack.c.l.b16 %v1791
      %v1888 = vunpack.c.l.b16 %v1792
      %v1889 = vunpack.c.l.b16 %v1793
      %v1890 = vunpack.c.l.b16 %v1794
      %v1891 = vunpack.c.l.b16 %v1795
      %v1892 = vunpack.c.l.b16 %v1796
      %v1893 = vunpack.c.l.b16 %v1797
      %v1894 = vunpack.c.l.b16 %v1798
      %v1895 = vunpack.c.l.b16 %v1799
      %v1896 = vunpack.c.l.b16 %v1800
      %v1897 = vunpack.c.l.b16 %v1801
      %v1898 = vunpack.c.l.b16 %v1802
      %v1899 = vunpack.c.l.b16 %v1803
      %v1900 = vpack.c.b16 %v1885, %v1884
      %v1901 = vpack.c.b16 %v1887, %v1886
      %v1902 = vpack.c.b16 %v1889, %v1888
      %v1903 = vpack.c.b16 %v1891, %v1890
      %v1904 = vpack.c.b16 %v1893, %v1892
      %v1905 = vpack.c.b16 %v1895, %v1894
      %v1906 = vpack.c.b16 %v1897, %v1896
      %v1907 = vpack.c.b16 %v1899, %v1898
      %1916 = vmatprep.subr.bf16.mxu0 0
      %1917 = vmatpush1.bf16.msra.mxu0 %v1900
      %1918 = vmatprep.subr.bf16.mxu0 0
      %1919 = vmatpush1.bf16.msra.mxu0 %v1901
      %1920 = vmatprep.subr.bf16.mxu0 0
      %1921 = vmatpush1.bf16.msra.mxu0 %v1902
      %1922 = vmatprep.subr.bf16.mxu0 0
      %1923 = vmatpush1.bf16.msra.mxu0 %v1903
      %1924 = vmatprep.subr.bf16.mxu0 0
      %1925 = vmatpush1.bf16.msra.mxu0 %v1904
      %1926 = vmatprep.subr.bf16.mxu0 0
      %1927 = vmatpush1.bf16.msra.mxu0 %v1905
      %1928 = vmatprep.subr.bf16.mxu0 0
      %1929 = vmatpush1.bf16.msra.mxu0 %v1906
      %1930 = vmatprep.subr.bf16.mxu0 0
      %1931 = vmatpush1.bf16.msra.mxu0 %v1907
      %1932 = vmatprep.subr.bf16.mxu0 0
      %1933 = vmatpush1.bf16.msra.mxu0 0
      %1934 = vmatprep.subr.bf16.mxu0 0
      %1935 = vmatpush1.bf16.msra.mxu0 0
      %1936 = vmatprep.subr.bf16.mxu0 0
      %1937 = vmatpush1.bf16.msra.mxu0 0
      %1938 = vmatprep.subr.bf16.mxu0 0
      %1939 = vmatpush1.bf16.msra.mxu0 0
      %1940 = vmatprep.subr.bf16.mxu0 0
      %1941 = vmatpush1.bf16.msra.mxu0 0
      %1942 = vmatprep.subr.bf16.mxu0 0
      %1943 = vmatpush1.bf16.msra.mxu0 0
      %1944 = vmatprep.subr.bf16.mxu0 0
      %1945 = vmatpush1.bf16.msra.mxu0 0
      %1946 = vmatprep.subr.bf16.mxu0 0
      %1947 = vmatpush1.bf16.msra.mxu0 0
      %1948 = vmatprep.mubr.bf16.mxu0 0
      %1949 = vmatmul.mubr.bf16.gmra.mrb[0].mxu0 %v1836
      %v1950 = vpop.f32.mrb[0].mxu0
      %v1951 = vadd.f32 0.0, %v1950
      %v1952 = vpop.f32.mrb[0].mxu0
      %v1953 = vpop.f32.mrb[0].mxu0
      %v1954 = vadd.f32 0.0, %v1953
      %v1955 = vpop.f32.mrb[0].mxu0
      %1956 = vmatprep.mubr.bf16.mxu0 0
      %1957 = vmatmul.mubr.bf16.gmra.mrb[0].mxu0 %v1837
      %v1958 = vpop.f32.mrb[0].mxu0
      %v1959 = vadd.f32 0.0, %v1958
      %v1960 = vpop.f32.mrb[0].mxu0
      %v1961 = vpop.f32.mrb[0].mxu0
      %v1962 = vadd.f32 0.0, %v1961
      %v1963 = vpop.f32.mrb[0].mxu0
      %1964 = vmatprep.mubr.bf16.mxu0 0
      %1965 = vmatmul.mubr.bf16.gmra.mrb[0].mxu0 %v1838
      %v1966 = vpop.f32.mrb[0].mxu0
      %v1967 = vadd.f32 0.0, %v1966
      %v1968 = vpop.f32.mrb[0].mxu0
      %v1969 = vpop.f32.mrb[0].mxu0
      %v1970 = vadd.f32 0.0, %v1969
      %v1971 = vpop.f32.mrb[0].mxu0
      %1972 = vmatprep.mubr.bf16.mxu0 0
      %1973 = vmatmul.mubr.bf16.gmra.mrb[0].mxu0 %v1839
      %v1974 = vpop.f32.mrb[0].mxu0
      %v1975 = vadd.f32 0.0, %v1974
      %v1976 = vpop.f32.mrb[0].mxu0
      %v1977 = vpop.f32.mrb[0].mxu0
      %v1978 = vadd.f32 0.0, %v1977
      %v1979 = vpop.f32.mrb[0].mxu0
      %1980 = vmatprep.mubr.bf16.mxu0 0
      %1981 = vmatmul.mubr.bf16.gmra.mrb[0].mxu0 %v1840
      %v1982 = vpop.f32.mrb[0].mxu0
      %v1983 = vadd.f32 0.0, %v1982
      %v1984 = vpop.f32.mrb[0].mxu0
      %v1985 = vpop.f32.mrb[0].mxu0
      %v1986 = vadd.f32 0.0, %v1985
      %v1987 = vpop.f32.mrb[0].mxu0
      %1988 = vmatprep.mubr.bf16.mxu0 0
      %1989 = vmatmul.mubr.bf16.gmra.mrb[0].mxu0 %v1841
      %v1990 = vpop.f32.mrb[0].mxu0
      %v1991 = vadd.f32 0.0, %v1990
      %v1992 = vpop.f32.mrb[0].mxu0
      %v1993 = vpop.f32.mrb[0].mxu0
      %v1994 = vadd.f32 0.0, %v1993
      %v1995 = vpop.f32.mrb[0].mxu0
      %1996 = vmatprep.mubr.bf16.mxu0 0
      %1997 = vmatmul.mubr.bf16.gmra.mrb[0].mxu0 %v1842
      %v1998 = vpop.f32.mrb[0].mxu0
      %v1999 = vadd.f32 0.0, %v1998
      %v2000 = vpop.f32.mrb[0].mxu0
      %v2001 = vpop.f32.mrb[0].mxu0
      %v2002 = vadd.f32 0.0, %v2001
      %v2003 = vpop.f32.mrb[0].mxu0
      %2004 = vmatprep.mubr.bf16.mxu0 0
      %2005 = vmatmul.mubr.bf16.gmra.mrb[0].mxu0 %v1843
      %v2006 = vpop.f32.mrb[0].mxu0
      %v2007 = vadd.f32 0.0, %v2006
      %v2008 = vpop.f32.mrb[0].mxu0
      %v2009 = vpop.f32.mrb[0].mxu0
      %v2010 = vadd.f32 0.0, %v2009
      %v2011 = vpop.f32.mrb[0].mxu0
      %2012 = vmatprep.mubr.bf16.mxu0 0
      %2013 = vmatmul.mubr.bf16.gmra.mrb[0].mxu0 %v1844
      %v2014 = vpop.f32.mrb[0].mxu0
      %v2015 = vadd.f32 0.0, %v2014
      %v2016 = vpop.f32.mrb[0].mxu0
      %v2017 = vpop.f32.mrb[0].mxu0
      %v2018 = vadd.f32 0.0, %v2017
      %v2019 = vpop.f32.mrb[0].mxu0
      %2020 = vmatprep.mubr.bf16.mxu0 0
      %2021 = vmatmul.mubr.bf16.gmra.mrb[0].mxu0 %v1845
      %v2022 = vpop.f32.mrb[0].mxu0
      %v2023 = vadd.f32 0.0, %v2022
      %v2024 = vpop.f32.mrb[0].mxu0
      %v2025 = vpop.f32.mrb[0].mxu0
      %v2026 = vadd.f32 0.0, %v2025
      %v2027 = vpop.f32.mrb[0].mxu0
      %2028 = vmatprep.mubr.bf16.mxu0 0
      %2029 = vmatmul.mubr.bf16.gmra.mrb[0].mxu0 %v1846
      %v2030 = vpop.f32.mrb[0].mxu0
      %v2031 = vadd.f32 0.0, %v2030
      %v2032 = vpop.f32.mrb[0].mxu0
      %v2033 = vpop.f32.mrb[0].mxu0
      %v2034 = vadd.f32 0.0, %v2033
      %v2035 = vpop.f32.mrb[0].mxu0
      %2036 = vmatprep.mubr.bf16.mxu0 0
      %2037 = vmatmul.mubr.bf16.gmra.mrb[0].mxu0 %v1847
      %v2038 = vpop.f32.mrb[0].mxu0
      %v2039 = vadd.f32 0.0, %v2038
      %v2040 = vpop.f32.mrb[0].mxu0
      %v2041 = vpop.f32.mrb[0].mxu0
      %v2042 = vadd.f32 0.0, %v2041
      %v2043 = vpop.f32.mrb[0].mxu0
      %2044 = vmatprep.mubr.bf16.mxu0 0
      %2045 = vmatmul.mubr.bf16.gmra.mrb[0].mxu0 %v1848
      %v2046 = vpop.f32.mrb[0].mxu0
      %v2047 = vadd.f32 0.0, %v2046
      %v2048 = vpop.f32.mrb[0].mxu0
      %v2049 = vpop.f32.mrb[0].mxu0
      %v2050 = vadd.f32 0.0, %v2049
      %v2051 = vpop.f32.mrb[0].mxu0
      %2052 = vmatprep.mubr.bf16.mxu0 0
      %2053 = vmatmul.mubr.bf16.gmra.mrb[0].mxu0 %v1849
      %v2054 = vpop.f32.mrb[0].mxu0
      %v2055 = vadd.f32 0.0, %v2054
      %v2056 = vpop.f32.mrb[0].mxu0
      %v2057 = vpop.f32.mrb[0].mxu0
      %v2058 = vadd.f32 0.0, %v2057
      %v2059 = vpop.f32.mrb[0].mxu0
      %2060 = vmatprep.mubr.bf16.mxu0 0
      %2061 = vmatmul.mubr.bf16.gmra.mrb[0].mxu0 %v1850
      %v2062 = vpop.f32.mrb[0].mxu0
      %v2063 = vadd.f32 0.0, %v2062
      %v2064 = vpop.f32.mrb[0].mxu0
      %v2065 = vpop.f32.mrb[0].mxu0
      %v2066 = vadd.f32 0.0, %v2065
      %v2067 = vpop.f32.mrb[0].mxu0
      %2068 = vmatprep.mubr.bf16.mxu0 0
      %2069 = vmatmul.mubr.bf16.gmra.mrb[0].mxu0 %v1851
      %v2070 = vpop.f32.mrb[0].mxu0
      %v2071 = vadd.f32 0.0, %v2070
      %v2072 = vpop.f32.mrb[0].mxu0
      %v2073 = vpop.f32.mrb[0].mxu0
      %v2074 = vadd.f32 0.0, %v2073
      %v2075 = vpop.f32.mrb[0].mxu0
      %2076 = vdwg.mxu0
      %v2109 = vunpack.c.l.b16 %v1337
      %v2110 = vunpack.c.l.b16 %v1338
      %v2111 = vunpack.c.l.b16 %v1339
      %v2112 = vunpack.c.l.b16 %v1340
      %v2113 = vunpack.c.l.b16 %v1341
      %v2114 = vunpack.c.l.b16 %v1342
      %v2115 = vunpack.c.l.b16 %v1343
      %v2116 = vunpack.c.l.b16 %v1344
      %v2117 = vunpack.c.l.b16 %v1345
      %v2118 = vunpack.c.l.b16 %v1346
      %v2119 = vunpack.c.l.b16 %v1347
      %v2120 = vunpack.c.l.b16 %v1348
      %v2121 = vunpack.c.l.b16 %v1349
      %v2122 = vunpack.c.l.b16 %v1350
      %v2123 = vunpack.c.l.b16 %v1351
      %v2124 = vunpack.c.l.b16 %v1352
      %v2125 = vunpack.c.l.b16 %v1353
      %v2126 = vunpack.c.l.b16 %v1354
      %v2127 = vunpack.c.l.b16 %v1355
      %v2128 = vunpack.c.l.b16 %v1356
      %v2129 = vunpack.c.l.b16 %v1357
      %v2130 = vunpack.c.l.b16 %v1358
      %v2131 = vunpack.c.l.b16 %v1359
      %v2132 = vunpack.c.l.b16 %v1360
      %v2133 = vunpack.c.l.b16 %v1361
      %v2134 = vunpack.c.l.b16 %v1362
      %v2135 = vunpack.c.l.b16 %v1363
      %v2136 = vunpack.c.l.b16 %v1364
      %v2137 = vunpack.c.l.b16 %v1365
      %v2138 = vunpack.c.l.b16 %v1366
      %v2139 = vunpack.c.l.b16 %v1367
      %v2140 = vunpack.c.l.b16 %v1368
      %v2141 = vpack.c.b16 %v2110, %v2109
      %v2142 = vpack.c.b16 %v2112, %v2111
      %v2143 = vpack.c.b16 %v2114, %v2113
      %v2144 = vpack.c.b16 %v2116, %v2115
      %v2145 = vpack.c.b16 %v2118, %v2117
      %v2146 = vpack.c.b16 %v2120, %v2119
      %v2147 = vpack.c.b16 %v2122, %v2121
      %v2148 = vpack.c.b16 %v2124, %v2123
      %v2149 = vpack.c.b16 %v2126, %v2125
      %v2150 = vpack.c.b16 %v2128, %v2127
      %v2151 = vpack.c.b16 %v2130, %v2129
      %v2152 = vpack.c.b16 %v2132, %v2131
      %v2153 = vpack.c.b16 %v2134, %v2133
      %v2154 = vpack.c.b16 %v2136, %v2135
      %v2155 = vpack.c.b16 %v2138, %v2137
      %v2156 = vpack.c.b16 %v2140, %v2139
      %v2189 = vunpack.c.l.b16 %v1369
      %v2190 = vunpack.c.l.b16 %v1370
      %v2191 = vunpack.c.l.b16 %v1371
      %v2192 = vunpack.c.l.b16 %v1372
      %v2193 = vunpack.c.l.b16 %v1373
      %v2194 = vunpack.c.l.b16 %v1374
      %v2195 = vunpack.c.l.b16 %v1375
      %v2196 = vunpack.c.l.b16 %v1376
      %v2197 = vunpack.c.l.b16 %v1377
      %v2198 = vunpack.c.l.b16 %v1378
      %v2199 = vunpack.c.l.b16 %v1379
      %v2200 = vunpack.c.l.b16 %v1380
      %v2201 = vunpack.c.l.b16 %v1381
      %v2202 = vunpack.c.l.b16 %v1382
      %v2203 = vunpack.c.l.b16 %v1383
      %v2204 = vunpack.c.l.b16 %v1384
      %v2205 = vpack.c.b16 %v2190, %v2189
      %v2206 = vpack.c.b16 %v2192, %v2191
      %v2207 = vpack.c.b16 %v2194, %v2193
      %v2208 = vpack.c.b16 %v2196, %v2195
      %v2209 = vpack.c.b16 %v2198, %v2197
      %v2210 = vpack.c.b16 %v2200, %v2199
      %v2211 = vpack.c.b16 %v2202, %v2201
      %v2212 = vpack.c.b16 %v2204, %v2203
      %2221 = vmatprep.subr.bf16.mxu0 0
      %2222 = vmatpush1.bf16.msra.mxu0 %v2205
      %2223 = vmatprep.subr.bf16.mxu0 0
      %2224 = vmatpush1.bf16.msra.mxu0 %v2206
      %2225 = vmatprep.subr.bf16.mxu0 0
      %2226 = vmatpush1.bf16.msra.mxu0 %v2207
      %2227 = vmatprep.subr.bf16.mxu0 0
      %2228 = vmatpush1.bf16.msra.mxu0 %v2208
      %2229 = vmatprep.subr.bf16.mxu0 0
      %2230 = vmatpush1.bf16.msra.mxu0 %v2209
      %2231 = vmatprep.subr.bf16.mxu0 0
      %2232 = vmatpush1.bf16.msra.mxu0 %v2210
      %2233 = vmatprep.subr.bf16.mxu0 0
      %2234 = vmatpush1.bf16.msra.mxu0 %v2211
      %2235 = vmatprep.subr.bf16.mxu0 0
      %2236 = vmatpush1.bf16.msra.mxu0 %v2212
      %2237 = vmatprep.subr.bf16.mxu0 0
      %2238 = vmatpush1.bf16.msra.mxu0 0
      %2239 = vmatprep.subr.bf16.mxu0 0
      %2240 = vmatpush1.bf16.msra.mxu0 0
      %2241 = vmatprep.subr.bf16.mxu0 0
      %2242 = vmatpush1.bf16.msra.mxu0 0
      %2243 = vmatprep.subr.bf16.mxu0 0
      %2244 = vmatpush1.bf16.msra.mxu0 0
      %2245 = vmatprep.subr.bf16.mxu0 0
      %2246 = vmatpush1.bf16.msra.mxu0 0
      %2247 = vmatprep.subr.bf16.mxu0 0
      %2248 = vmatpush1.bf16.msra.mxu0 0
      %2249 = vmatprep.subr.bf16.mxu0 0
      %2250 = vmatpush1.bf16.msra.mxu0 0
      %2251 = vmatprep.subr.bf16.mxu0 0
      %2252 = vmatpush1.bf16.msra.mxu0 0
      %2253 = vmatprep.mubr.bf16.mxu0 0
      %2254 = vmatmul.mubr.bf16.gmra.mrb[0].mxu0 %v2141
      %v2255 = vpop.f32.mrb[0].mxu0
      %v2256 = vadd.f32 %v1951, %v2255
      %v2257 = vpop.f32.mrb[0].mxu0
      %v2258 = vpop.f32.mrb[0].mxu0
      %v2259 = vadd.f32 %v1954, %v2258
      %v2260 = vpop.f32.mrb[0].mxu0
      %2261 = vmatprep.mubr.bf16.mxu0 0
      %2262 = vmatmul.mubr.bf16.gmra.mrb[0].mxu0 %v2142
      %v2263 = vpop.f32.mrb[0].mxu0
      %v2264 = vadd.f32 %v1959, %v2263
      %v2265 = vpop.f32.mrb[0].mxu0
      %v2266 = vpop.f32.mrb[0].mxu0
      %v2267 = vadd.f32 %v1962, %v2266
      %v2268 = vpop.f32.mrb[0].mxu0
      %2269 = vmatprep.mubr.bf16.mxu0 0
      %2270 = vmatmul.mubr.bf16.gmra.mrb[0].mxu0 %v2143
      %v2271 = vpop.f32.mrb[0].mxu0
      %v2272 = vadd.f32 %v1967, %v2271
      %v2273 = vpop.f32.mrb[0].mxu0
      %v2274 = vpop.f32.mrb[0].mxu0
      %v2275 = vadd.f32 %v1970, %v2274
      %v2276 = vpop.f32.mrb[0].mxu0
      %2277 = vmatprep.mubr.bf16.mxu0 0
      %2278 = vmatmul.mubr.bf16.gmra.mrb[0].mxu0 %v2144
      %v2279 = vpop.f32.mrb[0].mxu0
      %v2280 = vadd.f32 %v1975, %v2279
      %v2281 = vpop.f32.mrb[0].mxu0
      %v2282 = vpop.f32.mrb[0].mxu0
      %v2283 = vadd.f32 %v1978, %v2282
      %v2284 = vpop.f32.mrb[0].mxu0
      %2285 = vmatprep.mubr.bf16.mxu0 0
      %2286 = vmatmul.mubr.bf16.gmra.mrb[0].mxu0 %v2145
      %v2287 = vpop.f32.mrb[0].mxu0
      %v2288 = vadd.f32 %v1983, %v2287
      %v2289 = vpop.f32.mrb[0].mxu0
      %v2290 = vpop.f32.mrb[0].mxu0
      %v2291 = vadd.f32 %v1986, %v2290
      %v2292 = vpop.f32.mrb[0].mxu0
      %2293 = vmatprep.mubr.bf16.mxu0 0
      %2294 = vmatmul.mubr.bf16.gmra.mrb[0].mxu0 %v2146
      %v2295 = vpop.f32.mrb[0].mxu0
      %v2296 = vadd.f32 %v1991, %v2295
      %v2297 = vpop.f32.mrb[0].mxu0
      %v2298 = vpop.f32.mrb[0].mxu0
      %v2299 = vadd.f32 %v1994, %v2298
      %v2300 = vpop.f32.mrb[0].mxu0
      %2301 = vmatprep.mubr.bf16.mxu0 0
      %2302 = vmatmul.mubr.bf16.gmra.mrb[0].mxu0 %v2147
      %v2303 = vpop.f32.mrb[0].mxu0
      %v2304 = vadd.f32 %v1999, %v2303
      %v2305 = vpop.f32.mrb[0].mxu0
      %v2306 = vpop.f32.mrb[0].mxu0
      %v2307 = vadd.f32 %v2002, %v2306
      %v2308 = vpop.f32.mrb[0].mxu0
      %2309 = vmatprep.mubr.bf16.mxu0 0
      %2310 = vmatmul.mubr.bf16.gmra.mrb[0].mxu0 %v2148
      %v2311 = vpop.f32.mrb[0].mxu0
      %v2312 = vadd.f32 %v2007, %v2311
      %v2313 = vpop.f32.mrb[0].mxu0
      %v2314 = vpop.f32.mrb[0].mxu0
      %v2315 = vadd.f32 %v2010, %v2314
      %v2316 = vpop.f32.mrb[0].mxu0
      %2317 = vmatprep.mubr.bf16.mxu0 0
      %2318 = vmatmul.mubr.bf16.gmra.mrb[0].mxu0 %v2149
      %v2319 = vpop.f32.mrb[0].mxu0
      %v2320 = vadd.f32 %v2015, %v2319
      %v2321 = vpop.f32.mrb[0].mxu0
      %v2322 = vpop.f32.mrb[0].mxu0
      %v2323 = vadd.f32 %v2018, %v2322
      %v2324 = vpop.f32.mrb[0].mxu0
      %2325 = vmatprep.mubr.bf16.mxu0 0
      %2326 = vmatmul.mubr.bf16.gmra.mrb[0].mxu0 %v2150
      %v2327 = vpop.f32.mrb[0].mxu0
      %v2328 = vadd.f32 %v2023, %v2327
      %v2329 = vpop.f32.mrb[0].mxu0
      %v2330 = vpop.f32.mrb[0].mxu0
      %v2331 = vadd.f32 %v2026, %v2330
      %v2332 = vpop.f32.mrb[0].mxu0
      %2333 = vmatprep.mubr.bf16.mxu0 0
      %2334 = vmatmul.mubr.bf16.gmra.mrb[0].mxu0 %v2151
      %v2335 = vpop.f32.mrb[0].mxu0
      %v2336 = vadd.f32 %v2031, %v2335
      %v2337 = vpop.f32.mrb[0].mxu0
      %v2338 = vpop.f32.mrb[0].mxu0
      %v2339 = vadd.f32 %v2034, %v2338
      %v2340 = vpop.f32.mrb[0].mxu0
      %2341 = vmatprep.mubr.bf16.mxu0 0
      %2342 = vmatmul.mubr.bf16.gmra.mrb[0].mxu0 %v2152
      %v2343 = vpop.f32.mrb[0].mxu0
      %v2344 = vadd.f32 %v2039, %v2343
      %v2345 = vpop.f32.mrb[0].mxu0
      %v2346 = vpop.f32.mrb[0].mxu0
      %v2347 = vadd.f32 %v2042, %v2346
      %v2348 = vpop.f32.mrb[0].mxu0
      %2349 = vmatprep.mubr.bf16.mxu0 0
      %2350 = vmatmul.mubr.bf16.gmra.mrb[0].mxu0 %v2153
      %v2351 = vpop.f32.mrb[0].mxu0
      %v2352 = vadd.f32 %v2047, %v2351
      %v2353 = vpop.f32.mrb[0].mxu0
      %v2354 = vpop.f32.mrb[0].mxu0
      %v2355 = vadd.f32 %v2050, %v2354
      %v2356 = vpop.f32.mrb[0].mxu0
      %2357 = vmatprep.mubr.bf16.mxu0 0
      %2358 = vmatmul.mubr.bf16.gmra.mrb[0].mxu0 %v2154
      %v2359 = vpop.f32.mrb[0].mxu0
      %v2360 = vadd.f32 %v2055, %v2359
      %v2361 = vpop.f32.mrb[0].mxu0
      %v2362 = vpop.f32.mrb[0].mxu0
      %v2363 = vadd.f32 %v2058, %v2362
      %v2364 = vpop.f32.mrb[0].mxu0
      %2365 = vmatprep.mubr.bf16.mxu0 0
      %2366 = vmatmul.mubr.bf16.gmra.mrb[0].mxu0 %v2155
      %v2367 = vpop.f32.mrb[0].mxu0
      %v2368 = vadd.f32 %v2063, %v2367
      %v2369 = vpop.f32.mrb[0].mxu0
      %v2370 = vpop.f32.mrb[0].mxu0
      %v2371 = vadd.f32 %v2066, %v2370
      %v2372 = vpop.f32.mrb[0].mxu0
      %2373 = vmatprep.mubr.bf16.mxu0 0
      %2374 = vmatmul.mubr.bf16.gmra.mrb[0].mxu0 %v2156
      %v2375 = vpop.f32.mrb[0].mxu0
      %v2376 = vadd.f32 %v2071, %v2375
      %v2377 = vpop.f32.mrb[0].mxu0
      %v2378 = vpop.f32.mrb[0].mxu0
      %v2379 = vadd.f32 %v2074, %v2378
      %v2380 = vpop.f32.mrb[0].mxu0
      %2381 = vdwg.mxu0
      %v2382 = vld [vmem:[#allocation2] sm:$0xe]
      %v2383 = vld [vmem:[#allocation2 + $0xc] sm:$0xe]
      %v2384 = vld [vmem:[#allocation2 + $0x18] sm:$0xe]
      %v2385 = vld [vmem:[#allocation2 + $0x24] sm:$0xe]
      %v2386 = vld [vmem:[#allocation2 + $0x30] sm:$0xe]
      %v2387 = vld [vmem:[#allocation2 + $0x3c] sm:$0xe]
      %v2388 = vld [vmem:[#allocation2 + $0x48] sm:$0xe]
      %v2389 = vld [vmem:[#allocation2 + $0x54] sm:$0xe]
      %v2390 = vld [vmem:[#allocation2 + $0x60] sm:$0xe]
      %v2391 = vld [vmem:[#allocation2 + $0x6c] sm:$0xe]
      %v2392 = vld [vmem:[#allocation2 + $0x78] sm:$0xe]
      %v2393 = vld [vmem:[#allocation2 + $0x84] sm:$0xe]
      %v2394 = vld [vmem:[#allocation2 + $0x90] sm:$0xe]
      %v2395 = vld [vmem:[#allocation2 + $0x9c] sm:$0xe]
      %v2396 = vld [vmem:[#allocation2 + $0xa8] sm:$0xe]
      %v2397 = vld [vmem:[#allocation2 + $0xb4] sm:$0xe]
      %vm2430 = vcmask 1042432
      %vm2431 = vcmask 1046532
      %vm2432 = vmor %vm2430, %vm2431
      %v2433 = vrot.slane %v2382, 5
      %v2434 = vrot.slane %v2433, 4
      %v2435 = vrot.slane %v1338, 5
      %v2436 = vsel %vm2432, %v2434, %v2435
      %v2437 = vrot.slane %v2435, 4
      %v2438 = vrot.slane %v1385, 5
      %v2439 = vsel %vm2432, %v2437, %v2438
      %v2440 = vrot.slane %v2383, 5
      %v2441 = vrot.slane %v2440, 4
      %v2442 = vrot.slane %v1340, 5
      %v2443 = vsel %vm2432, %v2441, %v2442
      %v2444 = vrot.slane %v2442, 4
      %v2445 = vrot.slane %v1386, 5
      %v2446 = vsel %vm2432, %v2444, %v2445
      %v2447 = vrot.slane %v2384, 5
      %v2448 = vrot.slane %v2447, 4
      %v2449 = vrot.slane %v1342, 5
      %v2450 = vsel %vm2432, %v2448, %v2449
      %v2451 = vrot.slane %v2449, 4
      %v2452 = vrot.slane %v1387, 5
      %v2453 = vsel %vm2432, %v2451, %v2452
      %v2454 = vrot.slane %v2385, 5
      %v2455 = vrot.slane %v2454, 4
      %v2456 = vrot.slane %v1344, 5
      %v2457 = vsel %vm2432, %v2455, %v2456
      %v2458 = vrot.slane %v2456, 4
      %v2459 = vrot.slane %v1388, 5
      %v2460 = vsel %vm2432, %v2458, %v2459
      %v2461 = vrot.slane %v2386, 5
      %v2462 = vrot.slane %v2461, 4
      %v2463 = vrot.slane %v1346, 5
      %v2464 = vsel %vm2432, %v2462, %v2463
      %v2465 = vrot.slane %v2463, 4
      %v2466 = vrot.slane %v1389, 5
      %v2467 = vsel %vm2432, %v2465, %v2466
      %v2468 = vrot.slane %v2387, 5
      %v2469 = vrot.slane %v2468, 4
      %v2470 = vrot.slane %v1348, 5
      %v2471 = vsel %vm2432, %v2469, %v2470
      %v2472 = vrot.slane %v2470, 4
      %v2473 = vrot.slane %v1390, 5
      %v2474 = vsel %vm2432, %v2472, %v2473
      %v2475 = vrot.slane %v2388, 5
      %v2476 = vrot.slane %v2475, 4
      %v2477 = vrot.slane %v1350, 5
      %v2478 = vsel %vm2432, %v2476, %v2477
      %v2479 = vrot.slane %v2477, 4
      %v2480 = vrot.slane %v1391, 5
      %v2481 = vsel %vm2432, %v2479, %v2480
      %v2482 = vrot.slane %v2389, 5
      %v2483 = vrot.slane %v2482, 4
      %v2484 = vrot.slane %v1352, 5
      %v2485 = vsel %vm2432, %v2483, %v2484
      %v2486 = vrot.slane %v2484, 4
      %v2487 = vrot.slane %v1392, 5
      %v2488 = vsel %vm2432, %v2486, %v2487
      %v2489 = vrot.slane %v2390, 5
      %v2490 = vrot.slane %v2489, 4
      %v2491 = vrot.slane %v1354, 5
      %v2492 = vsel %vm2432, %v2490, %v2491
      %v2493 = vrot.slane %v2491, 4
      %v2494 = vrot.slane %v1393, 5
      %v2495 = vsel %vm2432, %v2493, %v2494
      %v2496 = vrot.slane %v2391, 5
      %v2497 = vrot.slane %v2496, 4
      %v2498 = vrot.slane %v1356, 5
      %v2499 = vsel %vm2432, %v2497, %v2498
      %v2500 = vrot.slane %v2498, 4
      %v2501 = vrot.slane %v1394, 5
      %v2502 = vsel %vm2432, %v2500, %v2501
      %v2503 = vrot.slane %v2392, 5
      %v2504 = vrot.slane %v2503, 4
      %v2505 = vrot.slane %v1358, 5
      %v2506 = vsel %vm2432, %v2504, %v2505
      %v2507 = vrot.slane %v2505, 4
      %v2508 = vrot.slane %v1395, 5
      %v2509 = vsel %vm2432, %v2507, %v2508
      %v2510 = vrot.slane %v2393, 5
      %v2511 = vrot.slane %v2510, 4
      %v2512 = vrot.slane %v1360, 5
      %v2513 = vsel %vm2432, %v2511, %v2512
      %v2514 = vrot.slane %v2512, 4
      %v2515 = vrot.slane %v1396, 5
      %v2516 = vsel %vm2432, %v2514, %v2515
      %v2517 = vrot.slane %v2394, 5
      %v2518 = vrot.slane %v2517, 4
      %v2519 = vrot.slane %v1362, 5
      %v2520 = vsel %vm2432, %v2518, %v2519
      %v2521 = vrot.slane %v2519, 4
      %v2522 = vrot.slane %v1397, 5
      %v2523 = vsel %vm2432, %v2521, %v2522
      %v2524 = vrot.slane %v2395, 5
      %v2525 = vrot.slane %v2524, 4
      %v2526 = vrot.slane %v1364, 5
      %v2527 = vsel %vm2432, %v2525, %v2526
      %v2528 = vrot.slane %v2526, 4
      %v2529 = vrot.slane %v1398, 5
      %v2530 = vsel %vm2432, %v2528, %v2529
      %v2531 = vrot.slane %v2396, 5
      %v2532 = vrot.slane %v2531, 4
      %v2533 = vrot.slane %v1366, 5
      %v2534 = vsel %vm2432, %v2532, %v2533
      %v2535 = vrot.slane %v2533, 4
      %v2536 = vrot.slane %v1399, 5
      %v2537 = vsel %vm2432, %v2535, %v2536
      %v2538 = vrot.slane %v2397, 5
      %v2539 = vrot.slane %v2538, 4
      %v2540 = vrot.slane %v1368, 5
      %v2541 = vsel %vm2432, %v2539, %v2540
      %v2542 = vrot.slane %v2540, 4
      %v2543 = vrot.slane %v1400, 5
      %v2544 = vsel %vm2432, %v2542, %v2543
      %v2545 = vld [vmem:[%s3 + $0x80] sm:$0xf]
      %v2546 = vld [vmem:[%s3 + $0x84] sm:$0xf]
      %v2547 = vld [vmem:[%s3 + $0x88] sm:$0xf]
      %v2548 = vld [vmem:[%s3 + $0x8c] sm:$0xf]
      %v2549 = vld [vmem:[%s3 + $0x90] sm:$0xf]
      %v2550 = vld [vmem:[%s3 + $0x94] sm:$0xf]
      %v2551 = vld [vmem:[%s3 + $0x98] sm:$0xf]
      %v2552 = vld [vmem:[%s3 + $0x9c] sm:$0xf]
      %v2553 = vld [vmem:[%s3 + $0xa0] sm:$0xf]
      %v2554 = vld [vmem:[%s3 + $0xa4] sm:$0xf]
      %v2555 = vld [vmem:[%s3 + $0xa8] sm:$0xf]
      %v2556 = vld [vmem:[%s3 + $0xac] sm:$0xf]
      %v2557 = vld [vmem:[%s3 + $0xb0] sm:$0xf]
      %v2558 = vld [vmem:[%s3 + $0xb4] sm:$0xf]
      %v2559 = vld [vmem:[%s3 + $0xb8] sm:$0xf]
      %v2560 = vld [vmem:[%s3 + $0xbc] sm:$0xf]
      %v2561 = vunpack.c.l.b16 %v2436
      %v2562 = vunpack.c.l.b16 %v2439
      %v2563 = vunpack.c.l.b16 %v2443
      %v2564 = vunpack.c.l.b16 %v2446
      %v2565 = vunpack.c.l.b16 %v2450
      %v2566 = vunpack.c.l.b16 %v2453
      %v2567 = vunpack.c.l.b16 %v2457
      %v2568 = vunpack.c.l.b16 %v2460
      %v2569 = vunpack.c.l.b16 %v2464
      %v2570 = vunpack.c.l.b16 %v2467
      %v2571 = vunpack.c.l.b16 %v2471
      %v2572 = vunpack.c.l.b16 %v2474
      %v2573 = vunpack.c.l.b16 %v2478
      %v2574 = vunpack.c.l.b16 %v2481
      %v2575 = vunpack.c.l.b16 %v2485
      %v2576 = vunpack.c.l.b16 %v2488
      %v2577 = vunpack.c.l.b16 %v2492
      %v2578 = vunpack.c.l.b16 %v2495
      %v2579 = vunpack.c.l.b16 %v2499
      %v2580 = vunpack.c.l.b16 %v2502
      %v2581 = vunpack.c.l.b16 %v2506
      %v2582 = vunpack.c.l.b16 %v2509
      %v2583 = vunpack.c.l.b16 %v2513
      %v2584 = vunpack.c.l.b16 %v2516
      %v2585 = vunpack.c.l.b16 %v2520
      %v2586 = vunpack.c.l.b16 %v2523
      %v2587 = vunpack.c.l.b16 %v2527
      %v2588 = vunpack.c.l.b16 %v2530
      %v2589 = vunpack.c.l.b16 %v2534
      %v2590 = vunpack.c.l.b16 %v2537
      %v2591 = vunpack.c.l.b16 %v2541
      %v2592 = vunpack.c.l.b16 %v2544
      %v2593 = vpack.c.b16 %v2562, %v2561
      %v2594 = vpack.c.b16 %v2564, %v2563
      %v2595 = vpack.c.b16 %v2566, %v2565
      %v2596 = vpack.c.b16 %v2568, %v2567
      %v2597 = vpack.c.b16 %v2570, %v2569
      %v2598 = vpack.c.b16 %v2572, %v2571
      %v2599 = vpack.c.b16 %v2574, %v2573
      %v2600 = vpack.c.b16 %v2576, %v2575
      %v2601 = vpack.c.b16 %v2578, %v2577
      %v2602 = vpack.c.b16 %v2580, %v2579
      %v2603 = vpack.c.b16 %v2582, %v2581
      %v2604 = vpack.c.b16 %v2584, %v2583
      %v2605 = vpack.c.b16 %v2586, %v2585
      %v2606 = vpack.c.b16 %v2588, %v2587
      %v2607 = vpack.c.b16 %v2590, %v2589
      %v2608 = vpack.c.b16 %v2592, %v2591
      %v2641 = vunpack.c.l.b16 %v2545
      %v2642 = vunpack.c.l.b16 %v2546
      %v2643 = vunpack.c.l.b16 %v2547
      %v2644 = vunpack.c.l.b16 %v2548
      %v2645 = vunpack.c.l.b16 %v2549
      %v2646 = vunpack.c.l.b16 %v2550
      %v2647 = vunpack.c.l.b16 %v2551
      %v2648 = vunpack.c.l.b16 %v2552
      %v2649 = vunpack.c.l.b16 %v2553
      %v2650 = vunpack.c.l.b16 %v2554
      %v2651 = vunpack.c.l.b16 %v2555
      %v2652 = vunpack.c.l.b16 %v2556
      %v2653 = vunpack.c.l.b16 %v2557
      %v2654 = vunpack.c.l.b16 %v2558
      %v2655 = vunpack.c.l.b16 %v2559
      %v2656 = vunpack.c.l.b16 %v2560
      %v2657 = vpack.c.b16 %v2642, %v2641
      %v2658 = vpack.c.b16 %v2644, %v2643
      %v2659 = vpack.c.b16 %v2646, %v2645
      %v2660 = vpack.c.b16 %v2648, %v2647
      %v2661 = vpack.c.b16 %v2650, %v2649
      %v2662 = vpack.c.b16 %v2652, %v2651
      %v2663 = vpack.c.b16 %v2654, %v2653
      %v2664 = vpack.c.b16 %v2656, %v2655
      %2673 = vmatprep.subr.bf16.mxu0 0
      %2674 = vmatpush1.bf16.msra.mxu0 %v2657
      %2675 = vmatprep.subr.bf16.mxu0 0
      %2676 = vmatpush1.bf16.msra.mxu0 %v2658
      %2677 = vmatprep.subr.bf16.mxu0 0
      %2678 = vmatpush1.bf16.msra.mxu0 %v2659
      %2679 = vmatprep.subr.bf16.mxu0 0
      %2680 = vmatpush1.bf16.msra.mxu0 %v2660
      %2681 = vmatprep.subr.bf16.mxu0 0
      %2682 = vmatpush1.bf16.msra.mxu0 %v2661
      %2683 = vmatprep.subr.bf16.mxu0 0
      %2684 = vmatpush1.bf16.msra.mxu0 %v2662
      %2685 = vmatprep.subr.bf16.mxu0 0
      %2686 = vmatpush1.bf16.msra.mxu0 %v2663
      %2687 = vmatprep.subr.bf16.mxu0 0
      %2688 = vmatpush1.bf16.msra.mxu0 %v2664
      %2689 = vmatprep.subr.bf16.mxu0 0
      %2690 = vmatpush1.bf16.msra.mxu0 0
      %2691 = vmatprep.subr.bf16.mxu0 0
      %2692 = vmatpush1.bf16.msra.mxu0 0
      %2693 = vmatprep.subr.bf16.mxu0 0
      %2694 = vmatpush1.bf16.msra.mxu0 0
      %2695 = vmatprep.subr.bf16.mxu0 0
      %2696 = vmatpush1.bf16.msra.mxu0 0
      %2697 = vmatprep.subr.bf16.mxu0 0
      %2698 = vmatpush1.bf16.msra.mxu0 0
      %2699 = vmatprep.subr.bf16.mxu0 0
      %2700 = vmatpush1.bf16.msra.mxu0 0
      %2701 = vmatprep.subr.bf16.mxu0 0
      %2702 = vmatpush1.bf16.msra.mxu0 0
      %2703 = vmatprep.subr.bf16.mxu0 0
      %2704 = vmatpush1.bf16.msra.mxu0 0
      %2705 = vmatprep.mubr.bf16.mxu0 0
      %2706 = vmatmul.mubr.bf16.gmra.mrb[0].mxu0 %v2593
      %v2707 = vpop.f32.mrb[0].mxu0
      %v2708 = vadd.f32 0.0, %v2707
      %v2709 = vpop.f32.mrb[0].mxu0
      %v2710 = vpop.f32.mrb[0].mxu0
      %v2711 = vadd.f32 0.0, %v2710
      %v2712 = vpop.f32.mrb[0].mxu0
      %2713 = vmatprep.mubr.bf16.mxu0 0
      %2714 = vmatmul.mubr.bf16.gmra.mrb[0].mxu0 %v2594
      %v2715 = vpop.f32.mrb[0].mxu0
      %v2716 = vadd.f32 0.0, %v2715
      %v2717 = vpop.f32.mrb[0].mxu0
      %v2718 = vpop.f32.mrb[0].mxu0
      %v2719 = vadd.f32 0.0, %v2718
      %v2720 = vpop.f32.mrb[0].mxu0
      %2721 = vmatprep.mubr.bf16.mxu0 0
      %2722 = vmatmul.mubr.bf16.gmra.mrb[0].mxu0 %v2595
      %v2723 = vpop.f32.mrb[0].mxu0
      %v2724 = vadd.f32 0.0, %v2723
      %v2725 = vpop.f32.mrb[0].mxu0
      %v2726 = vpop.f32.mrb[0].mxu0
      %v2727 = vadd.f32 0.0, %v2726
      %v2728 = vpop.f32.mrb[0].mxu0
      %2729 = vmatprep.mubr.bf16.mxu0 0
      %2730 = vmatmul.mubr.bf16.gmra.mrb[0].mxu0 %v2596
      %v2731 = vpop.f32.mrb[0].mxu0
      %v2732 = vadd.f32 0.0, %v2731
      %v2733 = vpop.f32.mrb[0].mxu0
      %v2734 = vpop.f32.mrb[0].mxu0
      %v2735 = vadd.f32 0.0, %v2734
      %v2736 = vpop.f32.mrb[0].mxu0
      %2737 = vmatprep.mubr.bf16.mxu0 0
      %2738 = vmatmul.mubr.bf16.gmra.mrb[0].mxu0 %v2597
      %v2739 = vpop.f32.mrb[0].mxu0
      %v2740 = vadd.f32 0.0, %v2739
      %v2741 = vpop.f32.mrb[0].mxu0
      %v2742 = vpop.f32.mrb[0].mxu0
      %v2743 = vadd.f32 0.0, %v2742
      %v2744 = vpop.f32.mrb[0].mxu0
      %2745 = vmatprep.mubr.bf16.mxu0 0
      %2746 = vmatmul.mubr.bf16.gmra.mrb[0].mxu0 %v2598
      %v2747 = vpop.f32.mrb[0].mxu0
      %v2748 = vadd.f32 0.0, %v2747
      %v2749 = vpop.f32.mrb[0].mxu0
      %v2750 = vpop.f32.mrb[0].mxu0
      %v2751 = vadd.f32 0.0, %v2750
      %v2752 = vpop.f32.mrb[0].mxu0
      %2753 = vmatprep.mubr.bf16.mxu0 0
      %2754 = vmatmul.mubr.bf16.gmra.mrb[0].mxu0 %v2599
      %v2755 = vpop.f32.mrb[0].mxu0
      %v2756 = vadd.f32 0.0, %v2755
      %v2757 = vpop.f32.mrb[0].mxu0
      %v2758 = vpop.f32.mrb[0].mxu0
      %v2759 = vadd.f32 0.0, %v2758
      %v2760 = vpop.f32.mrb[0].mxu0
      %2761 = vmatprep.mubr.bf16.mxu0 0
      %2762 = vmatmul.mubr.bf16.gmra.mrb[0].mxu0 %v2600
      %v2763 = vpop.f32.mrb[0].mxu0
      %v2764 = vadd.f32 0.0, %v2763
      %v2765 = vpop.f32.mrb[0].mxu0
      %v2766 = vpop.f32.mrb[0].mxu0
      %v2767 = vadd.f32 0.0, %v2766
      %v2768 = vpop.f32.mrb[0].mxu0
      %2769 = vmatprep.mubr.bf16.mxu0 0
      %2770 = vmatmul.mubr.bf16.gmra.mrb[0].mxu0 %v2601
      %v2771 = vpop.f32.mrb[0].mxu0
      %v2772 = vadd.f32 0.0, %v2771
      %v2773 = vpop.f32.mrb[0].mxu0
      %v2774 = vpop.f32.mrb[0].mxu0
      %v2775 = vadd.f32 0.0, %v2774
      %v2776 = vpop.f32.mrb[0].mxu0
      %2777 = vmatprep.mubr.bf16.mxu0 0
      %2778 = vmatmul.mubr.bf16.gmra.mrb[0].mxu0 %v2602
      %v2779 = vpop.f32.mrb[0].mxu0
      %v2780 = vadd.f32 0.0, %v2779
      %v2781 = vpop.f32.mrb[0].mxu0
      %v2782 = vpop.f32.mrb[0].mxu0
      %v2783 = vadd.f32 0.0, %v2782
      %v2784 = vpop.f32.mrb[0].mxu0
      %2785 = vmatprep.mubr.bf16.mxu0 0
      %2786 = vmatmul.mubr.bf16.gmra.mrb[0].mxu0 %v2603
      %v2787 = vpop.f32.mrb[0].mxu0
      %v2788 = vadd.f32 0.0, %v2787
      %v2789 = vpop.f32.mrb[0].mxu0
      %v2790 = vpop.f32.mrb[0].mxu0
      %v2791 = vadd.f32 0.0, %v2790
      %v2792 = vpop.f32.mrb[0].mxu0
      %2793 = vmatprep.mubr.bf16.mxu0 0
      %2794 = vmatmul.mubr.bf16.gmra.mrb[0].mxu0 %v2604
      %v2795 = vpop.f32.mrb[0].mxu0
      %v2796 = vadd.f32 0.0, %v2795
      %v2797 = vpop.f32.mrb[0].mxu0
      %v2798 = vpop.f32.mrb[0].mxu0
      %v2799 = vadd.f32 0.0, %v2798
      %v2800 = vpop.f32.mrb[0].mxu0
      %2801 = vmatprep.mubr.bf16.mxu0 0
      %2802 = vmatmul.mubr.bf16.gmra.mrb[0].mxu0 %v2605
      %v2803 = vpop.f32.mrb[0].mxu0
      %v2804 = vadd.f32 0.0, %v2803
      %v2805 = vpop.f32.mrb[0].mxu0
      %v2806 = vpop.f32.mrb[0].mxu0
      %v2807 = vadd.f32 0.0, %v2806
      %v2808 = vpop.f32.mrb[0].mxu0
      %2809 = vmatprep.mubr.bf16.mxu0 0
      %2810 = vmatmul.mubr.bf16.gmra.mrb[0].mxu0 %v2606
      %v2811 = vpop.f32.mrb[0].mxu0
      %v2812 = vadd.f32 0.0, %v2811
      %v2813 = vpop.f32.mrb[0].mxu0
      %v2814 = vpop.f32.mrb[0].mxu0
      %v2815 = vadd.f32 0.0, %v2814
      %v2816 = vpop.f32.mrb[0].mxu0
      %2817 = vmatprep.mubr.bf16.mxu0 0
      %2818 = vmatmul.mubr.bf16.gmra.mrb[0].mxu0 %v2607
      %v2819 = vpop.f32.mrb[0].mxu0
      %v2820 = vadd.f32 0.0, %v2819
      %v2821 = vpop.f32.mrb[0].mxu0
      %v2822 = vpop.f32.mrb[0].mxu0
      %v2823 = vadd.f32 0.0, %v2822
      %v2824 = vpop.f32.mrb[0].mxu0
      %2825 = vmatprep.mubr.bf16.mxu0 0
      %2826 = vmatmul.mubr.bf16.gmra.mrb[0].mxu0 %v2608
      %v2827 = vpop.f32.mrb[0].mxu0
      %v2828 = vadd.f32 0.0, %v2827
      %v2829 = vpop.f32.mrb[0].mxu0
      %v2830 = vpop.f32.mrb[0].mxu0
      %v2831 = vadd.f32 0.0, %v2830
      %v2832 = vpop.f32.mrb[0].mxu0
      %2833 = vdwg.mxu0
      %v2834 = vadd.f32 %v2256, %v2708
      %v2835 = vadd.f32 %v2259, %v2711
      %v2836 = vadd.f32 %v2264, %v2716
      %v2837 = vadd.f32 %v2267, %v2719
      %v2838 = vadd.f32 %v2272, %v2724
      %v2839 = vadd.f32 %v2275, %v2727
      %v2840 = vadd.f32 %v2280, %v2732
      %v2841 = vadd.f32 %v2283, %v2735
      %v2842 = vadd.f32 %v2288, %v2740
      %v2843 = vadd.f32 %v2291, %v2743
      %v2844 = vadd.f32 %v2296, %v2748
      %v2845 = vadd.f32 %v2299, %v2751
      %v2846 = vadd.f32 %v2304, %v2756
      %v2847 = vadd.f32 %v2307, %v2759
      %v2848 = vadd.f32 %v2312, %v2764
      %v2849 = vadd.f32 %v2315, %v2767
      %v2850 = vadd.f32 %v2320, %v2772
      %v2851 = vadd.f32 %v2323, %v2775
      %v2852 = vadd.f32 %v2328, %v2780
      %v2853 = vadd.f32 %v2331, %v2783
      %v2854 = vadd.f32 %v2336, %v2788
      %v2855 = vadd.f32 %v2339, %v2791
      %v2856 = vadd.f32 %v2344, %v2796
      %v2857 = vadd.f32 %v2347, %v2799
      %v2858 = vadd.f32 %v2352, %v2804
      %v2859 = vadd.f32 %v2355, %v2807
      %v2860 = vadd.f32 %v2360, %v2812
      %v2861 = vadd.f32 %v2363, %v2815
      %v2862 = vadd.f32 %v2368, %v2820
      %v2863 = vadd.f32 %v2371, %v2823
      %v2864 = vadd.f32 %v2376, %v2828
      %v2865 = vadd.f32 %v2379, %v2831
      %v2866 = vld [vmem:[%s1219] sm:$0xf]
      %v2867 = vld [vmem:[%s1219 + $0x4] sm:$0xf]
      %v2868 = vld [vmem:[%s1219 + $0xc] sm:$0xf]
      %v2869 = vld [vmem:[%s1219 + $0x10] sm:$0xf]
      %v2870 = vld [vmem:[%s1219 + $0x18] sm:$0xf]
      %v2871 = vld [vmem:[%s1219 + $0x1c] sm:$0xf]
      %v2872 = vld [vmem:[%s1219 + $0x24] sm:$0xf]
      %v2873 = vld [vmem:[%s1219 + $0x28] sm:$0xf]
      %v2874 = vld [vmem:[%s1219 + $0x30] sm:$0xf]
      %v2875 = vld [vmem:[%s1219 + $0x34] sm:$0xf]
      %v2876 = vld [vmem:[%s1219 + $0x3c] sm:$0xf]
      %v2877 = vld [vmem:[%s1219 + $0x40] sm:$0xf]
      %v2878 = vld [vmem:[%s1219 + $0x48] sm:$0xf]
      %v2879 = vld [vmem:[%s1219 + $0x4c] sm:$0xf]
      %v2880 = vld [vmem:[%s1219 + $0x54] sm:$0xf]
      %v2881 = vld [vmem:[%s1219 + $0x58] sm:$0xf]
      %v2882 = vld [vmem:[%s1219 + $0x60] sm:$0xf]
      %v2883 = vld [vmem:[%s1219 + $0x64] sm:$0xf]
      %v2884 = vld [vmem:[%s1219 + $0x6c] sm:$0xf]
      %v2885 = vld [vmem:[%s1219 + $0x70] sm:$0xf]
      %v2886 = vld [vmem:[%s1219 + $0x78] sm:$0xf]
      %v2887 = vld [vmem:[%s1219 + $0x7c] sm:$0xf]
      %v2888 = vld [vmem:[%s1219 + $0x84] sm:$0xf]
      %v2889 = vld [vmem:[%s1219 + $0x88] sm:$0xf]
      %v2890 = vld [vmem:[%s1219 + $0x90] sm:$0xf]
      %v2891 = vld [vmem:[%s1219 + $0x94] sm:$0xf]
      %v2892 = vld [vmem:[%s1219 + $0x9c] sm:$0xf]
      %v2893 = vld [vmem:[%s1219 + $0xa0] sm:$0xf]
      %v2894 = vld [vmem:[%s1219 + $0xa8] sm:$0xf]
      %v2895 = vld [vmem:[%s1219 + $0xac] sm:$0xf]
      %v2896 = vld [vmem:[%s1219 + $0xb4] sm:$0xf]
      %v2897 = vld [vmem:[%s1219 + $0xb8] sm:$0xf]
      %v2898 = vld [vmem:[%s3 + $0xc0] sm:$0xf]
      %v2899 = vld [vmem:[%s3 + $0xc4] sm:$0xf]
      %v2900 = vld [vmem:[%s3 + $0xc8] sm:$0xf]
      %v2901 = vld [vmem:[%s3 + $0xcc] sm:$0xf]
      %v2902 = vld [vmem:[%s3 + $0xd0] sm:$0xf]
      %v2903 = vld [vmem:[%s3 + $0xd4] sm:$0xf]
      %v2904 = vld [vmem:[%s3 + $0xd8] sm:$0xf]
      %v2905 = vld [vmem:[%s3 + $0xdc] sm:$0xf]
      %v2906 = vld [vmem:[%s3 + $0xe0] sm:$0xf]
      %v2907 = vld [vmem:[%s3 + $0xe4] sm:$0xf]
      %v2908 = vld [vmem:[%s3 + $0xe8] sm:$0xf]
      %v2909 = vld [vmem:[%s3 + $0xec] sm:$0xf]
      %v2910 = vld [vmem:[%s3 + $0xf0] sm:$0xf]
      %v2911 = vld [vmem:[%s3 + $0xf4] sm:$0xf]
      %v2912 = vld [vmem:[%s3 + $0xf8] sm:$0xf]
      %v2913 = vld [vmem:[%s3 + $0xfc] sm:$0xf]
      %v2946 = vunpack.c.l.b16 %v2866
      %v2947 = vunpack.c.l.b16 %v2867
      %v2948 = vunpack.c.l.b16 %v2868
      %v2949 = vunpack.c.l.b16 %v2869
      %v2950 = vunpack.c.l.b16 %v2870
      %v2951 = vunpack.c.l.b16 %v2871
      %v2952 = vunpack.c.l.b16 %v2872
      %v2953 = vunpack.c.l.b16 %v2873
      %v2954 = vunpack.c.l.b16 %v2874
      %v2955 = vunpack.c.l.b16 %v2875
      %v2956 = vunpack.c.l.b16 %v2876
      %v2957 = vunpack.c.l.b16 %v2877
      %v2958 = vunpack.c.l.b16 %v2878
      %v2959 = vunpack.c.l.b16 %v2879
      %v2960 = vunpack.c.l.b16 %v2880
      %v2961 = vunpack.c.l.b16 %v2881
      %v2962 = vunpack.c.l.b16 %v2882
      %v2963 = vunpack.c.l.b16 %v2883
      %v2964 = vunpack.c.l.b16 %v2884
      %v2965 = vunpack.c.l.b16 %v2885
      %v2966 = vunpack.c.l.b16 %v2886
      %v2967 = vunpack.c.l.b16 %v2887
      %v2968 = vunpack.c.l.b16 %v2888
      %v2969 = vunpack.c.l.b16 %v2889
      %v2970 = vunpack.c.l.b16 %v2890
      %v2971 = vunpack.c.l.b16 %v2891
      %v2972 = vunpack.c.l.b16 %v2892
      %v2973 = vunpack.c.l.b16 %v2893
      %v2974 = vunpack.c.l.b16 %v2894
      %v2975 = vunpack.c.l.b16 %v2895
      %v2976 = vunpack.c.l.b16 %v2896
      %v2977 = vunpack.c.l.b16 %v2897
      %v2978 = vpack.c.b16 %v2947, %v2946
      %v2979 = vpack.c.b16 %v2949, %v2948
      %v2980 = vpack.c.b16 %v2951, %v2950
      %v2981 = vpack.c.b16 %v2953, %v2952
      %v2982 = vpack.c.b16 %v2955, %v2954
      %v2983 = vpack.c.b16 %v2957, %v2956
      %v2984 = vpack.c.b16 %v2959, %v2958
      %v2985 = vpack.c.b16 %v2961, %v2960
      %v2986 = vpack.c.b16 %v2963, %v2962
      %v2987 = vpack.c.b16 %v2965, %v2964
      %v2988 = vpack.c.b16 %v2967, %v2966
      %v2989 = vpack.c.b16 %v2969, %v2968
      %v2990 = vpack.c.b16 %v2971, %v2970
      %v2991 = vpack.c.b16 %v2973, %v2972
      %v2992 = vpack.c.b16 %v2975, %v2974
      %v2993 = vpack.c.b16 %v2977, %v2976
      %v3026 = vunpack.c.l.b16 %v2898
      %v3027 = vunpack.c.l.b16 %v2899
      %v3028 = vunpack.c.l.b16 %v2900
      %v3029 = vunpack.c.l.b16 %v2901
      %v3030 = vunpack.c.l.b16 %v2902
      %v3031 = vunpack.c.l.b16 %v2903
      %v3032 = vunpack.c.l.b16 %v2904
      %v3033 = vunpack.c.l.b16 %v2905
      %v3034 = vunpack.c.l.b16 %v2906
      %v3035 = vunpack.c.l.b16 %v2907
      %v3036 = vunpack.c.l.b16 %v2908
      %v3037 = vunpack.c.l.b16 %v2909
      %v3038 = vunpack.c.l.b16 %v2910
      %v3039 = vunpack.c.l.b16 %v2911
      %v3040 = vunpack.c.l.b16 %v2912
      %v3041 = vunpack.c.l.b16 %v2913
      %v3042 = vpack.c.b16 %v3027, %v3026
      %v3043 = vpack.c.b16 %v3029, %v3028
      %v3044 = vpack.c.b16 %v3031, %v3030
      %v3045 = vpack.c.b16 %v3033, %v3032
      %v3046 = vpack.c.b16 %v3035, %v3034
      %v3047 = vpack.c.b16 %v3037, %v3036
      %v3048 = vpack.c.b16 %v3039, %v3038
      %v3049 = vpack.c.b16 %v3041, %v3040
      %3058 = vmatprep.subr.bf16.mxu0 0
      %3059 = vmatpush1.bf16.msra.mxu0 %v3042
      %3060 = vmatprep.subr.bf16.mxu0 0
      %3061 = vmatpush1.bf16.msra.mxu0 %v3043
      %3062 = vmatprep.subr.bf16.mxu0 0
      %3063 = vmatpush1.bf16.msra.mxu0 %v3044
      %3064 = vmatprep.subr.bf16.mxu0 0
      %3065 = vmatpush1.bf16.msra.mxu0 %v3045
      %3066 = vmatprep.subr.bf16.mxu0 0
      %3067 = vmatpush1.bf16.msra.mxu0 %v3046
      %3068 = vmatprep.subr.bf16.mxu0 0
      %3069 = vmatpush1.bf16.msra.mxu0 %v3047
      %3070 = vmatprep.subr.bf16.mxu0 0
      %3071 = vmatpush1.bf16.msra.mxu0 %v3048
      %3072 = vmatprep.subr.bf16.mxu0 0
      %3073 = vmatpush1.bf16.msra.mxu0 %v3049
      %3074 = vmatprep.subr.bf16.mxu0 0
      %3075 = vmatpush1.bf16.msra.mxu0 0
      %3076 = vmatprep.subr.bf16.mxu0 0
      %3077 = vmatpush1.bf16.msra.mxu0 0
      %3078 = vmatprep.subr.bf16.mxu0 0
      %3079 = vmatpush1.bf16.msra.mxu0 0
      %3080 = vmatprep.subr.bf16.mxu0 0
      %3081 = vmatpush1.bf16.msra.mxu0 0
      %3082 = vmatprep.subr.bf16.mxu0 0
      %3083 = vmatpush1.bf16.msra.mxu0 0
      %3084 = vmatprep.subr.bf16.mxu0 0
      %3085 = vmatpush1.bf16.msra.mxu0 0
      %3086 = vmatprep.subr.bf16.mxu0 0
      %3087 = vmatpush1.bf16.msra.mxu0 0
      %3088 = vmatprep.subr.bf16.mxu0 0
      %3089 = vmatpush1.bf16.msra.mxu0 0
      %3090 = vmatprep.mubr.bf16.mxu0 0
      %3091 = vmatmul.mubr.bf16.gmra.mrb[0].mxu0 %v2978
      %v3092 = vpop.f32.mrb[0].mxu0
      %v3093 = vadd.f32 0.0, %v3092
      %v3094 = vpop.f32.mrb[0].mxu0
      %v3095 = vpop.f32.mrb[0].mxu0
      %v3096 = vadd.f32 0.0, %v3095
      %v3097 = vpop.f32.mrb[0].mxu0
      %3098 = vmatprep.mubr.bf16.mxu0 0
      %3099 = vmatmul.mubr.bf16.gmra.mrb[0].mxu0 %v2979
      %v3100 = vpop.f32.mrb[0].mxu0
      %v3101 = vadd.f32 0.0, %v3100
      %v3102 = vpop.f32.mrb[0].mxu0
      %v3103 = vpop.f32.mrb[0].mxu0
      %v3104 = vadd.f32 0.0, %v3103
      %v3105 = vpop.f32.mrb[0].mxu0
      %3106 = vmatprep.mubr.bf16.mxu0 0
      %3107 = vmatmul.mubr.bf16.gmra.mrb[0].mxu0 %v2980
      %v3108 = vpop.f32.mrb[0].mxu0
      %v3109 = vadd.f32 0.0, %v3108
      %v3110 = vpop.f32.mrb[0].mxu0
      %v3111 = vpop.f32.mrb[0].mxu0
      %v3112 = vadd.f32 0.0, %v3111
      %v3113 = vpop.f32.mrb[0].mxu0
      %3114 = vmatprep.mubr.bf16.mxu0 0
      %3115 = vmatmul.mubr.bf16.gmra.mrb[0].mxu0 %v2981
      %v3116 = vpop.f32.mrb[0].mxu0
      %v3117 = vadd.f32 0.0, %v3116
      %v3118 = vpop.f32.mrb[0].mxu0
      %v3119 = vpop.f32.mrb[0].mxu0
      %v3120 = vadd.f32 0.0, %v3119
      %v3121 = vpop.f32.mrb[0].mxu0
      %3122 = vmatprep.mubr.bf16.mxu0 0
      %3123 = vmatmul.mubr.bf16.gmra.mrb[0].mxu0 %v2982
      %v3124 = vpop.f32.mrb[0].mxu0
      %v3125 = vadd.f32 0.0, %v3124
      %v3126 = vpop.f32.mrb[0].mxu0
      %v3127 = vpop.f32.mrb[0].mxu0
      %v3128 = vadd.f32 0.0, %v3127
      %v3129 = vpop.f32.mrb[0].mxu0
      %3130 = vmatprep.mubr.bf16.mxu0 0
      %3131 = vmatmul.mubr.bf16.gmra.mrb[0].mxu0 %v2983
      %v3132 = vpop.f32.mrb[0].mxu0
      %v3133 = vadd.f32 0.0, %v3132
      %v3134 = vpop.f32.mrb[0].mxu0
      %v3135 = vpop.f32.mrb[0].mxu0
      %v3136 = vadd.f32 0.0, %v3135
      %v3137 = vpop.f32.mrb[0].mxu0
      %3138 = vmatprep.mubr.bf16.mxu0 0
      %3139 = vmatmul.mubr.bf16.gmra.mrb[0].mxu0 %v2984
      %v3140 = vpop.f32.mrb[0].mxu0
      %v3141 = vadd.f32 0.0, %v3140
      %v3142 = vpop.f32.mrb[0].mxu0
      %v3143 = vpop.f32.mrb[0].mxu0
      %v3144 = vadd.f32 0.0, %v3143
      %v3145 = vpop.f32.mrb[0].mxu0
      %3146 = vmatprep.mubr.bf16.mxu0 0
      %3147 = vmatmul.mubr.bf16.gmra.mrb[0].mxu0 %v2985
      %v3148 = vpop.f32.mrb[0].mxu0
      %v3149 = vadd.f32 0.0, %v3148
      %v3150 = vpop.f32.mrb[0].mxu0
      %v3151 = vpop.f32.mrb[0].mxu0
      %v3152 = vadd.f32 0.0, %v3151
      %v3153 = vpop.f32.mrb[0].mxu0
      %3154 = vmatprep.mubr.bf16.mxu0 0
      %3155 = vmatmul.mubr.bf16.gmra.mrb[0].mxu0 %v2986
      %v3156 = vpop.f32.mrb[0].mxu0
      %v3157 = vadd.f32 0.0, %v3156
      %v3158 = vpop.f32.mrb[0].mxu0
      %v3159 = vpop.f32.mrb[0].mxu0
      %v3160 = vadd.f32 0.0, %v3159
      %v3161 = vpop.f32.mrb[0].mxu0
      %3162 = vmatprep.mubr.bf16.mxu0 0
      %3163 = vmatmul.mubr.bf16.gmra.mrb[0].mxu0 %v2987
      %v3164 = vpop.f32.mrb[0].mxu0
      %v3165 = vadd.f32 0.0, %v3164
      %v3166 = vpop.f32.mrb[0].mxu0
      %v3167 = vpop.f32.mrb[0].mxu0
      %v3168 = vadd.f32 0.0, %v3167
      %v3169 = vpop.f32.mrb[0].mxu0
      %3170 = vmatprep.mubr.bf16.mxu0 0
      %3171 = vmatmul.mubr.bf16.gmra.mrb[0].mxu0 %v2988
      %v3172 = vpop.f32.mrb[0].mxu0
      %v3173 = vadd.f32 0.0, %v3172
      %v3174 = vpop.f32.mrb[0].mxu0
      %v3175 = vpop.f32.mrb[0].mxu0
      %v3176 = vadd.f32 0.0, %v3175
      %v3177 = vpop.f32.mrb[0].mxu0
      %3178 = vmatprep.mubr.bf16.mxu0 0
      %3179 = vmatmul.mubr.bf16.gmra.mrb[0].mxu0 %v2989
      %v3180 = vpop.f32.mrb[0].mxu0
      %v3181 = vadd.f32 0.0, %v3180
      %v3182 = vpop.f32.mrb[0].mxu0
      %v3183 = vpop.f32.mrb[0].mxu0
      %v3184 = vadd.f32 0.0, %v3183
      %v3185 = vpop.f32.mrb[0].mxu0
      %3186 = vmatprep.mubr.bf16.mxu0 0
      %3187 = vmatmul.mubr.bf16.gmra.mrb[0].mxu0 %v2990
      %v3188 = vpop.f32.mrb[0].mxu0
      %v3189 = vadd.f32 0.0, %v3188
      %v3190 = vpop.f32.mrb[0].mxu0
      %v3191 = vpop.f32.mrb[0].mxu0
      %v3192 = vadd.f32 0.0, %v3191
      %v3193 = vpop.f32.mrb[0].mxu0
      %3194 = vmatprep.mubr.bf16.mxu0 0
      %3195 = vmatmul.mubr.bf16.gmra.mrb[0].mxu0 %v2991
      %v3196 = vpop.f32.mrb[0].mxu0
      %v3197 = vadd.f32 0.0, %v3196
      %v3198 = vpop.f32.mrb[0].mxu0
      %v3199 = vpop.f32.mrb[0].mxu0
      %v3200 = vadd.f32 0.0, %v3199
      %v3201 = vpop.f32.mrb[0].mxu0
      %3202 = vmatprep.mubr.bf16.mxu0 0
      %3203 = vmatmul.mubr.bf16.gmra.mrb[0].mxu0 %v2992
      %v3204 = vpop.f32.mrb[0].mxu0
      %v3205 = vadd.f32 0.0, %v3204
      %v3206 = vpop.f32.mrb[0].mxu0
      %v3207 = vpop.f32.mrb[0].mxu0
      %v3208 = vadd.f32 0.0, %v3207
      %v3209 = vpop.f32.mrb[0].mxu0
      %3210 = vmatprep.mubr.bf16.mxu0 0
      %3211 = vmatmul.mubr.bf16.gmra.mrb[0].mxu0 %v2993
      %v3212 = vpop.f32.mrb[0].mxu0
      %v3213 = vadd.f32 0.0, %v3212
      %v3214 = vpop.f32.mrb[0].mxu0
      %v3215 = vpop.f32.mrb[0].mxu0
      %v3216 = vadd.f32 0.0, %v3215
      %v3217 = vpop.f32.mrb[0].mxu0
      %3218 = vdwg.mxu0
      %v3219 = vadd.f32 %v2834, %v3093
      %v3220 = vadd.f32 %v2835, %v3096
      %v3221 = vadd.f32 %v2836, %v3101
      %v3222 = vadd.f32 %v2837, %v3104
      %v3223 = vadd.f32 %v2838, %v3109
      %v3224 = vadd.f32 %v2839, %v3112
      %v3225 = vadd.f32 %v2840, %v3117
      %v3226 = vadd.f32 %v2841, %v3120
      %v3227 = vadd.f32 %v2842, %v3125
      %v3228 = vadd.f32 %v2843, %v3128
      %v3229 = vadd.f32 %v2844, %v3133
      %v3230 = vadd.f32 %v2845, %v3136
      %v3231 = vadd.f32 %v2846, %v3141
      %v3232 = vadd.f32 %v2847, %v3144
      %v3233 = vadd.f32 %v2848, %v3149
      %v3234 = vadd.f32 %v2849, %v3152
      %v3235 = vadd.f32 %v2850, %v3157
      %v3236 = vadd.f32 %v2851, %v3160
      %v3237 = vadd.f32 %v2852, %v3165
      %v3238 = vadd.f32 %v2853, %v3168
      %v3239 = vadd.f32 %v2854, %v3173
      %v3240 = vadd.f32 %v2855, %v3176
      %v3241 = vadd.f32 %v2856, %v3181
      %v3242 = vadd.f32 %v2857, %v3184
      %v3243 = vadd.f32 %v2858, %v3189
      %v3244 = vadd.f32 %v2859, %v3192
      %v3245 = vadd.f32 %v2860, %v3197
      %v3246 = vadd.f32 %v2861, %v3200
      %v3247 = vadd.f32 %v2862, %v3205
      %v3248 = vadd.f32 %v2863, %v3208
      %v3249 = vadd.f32 %v2864, %v3213
      %v3250 = vadd.f32 %v2865, %v3216
      %v3251 = vld [vmem:[%s1219] sm:$0xf]
      %v3252 = vld [vmem:[%s1219 + $0x4] sm:$0xf]
      %v3253 = vld [vmem:[%s1219 + $0x8] sm:$0x1]
      %v3254 = vld [vmem:[%s1219 + $0xc] sm:$0xf]
      %v3255 = vld [vmem:[%s1219 + $0x10] sm:$0xf]
      %v3256 = vld [vmem:[%s1219 + $0x14] sm:$0x1]
      %v3257 = vld [vmem:[%s1219 + $0x18] sm:$0xf]
      %v3258 = vld [vmem:[%s1219 + $0x1c] sm:$0xf]
      %v3259 = vld [vmem:[%s1219 + $0x20] sm:$0x1]
      %v3260 = vld [vmem:[%s1219 + $0x24] sm:$0xf]
      %v3261 = vld [vmem:[%s1219 + $0x28] sm:$0xf]
      %v3262 = vld [vmem:[%s1219 + $0x2c] sm:$0x1]
      %v3263 = vld [vmem:[%s1219 + $0x30] sm:$0xf]
      %v3264 = vld [vmem:[%s1219 + $0x34] sm:$0xf]
      %v3265 = vld [vmem:[%s1219 + $0x38] sm:$0x1]
      %v3266 = vld [vmem:[%s1219 + $0x3c] sm:$0xf]
      %v3267 = vld [vmem:[%s1219 + $0x40] sm:$0xf]
      %v3268 = vld [vmem:[%s1219 + $0x44] sm:$0x1]
      %v3269 = vld [vmem:[%s1219 + $0x48] sm:$0xf]
      %v3270 = vld [vmem:[%s1219 + $0x4c] sm:$0xf]
      %v3271 = vld [vmem:[%s1219 + $0x50] sm:$0x1]
      %v3272 = vld [vmem:[%s1219 + $0x54] sm:$0xf]
      %v3273 = vld [vmem:[%s1219 + $0x58] sm:$0xf]
      %v3274 = vld [vmem:[%s1219 + $0x5c] sm:$0x1]
      %v3275 = vld [vmem:[%s1219 + $0x60] sm:$0xf]
      %v3276 = vld [vmem:[%s1219 + $0x64] sm:$0xf]
      %v3277 = vld [vmem:[%s1219 + $0x68] sm:$0x1]
      %v3278 = vld [vmem:[%s1219 + $0x6c] sm:$0xf]
      %v3279 = vld [vmem:[%s1219 + $0x70] sm:$0xf]
      %v3280 = vld [vmem:[%s1219 + $0x74] sm:$0x1]
      %v3281 = vld [vmem:[%s1219 + $0x78] sm:$0xf]
      %v3282 = vld [vmem:[%s1219 + $0x7c] sm:$0xf]
      %v3283 = vld [vmem:[%s1219 + $0x80] sm:$0x1]
      %v3284 = vld [vmem:[%s1219 + $0x84] sm:$0xf]
      %v3285 = vld [vmem:[%s1219 + $0x88] sm:$0xf]
      %v3286 = vld [vmem:[%s1219 + $0x8c] sm:$0x1]
      %v3287 = vld [vmem:[%s1219 + $0x90] sm:$0xf]
      %v3288 = vld [vmem:[%s1219 + $0x94] sm:$0xf]
      %v3289 = vld [vmem:[%s1219 + $0x98] sm:$0x1]
      %v3290 = vld [vmem:[%s1219 + $0x9c] sm:$0xf]
      %v3291 = vld [vmem:[%s1219 + $0xa0] sm:$0xf]
      %v3292 = vld [vmem:[%s1219 + $0xa4] sm:$0x1]
      %v3293 = vld [vmem:[%s1219 + $0xa8] sm:$0xf]
      %v3294 = vld [vmem:[%s1219 + $0xac] sm:$0xf]
      %v3295 = vld [vmem:[%s1219 + $0xb0] sm:$0x1]
      %v3296 = vld [vmem:[%s1219 + $0xb4] sm:$0xf]
      %v3297 = vld [vmem:[%s1219 + $0xb8] sm:$0xf]
      %v3298 = vld [vmem:[%s1219 + $0xbc] sm:$0x1]
      %v3300 = vshrl.u32 %v3251, 16
      %v3302 = vrot.slane %v3300, 4
      %v3303 = vshll.u32 %v3251, 16
      %v3305 = vrot.slane %v3303, 5
      %v3306 = vor.u32 %v3302, %v3305
      %v3307 = vrot.slane %v3306, 4
      %v3309 = vshll.u32 %v3252, 16
      %v3311 = vrot.slane %v3309, 5
      %v3312 = vsel %vm1403, %v3307, %v3311
      %v3313 = vshrl.u32 %v3252, 16
      %v3315 = vrot.slane %v3313, 4
      %v3316 = vor.u32 %v3315, %v3311
      %v3317 = vrot.slane %v3316, 4
      %v3319 = vshll.u32 %v3253, 16
      %v3321 = vrot.slane %v3319, 5
      %v3322 = vsel %vm1403, %v3317, %v3321
      %v3324 = vshrl.u32 %v3254, 16
      %v3326 = vrot.slane %v3324, 4
      %v3327 = vshll.u32 %v3254, 16
      %v3329 = vrot.slane %v3327, 5
      %v3330 = vor.u32 %v3326, %v3329
      %v3331 = vrot.slane %v3330, 4
      %v3333 = vshll.u32 %v3255, 16
      %v3335 = vrot.slane %v3333, 5
      %v3336 = vsel %vm1403, %v3331, %v3335
      %v3337 = vshrl.u32 %v3255, 16
      %v3339 = vrot.slane %v3337, 4
      %v3340 = vor.u32 %v3339, %v3335
      %v3341 = vrot.slane %v3340, 4
      %v3343 = vshll.u32 %v3256, 16
      %v3345 = vrot.slane %v3343, 5
      %v3346 = vsel %vm1403, %v3341, %v3345
      %v3348 = vshrl.u32 %v3257, 16
      %v3350 = vrot.slane %v3348, 4
      %v3351 = vshll.u32 %v3257, 16
      %v3353 = vrot.slane %v3351, 5
      %v3354 = vor.u32 %v3350, %v3353
      %v3355 = vrot.slane %v3354, 4
      %v3357 = vshll.u32 %v3258, 16
      %v3359 = vrot.slane %v3357, 5
      %v3360 = vsel %vm1403, %v3355, %v3359
      %v3361 = vshrl.u32 %v3258, 16
      %v3363 = vrot.slane %v3361, 4
      %v3364 = vor.u32 %v3363, %v3359
      %v3365 = vrot.slane %v3364, 4
      %v3367 = vshll.u32 %v3259, 16
      %v3369 = vrot.slane %v3367, 5
      %v3370 = vsel %vm1403, %v3365, %v3369
      %v3372 = vshrl.u32 %v3260, 16
      %v3374 = vrot.slane %v3372, 4
      %v3375 = vshll.u32 %v3260, 16
      %v3377 = vrot.slane %v3375, 5
      %v3378 = vor.u32 %v3374, %v3377
      %v3379 = vrot.slane %v3378, 4
      %v3381 = vshll.u32 %v3261, 16
      %v3383 = vrot.slane %v3381, 5
      %v3384 = vsel %vm1403, %v3379, %v3383
      %v3385 = vshrl.u32 %v3261, 16
      %v3387 = vrot.slane %v3385, 4
      %v3388 = vor.u32 %v3387, %v3383
      %v3389 = vrot.slane %v3388, 4
      %v3391 = vshll.u32 %v3262, 16
      %v3393 = vrot.slane %v3391, 5
      %v3394 = vsel %vm1403, %v3389, %v3393
      %v3396 = vshrl.u32 %v3263, 16
      %v3398 = vrot.slane %v3396, 4
      %v3399 = vshll.u32 %v3263, 16
      %v3401 = vrot.slane %v3399, 5
      %v3402 = vor.u32 %v3398, %v3401
      %v3403 = vrot.slane %v3402, 4
      %v3405 = vshll.u32 %v3264, 16
      %v3407 = vrot.slane %v3405, 5
      %v3408 = vsel %vm1403, %v3403, %v3407
      %v3409 = vshrl.u32 %v3264, 16
      %v3411 = vrot.slane %v3409, 4
      %v3412 = vor.u32 %v3411, %v3407
      %v3413 = vrot.slane %v3412, 4
      %v3415 = vshll.u32 %v3265, 16
      %v3417 = vrot.slane %v3415, 5
      %v3418 = vsel %vm1403, %v3413, %v3417
      %v3420 = vshrl.u32 %v3266, 16
      %v3422 = vrot.slane %v3420, 4
      %v3423 = vshll.u32 %v3266, 16
      %v3425 = vrot.slane %v3423, 5
      %v3426 = vor.u32 %v3422, %v3425
      %v3427 = vrot.slane %v3426, 4
      %v3429 = vshll.u32 %v3267, 16
      %v3431 = vrot.slane %v3429, 5
      %v3432 = vsel %vm1403, %v3427, %v3431
      %v3433 = vshrl.u32 %v3267, 16
      %v3435 = vrot.slane %v3433, 4
      %v3436 = vor.u32 %v3435, %v3431
      %v3437 = vrot.slane %v3436, 4
      %v3439 = vshll.u32 %v3268, 16
      %v3441 = vrot.slane %v3439, 5
      %v3442 = vsel %vm1403, %v3437, %v3441
      %v3444 = vshrl.u32 %v3269, 16
      %v3446 = vrot.slane %v3444, 4
      %v3447 = vshll.u32 %v3269, 16
      %v3449 = vrot.slane %v3447, 5
      %v3450 = vor.u32 %v3446, %v3449
      %v3451 = vrot.slane %v3450, 4
      %v3453 = vshll.u32 %v3270, 16
      %v3455 = vrot.slane %v3453, 5
      %v3456 = vsel %vm1403, %v3451, %v3455
      %v3457 = vshrl.u32 %v3270, 16
      %v3459 = vrot.slane %v3457, 4
      %v3460 = vor.u32 %v3459, %v3455
      %v3461 = vrot.slane %v3460, 4
      %v3463 = vshll.u32 %v3271, 16
      %v3465 = vrot.slane %v3463, 5
      %v3466 = vsel %vm1403, %v3461, %v3465
      %v3468 = vshrl.u32 %v3272, 16
      %v3470 = vrot.slane %v3468, 4
      %v3471 = vshll.u32 %v3272, 16
      %v3473 = vrot.slane %v3471, 5
      %v3474 = vor.u32 %v3470, %v3473
      %v3475 = vrot.slane %v3474, 4
      %v3477 = vshll.u32 %v3273, 16
      %v3479 = vrot.slane %v3477, 5
      %v3480 = vsel %vm1403, %v3475, %v3479
      %v3481 = vshrl.u32 %v3273, 16
      %v3483 = vrot.slane %v3481, 4
      %v3484 = vor.u32 %v3483, %v3479
      %v3485 = vrot.slane %v3484, 4
      %v3487 = vshll.u32 %v3274, 16
      %v3489 = vrot.slane %v3487, 5
      %v3490 = vsel %vm1403, %v3485, %v3489
      %v3492 = vshrl.u32 %v3275, 16
      %v3494 = vrot.slane %v3492, 4
      %v3495 = vshll.u32 %v3275, 16
      %v3497 = vrot.slane %v3495, 5
      %v3498 = vor.u32 %v3494, %v3497
      %v3499 = vrot.slane %v3498, 4
      %v3501 = vshll.u32 %v3276, 16
      %v3503 = vrot.slane %v3501, 5
      %v3504 = vsel %vm1403, %v3499, %v3503
      %v3505 = vshrl.u32 %v3276, 16
      %v3507 = vrot.slane %v3505, 4
      %v3508 = vor.u32 %v3507, %v3503
      %v3509 = vrot.slane %v3508, 4
      %v3511 = vshll.u32 %v3277, 16
      %v3513 = vrot.slane %v3511, 5
      %v3514 = vsel %vm1403, %v3509, %v3513
      %v3516 = vshrl.u32 %v3278, 16
      %v3518 = vrot.slane %v3516, 4
      %v3519 = vshll.u32 %v3278, 16
      %v3521 = vrot.slane %v3519, 5
      %v3522 = vor.u32 %v3518, %v3521
      %v3523 = vrot.slane %v3522, 4
      %v3525 = vshll.u32 %v3279, 16
      %v3527 = vrot.slane %v3525, 5
      %v3528 = vsel %vm1403, %v3523, %v3527
      %v3529 = vshrl.u32 %v3279, 16
      %v3531 = vrot.slane %v3529, 4
      %v3532 = vor.u32 %v3531, %v3527
      %v3533 = vrot.slane %v3532, 4
      %v3535 = vshll.u32 %v3280, 16
      %v3537 = vrot.slane %v3535, 5
      %v3538 = vsel %vm1403, %v3533, %v3537
      %v3540 = vshrl.u32 %v3281, 16
      %v3542 = vrot.slane %v3540, 4
      %v3543 = vshll.u32 %v3281, 16
      %v3545 = vrot.slane %v3543, 5
      %v3546 = vor.u32 %v3542, %v3545
      %v3547 = vrot.slane %v3546, 4
      %v3549 = vshll.u32 %v3282, 16
      %v3551 = vrot.slane %v3549, 5
      %v3552 = vsel %vm1403, %v3547, %v3551
      %v3553 = vshrl.u32 %v3282, 16
      %v3555 = vrot.slane %v3553, 4
      %v3556 = vor.u32 %v3555, %v3551
      %v3557 = vrot.slane %v3556, 4
      %v3559 = vshll.u32 %v3283, 16
      %v3561 = vrot.slane %v3559, 5
      %v3562 = vsel %vm1403, %v3557, %v3561
      %v3564 = vshrl.u32 %v3284, 16
      %v3566 = vrot.slane %v3564, 4
      %v3567 = vshll.u32 %v3284, 16
      %v3569 = vrot.slane %v3567, 5
      %v3570 = vor.u32 %v3566, %v3569
      %v3571 = vrot.slane %v3570, 4
      %v3573 = vshll.u32 %v3285, 16
      %v3575 = vrot.slane %v3573, 5
      %v3576 = vsel %vm1403, %v3571, %v3575
      %v3577 = vshrl.u32 %v3285, 16
      %v3579 = vrot.slane %v3577, 4
      %v3580 = vor.u32 %v3579, %v3575
      %v3581 = vrot.slane %v3580, 4
      %v3583 = vshll.u32 %v3286, 16
      %v3585 = vrot.slane %v3583, 5
      %v3586 = vsel %vm1403, %v3581, %v3585
      %v3588 = vshrl.u32 %v3287, 16
      %v3590 = vrot.slane %v3588, 4
      %v3591 = vshll.u32 %v3287, 16
      %v3593 = vrot.slane %v3591, 5
      %v3594 = vor.u32 %v3590, %v3593
      %v3595 = vrot.slane %v3594, 4
      %v3597 = vshll.u32 %v3288, 16
      %v3599 = vrot.slane %v3597, 5
      %v3600 = vsel %vm1403, %v3595, %v3599
      %v3601 = vshrl.u32 %v3288, 16
      %v3603 = vrot.slane %v3601, 4
      %v3604 = vor.u32 %v3603, %v3599
      %v3605 = vrot.slane %v3604, 4
      %v3607 = vshll.u32 %v3289, 16
      %v3609 = vrot.slane %v3607, 5
      %v3610 = vsel %vm1403, %v3605, %v3609
      %v3612 = vshrl.u32 %v3290, 16
      %v3614 = vrot.slane %v3612, 4
      %v3615 = vshll.u32 %v3290, 16
      %v3617 = vrot.slane %v3615, 5
      %v3618 = vor.u32 %v3614, %v3617
      %v3619 = vrot.slane %v3618, 4
      %v3621 = vshll.u32 %v3291, 16
      %v3623 = vrot.slane %v3621, 5
      %v3624 = vsel %vm1403, %v3619, %v3623
      %v3625 = vshrl.u32 %v3291, 16
      %v3627 = vrot.slane %v3625, 4
      %v3628 = vor.u32 %v3627, %v3623
      %v3629 = vrot.slane %v3628, 4
      %v3631 = vshll.u32 %v3292, 16
      %v3633 = vrot.slane %v3631, 5
      %v3634 = vsel %vm1403, %v3629, %v3633
      %v3636 = vshrl.u32 %v3293, 16
      %v3638 = vrot.slane %v3636, 4
      %v3639 = vshll.u32 %v3293, 16
      %v3641 = vrot.slane %v3639, 5
      %v3642 = vor.u32 %v3638, %v3641
      %v3643 = vrot.slane %v3642, 4
      %v3645 = vshll.u32 %v3294, 16
      %v3647 = vrot.slane %v3645, 5
      %v3648 = vsel %vm1403, %v3643, %v3647
      %v3649 = vshrl.u32 %v3294, 16
      %v3651 = vrot.slane %v3649, 4
      %v3652 = vor.u32 %v3651, %v3647
      %v3653 = vrot.slane %v3652, 4
      %v3655 = vshll.u32 %v3295, 16
      %v3657 = vrot.slane %v3655, 5
      %v3658 = vsel %vm1403, %v3653, %v3657
      %v3660 = vshrl.u32 %v3296, 16
      %v3662 = vrot.slane %v3660, 4
      %v3663 = vshll.u32 %v3296, 16
      %v3665 = vrot.slane %v3663, 5
      %v3666 = vor.u32 %v3662, %v3665
      %v3667 = vrot.slane %v3666, 4
      %v3669 = vshll.u32 %v3297, 16
      %v3671 = vrot.slane %v3669, 5
      %v3672 = vsel %vm1403, %v3667, %v3671
      %v3673 = vshrl.u32 %v3297, 16
      %v3675 = vrot.slane %v3673, 4
      %v3676 = vor.u32 %v3675, %v3671
      %v3677 = vrot.slane %v3676, 4
      %v3679 = vshll.u32 %v3298, 16
      %v3681 = vrot.slane %v3679, 5
      %v3682 = vsel %vm1403, %v3677, %v3681
      %v3683 = vld [vmem:[%s3 + $0x100] sm:$0xf]
      %v3684 = vld [vmem:[%s3 + $0x104] sm:$0xf]
      %v3685 = vld [vmem:[%s3 + $0x108] sm:$0xf]
      %v3686 = vld [vmem:[%s3 + $0x10c] sm:$0xf]
      %v3687 = vld [vmem:[%s3 + $0x110] sm:$0xf]
      %v3688 = vld [vmem:[%s3 + $0x114] sm:$0xf]
      %v3689 = vld [vmem:[%s3 + $0x118] sm:$0xf]
      %v3690 = vld [vmem:[%s3 + $0x11c] sm:$0xf]
      %v3691 = vld [vmem:[%s3 + $0x120] sm:$0xf]
      %v3692 = vld [vmem:[%s3 + $0x124] sm:$0xf]
      %v3693 = vld [vmem:[%s3 + $0x128] sm:$0xf]
      %v3694 = vld [vmem:[%s3 + $0x12c] sm:$0xf]
      %v3695 = vld [vmem:[%s3 + $0x130] sm:$0xf]
      %v3696 = vld [vmem:[%s3 + $0x134] sm:$0xf]
      %v3697 = vld [vmem:[%s3 + $0x138] sm:$0xf]
      %v3698 = vld [vmem:[%s3 + $0x13c] sm:$0xf]
      %v3699 = vunpack.c.l.b16 %v3312
      %v3700 = vunpack.c.l.b16 %v3322
      %v3701 = vunpack.c.l.b16 %v3336
      %v3702 = vunpack.c.l.b16 %v3346
      %v3703 = vunpack.c.l.b16 %v3360
      %v3704 = vunpack.c.l.b16 %v3370
      %v3705 = vunpack.c.l.b16 %v3384
      %v3706 = vunpack.c.l.b16 %v3394
      %v3707 = vunpack.c.l.b16 %v3408
      %v3708 = vunpack.c.l.b16 %v3418
      %v3709 = vunpack.c.l.b16 %v3432
      %v3710 = vunpack.c.l.b16 %v3442
      %v3711 = vunpack.c.l.b16 %v3456
      %v3712 = vunpack.c.l.b16 %v3466
      %v3713 = vunpack.c.l.b16 %v3480
      %v3714 = vunpack.c.l.b16 %v3490
      %v3715 = vunpack.c.l.b16 %v3504
      %v3716 = vunpack.c.l.b16 %v3514
      %v3717 = vunpack.c.l.b16 %v3528
      %v3718 = vunpack.c.l.b16 %v3538
      %v3719 = vunpack.c.l.b16 %v3552
      %v3720 = vunpack.c.l.b16 %v3562
      %v3721 = vunpack.c.l.b16 %v3576
      %v3722 = vunpack.c.l.b16 %v3586
      %v3723 = vunpack.c.l.b16 %v3600
      %v3724 = vunpack.c.l.b16 %v3610
      %v3725 = vunpack.c.l.b16 %v3624
      %v3726 = vunpack.c.l.b16 %v3634
      %v3727 = vunpack.c.l.b16 %v3648
      %v3728 = vunpack.c.l.b16 %v3658
      %v3729 = vunpack.c.l.b16 %v3672
      %v3730 = vunpack.c.l.b16 %v3682
      %v3731 = vpack.c.b16 %v3700, %v3699
      %v3732 = vpack.c.b16 %v3702, %v3701
      %v3733 = vpack.c.b16 %v3704, %v3703
      %v3734 = vpack.c.b16 %v3706, %v3705
      %v3735 = vpack.c.b16 %v3708, %v3707
      %v3736 = vpack.c.b16 %v3710, %v3709
      %v3737 = vpack.c.b16 %v3712, %v3711
      %v3738 = vpack.c.b16 %v3714, %v3713
      %v3739 = vpack.c.b16 %v3716, %v3715
      %v3740 = vpack.c.b16 %v3718, %v3717
      %v3741 = vpack.c.b16 %v3720, %v3719
      %v3742 = vpack.c.b16 %v3722, %v3721
      %v3743 = vpack.c.b16 %v3724, %v3723
      %v3744 = vpack.c.b16 %v3726, %v3725
      %v3745 = vpack.c.b16 %v3728, %v3727
      %v3746 = vpack.c.b16 %v3730, %v3729
      %v3779 = vunpack.c.l.b16 %v3683
      %v3780 = vunpack.c.l.b16 %v3684
      %v3781 = vunpack.c.l.b16 %v3685
      %v3782 = vunpack.c.l.b16 %v3686
      %v3783 = vunpack.c.l.b16 %v3687
      %v3784 = vunpack.c.l.b16 %v3688
      %v3785 = vunpack.c.l.b16 %v3689
      %v3786 = vunpack.c.l.b16 %v3690
      %v3787 = vunpack.c.l.b16 %v3691
      %v3788 = vunpack.c.l.b16 %v3692
      %v3789 = vunpack.c.l.b16 %v3693
      %v3790 = vunpack.c.l.b16 %v3694
      %v3791 = vunpack.c.l.b16 %v3695
      %v3792 = vunpack.c.l.b16 %v3696
      %v3793 = vunpack.c.l.b16 %v3697
      %v3794 = vunpack.c.l.b16 %v3698
      %v3795 = vpack.c.b16 %v3780, %v3779
      %v3796 = vpack.c.b16 %v3782, %v3781
      %v3797 = vpack.c.b16 %v3784, %v3783
      %v3798 = vpack.c.b16 %v3786, %v3785
      %v3799 = vpack.c.b16 %v3788, %v3787
      %v3800 = vpack.c.b16 %v3790, %v3789
      %v3801 = vpack.c.b16 %v3792, %v3791
      %v3802 = vpack.c.b16 %v3794, %v3793
      %3811 = vmatprep.subr.bf16.mxu0 0
      %3812 = vmatpush1.bf16.msra.mxu0 %v3795
      %3813 = vmatprep.subr.bf16.mxu0 0
      %3814 = vmatpush1.bf16.msra.mxu0 %v3796
      %3815 = vmatprep.subr.bf16.mxu0 0
      %3816 = vmatpush1.bf16.msra.mxu0 %v3797
      %3817 = vmatprep.subr.bf16.mxu0 0
      %3818 = vmatpush1.bf16.msra.mxu0 %v3798
      %3819 = vmatprep.subr.bf16.mxu0 0
      %3820 = vmatpush1.bf16.msra.mxu0 %v3799
      %3821 = vmatprep.subr.bf16.mxu0 0
      %3822 = vmatpush1.bf16.msra.mxu0 %v3800
      %3823 = vmatprep.subr.bf16.mxu0 0
      %3824 = vmatpush1.bf16.msra.mxu0 %v3801
      %3825 = vmatprep.subr.bf16.mxu0 0
      %3826 = vmatpush1.bf16.msra.mxu0 %v3802
      %3827 = vmatprep.subr.bf16.mxu0 0
      %3828 = vmatpush1.bf16.msra.mxu0 0
      %3829 = vmatprep.subr.bf16.mxu0 0
      %3830 = vmatpush1.bf16.msra.mxu0 0
      %3831 = vmatprep.subr.bf16.mxu0 0
      %3832 = vmatpush1.bf16.msra.mxu0 0
      %3833 = vmatprep.subr.bf16.mxu0 0
      %3834 = vmatpush1.bf16.msra.mxu0 0
      %3835 = vmatprep.subr.bf16.mxu0 0
      %3836 = vmatpush1.bf16.msra.mxu0 0
      %3837 = vmatprep.subr.bf16.mxu0 0
      %3838 = vmatpush1.bf16.msra.mxu0 0
      %3839 = vmatprep.subr.bf16.mxu0 0
      %3840 = vmatpush1.bf16.msra.mxu0 0
      %3841 = vmatprep.subr.bf16.mxu0 0
      %3842 = vmatpush1.bf16.msra.mxu0 0
      %3843 = vmatprep.mubr.bf16.mxu0 0
      %3844 = vmatmul.mubr.bf16.gmra.mrb[0].mxu0 %v3731
      %v3845 = vpop.f32.mrb[0].mxu0
      %v3846 = vadd.f32 0.0, %v3845
      %v3847 = vpop.f32.mrb[0].mxu0
      %v3848 = vpop.f32.mrb[0].mxu0
      %v3849 = vadd.f32 0.0, %v3848
      %v3850 = vpop.f32.mrb[0].mxu0
      %3851 = vmatprep.mubr.bf16.mxu0 0
      %3852 = vmatmul.mubr.bf16.gmra.mrb[0].mxu0 %v3732
      %v3853 = vpop.f32.mrb[0].mxu0
      %v3854 = vadd.f32 0.0, %v3853
      %v3855 = vpop.f32.mrb[0].mxu0
      %v3856 = vpop.f32.mrb[0].mxu0
      %v3857 = vadd.f32 0.0, %v3856
      %v3858 = vpop.f32.mrb[0].mxu0
      %3859 = vmatprep.mubr.bf16.mxu0 0
      %3860 = vmatmul.mubr.bf16.gmra.mrb[0].mxu0 %v3733
      %v3861 = vpop.f32.mrb[0].mxu0
      %v3862 = vadd.f32 0.0, %v3861
      %v3863 = vpop.f32.mrb[0].mxu0
      %v3864 = vpop.f32.mrb[0].mxu0
      %v3865 = vadd.f32 0.0, %v3864
      %v3866 = vpop.f32.mrb[0].mxu0
      %3867 = vmatprep.mubr.bf16.mxu0 0
      %3868 = vmatmul.mubr.bf16.gmra.mrb[0].mxu0 %v3734
      %v3869 = vpop.f32.mrb[0].mxu0
      %v3870 = vadd.f32 0.0, %v3869
      %v3871 = vpop.f32.mrb[0].mxu0
      %v3872 = vpop.f32.mrb[0].mxu0
      %v3873 = vadd.f32 0.0, %v3872
      %v3874 = vpop.f32.mrb[0].mxu0
      %3875 = vmatprep.mubr.bf16.mxu0 0
      %3876 = vmatmul.mubr.bf16.gmra.mrb[0].mxu0 %v3735
      %v3877 = vpop.f32.mrb[0].mxu0
      %v3878 = vadd.f32 0.0, %v3877
      %v3879 = vpop.f32.mrb[0].mxu0
      %v3880 = vpop.f32.mrb[0].mxu0
      %v3881 = vadd.f32 0.0, %v3880
      %v3882 = vpop.f32.mrb[0].mxu0
      %3883 = vmatprep.mubr.bf16.mxu0 0
      %3884 = vmatmul.mubr.bf16.gmra.mrb[0].mxu0 %v3736
      %v3885 = vpop.f32.mrb[0].mxu0
      %v3886 = vadd.f32 0.0, %v3885
      %v3887 = vpop.f32.mrb[0].mxu0
      %v3888 = vpop.f32.mrb[0].mxu0
      %v3889 = vadd.f32 0.0, %v3888
      %v3890 = vpop.f32.mrb[0].mxu0
      %3891 = vmatprep.mubr.bf16.mxu0 0
      %3892 = vmatmul.mubr.bf16.gmra.mrb[0].mxu0 %v3737
      %v3893 = vpop.f32.mrb[0].mxu0
      %v3894 = vadd.f32 0.0, %v3893
      %v3895 = vpop.f32.mrb[0].mxu0
      %v3896 = vpop.f32.mrb[0].mxu0
      %v3897 = vadd.f32 0.0, %v3896
      %v3898 = vpop.f32.mrb[0].mxu0
      %3899 = vmatprep.mubr.bf16.mxu0 0
      %3900 = vmatmul.mubr.bf16.gmra.mrb[0].mxu0 %v3738
      %v3901 = vpop.f32.mrb[0].mxu0
      %v3902 = vadd.f32 0.0, %v3901
      %v3903 = vpop.f32.mrb[0].mxu0
      %v3904 = vpop.f32.mrb[0].mxu0
      %v3905 = vadd.f32 0.0, %v3904
      %v3906 = vpop.f32.mrb[0].mxu0
      %3907 = vmatprep.mubr.bf16.mxu0 0
      %3908 = vmatmul.mubr.bf16.gmra.mrb[0].mxu0 %v3739
      %v3909 = vpop.f32.mrb[0].mxu0
      %v3910 = vadd.f32 0.0, %v3909
      %v3911 = vpop.f32.mrb[0].mxu0
      %v3912 = vpop.f32.mrb[0].mxu0
      %v3913 = vadd.f32 0.0, %v3912
      %v3914 = vpop.f32.mrb[0].mxu0
      %3915 = vmatprep.mubr.bf16.mxu0 0
      %3916 = vmatmul.mubr.bf16.gmra.mrb[0].mxu0 %v3740
      %v3917 = vpop.f32.mrb[0].mxu0
      %v3918 = vadd.f32 0.0, %v3917
      %v3919 = vpop.f32.mrb[0].mxu0
      %v3920 = vpop.f32.mrb[0].mxu0
      %v3921 = vadd.f32 0.0, %v3920
      %v3922 = vpop.f32.mrb[0].mxu0
      %3923 = vmatprep.mubr.bf16.mxu0 0
      %3924 = vmatmul.mubr.bf16.gmra.mrb[0].mxu0 %v3741
      %v3925 = vpop.f32.mrb[0].mxu0
      %v3926 = vadd.f32 0.0, %v3925
      %v3927 = vpop.f32.mrb[0].mxu0
      %v3928 = vpop.f32.mrb[0].mxu0
      %v3929 = vadd.f32 0.0, %v3928
      %v3930 = vpop.f32.mrb[0].mxu0
      %3931 = vmatprep.mubr.bf16.mxu0 0
      %3932 = vmatmul.mubr.bf16.gmra.mrb[0].mxu0 %v3742
      %v3933 = vpop.f32.mrb[0].mxu0
      %v3934 = vadd.f32 0.0, %v3933
      %v3935 = vpop.f32.mrb[0].mxu0
      %v3936 = vpop.f32.mrb[0].mxu0
      %v3937 = vadd.f32 0.0, %v3936
      %v3938 = vpop.f32.mrb[0].mxu0
      %3939 = vmatprep.mubr.bf16.mxu0 0
      %3940 = vmatmul.mubr.bf16.gmra.mrb[0].mxu0 %v3743
      %v3941 = vpop.f32.mrb[0].mxu0
      %v3942 = vadd.f32 0.0, %v3941
      %v3943 = vpop.f32.mrb[0].mxu0
      %v3944 = vpop.f32.mrb[0].mxu0
      %v3945 = vadd.f32 0.0, %v3944
      %v3946 = vpop.f32.mrb[0].mxu0
      %3947 = vmatprep.mubr.bf16.mxu0 0
      %3948 = vmatmul.mubr.bf16.gmra.mrb[0].mxu0 %v3744
      %v3949 = vpop.f32.mrb[0].mxu0
      %v3950 = vadd.f32 0.0, %v3949
      %v3951 = vpop.f32.mrb[0].mxu0
      %v3952 = vpop.f32.mrb[0].mxu0
      %v3953 = vadd.f32 0.0, %v3952
      %v3954 = vpop.f32.mrb[0].mxu0
      %3955 = vmatprep.mubr.bf16.mxu0 0
      %3956 = vmatmul.mubr.bf16.gmra.mrb[0].mxu0 %v3745
      %v3957 = vpop.f32.mrb[0].mxu0
      %v3958 = vadd.f32 0.0, %v3957
      %v3959 = vpop.f32.mrb[0].mxu0
      %v3960 = vpop.f32.mrb[0].mxu0
      %v3961 = vadd.f32 0.0, %v3960
      %v3962 = vpop.f32.mrb[0].mxu0
      %3963 = vmatprep.mubr.bf16.mxu0 0
      %3964 = vmatmul.mubr.bf16.gmra.mrb[0].mxu0 %v3746
      %v3965 = vpop.f32.mrb[0].mxu0
      %v3966 = vadd.f32 0.0, %v3965
      %v3967 = vpop.f32.mrb[0].mxu0
      %v3968 = vpop.f32.mrb[0].mxu0
      %v3969 = vadd.f32 0.0, %v3968
      %v3970 = vpop.f32.mrb[0].mxu0
      %3971 = vdwg.mxu0
      %v3972 = vadd.f32 %v3219, %v3846
      %v3973 = vadd.f32 %v3220, %v3849
      %v3974 = vadd.f32 %v3221, %v3854
      %v3975 = vadd.f32 %v3222, %v3857
      %v3976 = vadd.f32 %v3223, %v3862
      %v3977 = vadd.f32 %v3224, %v3865
      %v3978 = vadd.f32 %v3225, %v3870
      %v3979 = vadd.f32 %v3226, %v3873
      %v3980 = vadd.f32 %v3227, %v3878
      %v3981 = vadd.f32 %v3228, %v3881
      %v3982 = vadd.f32 %v3229, %v3886
      %v3983 = vadd.f32 %v3230, %v3889
      %v3984 = vadd.f32 %v3231, %v3894
      %v3985 = vadd.f32 %v3232, %v3897
      %v3986 = vadd.f32 %v3233, %v3902
      %v3987 = vadd.f32 %v3234, %v3905
      %v3988 = vadd.f32 %v3235, %v3910
      %v3989 = vadd.f32 %v3236, %v3913
      %v3990 = vadd.f32 %v3237, %v3918
      %v3991 = vadd.f32 %v3238, %v3921
      %v3992 = vadd.f32 %v3239, %v3926
      %v3993 = vadd.f32 %v3240, %v3929
      %v3994 = vadd.f32 %v3241, %v3934
      %v3995 = vadd.f32 %v3242, %v3937
      %v3996 = vadd.f32 %v3243, %v3942
      %v3997 = vadd.f32 %v3244, %v3945
      %v3998 = vadd.f32 %v3245, %v3950
      %v3999 = vadd.f32 %v3246, %v3953
      %v4000 = vadd.f32 %v3247, %v3958
      %v4001 = vadd.f32 %v3248, %v3961
      %v4002 = vadd.f32 %v3249, %v3966
      %v4003 = vadd.f32 %v3250, %v3969
      %v4004 = vld [vmem:[%s1219] sm:$0xe]
      %v4005 = vld [vmem:[%s1219 + $0xc] sm:$0xe]
      %v4006 = vld [vmem:[%s1219 + $0x18] sm:$0xe]
      %v4007 = vld [vmem:[%s1219 + $0x24] sm:$0xe]
      %v4008 = vld [vmem:[%s1219 + $0x30] sm:$0xe]
      %v4009 = vld [vmem:[%s1219 + $0x3c] sm:$0xe]
      %v4010 = vld [vmem:[%s1219 + $0x48] sm:$0xe]
      %v4011 = vld [vmem:[%s1219 + $0x54] sm:$0xe]
      %v4012 = vld [vmem:[%s1219 + $0x60] sm:$0xe]
      %v4013 = vld [vmem:[%s1219 + $0x6c] sm:$0xe]
      %v4014 = vld [vmem:[%s1219 + $0x78] sm:$0xe]
      %v4015 = vld [vmem:[%s1219 + $0x84] sm:$0xe]
      %v4016 = vld [vmem:[%s1219 + $0x90] sm:$0xe]
      %v4017 = vld [vmem:[%s1219 + $0x9c] sm:$0xe]
      %v4018 = vld [vmem:[%s1219 + $0xa8] sm:$0xe]
      %v4019 = vld [vmem:[%s1219 + $0xb4] sm:$0xe]
      %v4068 = vrot.slane %v4004, 5
      %v4069 = vrot.slane %v4068, 4
      %v4070 = vrot.slane %v3252, 5
      %v4071 = vsel %vm2432, %v4069, %v4070
      %v4072 = vrot.slane %v4070, 4
      %v4073 = vrot.slane %v3253, 5
      %v4074 = vsel %vm2432, %v4072, %v4073
      %v4075 = vrot.slane %v4005, 5
      %v4076 = vrot.slane %v4075, 4
      %v4077 = vrot.slane %v3255, 5
      %v4078 = vsel %vm2432, %v4076, %v4077
      %v4079 = vrot.slane %v4077, 4
      %v4080 = vrot.slane %v3256, 5
      %v4081 = vsel %vm2432, %v4079, %v4080
      %v4082 = vrot.slane %v4006, 5
      %v4083 = vrot.slane %v4082, 4
      %v4084 = vrot.slane %v3258, 5
      %v4085 = vsel %vm2432, %v4083, %v4084
      %v4086 = vrot.slane %v4084, 4
      %v4087 = vrot.slane %v3259, 5
      %v4088 = vsel %vm2432, %v4086, %v4087
      %v4089 = vrot.slane %v4007, 5
      %v4090 = vrot.slane %v4089, 4
      %v4091 = vrot.slane %v3261, 5
      %v4092 = vsel %vm2432, %v4090, %v4091
      %v4093 = vrot.slane %v4091, 4
      %v4094 = vrot.slane %v3262, 5
      %v4095 = vsel %vm2432, %v4093, %v4094
      %v4096 = vrot.slane %v4008, 5
      %v4097 = vrot.slane %v4096, 4
      %v4098 = vrot.slane %v3264, 5
      %v4099 = vsel %vm2432, %v4097, %v4098
      %v4100 = vrot.slane %v4098, 4
      %v4101 = vrot.slane %v3265, 5
      %v4102 = vsel %vm2432, %v4100, %v4101
      %v4103 = vrot.slane %v4009, 5
      %v4104 = vrot.slane %v4103, 4
      %v4105 = vrot.slane %v3267, 5
      %v4106 = vsel %vm2432, %v4104, %v4105
      %v4107 = vrot.slane %v4105, 4
      %v4108 = vrot.slane %v3268, 5
      %v4109 = vsel %vm2432, %v4107, %v4108
      %v4110 = vrot.slane %v4010, 5
      %v4111 = vrot.slane %v4110, 4
      %v4112 = vrot.slane %v3270, 5
      %v4113 = vsel %vm2432, %v4111, %v4112
      %v4114 = vrot.slane %v4112, 4
      %v4115 = vrot.slane %v3271, 5
      %v4116 = vsel %vm2432, %v4114, %v4115
      %v4117 = vrot.slane %v4011, 5
      %v4118 = vrot.slane %v4117, 4
      %v4119 = vrot.slane %v3273, 5
      %v4120 = vsel %vm2432, %v4118, %v4119
      %v4121 = vrot.slane %v4119, 4
      %v4122 = vrot.slane %v3274, 5
      %v4123 = vsel %vm2432, %v4121, %v4122
      %v4124 = vrot.slane %v4012, 5
      %v4125 = vrot.slane %v4124, 4
      %v4126 = vrot.slane %v3276, 5
      %v4127 = vsel %vm2432, %v4125, %v4126
      %v4128 = vrot.slane %v4126, 4
      %v4129 = vrot.slane %v3277, 5
      %v4130 = vsel %vm2432, %v4128, %v4129
      %v4131 = vrot.slane %v4013, 5
      %v4132 = vrot.slane %v4131, 4
      %v4133 = vrot.slane %v3279, 5
      %v4134 = vsel %vm2432, %v4132, %v4133
      %v4135 = vrot.slane %v4133, 4
      %v4136 = vrot.slane %v3280, 5
      %v4137 = vsel %vm2432, %v4135, %v4136
      %v4138 = vrot.slane %v4014, 5
      %v4139 = vrot.slane %v4138, 4
      %v4140 = vrot.slane %v3282, 5
      %v4141 = vsel %vm2432, %v4139, %v4140
      %v4142 = vrot.slane %v4140, 4
      %v4143 = vrot.slane %v3283, 5
      %v4144 = vsel %vm2432, %v4142, %v4143
      %v4145 = vrot.slane %v4015, 5
      %v4146 = vrot.slane %v4145, 4
      %v4147 = vrot.slane %v3285, 5
      %v4148 = vsel %vm2432, %v4146, %v4147
      %v4149 = vrot.slane %v4147, 4
      %v4150 = vrot.slane %v3286, 5
      %v4151 = vsel %vm2432, %v4149, %v4150
      %v4152 = vrot.slane %v4016, 5
      %v4153 = vrot.slane %v4152, 4
      %v4154 = vrot.slane %v3288, 5
      %v4155 = vsel %vm2432, %v4153, %v4154
      %v4156 = vrot.slane %v4154, 4
      %v4157 = vrot.slane %v3289, 5
      %v4158 = vsel %vm2432, %v4156, %v4157
      %v4159 = vrot.slane %v4017, 5
      %v4160 = vrot.slane %v4159, 4
      %v4161 = vrot.slane %v3291, 5
      %v4162 = vsel %vm2432, %v4160, %v4161
      %v4163 = vrot.slane %v4161, 4
      %v4164 = vrot.slane %v3292, 5
      %v4165 = vsel %vm2432, %v4163, %v4164
      %v4166 = vrot.slane %v4018, 5
      %v4167 = vrot.slane %v4166, 4
      %v4168 = vrot.slane %v3294, 5
      %v4169 = vsel %vm2432, %v4167, %v4168
      %v4170 = vrot.slane %v4168, 4
      %v4171 = vrot.slane %v3295, 5
      %v4172 = vsel %vm2432, %v4170, %v4171
      %v4173 = vrot.slane %v4019, 5
      %v4174 = vrot.slane %v4173, 4
      %v4175 = vrot.slane %v3297, 5
      %v4176 = vsel %vm2432, %v4174, %v4175
      %v4177 = vrot.slane %v4175, 4
      %v4178 = vrot.slane %v3298, 5
      %v4179 = vsel %vm2432, %v4177, %v4178
      %v4180 = vld [vmem:[%s3 + $0x140] sm:$0xf]
      %v4181 = vld [vmem:[%s3 + $0x144] sm:$0xf]
      %v4182 = vld [vmem:[%s3 + $0x148] sm:$0xf]
      %v4183 = vld [vmem:[%s3 + $0x14c] sm:$0xf]
      %v4184 = vld [vmem:[%s3 + $0x150] sm:$0xf]
      %v4185 = vld [vmem:[%s3 + $0x154] sm:$0xf]
      %v4186 = vld [vmem:[%s3 + $0x158] sm:$0xf]
      %v4187 = vld [vmem:[%s3 + $0x15c] sm:$0xf]
      %v4188 = vld [vmem:[%s3 + $0x160] sm:$0xf]
      %v4189 = vld [vmem:[%s3 + $0x164] sm:$0xf]
      %v4190 = vld [vmem:[%s3 + $0x168] sm:$0xf]
      %v4191 = vld [vmem:[%s3 + $0x16c] sm:$0xf]
      %v4192 = vld [vmem:[%s3 + $0x170] sm:$0xf]
      %v4193 = vld [vmem:[%s3 + $0x174] sm:$0xf]
      %v4194 = vld [vmem:[%s3 + $0x178] sm:$0xf]
      %v4195 = vld [vmem:[%s3 + $0x17c] sm:$0xf]
      %v4196 = vunpack.c.l.b16 %v4071
      %v4197 = vunpack.c.l.b16 %v4074
      %v4198 = vunpack.c.l.b16 %v4078
      %v4199 = vunpack.c.l.b16 %v4081
      %v4200 = vunpack.c.l.b16 %v4085
      %v4201 = vunpack.c.l.b16 %v4088
      %v4202 = vunpack.c.l.b16 %v4092
      %v4203 = vunpack.c.l.b16 %v4095
      %v4204 = vunpack.c.l.b16 %v4099
      %v4205 = vunpack.c.l.b16 %v4102
      %v4206 = vunpack.c.l.b16 %v4106
      %v4207 = vunpack.c.l.b16 %v4109
      %v4208 = vunpack.c.l.b16 %v4113
      %v4209 = vunpack.c.l.b16 %v4116
      %v4210 = vunpack.c.l.b16 %v4120
      %v4211 = vunpack.c.l.b16 %v4123
      %v4212 = vunpack.c.l.b16 %v4127
      %v4213 = vunpack.c.l.b16 %v4130
      %v4214 = vunpack.c.l.b16 %v4134
      %v4215 = vunpack.c.l.b16 %v4137
      %v4216 = vunpack.c.l.b16 %v4141
      %v4217 = vunpack.c.l.b16 %v4144
      %v4218 = vunpack.c.l.b16 %v4148
      %v4219 = vunpack.c.l.b16 %v4151
      %v4220 = vunpack.c.l.b16 %v4155
      %v4221 = vunpack.c.l.b16 %v4158
      %v4222 = vunpack.c.l.b16 %v4162
      %v4223 = vunpack.c.l.b16 %v4165
      %v4224 = vunpack.c.l.b16 %v4169
      %v4225 = vunpack.c.l.b16 %v4172
      %v4226 = vunpack.c.l.b16 %v4176
      %v4227 = vunpack.c.l.b16 %v4179
      %v4228 = vpack.c.b16 %v4197, %v4196
      %v4229 = vpack.c.b16 %v4199, %v4198
      %v4230 = vpack.c.b16 %v4201, %v4200
      %v4231 = vpack.c.b16 %v4203, %v4202
      %v4232 = vpack.c.b16 %v4205, %v4204
      %v4233 = vpack.c.b16 %v4207, %v4206
      %v4234 = vpack.c.b16 %v4209, %v4208
      %v4235 = vpack.c.b16 %v4211, %v4210
      %v4236 = vpack.c.b16 %v4213, %v4212
      %v4237 = vpack.c.b16 %v4215, %v4214
      %v4238 = vpack.c.b16 %v4217, %v4216
      %v4239 = vpack.c.b16 %v4219, %v4218
      %v4240 = vpack.c.b16 %v4221, %v4220
      %v4241 = vpack.c.b16 %v4223, %v4222
      %v4242 = vpack.c.b16 %v4225, %v4224
      %v4243 = vpack.c.b16 %v4227, %v4226
      %v4276 = vunpack.c.l.b16 %v4180
      %v4277 = vunpack.c.l.b16 %v4181
      %v4278 = vunpack.c.l.b16 %v4182
      %v4279 = vunpack.c.l.b16 %v4183
      %v4280 = vunpack.c.l.b16 %v4184
      %v4281 = vunpack.c.l.b16 %v4185
      %v4282 = vunpack.c.l.b16 %v4186
      %v4283 = vunpack.c.l.b16 %v4187
      %v4284 = vunpack.c.l.b16 %v4188
      %v4285 = vunpack.c.l.b16 %v4189
      %v4286 = vunpack.c.l.b16 %v4190
      %v4287 = vunpack.c.l.b16 %v4191
      %v4288 = vunpack.c.l.b16 %v4192
      %v4289 = vunpack.c.l.b16 %v4193
      %v4290 = vunpack.c.l.b16 %v4194
      %v4291 = vunpack.c.l.b16 %v4195
      %v4292 = vpack.c.b16 %v4277, %v4276
      %v4293 = vpack.c.b16 %v4279, %v4278
      %v4294 = vpack.c.b16 %v4281, %v4280
      %v4295 = vpack.c.b16 %v4283, %v4282
      %v4296 = vpack.c.b16 %v4285, %v4284
      %v4297 = vpack.c.b16 %v4287, %v4286
      %v4298 = vpack.c.b16 %v4289, %v4288
      %v4299 = vpack.c.b16 %v4291, %v4290
      %4308 = vmatprep.subr.bf16.mxu0 0
      %4309 = vmatpush1.bf16.msra.mxu0 %v4292
      %4310 = vmatprep.subr.bf16.mxu0 0
      %4311 = vmatpush1.bf16.msra.mxu0 %v4293
      %4312 = vmatprep.subr.bf16.mxu0 0
      %4313 = vmatpush1.bf16.msra.mxu0 %v4294
      %4314 = vmatprep.subr.bf16.mxu0 0
      %4315 = vmatpush1.bf16.msra.mxu0 %v4295
      %4316 = vmatprep.subr.bf16.mxu0 0
      %4317 = vmatpush1.bf16.msra.mxu0 %v4296
      %4318 = vmatprep.subr.bf16.mxu0 0
      %4319 = vmatpush1.bf16.msra.mxu0 %v4297
      %4320 = vmatprep.subr.bf16.mxu0 0
      %4321 = vmatpush1.bf16.msra.mxu0 %v4298
      %4322 = vmatprep.subr.bf16.mxu0 0
      %4323 = vmatpush1.bf16.msra.mxu0 %v4299
      %4324 = vmatprep.subr.bf16.mxu0 0
      %4325 = vmatpush1.bf16.msra.mxu0 0
      %4326 = vmatprep.subr.bf16.mxu0 0
      %4327 = vmatpush1.bf16.msra.mxu0 0
      %4328 = vmatprep.subr.bf16.mxu0 0
      %4329 = vmatpush1.bf16.msra.mxu0 0
      %4330 = vmatprep.subr.bf16.mxu0 0
      %4331 = vmatpush1.bf16.msra.mxu0 0
      %4332 = vmatprep.subr.bf16.mxu0 0
      %4333 = vmatpush1.bf16.msra.mxu0 0
      %4334 = vmatprep.subr.bf16.mxu0 0
      %4335 = vmatpush1.bf16.msra.mxu0 0
      %4336 = vmatprep.subr.bf16.mxu0 0
      %4337 = vmatpush1.bf16.msra.mxu0 0
      %4338 = vmatprep.subr.bf16.mxu0 0
      %4339 = vmatpush1.bf16.msra.mxu0 0
      %4340 = vmatprep.mubr.bf16.mxu0 0
      %4341 = vmatmul.mubr.bf16.gmra.mrb[0].mxu0 %v4228
      %v4342 = vpop.f32.mrb[0].mxu0
      %v4343 = vadd.f32 0.0, %v4342
      %v4344 = vpop.f32.mrb[0].mxu0
      %v4345 = vpop.f32.mrb[0].mxu0
      %v4346 = vadd.f32 0.0, %v4345
      %v4347 = vpop.f32.mrb[0].mxu0
      %4348 = vmatprep.mubr.bf16.mxu0 0
      %4349 = vmatmul.mubr.bf16.gmra.mrb[0].mxu0 %v4229
      %v4350 = vpop.f32.mrb[0].mxu0
      %v4351 = vadd.f32 0.0, %v4350
      %v4352 = vpop.f32.mrb[0].mxu0
      %v4353 = vpop.f32.mrb[0].mxu0
      %v4354 = vadd.f32 0.0, %v4353
      %v4355 = vpop.f32.mrb[0].mxu0
      %4356 = vmatprep.mubr.bf16.mxu0 0
      %4357 = vmatmul.mubr.bf16.gmra.mrb[0].mxu0 %v4230
      %v4358 = vpop.f32.mrb[0].mxu0
      %v4359 = vadd.f32 0.0, %v4358
      %v4360 = vpop.f32.mrb[0].mxu0
      %v4361 = vpop.f32.mrb[0].mxu0
      %v4362 = vadd.f32 0.0, %v4361
      %v4363 = vpop.f32.mrb[0].mxu0
      %4364 = vmatprep.mubr.bf16.mxu0 0
      %4365 = vmatmul.mubr.bf16.gmra.mrb[0].mxu0 %v4231
      %v4366 = vpop.f32.mrb[0].mxu0
      %v4367 = vadd.f32 0.0, %v4366
      %v4368 = vpop.f32.mrb[0].mxu0
      %v4369 = vpop.f32.mrb[0].mxu0
      %v4370 = vadd.f32 0.0, %v4369
      %v4371 = vpop.f32.mrb[0].mxu0
      %4372 = vmatprep.mubr.bf16.mxu0 0
      %4373 = vmatmul.mubr.bf16.gmra.mrb[0].mxu0 %v4232
      %v4374 = vpop.f32.mrb[0].mxu0
      %v4375 = vadd.f32 0.0, %v4374
      %v4376 = vpop.f32.mrb[0].mxu0
      %v4377 = vpop.f32.mrb[0].mxu0
      %v4378 = vadd.f32 0.0, %v4377
      %v4379 = vpop.f32.mrb[0].mxu0
      %4380 = vmatprep.mubr.bf16.mxu0 0
      %4381 = vmatmul.mubr.bf16.gmra.mrb[0].mxu0 %v4233
      %v4382 = vpop.f32.mrb[0].mxu0
      %v4383 = vadd.f32 0.0, %v4382
      %v4384 = vpop.f32.mrb[0].mxu0
      %v4385 = vpop.f32.mrb[0].mxu0
      %v4386 = vadd.f32 0.0, %v4385
      %v4387 = vpop.f32.mrb[0].mxu0
      %4388 = vmatprep.mubr.bf16.mxu0 0
      %4389 = vmatmul.mubr.bf16.gmra.mrb[0].mxu0 %v4234
      %v4390 = vpop.f32.mrb[0].mxu0
      %v4391 = vadd.f32 0.0, %v4390
      %v4392 = vpop.f32.mrb[0].mxu0
      %v4393 = vpop.f32.mrb[0].mxu0
      %v4394 = vadd.f32 0.0, %v4393
      %v4395 = vpop.f32.mrb[0].mxu0
      %4396 = vmatprep.mubr.bf16.mxu0 0
      %4397 = vmatmul.mubr.bf16.gmra.mrb[0].mxu0 %v4235
      %v4398 = vpop.f32.mrb[0].mxu0
      %v4399 = vadd.f32 0.0, %v4398
      %v4400 = vpop.f32.mrb[0].mxu0
      %v4401 = vpop.f32.mrb[0].mxu0
      %v4402 = vadd.f32 0.0, %v4401
      %v4403 = vpop.f32.mrb[0].mxu0
      %4404 = vmatprep.mubr.bf16.mxu0 0
      %4405 = vmatmul.mubr.bf16.gmra.mrb[0].mxu0 %v4236
      %v4406 = vpop.f32.mrb[0].mxu0
      %v4407 = vadd.f32 0.0, %v4406
      %v4408 = vpop.f32.mrb[0].mxu0
      %v4409 = vpop.f32.mrb[0].mxu0
      %v4410 = vadd.f32 0.0, %v4409
      %v4411 = vpop.f32.mrb[0].mxu0
      %4412 = vmatprep.mubr.bf16.mxu0 0
      %4413 = vmatmul.mubr.bf16.gmra.mrb[0].mxu0 %v4237
      %v4414 = vpop.f32.mrb[0].mxu0
      %v4415 = vadd.f32 0.0, %v4414
      %v4416 = vpop.f32.mrb[0].mxu0
      %v4417 = vpop.f32.mrb[0].mxu0
      %v4418 = vadd.f32 0.0, %v4417
      %v4419 = vpop.f32.mrb[0].mxu0
      %4420 = vmatprep.mubr.bf16.mxu0 0
      %4421 = vmatmul.mubr.bf16.gmra.mrb[0].mxu0 %v4238
      %v4422 = vpop.f32.mrb[0].mxu0
      %v4423 = vadd.f32 0.0, %v4422
      %v4424 = vpop.f32.mrb[0].mxu0
      %v4425 = vpop.f32.mrb[0].mxu0
      %v4426 = vadd.f32 0.0, %v4425
      %v4427 = vpop.f32.mrb[0].mxu0
      %4428 = vmatprep.mubr.bf16.mxu0 0
      %4429 = vmatmul.mubr.bf16.gmra.mrb[0].mxu0 %v4239
      %v4430 = vpop.f32.mrb[0].mxu0
      %v4431 = vadd.f32 0.0, %v4430
      %v4432 = vpop.f32.mrb[0].mxu0
      %v4433 = vpop.f32.mrb[0].mxu0
      %v4434 = vadd.f32 0.0, %v4433
      %v4435 = vpop.f32.mrb[0].mxu0
      %4436 = vmatprep.mubr.bf16.mxu0 0
      %4437 = vmatmul.mubr.bf16.gmra.mrb[0].mxu0 %v4240
      %v4438 = vpop.f32.mrb[0].mxu0
      %v4439 = vadd.f32 0.0, %v4438
      %v4440 = vpop.f32.mrb[0].mxu0
      %v4441 = vpop.f32.mrb[0].mxu0
      %v4442 = vadd.f32 0.0, %v4441
      %v4443 = vpop.f32.mrb[0].mxu0
      %4444 = vmatprep.mubr.bf16.mxu0 0
      %4445 = vmatmul.mubr.bf16.gmra.mrb[0].mxu0 %v4241
      %v4446 = vpop.f32.mrb[0].mxu0
      %v4447 = vadd.f32 0.0, %v4446
      %v4448 = vpop.f32.mrb[0].mxu0
      %v4449 = vpop.f32.mrb[0].mxu0
      %v4450 = vadd.f32 0.0, %v4449
      %v4451 = vpop.f32.mrb[0].mxu0
      %4452 = vmatprep.mubr.bf16.mxu0 0
      %4453 = vmatmul.mubr.bf16.gmra.mrb[0].mxu0 %v4242
      %v4454 = vpop.f32.mrb[0].mxu0
      %v4455 = vadd.f32 0.0, %v4454
      %v4456 = vpop.f32.mrb[0].mxu0
      %v4457 = vpop.f32.mrb[0].mxu0
      %v4458 = vadd.f32 0.0, %v4457
      %v4459 = vpop.f32.mrb[0].mxu0
      %4460 = vmatprep.mubr.bf16.mxu0 0
      %4461 = vmatmul.mubr.bf16.gmra.mrb[0].mxu0 %v4243
      %v4462 = vpop.f32.mrb[0].mxu0
      %v4463 = vadd.f32 0.0, %v4462
      %v4464 = vpop.f32.mrb[0].mxu0
      %v4465 = vpop.f32.mrb[0].mxu0
      %v4466 = vadd.f32 0.0, %v4465
      %v4467 = vpop.f32.mrb[0].mxu0
      %4468 = vdwg.mxu0
      %v4469 = vadd.f32 %v3972, %v4343
      %v4470 = vadd.f32 %v3973, %v4346
      %v4471 = vadd.f32 %v3974, %v4351
      %v4472 = vadd.f32 %v3975, %v4354
      %v4473 = vadd.f32 %v3976, %v4359
      %v4474 = vadd.f32 %v3977, %v4362
      %v4475 = vadd.f32 %v3978, %v4367
      %v4476 = vadd.f32 %v3979, %v4370
      %v4477 = vadd.f32 %v3980, %v4375
      %v4478 = vadd.f32 %v3981, %v4378
      %v4479 = vadd.f32 %v3982, %v4383
      %v4480 = vadd.f32 %v3983, %v4386
      %v4481 = vadd.f32 %v3984, %v4391
      %v4482 = vadd.f32 %v3985, %v4394
      %v4483 = vadd.f32 %v3986, %v4399
      %v4484 = vadd.f32 %v3987, %v4402
      %v4485 = vadd.f32 %v3988, %v4407
      %v4486 = vadd.f32 %v3989, %v4410
      %v4487 = vadd.f32 %v3990, %v4415
      %v4488 = vadd.f32 %v3991, %v4418
      %v4489 = vadd.f32 %v3992, %v4423
      %v4490 = vadd.f32 %v3993, %v4426
      %v4491 = vadd.f32 %v3994, %v4431
      %v4492 = vadd.f32 %v3995, %v4434
      %v4493 = vadd.f32 %v3996, %v4439
      %v4494 = vadd.f32 %v3997, %v4442
      %v4495 = vadd.f32 %v3998, %v4447
      %v4496 = vadd.f32 %v3999, %v4450
      %v4497 = vadd.f32 %v4000, %v4455
      %v4498 = vadd.f32 %v4001, %v4458
      %v4499 = vadd.f32 %v4002, %v4463
      %v4500 = vadd.f32 %v4003, %v4466
      %s4501 = scalar_lea.vmem [#allocation2], 24
      %v4502 = vld [vmem:[%s4501] sm:$0xf]
      %v4503 = vld [vmem:[%s4501 + $0x4] sm:$0xf]
      %v4504 = vld [vmem:[%s4501 + $0xc] sm:$0xf]
      %v4505 = vld [vmem:[%s4501 + $0x10] sm:$0xf]
      %v4506 = vld [vmem:[%s4501 + $0x18] sm:$0xf]
      %v4507 = vld [vmem:[%s4501 + $0x1c] sm:$0xf]
      %v4508 = vld [vmem:[%s4501 + $0x24] sm:$0xf]
      %v4509 = vld [vmem:[%s4501 + $0x28] sm:$0xf]
      %v4510 = vld [vmem:[%s4501 + $0x30] sm:$0xf]
      %v4511 = vld [vmem:[%s4501 + $0x34] sm:$0xf]
      %v4512 = vld [vmem:[%s4501 + $0x3c] sm:$0xf]
      %v4513 = vld [vmem:[%s4501 + $0x40] sm:$0xf]
      %v4514 = vld [vmem:[%s4501 + $0x48] sm:$0xf]
      %v4515 = vld [vmem:[%s4501 + $0x4c] sm:$0xf]
      %v4516 = vld [vmem:[%s4501 + $0x54] sm:$0xf]
      %v4517 = vld [vmem:[%s4501 + $0x58] sm:$0xf]
      %v4518 = vld [vmem:[%s4501 + $0x60] sm:$0xf]
      %v4519 = vld [vmem:[%s4501 + $0x64] sm:$0xf]
      %v4520 = vld [vmem:[%s4501 + $0x6c] sm:$0xf]
      %v4521 = vld [vmem:[%s4501 + $0x70] sm:$0xf]
      %v4522 = vld [vmem:[%s4501 + $0x78] sm:$0xf]
      %v4523 = vld [vmem:[%s4501 + $0x7c] sm:$0xf]
      %v4524 = vld [vmem:[%s4501 + $0x84] sm:$0xf]
      %v4525 = vld [vmem:[%s4501 + $0x88] sm:$0xf]
      %v4526 = vld [vmem:[%s4501 + $0x90] sm:$0xf]
      %v4527 = vld [vmem:[%s4501 + $0x94] sm:$0xf]
      %v4528 = vld [vmem:[%s4501 + $0x9c] sm:$0xf]
      %v4529 = vld [vmem:[%s4501 + $0xa0] sm:$0xf]
      %v4530 = vld [vmem:[%s4501 + $0xa8] sm:$0xf]
      %v4531 = vld [vmem:[%s4501 + $0xac] sm:$0xf]
      %v4532 = vld [vmem:[%s4501 + $0xb4] sm:$0xf]
      %v4533 = vld [vmem:[%s4501 + $0xb8] sm:$0xf]
      %v4534 = vld [vmem:[%s3 + $0x180] sm:$0xf]
      %v4535 = vld [vmem:[%s3 + $0x184] sm:$0xf]
      %v4536 = vld [vmem:[%s3 + $0x188] sm:$0xf]
      %v4537 = vld [vmem:[%s3 + $0x18c] sm:$0xf]
      %v4538 = vld [vmem:[%s3 + $0x190] sm:$0xf]
      %v4539 = vld [vmem:[%s3 + $0x194] sm:$0xf]
      %v4540 = vld [vmem:[%s3 + $0x198] sm:$0xf]
      %v4541 = vld [vmem:[%s3 + $0x19c] sm:$0xf]
      %v4542 = vld [vmem:[%s3 + $0x1a0] sm:$0xf]
      %v4543 = vld [vmem:[%s3 + $0x1a4] sm:$0xf]
      %v4544 = vld [vmem:[%s3 + $0x1a8] sm:$0xf]
      %v4545 = vld [vmem:[%s3 + $0x1ac] sm:$0xf]
      %v4546 = vld [vmem:[%s3 + $0x1b0] sm:$0xf]
      %v4547 = vld [vmem:[%s3 + $0x1b4] sm:$0xf]
      %v4548 = vld [vmem:[%s3 + $0x1b8] sm:$0xf]
      %v4549 = vld [vmem:[%s3 + $0x1bc] sm:$0xf]
      %v4582 = vunpack.c.l.b16 %v4502
      %v4583 = vunpack.c.l.b16 %v4503
      %v4584 = vunpack.c.l.b16 %v4504
      %v4585 = vunpack.c.l.b16 %v4505
      %v4586 = vunpack.c.l.b16 %v4506
      %v4587 = vunpack.c.l.b16 %v4507
      %v4588 = vunpack.c.l.b16 %v4508
      %v4589 = vunpack.c.l.b16 %v4509
      %v4590 = vunpack.c.l.b16 %v4510
      %v4591 = vunpack.c.l.b16 %v4511
      %v4592 = vunpack.c.l.b16 %v4512
      %v4593 = vunpack.c.l.b16 %v4513
      %v4594 = vunpack.c.l.b16 %v4514
      %v4595 = vunpack.c.l.b16 %v4515
      %v4596 = vunpack.c.l.b16 %v4516
      %v4597 = vunpack.c.l.b16 %v4517
      %v4598 = vunpack.c.l.b16 %v4518
      %v4599 = vunpack.c.l.b16 %v4519
      %v4600 = vunpack.c.l.b16 %v4520
      %v4601 = vunpack.c.l.b16 %v4521
      %v4602 = vunpack.c.l.b16 %v4522
      %v4603 = vunpack.c.l.b16 %v4523
      %v4604 = vunpack.c.l.b16 %v4524
      %v4605 = vunpack.c.l.b16 %v4525
      %v4606 = vunpack.c.l.b16 %v4526
      %v4607 = vunpack.c.l.b16 %v4527
      %v4608 = vunpack.c.l.b16 %v4528
      %v4609 = vunpack.c.l.b16 %v4529
      %v4610 = vunpack.c.l.b16 %v4530
      %v4611 = vunpack.c.l.b16 %v4531
      %v4612 = vunpack.c.l.b16 %v4532
      %v4613 = vunpack.c.l.b16 %v4533
      %v4614 = vpack.c.b16 %v4583, %v4582
      %v4615 = vpack.c.b16 %v4585, %v4584
      %v4616 = vpack.c.b16 %v4587, %v4586
      %v4617 = vpack.c.b16 %v4589, %v4588
      %v4618 = vpack.c.b16 %v4591, %v4590
      %v4619 = vpack.c.b16 %v4593, %v4592
      %v4620 = vpack.c.b16 %v4595, %v4594
      %v4621 = vpack.c.b16 %v4597, %v4596
      %v4622 = vpack.c.b16 %v4599, %v4598
      %v4623 = vpack.c.b16 %v4601, %v4600
      %v4624 = vpack.c.b16 %v4603, %v4602
      %v4625 = vpack.c.b16 %v4605, %v4604
      %v4626 = vpack.c.b16 %v4607, %v4606
      %v4627 = vpack.c.b16 %v4609, %v4608
      %v4628 = vpack.c.b16 %v4611, %v4610
      %v4629 = vpack.c.b16 %v4613, %v4612
      %v4662 = vunpack.c.l.b16 %v4534
      %v4663 = vunpack.c.l.b16 %v4535
      %v4664 = vunpack.c.l.b16 %v4536
      %v4665 = vunpack.c.l.b16 %v4537
      %v4666 = vunpack.c.l.b16 %v4538
      %v4667 = vunpack.c.l.b16 %v4539
      %v4668 = vunpack.c.l.b16 %v4540
      %v4669 = vunpack.c.l.b16 %v4541
      %v4670 = vunpack.c.l.b16 %v4542
      %v4671 = vunpack.c.l.b16 %v4543
      %v4672 = vunpack.c.l.b16 %v4544
      %v4673 = vunpack.c.l.b16 %v4545
      %v4674 = vunpack.c.l.b16 %v4546
      %v4675 = vunpack.c.l.b16 %v4547
      %v4676 = vunpack.c.l.b16 %v4548
      %v4677 = vunpack.c.l.b16 %v4549
      %v4678 = vpack.c.b16 %v4663, %v4662
      %v4679 = vpack.c.b16 %v4665, %v4664
      %v4680 = vpack.c.b16 %v4667, %v4666
      %v4681 = vpack.c.b16 %v4669, %v4668
      %v4682 = vpack.c.b16 %v4671, %v4670
      %v4683 = vpack.c.b16 %v4673, %v4672
      %v4684 = vpack.c.b16 %v4675, %v4674
      %v4685 = vpack.c.b16 %v4677, %v4676
      %4694 = vmatprep.subr.bf16.mxu0 0
      %4695 = vmatpush1.bf16.msra.mxu0 %v4678
      %4696 = vmatprep.subr.bf16.mxu0 0
      %4697 = vmatpush1.bf16.msra.mxu0 %v4679
      %4698 = vmatprep.subr.bf16.mxu0 0
      %4699 = vmatpush1.bf16.msra.mxu0 %v4680
      %4700 = vmatprep.subr.bf16.mxu0 0
      %4701 = vmatpush1.bf16.msra.mxu0 %v4681
      %4702 = vmatprep.subr.bf16.mxu0 0
      %4703 = vmatpush1.bf16.msra.mxu0 %v4682
      %4704 = vmatprep.subr.bf16.mxu0 0
      %4705 = vmatpush1.bf16.msra.mxu0 %v4683
      %4706 = vmatprep.subr.bf16.mxu0 0
      %4707 = vmatpush1.bf16.msra.mxu0 %v4684
      %4708 = vmatprep.subr.bf16.mxu0 0
      %4709 = vmatpush1.bf16.msra.mxu0 %v4685
      %4710 = vmatprep.subr.bf16.mxu0 0
      %4711 = vmatpush1.bf16.msra.mxu0 0
      %4712 = vmatprep.subr.bf16.mxu0 0
      %4713 = vmatpush1.bf16.msra.mxu0 0
      %4714 = vmatprep.subr.bf16.mxu0 0
      %4715 = vmatpush1.bf16.msra.mxu0 0
      %4716 = vmatprep.subr.bf16.mxu0 0
      %4717 = vmatpush1.bf16.msra.mxu0 0
      %4718 = vmatprep.subr.bf16.mxu0 0
      %4719 = vmatpush1.bf16.msra.mxu0 0
      %4720 = vmatprep.subr.bf16.mxu0 0
      %4721 = vmatpush1.bf16.msra.mxu0 0
      %4722 = vmatprep.subr.bf16.mxu0 0
      %4723 = vmatpush1.bf16.msra.mxu0 0
      %4724 = vmatprep.subr.bf16.mxu0 0
      %4725 = vmatpush1.bf16.msra.mxu0 0
      %4726 = vmatprep.mubr.bf16.mxu0 0
      %4727 = vmatmul.mubr.bf16.gmra.mrb[0].mxu0 %v4614
      %v4728 = vpop.f32.mrb[0].mxu0
      %v4729 = vadd.f32 0.0, %v4728
      %v4730 = vpop.f32.mrb[0].mxu0
      %v4731 = vpop.f32.mrb[0].mxu0
      %v4732 = vadd.f32 0.0, %v4731
      %v4733 = vpop.f32.mrb[0].mxu0
      %4734 = vmatprep.mubr.bf16.mxu0 0
      %4735 = vmatmul.mubr.bf16.gmra.mrb[0].mxu0 %v4615
      %v4736 = vpop.f32.mrb[0].mxu0
      %v4737 = vadd.f32 0.0, %v4736
      %v4738 = vpop.f32.mrb[0].mxu0
      %v4739 = vpop.f32.mrb[0].mxu0
      %v4740 = vadd.f32 0.0, %v4739
      %v4741 = vpop.f32.mrb[0].mxu0
      %4742 = vmatprep.mubr.bf16.mxu0 0
      %4743 = vmatmul.mubr.bf16.gmra.mrb[0].mxu0 %v4616
      %v4744 = vpop.f32.mrb[0].mxu0
      %v4745 = vadd.f32 0.0, %v4744
      %v4746 = vpop.f32.mrb[0].mxu0
      %v4747 = vpop.f32.mrb[0].mxu0
      %v4748 = vadd.f32 0.0, %v4747
      %v4749 = vpop.f32.mrb[0].mxu0
      %4750 = vmatprep.mubr.bf16.mxu0 0
      %4751 = vmatmul.mubr.bf16.gmra.mrb[0].mxu0 %v4617
      %v4752 = vpop.f32.mrb[0].mxu0
      %v4753 = vadd.f32 0.0, %v4752
      %v4754 = vpop.f32.mrb[0].mxu0
      %v4755 = vpop.f32.mrb[0].mxu0
      %v4756 = vadd.f32 0.0, %v4755
      %v4757 = vpop.f32.mrb[0].mxu0
      %4758 = vmatprep.mubr.bf16.mxu0 0
      %4759 = vmatmul.mubr.bf16.gmra.mrb[0].mxu0 %v4618
      %v4760 = vpop.f32.mrb[0].mxu0
      %v4761 = vadd.f32 0.0, %v4760
      %v4762 = vpop.f32.mrb[0].mxu0
      %v4763 = vpop.f32.mrb[0].mxu0
      %v4764 = vadd.f32 0.0, %v4763
      %v4765 = vpop.f32.mrb[0].mxu0
      %4766 = vmatprep.mubr.bf16.mxu0 0
      %4767 = vmatmul.mubr.bf16.gmra.mrb[0].mxu0 %v4619
      %v4768 = vpop.f32.mrb[0].mxu0
      %v4769 = vadd.f32 0.0, %v4768
      %v4770 = vpop.f32.mrb[0].mxu0
      %v4771 = vpop.f32.mrb[0].mxu0
      %v4772 = vadd.f32 0.0, %v4771
      %v4773 = vpop.f32.mrb[0].mxu0
      %4774 = vmatprep.mubr.bf16.mxu0 0
      %4775 = vmatmul.mubr.bf16.gmra.mrb[0].mxu0 %v4620
      %v4776 = vpop.f32.mrb[0].mxu0
      %v4777 = vadd.f32 0.0, %v4776
      %v4778 = vpop.f32.mrb[0].mxu0
      %v4779 = vpop.f32.mrb[0].mxu0
      %v4780 = vadd.f32 0.0, %v4779
      %v4781 = vpop.f32.mrb[0].mxu0
      %4782 = vmatprep.mubr.bf16.mxu0 0
      %4783 = vmatmul.mubr.bf16.gmra.mrb[0].mxu0 %v4621
      %v4784 = vpop.f32.mrb[0].mxu0
      %v4785 = vadd.f32 0.0, %v4784
      %v4786 = vpop.f32.mrb[0].mxu0
      %v4787 = vpop.f32.mrb[0].mxu0
      %v4788 = vadd.f32 0.0, %v4787
      %v4789 = vpop.f32.mrb[0].mxu0
      %4790 = vmatprep.mubr.bf16.mxu0 0
      %4791 = vmatmul.mubr.bf16.gmra.mrb[0].mxu0 %v4622
      %v4792 = vpop.f32.mrb[0].mxu0
      %v4793 = vadd.f32 0.0, %v4792
      %v4794 = vpop.f32.mrb[0].mxu0
      %v4795 = vpop.f32.mrb[0].mxu0
      %v4796 = vadd.f32 0.0, %v4795
      %v4797 = vpop.f32.mrb[0].mxu0
      %4798 = vmatprep.mubr.bf16.mxu0 0
      %4799 = vmatmul.mubr.bf16.gmra.mrb[0].mxu0 %v4623
      %v4800 = vpop.f32.mrb[0].mxu0
      %v4801 = vadd.f32 0.0, %v4800
      %v4802 = vpop.f32.mrb[0].mxu0
      %v4803 = vpop.f32.mrb[0].mxu0
      %v4804 = vadd.f32 0.0, %v4803
      %v4805 = vpop.f32.mrb[0].mxu0
      %4806 = vmatprep.mubr.bf16.mxu0 0
      %4807 = vmatmul.mubr.bf16.gmra.mrb[0].mxu0 %v4624
      %v4808 = vpop.f32.mrb[0].mxu0
      %v4809 = vadd.f32 0.0, %v4808
      %v4810 = vpop.f32.mrb[0].mxu0
      %v4811 = vpop.f32.mrb[0].mxu0
      %v4812 = vadd.f32 0.0, %v4811
      %v4813 = vpop.f32.mrb[0].mxu0
      %4814 = vmatprep.mubr.bf16.mxu0 0
      %4815 = vmatmul.mubr.bf16.gmra.mrb[0].mxu0 %v4625
      %v4816 = vpop.f32.mrb[0].mxu0
      %v4817 = vadd.f32 0.0, %v4816
      %v4818 = vpop.f32.mrb[0].mxu0
      %v4819 = vpop.f32.mrb[0].mxu0
      %v4820 = vadd.f32 0.0, %v4819
      %v4821 = vpop.f32.mrb[0].mxu0
      %4822 = vmatprep.mubr.bf16.mxu0 0
      %4823 = vmatmul.mubr.bf16.gmra.mrb[0].mxu0 %v4626
      %v4824 = vpop.f32.mrb[0].mxu0
      %v4825 = vadd.f32 0.0, %v4824
      %v4826 = vpop.f32.mrb[0].mxu0
      %v4827 = vpop.f32.mrb[0].mxu0
      %v4828 = vadd.f32 0.0, %v4827
      %v4829 = vpop.f32.mrb[0].mxu0
      %4830 = vmatprep.mubr.bf16.mxu0 0
      %4831 = vmatmul.mubr.bf16.gmra.mrb[0].mxu0 %v4627
      %v4832 = vpop.f32.mrb[0].mxu0
      %v4833 = vadd.f32 0.0, %v4832
      %v4834 = vpop.f32.mrb[0].mxu0
      %v4835 = vpop.f32.mrb[0].mxu0
      %v4836 = vadd.f32 0.0, %v4835
      %v4837 = vpop.f32.mrb[0].mxu0
      %4838 = vmatprep.mubr.bf16.mxu0 0
      %4839 = vmatmul.mubr.bf16.gmra.mrb[0].mxu0 %v4628
      %v4840 = vpop.f32.mrb[0].mxu0
      %v4841 = vadd.f32 0.0, %v4840
      %v4842 = vpop.f32.mrb[0].mxu0
      %v4843 = vpop.f32.mrb[0].mxu0
      %v4844 = vadd.f32 0.0, %v4843
      %v4845 = vpop.f32.mrb[0].mxu0
      %4846 = vmatprep.mubr.bf16.mxu0 0
      %4847 = vmatmul.mubr.bf16.gmra.mrb[0].mxu0 %v4629
      %v4848 = vpop.f32.mrb[0].mxu0
      %v4849 = vadd.f32 0.0, %v4848
      %v4850 = vpop.f32.mrb[0].mxu0
      %v4851 = vpop.f32.mrb[0].mxu0
      %v4852 = vadd.f32 0.0, %v4851
      %v4853 = vpop.f32.mrb[0].mxu0
      %4854 = vdwg.mxu0
      %v4855 = vadd.f32 %v4469, %v4729
      %v4856 = vadd.f32 %v4470, %v4732
      %v4857 = vadd.f32 %v4471, %v4737
      %v4858 = vadd.f32 %v4472, %v4740
      %v4859 = vadd.f32 %v4473, %v4745
      %v4860 = vadd.f32 %v4474, %v4748
      %v4861 = vadd.f32 %v4475, %v4753
      %v4862 = vadd.f32 %v4476, %v4756
      %v4863 = vadd.f32 %v4477, %v4761
      %v4864 = vadd.f32 %v4478, %v4764
      %v4865 = vadd.f32 %v4479, %v4769
      %v4866 = vadd.f32 %v4480, %v4772
      %v4867 = vadd.f32 %v4481, %v4777
      %v4868 = vadd.f32 %v4482, %v4780
      %v4869 = vadd.f32 %v4483, %v4785
      %v4870 = vadd.f32 %v4484, %v4788
      %v4871 = vadd.f32 %v4485, %v4793
      %v4872 = vadd.f32 %v4486, %v4796
      %v4873 = vadd.f32 %v4487, %v4801
      %v4874 = vadd.f32 %v4488, %v4804
      %v4875 = vadd.f32 %v4489, %v4809
      %v4876 = vadd.f32 %v4490, %v4812
      %v4877 = vadd.f32 %v4491, %v4817
      %v4878 = vadd.f32 %v4492, %v4820
      %v4879 = vadd.f32 %v4493, %v4825
      %v4880 = vadd.f32 %v4494, %v4828
      %v4881 = vadd.f32 %v4495, %v4833
      %v4882 = vadd.f32 %v4496, %v4836
      %v4883 = vadd.f32 %v4497, %v4841
      %v4884 = vadd.f32 %v4498, %v4844
      %v4885 = vadd.f32 %v4499, %v4849
      %v4886 = vadd.f32 %v4500, %v4852
      %v4887 = vld [vmem:[%s4501] sm:$0xf]
      %v4888 = vld [vmem:[%s4501 + $0x4] sm:$0xf]
      %v4889 = vld [vmem:[%s4501 + $0x8] sm:$0x1]
      %v4890 = vld [vmem:[%s4501 + $0xc] sm:$0xf]
      %v4891 = vld [vmem:[%s4501 + $0x10] sm:$0xf]
      %v4892 = vld [vmem:[%s4501 + $0x14] sm:$0x1]
      %v4893 = vld [vmem:[%s4501 + $0x18] sm:$0xf]
      %v4894 = vld [vmem:[%s4501 + $0x1c] sm:$0xf]
      %v4895 = vld [vmem:[%s4501 + $0x20] sm:$0x1]
      %v4896 = vld [vmem:[%s4501 + $0x24] sm:$0xf]
      %v4897 = vld [vmem:[%s4501 + $0x28] sm:$0xf]
      %v4898 = vld [vmem:[%s4501 + $0x2c] sm:$0x1]
      %v4899 = vld [vmem:[%s4501 + $0x30] sm:$0xf]
      %v4900 = vld [vmem:[%s4501 + $0x34] sm:$0xf]
      %v4901 = vld [vmem:[%s4501 + $0x38] sm:$0x1]
      %v4902 = vld [vmem:[%s4501 + $0x3c] sm:$0xf]
      %v4903 = vld [vmem:[%s4501 + $0x40] sm:$0xf]
      %v4904 = vld [vmem:[%s4501 + $0x44] sm:$0x1]
      %v4905 = vld [vmem:[%s4501 + $0x48] sm:$0xf]
      %v4906 = vld [vmem:[%s4501 + $0x4c] sm:$0xf]
      %v4907 = vld [vmem:[%s4501 + $0x50] sm:$0x1]
      %v4908 = vld [vmem:[%s4501 + $0x54] sm:$0xf]
      %v4909 = vld [vmem:[%s4501 + $0x58] sm:$0xf]
      %v4910 = vld [vmem:[%s4501 + $0x5c] sm:$0x1]
      %v4911 = vld [vmem:[%s4501 + $0x60] sm:$0xf]
      %v4912 = vld [vmem:[%s4501 + $0x64] sm:$0xf]
      %v4913 = vld [vmem:[%s4501 + $0x68] sm:$0x1]
      %v4914 = vld [vmem:[%s4501 + $0x6c] sm:$0xf]
      %v4915 = vld [vmem:[%s4501 + $0x70] sm:$0xf]
      %v4916 = vld [vmem:[%s4501 + $0x74] sm:$0x1]
      %v4917 = vld [vmem:[%s4501 + $0x78] sm:$0xf]
      %v4918 = vld [vmem:[%s4501 + $0x7c] sm:$0xf]
      %v4919 = vld [vmem:[%s4501 + $0x80] sm:$0x1]
      %v4920 = vld [vmem:[%s4501 + $0x84] sm:$0xf]
      %v4921 = vld [vmem:[%s4501 + $0x88] sm:$0xf]
      %v4922 = vld [vmem:[%s4501 + $0x8c] sm:$0x1]
      %v4923 = vld [vmem:[%s4501 + $0x90] sm:$0xf]
      %v4924 = vld [vmem:[%s4501 + $0x94] sm:$0xf]
      %v4925 = vld [vmem:[%s4501 + $0x98] sm:$0x1]
      %v4926 = vld [vmem:[%s4501 + $0x9c] sm:$0xf]
      %v4927 = vld [vmem:[%s4501 + $0xa0] sm:$0xf]
      %v4928 = vld [vmem:[%s4501 + $0xa4] sm:$0x1]
      %v4929 = vld [vmem:[%s4501 + $0xa8] sm:$0xf]
      %v4930 = vld [vmem:[%s4501 + $0xac] sm:$0xf]
      %v4931 = vld [vmem:[%s4501 + $0xb0] sm:$0x1]
      %v4932 = vld [vmem:[%s4501 + $0xb4] sm:$0xf]
      %v4933 = vld [vmem:[%s4501 + $0xb8] sm:$0xf]
      %v4934 = vld [vmem:[%s4501 + $0xbc] sm:$0x1]
      %v4936 = vshrl.u32 %v4887, 16
      %v4938 = vrot.slane %v4936, 4
      %v4939 = vshll.u32 %v4887, 16
      %v4941 = vrot.slane %v4939, 5
      %v4942 = vor.u32 %v4938, %v4941
      %v4943 = vrot.slane %v4942, 4
      %v4945 = vshll.u32 %v4888, 16
      %v4947 = vrot.slane %v4945, 5
      %v4948 = vsel %vm1403, %v4943, %v4947
      %v4949 = vshrl.u32 %v4888, 16
      %v4951 = vrot.slane %v4949, 4
      %v4952 = vor.u32 %v4951, %v4947
      %v4953 = vrot.slane %v4952, 4
      %v4955 = vshll.u32 %v4889, 16
      %v4957 = vrot.slane %v4955, 5
      %v4958 = vsel %vm1403, %v4953, %v4957
      %v4960 = vshrl.u32 %v4890, 16
      %v4962 = vrot.slane %v4960, 4
      %v4963 = vshll.u32 %v4890, 16
      %v4965 = vrot.slane %v4963, 5
      %v4966 = vor.u32 %v4962, %v4965
      %v4967 = vrot.slane %v4966, 4
      %v4969 = vshll.u32 %v4891, 16
      %v4971 = vrot.slane %v4969, 5
      %v4972 = vsel %vm1403, %v4967, %v4971
      %v4973 = vshrl.u32 %v4891, 16
      %v4975 = vrot.slane %v4973, 4
      %v4976 = vor.u32 %v4975, %v4971
      %v4977 = vrot.slane %v4976, 4
      %v4979 = vshll.u32 %v4892, 16
      %v4981 = vrot.slane %v4979, 5
      %v4982 = vsel %vm1403, %v4977, %v4981
      %v4984 = vshrl.u32 %v4893, 16
      %v4986 = vrot.slane %v4984, 4
      %v4987 = vshll.u32 %v4893, 16
      %v4989 = vrot.slane %v4987, 5
      %v4990 = vor.u32 %v4986, %v4989
      %v4991 = vrot.slane %v4990, 4
      %v4993 = vshll.u32 %v4894, 16
      %v4995 = vrot.slane %v4993, 5
      %v4996 = vsel %vm1403, %v4991, %v4995
      %v4997 = vshrl.u32 %v4894, 16
      %v4999 = vrot.slane %v4997, 4
      %v5000 = vor.u32 %v4999, %v4995
      %v5001 = vrot.slane %v5000, 4
      %v5003 = vshll.u32 %v4895, 16
      %v5005 = vrot.slane %v5003, 5
      %v5006 = vsel %vm1403, %v5001, %v5005
      %v5008 = vshrl.u32 %v4896, 16
      %v5010 = vrot.slane %v5008, 4
      %v5011 = vshll.u32 %v4896, 16
      %v5013 = vrot.slane %v5011, 5
      %v5014 = vor.u32 %v5010, %v5013
      %v5015 = vrot.slane %v5014, 4
      %v5017 = vshll.u32 %v4897, 16
      %v5019 = vrot.slane %v5017, 5
      %v5020 = vsel %vm1403, %v5015, %v5019
      %v5021 = vshrl.u32 %v4897, 16
      %v5023 = vrot.slane %v5021, 4
      %v5024 = vor.u32 %v5023, %v5019
      %v5025 = vrot.slane %v5024, 4
      %v5027 = vshll.u32 %v4898, 16
      %v5029 = vrot.slane %v5027, 5
      %v5030 = vsel %vm1403, %v5025, %v5029
      %v5032 = vshrl.u32 %v4899, 16
      %v5034 = vrot.slane %v5032, 4
      %v5035 = vshll.u32 %v4899, 16
      %v5037 = vrot.slane %v5035, 5
      %v5038 = vor.u32 %v5034, %v5037
      %v5039 = vrot.slane %v5038, 4
      %v5041 = vshll.u32 %v4900, 16
      %v5043 = vrot.slane %v5041, 5
      %v5044 = vsel %vm1403, %v5039, %v5043
      %v5045 = vshrl.u32 %v4900, 16
      %v5047 = vrot.slane %v5045, 4
      %v5048 = vor.u32 %v5047, %v5043
      %v5049 = vrot.slane %v5048, 4
      %v5051 = vshll.u32 %v4901, 16
      %v5053 = vrot.slane %v5051, 5
      %v5054 = vsel %vm1403, %v5049, %v5053
      %v5056 = vshrl.u32 %v4902, 16
      %v5058 = vrot.slane %v5056, 4
      %v5059 = vshll.u32 %v4902, 16
      %v5061 = vrot.slane %v5059, 5
      %v5062 = vor.u32 %v5058, %v5061
      %v5063 = vrot.slane %v5062, 4
      %v5065 = vshll.u32 %v4903, 16
      %v5067 = vrot.slane %v5065, 5
      %v5068 = vsel %vm1403, %v5063, %v5067
      %v5069 = vshrl.u32 %v4903, 16
      %v5071 = vrot.slane %v5069, 4
      %v5072 = vor.u32 %v5071, %v5067
      %v5073 = vrot.slane %v5072, 4
      %v5075 = vshll.u32 %v4904, 16
      %v5077 = vrot.slane %v5075, 5
      %v5078 = vsel %vm1403, %v5073, %v5077
      %v5080 = vshrl.u32 %v4905, 16
      %v5082 = vrot.slane %v5080, 4
      %v5083 = vshll.u32 %v4905, 16
      %v5085 = vrot.slane %v5083, 5
      %v5086 = vor.u32 %v5082, %v5085
      %v5087 = vrot.slane %v5086, 4
      %v5089 = vshll.u32 %v4906, 16
      %v5091 = vrot.slane %v5089, 5
      %v5092 = vsel %vm1403, %v5087, %v5091
      %v5093 = vshrl.u32 %v4906, 16
      %v5095 = vrot.slane %v5093, 4
      %v5096 = vor.u32 %v5095, %v5091
      %v5097 = vrot.slane %v5096, 4
      %v5099 = vshll.u32 %v4907, 16
      %v5101 = vrot.slane %v5099, 5
      %v5102 = vsel %vm1403, %v5097, %v5101
      %v5104 = vshrl.u32 %v4908, 16
      %v5106 = vrot.slane %v5104, 4
      %v5107 = vshll.u32 %v4908, 16
      %v5109 = vrot.slane %v5107, 5
      %v5110 = vor.u32 %v5106, %v5109
      %v5111 = vrot.slane %v5110, 4
      %v5113 = vshll.u32 %v4909, 16
      %v5115 = vrot.slane %v5113, 5
      %v5116 = vsel %vm1403, %v5111, %v5115
      %v5117 = vshrl.u32 %v4909, 16
      %v5119 = vrot.slane %v5117, 4
      %v5120 = vor.u32 %v5119, %v5115
      %v5121 = vrot.slane %v5120, 4
      %v5123 = vshll.u32 %v4910, 16
      %v5125 = vrot.slane %v5123, 5
      %v5126 = vsel %vm1403, %v5121, %v5125
      %v5128 = vshrl.u32 %v4911, 16
      %v5130 = vrot.slane %v5128, 4
      %v5131 = vshll.u32 %v4911, 16
      %v5133 = vrot.slane %v5131, 5
      %v5134 = vor.u32 %v5130, %v5133
      %v5135 = vrot.slane %v5134, 4
      %v5137 = vshll.u32 %v4912, 16
      %v5139 = vrot.slane %v5137, 5
      %v5140 = vsel %vm1403, %v5135, %v5139
      %v5141 = vshrl.u32 %v4912, 16
      %v5143 = vrot.slane %v5141, 4
      %v5144 = vor.u32 %v5143, %v5139
      %v5145 = vrot.slane %v5144, 4
      %v5147 = vshll.u32 %v4913, 16
      %v5149 = vrot.slane %v5147, 5
      %v5150 = vsel %vm1403, %v5145, %v5149
      %v5152 = vshrl.u32 %v4914, 16
      %v5154 = vrot.slane %v5152, 4
      %v5155 = vshll.u32 %v4914, 16
      %v5157 = vrot.slane %v5155, 5
      %v5158 = vor.u32 %v5154, %v5157
      %v5159 = vrot.slane %v5158, 4
      %v5161 = vshll.u32 %v4915, 16
      %v5163 = vrot.slane %v5161, 5
      %v5164 = vsel %vm1403, %v5159, %v5163
      %v5165 = vshrl.u32 %v4915, 16
      %v5167 = vrot.slane %v5165, 4
      %v5168 = vor.u32 %v5167, %v5163
      %v5169 = vrot.slane %v5168, 4
      %v5171 = vshll.u32 %v4916, 16
      %v5173 = vrot.slane %v5171, 5
      %v5174 = vsel %vm1403, %v5169, %v5173
      %v5176 = vshrl.u32 %v4917, 16
      %v5178 = vrot.slane %v5176, 4
      %v5179 = vshll.u32 %v4917, 16
      %v5181 = vrot.slane %v5179, 5
      %v5182 = vor.u32 %v5178, %v5181
      %v5183 = vrot.slane %v5182, 4
      %v5185 = vshll.u32 %v4918, 16
      %v5187 = vrot.slane %v5185, 5
      %v5188 = vsel %vm1403, %v5183, %v5187
      %v5189 = vshrl.u32 %v4918, 16
      %v5191 = vrot.slane %v5189, 4
      %v5192 = vor.u32 %v5191, %v5187
      %v5193 = vrot.slane %v5192, 4
      %v5195 = vshll.u32 %v4919, 16
      %v5197 = vrot.slane %v5195, 5
      %v5198 = vsel %vm1403, %v5193, %v5197
      %v5200 = vshrl.u32 %v4920, 16
      %v5202 = vrot.slane %v5200, 4
      %v5203 = vshll.u32 %v4920, 16
      %v5205 = vrot.slane %v5203, 5
      %v5206 = vor.u32 %v5202, %v5205
      %v5207 = vrot.slane %v5206, 4
      %v5209 = vshll.u32 %v4921, 16
      %v5211 = vrot.slane %v5209, 5
      %v5212 = vsel %vm1403, %v5207, %v5211
      %v5213 = vshrl.u32 %v4921, 16
      %v5215 = vrot.slane %v5213, 4
      %v5216 = vor.u32 %v5215, %v5211
      %v5217 = vrot.slane %v5216, 4
      %v5219 = vshll.u32 %v4922, 16
      %v5221 = vrot.slane %v5219, 5
      %v5222 = vsel %vm1403, %v5217, %v5221
      %v5224 = vshrl.u32 %v4923, 16
      %v5226 = vrot.slane %v5224, 4
      %v5227 = vshll.u32 %v4923, 16
      %v5229 = vrot.slane %v5227, 5
      %v5230 = vor.u32 %v5226, %v5229
      %v5231 = vrot.slane %v5230, 4
      %v5233 = vshll.u32 %v4924, 16
      %v5235 = vrot.slane %v5233, 5
      %v5236 = vsel %vm1403, %v5231, %v5235
      %v5237 = vshrl.u32 %v4924, 16
      %v5239 = vrot.slane %v5237, 4
      %v5240 = vor.u32 %v5239, %v5235
      %v5241 = vrot.slane %v5240, 4
      %v5243 = vshll.u32 %v4925, 16
      %v5245 = vrot.slane %v5243, 5
      %v5246 = vsel %vm1403, %v5241, %v5245
      %v5248 = vshrl.u32 %v4926, 16
      %v5250 = vrot.slane %v5248, 4
      %v5251 = vshll.u32 %v4926, 16
      %v5253 = vrot.slane %v5251, 5
      %v5254 = vor.u32 %v5250, %v5253
      %v5255 = vrot.slane %v5254, 4
      %v5257 = vshll.u32 %v4927, 16
      %v5259 = vrot.slane %v5257, 5
      %v5260 = vsel %vm1403, %v5255, %v5259
      %v5261 = vshrl.u32 %v4927, 16
      %v5263 = vrot.slane %v5261, 4
      %v5264 = vor.u32 %v5263, %v5259
      %v5265 = vrot.slane %v5264, 4
      %v5267 = vshll.u32 %v4928, 16
      %v5269 = vrot.slane %v5267, 5
      %v5270 = vsel %vm1403, %v5265, %v5269
      %v5272 = vshrl.u32 %v4929, 16
      %v5274 = vrot.slane %v5272, 4
      %v5275 = vshll.u32 %v4929, 16
      %v5277 = vrot.slane %v5275, 5
      %v5278 = vor.u32 %v5274, %v5277
      %v5279 = vrot.slane %v5278, 4
      %v5281 = vshll.u32 %v4930, 16
      %v5283 = vrot.slane %v5281, 5
      %v5284 = vsel %vm1403, %v5279, %v5283
      %v5285 = vshrl.u32 %v4930, 16
      %v5287 = vrot.slane %v5285, 4
      %v5288 = vor.u32 %v5287, %v5283
      %v5289 = vrot.slane %v5288, 4
      %v5291 = vshll.u32 %v4931, 16
      %v5293 = vrot.slane %v5291, 5
      %v5294 = vsel %vm1403, %v5289, %v5293
      %v5296 = vshrl.u32 %v4932, 16
      %v5298 = vrot.slane %v5296, 4
      %v5299 = vshll.u32 %v4932, 16
      %v5301 = vrot.slane %v5299, 5
      %v5302 = vor.u32 %v5298, %v5301
      %v5303 = vrot.slane %v5302, 4
      %v5305 = vshll.u32 %v4933, 16
      %v5307 = vrot.slane %v5305, 5
      %v5308 = vsel %vm1403, %v5303, %v5307
      %v5309 = vshrl.u32 %v4933, 16
      %v5311 = vrot.slane %v5309, 4
      %v5312 = vor.u32 %v5311, %v5307
      %v5313 = vrot.slane %v5312, 4
      %v5315 = vshll.u32 %v4934, 16
      %v5317 = vrot.slane %v5315, 5
      %v5318 = vsel %vm1403, %v5313, %v5317
      %v5319 = vld [vmem:[%s3 + $0x1c0] sm:$0xf]
      %v5320 = vld [vmem:[%s3 + $0x1c4] sm:$0xf]
      %v5321 = vld [vmem:[%s3 + $0x1c8] sm:$0xf]
      %v5322 = vld [vmem:[%s3 + $0x1cc] sm:$0xf]
      %v5323 = vld [vmem:[%s3 + $0x1d0] sm:$0xf]
      %v5324 = vld [vmem:[%s3 + $0x1d4] sm:$0xf]
      %v5325 = vld [vmem:[%s3 + $0x1d8] sm:$0xf]
      %v5326 = vld [vmem:[%s3 + $0x1dc] sm:$0xf]
      %v5327 = vld [vmem:[%s3 + $0x1e0] sm:$0xf]
      %v5328 = vld [vmem:[%s3 + $0x1e4] sm:$0xf]
      %v5329 = vld [vmem:[%s3 + $0x1e8] sm:$0xf]
      %v5330 = vld [vmem:[%s3 + $0x1ec] sm:$0xf]
      %v5331 = vld [vmem:[%s3 + $0x1f0] sm:$0xf]
      %v5332 = vld [vmem:[%s3 + $0x1f4] sm:$0xf]
      %v5333 = vld [vmem:[%s3 + $0x1f8] sm:$0xf]
      %v5334 = vld [vmem:[%s3 + $0x1fc] sm:$0xf]
      %v5335 = vunpack.c.l.b16 %v4948
      %v5336 = vunpack.c.l.b16 %v4958
      %v5337 = vunpack.c.l.b16 %v4972
      %v5338 = vunpack.c.l.b16 %v4982
      %v5339 = vunpack.c.l.b16 %v4996
      %v5340 = vunpack.c.l.b16 %v5006
      %v5341 = vunpack.c.l.b16 %v5020
      %v5342 = vunpack.c.l.b16 %v5030
      %v5343 = vunpack.c.l.b16 %v5044
      %v5344 = vunpack.c.l.b16 %v5054
      %v5345 = vunpack.c.l.b16 %v5068
      %v5346 = vunpack.c.l.b16 %v5078
      %v5347 = vunpack.c.l.b16 %v5092
      %v5348 = vunpack.c.l.b16 %v5102
      %v5349 = vunpack.c.l.b16 %v5116
      %v5350 = vunpack.c.l.b16 %v5126
      %v5351 = vunpack.c.l.b16 %v5140
      %v5352 = vunpack.c.l.b16 %v5150
      %v5353 = vunpack.c.l.b16 %v5164
      %v5354 = vunpack.c.l.b16 %v5174
      %v5355 = vunpack.c.l.b16 %v5188
      %v5356 = vunpack.c.l.b16 %v5198
      %v5357 = vunpack.c.l.b16 %v5212
      %v5358 = vunpack.c.l.b16 %v5222
      %v5359 = vunpack.c.l.b16 %v5236
      %v5360 = vunpack.c.l.b16 %v5246
      %v5361 = vunpack.c.l.b16 %v5260
      %v5362 = vunpack.c.l.b16 %v5270
      %v5363 = vunpack.c.l.b16 %v5284
      %v5364 = vunpack.c.l.b16 %v5294
      %v5365 = vunpack.c.l.b16 %v5308
      %v5366 = vunpack.c.l.b16 %v5318
      %v5367 = vpack.c.b16 %v5336, %v5335
      %v5368 = vpack.c.b16 %v5338, %v5337
      %v5369 = vpack.c.b16 %v5340, %v5339
      %v5370 = vpack.c.b16 %v5342, %v5341
      %v5371 = vpack.c.b16 %v5344, %v5343
      %v5372 = vpack.c.b16 %v5346, %v5345
      %v5373 = vpack.c.b16 %v5348, %v5347
      %v5374 = vpack.c.b16 %v5350, %v5349
      %v5375 = vpack.c.b16 %v5352, %v5351
      %v5376 = vpack.c.b16 %v5354, %v5353
      %v5377 = vpack.c.b16 %v5356, %v5355
      %v5378 = vpack.c.b16 %v5358, %v5357
      %v5379 = vpack.c.b16 %v5360, %v5359
      %v5380 = vpack.c.b16 %v5362, %v5361
      %v5381 = vpack.c.b16 %v5364, %v5363
      %v5382 = vpack.c.b16 %v5366, %v5365
      %v5415 = vunpack.c.l.b16 %v5319
      %v5416 = vunpack.c.l.b16 %v5320
      %v5417 = vunpack.c.l.b16 %v5321
      %v5418 = vunpack.c.l.b16 %v5322
      %v5419 = vunpack.c.l.b16 %v5323
      %v5420 = vunpack.c.l.b16 %v5324
      %v5421 = vunpack.c.l.b16 %v5325
      %v5422 = vunpack.c.l.b16 %v5326
      %v5423 = vunpack.c.l.b16 %v5327
      %v5424 = vunpack.c.l.b16 %v5328
      %v5425 = vunpack.c.l.b16 %v5329
      %v5426 = vunpack.c.l.b16 %v5330
      %v5427 = vunpack.c.l.b16 %v5331
      %v5428 = vunpack.c.l.b16 %v5332
      %v5429 = vunpack.c.l.b16 %v5333
      %v5430 = vunpack.c.l.b16 %v5334
      %v5431 = vpack.c.b16 %v5416, %v5415
      %v5432 = vpack.c.b16 %v5418, %v5417
      %v5433 = vpack.c.b16 %v5420, %v5419
      %v5434 = vpack.c.b16 %v5422, %v5421
      %v5435 = vpack.c.b16 %v5424, %v5423
      %v5436 = vpack.c.b16 %v5426, %v5425
      %v5437 = vpack.c.b16 %v5428, %v5427
      %v5438 = vpack.c.b16 %v5430, %v5429
      %5447 = vmatprep.subr.bf16.mxu0 0
      %5448 = vmatpush1.bf16.msra.mxu0 %v5431
      %5449 = vmatprep.subr.bf16.mxu0 0
      %5450 = vmatpush1.bf16.msra.mxu0 %v5432
      %5451 = vmatprep.subr.bf16.mxu0 0
      %5452 = vmatpush1.bf16.msra.mxu0 %v5433
      %5453 = vmatprep.subr.bf16.mxu0 0
      %5454 = vmatpush1.bf16.msra.mxu0 %v5434
      %5455 = vmatprep.subr.bf16.mxu0 0
      %5456 = vmatpush1.bf16.msra.mxu0 %v5435
      %5457 = vmatprep.subr.bf16.mxu0 0
      %5458 = vmatpush1.bf16.msra.mxu0 %v5436
      %5459 = vmatprep.subr.bf16.mxu0 0
      %5460 = vmatpush1.bf16.msra.mxu0 %v5437
      %5461 = vmatprep.subr.bf16.mxu0 0
      %5462 = vmatpush1.bf16.msra.mxu0 %v5438
      %5463 = vmatprep.subr.bf16.mxu0 0
      %5464 = vmatpush1.bf16.msra.mxu0 0
      %5465 = vmatprep.subr.bf16.mxu0 0
      %5466 = vmatpush1.bf16.msra.mxu0 0
      %5467 = vmatprep.subr.bf16.mxu0 0
      %5468 = vmatpush1.bf16.msra.mxu0 0
      %5469 = vmatprep.subr.bf16.mxu0 0
      %5470 = vmatpush1.bf16.msra.mxu0 0
      %5471 = vmatprep.subr.bf16.mxu0 0
      %5472 = vmatpush1.bf16.msra.mxu0 0
      %5473 = vmatprep.subr.bf16.mxu0 0
      %5474 = vmatpush1.bf16.msra.mxu0 0
      %5475 = vmatprep.subr.bf16.mxu0 0
      %5476 = vmatpush1.bf16.msra.mxu0 0
      %5477 = vmatprep.subr.bf16.mxu0 0
      %5478 = vmatpush1.bf16.msra.mxu0 0
      %5479 = vmatprep.mubr.bf16.mxu0 0
      %5480 = vmatmul.mubr.bf16.gmra.mrb[0].mxu0 %v5367
      %v5481 = vpop.f32.mrb[0].mxu0
      %v5482 = vadd.f32 0.0, %v5481
      %v5483 = vpop.f32.mrb[0].mxu0
      %v5484 = vpop.f32.mrb[0].mxu0
      %v5485 = vadd.f32 0.0, %v5484
      %v5486 = vpop.f32.mrb[0].mxu0
      %5487 = vmatprep.mubr.bf16.mxu0 0
      %5488 = vmatmul.mubr.bf16.gmra.mrb[0].mxu0 %v5368
      %v5489 = vpop.f32.mrb[0].mxu0
      %v5490 = vadd.f32 0.0, %v5489
      %v5491 = vpop.f32.mrb[0].mxu0
      %v5492 = vpop.f32.mrb[0].mxu0
      %v5493 = vadd.f32 0.0, %v5492
      %v5494 = vpop.f32.mrb[0].mxu0
      %5495 = vmatprep.mubr.bf16.mxu0 0
      %5496 = vmatmul.mubr.bf16.gmra.mrb[0].mxu0 %v5369
      %v5497 = vpop.f32.mrb[0].mxu0
      %v5498 = vadd.f32 0.0, %v5497
      %v5499 = vpop.f32.mrb[0].mxu0
      %v5500 = vpop.f32.mrb[0].mxu0
      %v5501 = vadd.f32 0.0, %v5500
      %v5502 = vpop.f32.mrb[0].mxu0
      %5503 = vmatprep.mubr.bf16.mxu0 0
      %5504 = vmatmul.mubr.bf16.gmra.mrb[0].mxu0 %v5370
      %v5505 = vpop.f32.mrb[0].mxu0
      %v5506 = vadd.f32 0.0, %v5505
      %v5507 = vpop.f32.mrb[0].mxu0
      %v5508 = vpop.f32.mrb[0].mxu0
      %v5509 = vadd.f32 0.0, %v5508
      %v5510 = vpop.f32.mrb[0].mxu0
      %5511 = vmatprep.mubr.bf16.mxu0 0
      %5512 = vmatmul.mubr.bf16.gmra.mrb[0].mxu0 %v5371
      %v5513 = vpop.f32.mrb[0].mxu0
      %v5514 = vadd.f32 0.0, %v5513
      %v5515 = vpop.f32.mrb[0].mxu0
      %v5516 = vpop.f32.mrb[0].mxu0
      %v5517 = vadd.f32 0.0, %v5516
      %v5518 = vpop.f32.mrb[0].mxu0
      %5519 = vmatprep.mubr.bf16.mxu0 0
      %5520 = vmatmul.mubr.bf16.gmra.mrb[0].mxu0 %v5372
      %v5521 = vpop.f32.mrb[0].mxu0
      %v5522 = vadd.f32 0.0, %v5521
      %v5523 = vpop.f32.mrb[0].mxu0
      %v5524 = vpop.f32.mrb[0].mxu0
      %v5525 = vadd.f32 0.0, %v5524
      %v5526 = vpop.f32.mrb[0].mxu0
      %5527 = vmatprep.mubr.bf16.mxu0 0
      %5528 = vmatmul.mubr.bf16.gmra.mrb[0].mxu0 %v5373
      %v5529 = vpop.f32.mrb[0].mxu0
      %v5530 = vadd.f32 0.0, %v5529
      %v5531 = vpop.f32.mrb[0].mxu0
      %v5532 = vpop.f32.mrb[0].mxu0
      %v5533 = vadd.f32 0.0, %v5532
      %v5534 = vpop.f32.mrb[0].mxu0
      %5535 = vmatprep.mubr.bf16.mxu0 0
      %5536 = vmatmul.mubr.bf16.gmra.mrb[0].mxu0 %v5374
      %v5537 = vpop.f32.mrb[0].mxu0
      %v5538 = vadd.f32 0.0, %v5537
      %v5539 = vpop.f32.mrb[0].mxu0
      %v5540 = vpop.f32.mrb[0].mxu0
      %v5541 = vadd.f32 0.0, %v5540
      %v5542 = vpop.f32.mrb[0].mxu0
      %5543 = vmatprep.mubr.bf16.mxu0 0
      %5544 = vmatmul.mubr.bf16.gmra.mrb[0].mxu0 %v5375
      %v5545 = vpop.f32.mrb[0].mxu0
      %v5546 = vadd.f32 0.0, %v5545
      %v5547 = vpop.f32.mrb[0].mxu0
      %v5548 = vpop.f32.mrb[0].mxu0
      %v5549 = vadd.f32 0.0, %v5548
      %v5550 = vpop.f32.mrb[0].mxu0
      %5551 = vmatprep.mubr.bf16.mxu0 0
      %5552 = vmatmul.mubr.bf16.gmra.mrb[0].mxu0 %v5376
      %v5553 = vpop.f32.mrb[0].mxu0
      %v5554 = vadd.f32 0.0, %v5553
      %v5555 = vpop.f32.mrb[0].mxu0
      %v5556 = vpop.f32.mrb[0].mxu0
      %v5557 = vadd.f32 0.0, %v5556
      %v5558 = vpop.f32.mrb[0].mxu0
      %5559 = vmatprep.mubr.bf16.mxu0 0
      %5560 = vmatmul.mubr.bf16.gmra.mrb[0].mxu0 %v5377
      %v5561 = vpop.f32.mrb[0].mxu0
      %v5562 = vadd.f32 0.0, %v5561
      %v5563 = vpop.f32.mrb[0].mxu0
      %v5564 = vpop.f32.mrb[0].mxu0
      %v5565 = vadd.f32 0.0, %v5564
      %v5566 = vpop.f32.mrb[0].mxu0
      %5567 = vmatprep.mubr.bf16.mxu0 0
      %5568 = vmatmul.mubr.bf16.gmra.mrb[0].mxu0 %v5378
      %v5569 = vpop.f32.mrb[0].mxu0
      %v5570 = vadd.f32 0.0, %v5569
      %v5571 = vpop.f32.mrb[0].mxu0
      %v5572 = vpop.f32.mrb[0].mxu0
      %v5573 = vadd.f32 0.0, %v5572
      %v5574 = vpop.f32.mrb[0].mxu0
      %5575 = vmatprep.mubr.bf16.mxu0 0
      %5576 = vmatmul.mubr.bf16.gmra.mrb[0].mxu0 %v5379
      %v5577 = vpop.f32.mrb[0].mxu0
      %v5578 = vadd.f32 0.0, %v5577
      %v5579 = vpop.f32.mrb[0].mxu0
      %v5580 = vpop.f32.mrb[0].mxu0
      %v5581 = vadd.f32 0.0, %v5580
      %v5582 = vpop.f32.mrb[0].mxu0
      %5583 = vmatprep.mubr.bf16.mxu0 0
      %5584 = vmatmul.mubr.bf16.gmra.mrb[0].mxu0 %v5380
      %v5585 = vpop.f32.mrb[0].mxu0
      %v5586 = vadd.f32 0.0, %v5585
      %v5587 = vpop.f32.mrb[0].mxu0
      %v5588 = vpop.f32.mrb[0].mxu0
      %v5589 = vadd.f32 0.0, %v5588
      %v5590 = vpop.f32.mrb[0].mxu0
      %5591 = vmatprep.mubr.bf16.mxu0 0
      %5592 = vmatmul.mubr.bf16.gmra.mrb[0].mxu0 %v5381
      %v5593 = vpop.f32.mrb[0].mxu0
      %v5594 = vadd.f32 0.0, %v5593
      %v5595 = vpop.f32.mrb[0].mxu0
      %v5596 = vpop.f32.mrb[0].mxu0
      %v5597 = vadd.f32 0.0, %v5596
      %v5598 = vpop.f32.mrb[0].mxu0
      %5599 = vmatprep.mubr.bf16.mxu0 0
      %5600 = vmatmul.mubr.bf16.gmra.mrb[0].mxu0 %v5382
      %v5601 = vpop.f32.mrb[0].mxu0
      %v5602 = vadd.f32 0.0, %v5601
      %v5603 = vpop.f32.mrb[0].mxu0
      %v5604 = vpop.f32.mrb[0].mxu0
      %v5605 = vadd.f32 0.0, %v5604
      %v5606 = vpop.f32.mrb[0].mxu0
      %5607 = vdwg.mxu0
      %v5608 = vadd.f32 %v4855, %v5482
      %v5609 = vadd.f32 %v4856, %v5485
      %v5610 = vadd.f32 %v4857, %v5490
      %v5611 = vadd.f32 %v4858, %v5493
      %v5612 = vadd.f32 %v4859, %v5498
      %v5613 = vadd.f32 %v4860, %v5501
      %v5614 = vadd.f32 %v4861, %v5506
      %v5615 = vadd.f32 %v4862, %v5509
      %v5616 = vadd.f32 %v4863, %v5514
      %v5617 = vadd.f32 %v4864, %v5517
      %v5618 = vadd.f32 %v4865, %v5522
      %v5619 = vadd.f32 %v4866, %v5525
      %v5620 = vadd.f32 %v4867, %v5530
      %v5621 = vadd.f32 %v4868, %v5533
      %v5622 = vadd.f32 %v4869, %v5538
      %v5623 = vadd.f32 %v4870, %v5541
      %v5624 = vadd.f32 %v4871, %v5546
      %v5625 = vadd.f32 %v4872, %v5549
      %v5626 = vadd.f32 %v4873, %v5554
      %v5627 = vadd.f32 %v4874, %v5557
      %v5628 = vadd.f32 %v4875, %v5562
      %v5629 = vadd.f32 %v4876, %v5565
      %v5630 = vadd.f32 %v4877, %v5570
      %v5631 = vadd.f32 %v4878, %v5573
      %v5632 = vadd.f32 %v4879, %v5578
      %v5633 = vadd.f32 %v4880, %v5581
      %v5634 = vadd.f32 %v4881, %v5586
      %v5635 = vadd.f32 %v4882, %v5589
      %v5636 = vadd.f32 %v4883, %v5594
      %v5637 = vadd.f32 %v4884, %v5597
      %v5638 = vadd.f32 %v4885, %v5602
      %v5639 = vadd.f32 %v4886, %v5605
      %v5640 = vld [vmem:[%s4501] sm:$0xe]
      %v5641 = vld [vmem:[%s4501 + $0xc] sm:$0xe]
      %v5642 = vld [vmem:[%s4501 + $0x18] sm:$0xe]
      %v5643 = vld [vmem:[%s4501 + $0x24] sm:$0xe]
      %v5644 = vld [vmem:[%s4501 + $0x30] sm:$0xe]
      %v5645 = vld [vmem:[%s4501 + $0x3c] sm:$0xe]
      %v5646 = vld [vmem:[%s4501 + $0x48] sm:$0xe]
      %v5647 = vld [vmem:[%s4501 + $0x54] sm:$0xe]
      %v5648 = vld [vmem:[%s4501 + $0x60] sm:$0xe]
      %v5649 = vld [vmem:[%s4501 + $0x6c] sm:$0xe]
      %v5650 = vld [vmem:[%s4501 + $0x78] sm:$0xe]
      %v5651 = vld [vmem:[%s4501 + $0x84] sm:$0xe]
      %v5652 = vld [vmem:[%s4501 + $0x90] sm:$0xe]
      %v5653 = vld [vmem:[%s4501 + $0x9c] sm:$0xe]
      %v5654 = vld [vmem:[%s4501 + $0xa8] sm:$0xe]
      %v5655 = vld [vmem:[%s4501 + $0xb4] sm:$0xe]
      %v5704 = vrot.slane %v5640, 5
      %v5705 = vrot.slane %v5704, 4
      %v5706 = vrot.slane %v4888, 5
      %v5707 = vsel %vm2432, %v5705, %v5706
      %v5708 = vrot.slane %v5706, 4
      %v5709 = vrot.slane %v4889, 5
      %v5710 = vsel %vm2432, %v5708, %v5709
      %v5711 = vrot.slane %v5641, 5
      %v5712 = vrot.slane %v5711, 4
      %v5713 = vrot.slane %v4891, 5
      %v5714 = vsel %vm2432, %v5712, %v5713
      %v5715 = vrot.slane %v5713, 4
      %v5716 = vrot.slane %v4892, 5
      %v5717 = vsel %vm2432, %v5715, %v5716
      %v5718 = vrot.slane %v5642, 5
      %v5719 = vrot.slane %v5718, 4
      %v5720 = vrot.slane %v4894, 5
      %v5721 = vsel %vm2432, %v5719, %v5720
      %v5722 = vrot.slane %v5720, 4
      %v5723 = vrot.slane %v4895, 5
      %v5724 = vsel %vm2432, %v5722, %v5723
      %v5725 = vrot.slane %v5643, 5
      %v5726 = vrot.slane %v5725, 4
      %v5727 = vrot.slane %v4897, 5
      %v5728 = vsel %vm2432, %v5726, %v5727
      %v5729 = vrot.slane %v5727, 4
      %v5730 = vrot.slane %v4898, 5
      %v5731 = vsel %vm2432, %v5729, %v5730
      %v5732 = vrot.slane %v5644, 5
      %v5733 = vrot.slane %v5732, 4
      %v5734 = vrot.slane %v4900, 5
      %v5735 = vsel %vm2432, %v5733, %v5734
      %v5736 = vrot.slane %v5734, 4
      %v5737 = vrot.slane %v4901, 5
      %v5738 = vsel %vm2432, %v5736, %v5737
      %v5739 = vrot.slane %v5645, 5
      %v5740 = vrot.slane %v5739, 4
      %v5741 = vrot.slane %v4903, 5
      %v5742 = vsel %vm2432, %v5740, %v5741
      %v5743 = vrot.slane %v5741, 4
      %v5744 = vrot.slane %v4904, 5
      %v5745 = vsel %vm2432, %v5743, %v5744
      %v5746 = vrot.slane %v5646, 5
      %v5747 = vrot.slane %v5746, 4
      %v5748 = vrot.slane %v4906, 5
      %v5749 = vsel %vm2432, %v5747, %v5748
      %v5750 = vrot.slane %v5748, 4
      %v5751 = vrot.slane %v4907, 5
      %v5752 = vsel %vm2432, %v5750, %v5751
      %v5753 = vrot.slane %v5647, 5
      %v5754 = vrot.slane %v5753, 4
      %v5755 = vrot.slane %v4909, 5
      %v5756 = vsel %vm2432, %v5754, %v5755
      %v5757 = vrot.slane %v5755, 4
      %v5758 = vrot.slane %v4910, 5
      %v5759 = vsel %vm2432, %v5757, %v5758
      %v5760 = vrot.slane %v5648, 5
      %v5761 = vrot.slane %v5760, 4
      %v5762 = vrot.slane %v4912, 5
      %v5763 = vsel %vm2432, %v5761, %v5762
      %v5764 = vrot.slane %v5762, 4
      %v5765 = vrot.slane %v4913, 5
      %v5766 = vsel %vm2432, %v5764, %v5765
      %v5767 = vrot.slane %v5649, 5
      %v5768 = vrot.slane %v5767, 4
      %v5769 = vrot.slane %v4915, 5
      %v5770 = vsel %vm2432, %v5768, %v5769
      %v5771 = vrot.slane %v5769, 4
      %v5772 = vrot.slane %v4916, 5
      %v5773 = vsel %vm2432, %v5771, %v5772
      %v5774 = vrot.slane %v5650, 5
      %v5775 = vrot.slane %v5774, 4
      %v5776 = vrot.slane %v4918, 5
      %v5777 = vsel %vm2432, %v5775, %v5776
      %v5778 = vrot.slane %v5776, 4
      %v5779 = vrot.slane %v4919, 5
      %v5780 = vsel %vm2432, %v5778, %v5779
      %v5781 = vrot.slane %v5651, 5
      %v5782 = vrot.slane %v5781, 4
      %v5783 = vrot.slane %v4921, 5
      %v5784 = vsel %vm2432, %v5782, %v5783
      %v5785 = vrot.slane %v5783, 4
      %v5786 = vrot.slane %v4922, 5
      %v5787 = vsel %vm2432, %v5785, %v5786
      %v5788 = vrot.slane %v5652, 5
      %v5789 = vrot.slane %v5788, 4
      %v5790 = vrot.slane %v4924, 5
      %v5791 = vsel %vm2432, %v5789, %v5790
      %v5792 = vrot.slane %v5790, 4
      %v5793 = vrot.slane %v4925, 5
      %v5794 = vsel %vm2432, %v5792, %v5793
      %v5795 = vrot.slane %v5653, 5
      %v5796 = vrot.slane %v5795, 4
      %v5797 = vrot.slane %v4927, 5
      %v5798 = vsel %vm2432, %v5796, %v5797
      %v5799 = vrot.slane %v5797, 4
      %v5800 = vrot.slane %v4928, 5
      %v5801 = vsel %vm2432, %v5799, %v5800
      %v5802 = vrot.slane %v5654, 5
      %v5803 = vrot.slane %v5802, 4
      %v5804 = vrot.slane %v4930, 5
      %v5805 = vsel %vm2432, %v5803, %v5804
      %v5806 = vrot.slane %v5804, 4
      %v5807 = vrot.slane %v4931, 5
      %v5808 = vsel %vm2432, %v5806, %v5807
      %v5809 = vrot.slane %v5655, 5
      %v5810 = vrot.slane %v5809, 4
      %v5811 = vrot.slane %v4933, 5
      %v5812 = vsel %vm2432, %v5810, %v5811
      %v5813 = vrot.slane %v5811, 4
      %v5814 = vrot.slane %v4934, 5
      %v5815 = vsel %vm2432, %v5813, %v5814
      %v5816 = vld [vmem:[%s3 + $0x200] sm:$0xf]
      %v5817 = vld [vmem:[%s3 + $0x204] sm:$0xf]
      %v5818 = vld [vmem:[%s3 + $0x208] sm:$0xf]
      %v5819 = vld [vmem:[%s3 + $0x20c] sm:$0xf]
      %v5820 = vld [vmem:[%s3 + $0x210] sm:$0xf]
      %v5821 = vld [vmem:[%s3 + $0x214] sm:$0xf]
      %v5822 = vld [vmem:[%s3 + $0x218] sm:$0xf]
      %v5823 = vld [vmem:[%s3 + $0x21c] sm:$0xf]
      %v5824 = vld [vmem:[%s3 + $0x220] sm:$0xf]
      %v5825 = vld [vmem:[%s3 + $0x224] sm:$0xf]
      %v5826 = vld [vmem:[%s3 + $0x228] sm:$0xf]
      %v5827 = vld [vmem:[%s3 + $0x22c] sm:$0xf]
      %v5828 = vld [vmem:[%s3 + $0x230] sm:$0xf]
      %v5829 = vld [vmem:[%s3 + $0x234] sm:$0xf]
      %v5830 = vld [vmem:[%s3 + $0x238] sm:$0xf]
      %v5831 = vld [vmem:[%s3 + $0x23c] sm:$0xf]
      %v5832 = vunpack.c.l.b16 %v5707
      %v5833 = vunpack.c.l.b16 %v5710
      %v5834 = vunpack.c.l.b16 %v5714
      %v5835 = vunpack.c.l.b16 %v5717
      %v5836 = vunpack.c.l.b16 %v5721
      %v5837 = vunpack.c.l.b16 %v5724
      %v5838 = vunpack.c.l.b16 %v5728
      %v5839 = vunpack.c.l.b16 %v5731
      %v5840 = vunpack.c.l.b16 %v5735
      %v5841 = vunpack.c.l.b16 %v5738
      %v5842 = vunpack.c.l.b16 %v5742
      %v5843 = vunpack.c.l.b16 %v5745
      %v5844 = vunpack.c.l.b16 %v5749
      %v5845 = vunpack.c.l.b16 %v5752
      %v5846 = vunpack.c.l.b16 %v5756
      %v5847 = vunpack.c.l.b16 %v5759
      %v5848 = vunpack.c.l.b16 %v5763
      %v5849 = vunpack.c.l.b16 %v5766
      %v5850 = vunpack.c.l.b16 %v5770
      %v5851 = vunpack.c.l.b16 %v5773
      %v5852 = vunpack.c.l.b16 %v5777
      %v5853 = vunpack.c.l.b16 %v5780
      %v5854 = vunpack.c.l.b16 %v5784
      %v5855 = vunpack.c.l.b16 %v5787
      %v5856 = vunpack.c.l.b16 %v5791
      %v5857 = vunpack.c.l.b16 %v5794
      %v5858 = vunpack.c.l.b16 %v5798
      %v5859 = vunpack.c.l.b16 %v5801
      %v5860 = vunpack.c.l.b16 %v5805
      %v5861 = vunpack.c.l.b16 %v5808
      %v5862 = vunpack.c.l.b16 %v5812
      %v5863 = vunpack.c.l.b16 %v5815
      %v5864 = vpack.c.b16 %v5833, %v5832
      %v5865 = vpack.c.b16 %v5835, %v5834
      %v5866 = vpack.c.b16 %v5837, %v5836
      %v5867 = vpack.c.b16 %v5839, %v5838
      %v5868 = vpack.c.b16 %v5841, %v5840
      %v5869 = vpack.c.b16 %v5843, %v5842
      %v5870 = vpack.c.b16 %v5845, %v5844
      %v5871 = vpack.c.b16 %v5847, %v5846
      %v5872 = vpack.c.b16 %v5849, %v5848
      %v5873 = vpack.c.b16 %v5851, %v5850
      %v5874 = vpack.c.b16 %v5853, %v5852
      %v5875 = vpack.c.b16 %v5855, %v5854
      %v5876 = vpack.c.b16 %v5857, %v5856
      %v5877 = vpack.c.b16 %v5859, %v5858
      %v5878 = vpack.c.b16 %v5861, %v5860
      %v5879 = vpack.c.b16 %v5863, %v5862
      %v5912 = vunpack.c.l.b16 %v5816
      %v5913 = vunpack.c.l.b16 %v5817
      %v5914 = vunpack.c.l.b16 %v5818
      %v5915 = vunpack.c.l.b16 %v5819
      %v5916 = vunpack.c.l.b16 %v5820
      %v5917 = vunpack.c.l.b16 %v5821
      %v5918 = vunpack.c.l.b16 %v5822
      %v5919 = vunpack.c.l.b16 %v5823
      %v5920 = vunpack.c.l.b16 %v5824
      %v5921 = vunpack.c.l.b16 %v5825
      %v5922 = vunpack.c.l.b16 %v5826
      %v5923 = vunpack.c.l.b16 %v5827
      %v5924 = vunpack.c.l.b16 %v5828
      %v5925 = vunpack.c.l.b16 %v5829
      %v5926 = vunpack.c.l.b16 %v5830
      %v5927 = vunpack.c.l.b16 %v5831
      %v5928 = vpack.c.b16 %v5913, %v5912
      %v5929 = vpack.c.b16 %v5915, %v5914
      %v5930 = vpack.c.b16 %v5917, %v5916
      %v5931 = vpack.c.b16 %v5919, %v5918
      %v5932 = vpack.c.b16 %v5921, %v5920
      %v5933 = vpack.c.b16 %v5923, %v5922
      %v5934 = vpack.c.b16 %v5925, %v5924
      %v5935 = vpack.c.b16 %v5927, %v5926
      %5944 = vmatprep.subr.bf16.mxu0 0
      %5945 = vmatpush1.bf16.msra.mxu0 %v5928
      %5946 = vmatprep.subr.bf16.mxu0 0
      %5947 = vmatpush1.bf16.msra.mxu0 %v5929
      %5948 = vmatprep.subr.bf16.mxu0 0
      %5949 = vmatpush1.bf16.msra.mxu0 %v5930
      %5950 = vmatprep.subr.bf16.mxu0 0
      %5951 = vmatpush1.bf16.msra.mxu0 %v5931
      %5952 = vmatprep.subr.bf16.mxu0 0
      %5953 = vmatpush1.bf16.msra.mxu0 %v5932
      %5954 = vmatprep.subr.bf16.mxu0 0
      %5955 = vmatpush1.bf16.msra.mxu0 %v5933
      %5956 = vmatprep.subr.bf16.mxu0 0
      %5957 = vmatpush1.bf16.msra.mxu0 %v5934
      %5958 = vmatprep.subr.bf16.mxu0 0
      %5959 = vmatpush1.bf16.msra.mxu0 %v5935
      %5960 = vmatprep.subr.bf16.mxu0 0
      %5961 = vmatpush1.bf16.msra.mxu0 0
      %5962 = vmatprep.subr.bf16.mxu0 0
      %5963 = vmatpush1.bf16.msra.mxu0 0
      %5964 = vmatprep.subr.bf16.mxu0 0
      %5965 = vmatpush1.bf16.msra.mxu0 0
      %5966 = vmatprep.subr.bf16.mxu0 0
      %5967 = vmatpush1.bf16.msra.mxu0 0
      %5968 = vmatprep.subr.bf16.mxu0 0
      %5969 = vmatpush1.bf16.msra.mxu0 0
      %5970 = vmatprep.subr.bf16.mxu0 0
      %5971 = vmatpush1.bf16.msra.mxu0 0
      %5972 = vmatprep.subr.bf16.mxu0 0
      %5973 = vmatpush1.bf16.msra.mxu0 0
      %5974 = vmatprep.subr.bf16.mxu0 0
      %5975 = vmatpush1.bf16.msra.mxu0 0
      %5976 = vmatprep.mubr.bf16.mxu0 0
      %5977 = vmatmul.mubr.bf16.gmra.mrb[0].mxu0 %v5864
      %v5978 = vpop.f32.mrb[0].mxu0
      %v5979 = vadd.f32 0.0, %v5978
      %v5980 = vpop.f32.mrb[0].mxu0
      %v5981 = vpop.f32.mrb[0].mxu0
      %v5982 = vadd.f32 0.0, %v5981
      %v5983 = vpop.f32.mrb[0].mxu0
      %5984 = vmatprep.mubr.bf16.mxu0 0
      %5985 = vmatmul.mubr.bf16.gmra.mrb[0].mxu0 %v5865
      %v5986 = vpop.f32.mrb[0].mxu0
      %v5987 = vadd.f32 0.0, %v5986
      %v5988 = vpop.f32.mrb[0].mxu0
      %v5989 = vpop.f32.mrb[0].mxu0
      %v5990 = vadd.f32 0.0, %v5989
      %v5991 = vpop.f32.mrb[0].mxu0
      %5992 = vmatprep.mubr.bf16.mxu0 0
      %5993 = vmatmul.mubr.bf16.gmra.mrb[0].mxu0 %v5866
      %v5994 = vpop.f32.mrb[0].mxu0
      %v5995 = vadd.f32 0.0, %v5994
      %v5996 = vpop.f32.mrb[0].mxu0
      %v5997 = vpop.f32.mrb[0].mxu0
      %v5998 = vadd.f32 0.0, %v5997
      %v5999 = vpop.f32.mrb[0].mxu0
      %6000 = vmatprep.mubr.bf16.mxu0 0
      %6001 = vmatmul.mubr.bf16.gmra.mrb[0].mxu0 %v5867
      %v6002 = vpop.f32.mrb[0].mxu0
      %v6003 = vadd.f32 0.0, %v6002
      %v6004 = vpop.f32.mrb[0].mxu0
      %v6005 = vpop.f32.mrb[0].mxu0
      %v6006 = vadd.f32 0.0, %v6005
      %v6007 = vpop.f32.mrb[0].mxu0
      %6008 = vmatprep.mubr.bf16.mxu0 0
      %6009 = vmatmul.mubr.bf16.gmra.mrb[0].mxu0 %v5868
      %v6010 = vpop.f32.mrb[0].mxu0
      %v6011 = vadd.f32 0.0, %v6010
      %v6012 = vpop.f32.mrb[0].mxu0
      %v6013 = vpop.f32.mrb[0].mxu0
      %v6014 = vadd.f32 0.0, %v6013
      %v6015 = vpop.f32.mrb[0].mxu0
      %6016 = vmatprep.mubr.bf16.mxu0 0
      %6017 = vmatmul.mubr.bf16.gmra.mrb[0].mxu0 %v5869
      %v6018 = vpop.f32.mrb[0].mxu0
      %v6019 = vadd.f32 0.0, %v6018
      %v6020 = vpop.f32.mrb[0].mxu0
      %v6021 = vpop.f32.mrb[0].mxu0
      %v6022 = vadd.f32 0.0, %v6021
      %v6023 = vpop.f32.mrb[0].mxu0
      %6024 = vmatprep.mubr.bf16.mxu0 0
      %6025 = vmatmul.mubr.bf16.gmra.mrb[0].mxu0 %v5870
      %v6026 = vpop.f32.mrb[0].mxu0
      %v6027 = vadd.f32 0.0, %v6026
      %v6028 = vpop.f32.mrb[0].mxu0
      %v6029 = vpop.f32.mrb[0].mxu0
      %v6030 = vadd.f32 0.0, %v6029
      %v6031 = vpop.f32.mrb[0].mxu0
      %6032 = vmatprep.mubr.bf16.mxu0 0
      %6033 = vmatmul.mubr.bf16.gmra.mrb[0].mxu0 %v5871
      %v6034 = vpop.f32.mrb[0].mxu0
      %v6035 = vadd.f32 0.0, %v6034
      %v6036 = vpop.f32.mrb[0].mxu0
      %v6037 = vpop.f32.mrb[0].mxu0
      %v6038 = vadd.f32 0.0, %v6037
      %v6039 = vpop.f32.mrb[0].mxu0
      %6040 = vmatprep.mubr.bf16.mxu0 0
      %6041 = vmatmul.mubr.bf16.gmra.mrb[0].mxu0 %v5872
      %v6042 = vpop.f32.mrb[0].mxu0
      %v6043 = vadd.f32 0.0, %v6042
      %v6044 = vpop.f32.mrb[0].mxu0
      %v6045 = vpop.f32.mrb[0].mxu0
      %v6046 = vadd.f32 0.0, %v6045
      %v6047 = vpop.f32.mrb[0].mxu0
      %6048 = vmatprep.mubr.bf16.mxu0 0
      %6049 = vmatmul.mubr.bf16.gmra.mrb[0].mxu0 %v5873
      %v6050 = vpop.f32.mrb[0].mxu0
      %v6051 = vadd.f32 0.0, %v6050
      %v6052 = vpop.f32.mrb[0].mxu0
      %v6053 = vpop.f32.mrb[0].mxu0
      %v6054 = vadd.f32 0.0, %v6053
      %v6055 = vpop.f32.mrb[0].mxu0
      %6056 = vmatprep.mubr.bf16.mxu0 0
      %6057 = vmatmul.mubr.bf16.gmra.mrb[0].mxu0 %v5874
      %v6058 = vpop.f32.mrb[0].mxu0
      %v6059 = vadd.f32 0.0, %v6058
      %v6060 = vpop.f32.mrb[0].mxu0
      %v6061 = vpop.f32.mrb[0].mxu0
      %v6062 = vadd.f32 0.0, %v6061
      %v6063 = vpop.f32.mrb[0].mxu0
      %6064 = vmatprep.mubr.bf16.mxu0 0
      %6065 = vmatmul.mubr.bf16.gmra.mrb[0].mxu0 %v5875
      %v6066 = vpop.f32.mrb[0].mxu0
      %v6067 = vadd.f32 0.0, %v6066
      %v6068 = vpop.f32.mrb[0].mxu0
      %v6069 = vpop.f32.mrb[0].mxu0
      %v6070 = vadd.f32 0.0, %v6069
      %v6071 = vpop.f32.mrb[0].mxu0
      %6072 = vmatprep.mubr.bf16.mxu0 0
      %6073 = vmatmul.mubr.bf16.gmra.mrb[0].mxu0 %v5876
      %v6074 = vpop.f32.mrb[0].mxu0
      %v6075 = vadd.f32 0.0, %v6074
      %v6076 = vpop.f32.mrb[0].mxu0
      %v6077 = vpop.f32.mrb[0].mxu0
      %v6078 = vadd.f32 0.0, %v6077
      %v6079 = vpop.f32.mrb[0].mxu0
      %6080 = vmatprep.mubr.bf16.mxu0 0
      %6081 = vmatmul.mubr.bf16.gmra.mrb[0].mxu0 %v5877
      %v6082 = vpop.f32.mrb[0].mxu0
      %v6083 = vadd.f32 0.0, %v6082
      %v6084 = vpop.f32.mrb[0].mxu0
      %v6085 = vpop.f32.mrb[0].mxu0
      %v6086 = vadd.f32 0.0, %v6085
      %v6087 = vpop.f32.mrb[0].mxu0
      %6088 = vmatprep.mubr.bf16.mxu0 0
      %6089 = vmatmul.mubr.bf16.gmra.mrb[0].mxu0 %v5878
      %v6090 = vpop.f32.mrb[0].mxu0
      %v6091 = vadd.f32 0.0, %v6090
      %v6092 = vpop.f32.mrb[0].mxu0
      %v6093 = vpop.f32.mrb[0].mxu0
      %v6094 = vadd.f32 0.0, %v6093
      %v6095 = vpop.f32.mrb[0].mxu0
      %6096 = vmatprep.mubr.bf16.mxu0 0
      %6097 = vmatmul.mubr.bf16.gmra.mrb[0].mxu0 %v5879
      %v6098 = vpop.f32.mrb[0].mxu0
      %v6099 = vadd.f32 0.0, %v6098
      %v6100 = vpop.f32.mrb[0].mxu0
      %v6101 = vpop.f32.mrb[0].mxu0
      %v6102 = vadd.f32 0.0, %v6101
      %v6103 = vpop.f32.mrb[0].mxu0
      %6104 = vdwg.mxu0
      %v6105 = vadd.f32 %v5608, %v5979
      %v6106 = vadd.f32 %v5609, %v5982
      %v6107 = vadd.f32 %v5610, %v5987
      %v6108 = vadd.f32 %v5611, %v5990
      %v6109 = vadd.f32 %v5612, %v5995
      %v6110 = vadd.f32 %v5613, %v5998
      %v6111 = vadd.f32 %v5614, %v6003
      %v6112 = vadd.f32 %v5615, %v6006
      %v6113 = vadd.f32 %v5616, %v6011
      %v6114 = vadd.f32 %v5617, %v6014
      %v6115 = vadd.f32 %v5618, %v6019
      %v6116 = vadd.f32 %v5619, %v6022
      %v6117 = vadd.f32 %v5620, %v6027
      %v6118 = vadd.f32 %v5621, %v6030
      %v6119 = vadd.f32 %v5622, %v6035
      %v6120 = vadd.f32 %v5623, %v6038
      %v6121 = vadd.f32 %v5624, %v6043
      %v6122 = vadd.f32 %v5625, %v6046
      %v6123 = vadd.f32 %v5626, %v6051
      %v6124 = vadd.f32 %v5627, %v6054
      %v6125 = vadd.f32 %v5628, %v6059
      %v6126 = vadd.f32 %v5629, %v6062
      %v6127 = vadd.f32 %v5630, %v6067
      %v6128 = vadd.f32 %v5631, %v6070
      %v6129 = vadd.f32 %v5632, %v6075
      %v6130 = vadd.f32 %v5633, %v6078
      %v6131 = vadd.f32 %v5634, %v6083
      %v6132 = vadd.f32 %v5635, %v6086
      %v6133 = vadd.f32 %v5636, %v6091
      %v6134 = vadd.f32 %v5637, %v6094
      %v6135 = vadd.f32 %v5638, %v6099
      %v6136 = vadd.f32 %v5639, %v6102
      %v6137 = vld [vmem:[%s4] sm:$0x1]
      %v6139 = vlaneseq
      %v6140 = vshrl.u32 %v6139, 7
      %v6141 = vsub.s32 0, %v6140
      %v6142 = vrot.slane %v6137, %v6141
      %v6144 = vadd.f32 %v6105, %v6142
      %v6145 = vadd.f32 %v6106, %v6142
      %v6146 = vadd.f32 %v6107, %v6142
      %v6147 = vadd.f32 %v6108, %v6142
      %v6148 = vadd.f32 %v6109, %v6142
      %v6149 = vadd.f32 %v6110, %v6142
      %v6150 = vadd.f32 %v6111, %v6142
      %v6151 = vadd.f32 %v6112, %v6142
      %v6152 = vadd.f32 %v6113, %v6142
      %v6153 = vadd.f32 %v6114, %v6142
      %v6154 = vadd.f32 %v6115, %v6142
      %v6155 = vadd.f32 %v6116, %v6142
      %v6156 = vadd.f32 %v6117, %v6142
      %v6157 = vadd.f32 %v6118, %v6142
      %v6158 = vadd.f32 %v6119, %v6142
      %v6159 = vadd.f32 %v6120, %v6142
      %v6160 = vadd.f32 %v6121, %v6142
      %v6161 = vadd.f32 %v6122, %v6142
      %v6162 = vadd.f32 %v6123, %v6142
      %v6163 = vadd.f32 %v6124, %v6142
      %v6164 = vadd.f32 %v6125, %v6142
      %v6165 = vadd.f32 %v6126, %v6142
      %v6166 = vadd.f32 %v6127, %v6142
      %v6167 = vadd.f32 %v6128, %v6142
      %v6168 = vadd.f32 %v6129, %v6142
      %v6169 = vadd.f32 %v6130, %v6142
      %v6170 = vadd.f32 %v6131, %v6142
      %v6171 = vadd.f32 %v6132, %v6142
      %v6172 = vadd.f32 %v6133, %v6142
      %v6173 = vadd.f32 %v6134, %v6142
      %v6174 = vadd.f32 %v6135, %v6142
      %v6175 = vadd.f32 %v6136, %v6142
      %v6176 = vmax.f32 %v6144, 0.0
      %v6177 = vmax.f32 %v6145, 0.0
      %v6178 = vmax.f32 %v6146, 0.0
      %v6179 = vmax.f32 %v6147, 0.0
      %v6180 = vmax.f32 %v6148, 0.0
      %v6181 = vmax.f32 %v6149, 0.0
      %v6182 = vmax.f32 %v6150, 0.0
      %v6183 = vmax.f32 %v6151, 0.0
      %v6184 = vmax.f32 %v6152, 0.0
      %v6185 = vmax.f32 %v6153, 0.0
      %v6186 = vmax.f32 %v6154, 0.0
      %v6187 = vmax.f32 %v6155, 0.0
      %v6188 = vmax.f32 %v6156, 0.0
      %v6189 = vmax.f32 %v6157, 0.0
      %v6190 = vmax.f32 %v6158, 0.0
      %v6191 = vmax.f32 %v6159, 0.0
      %v6192 = vmax.f32 %v6160, 0.0
      %v6193 = vmax.f32 %v6161, 0.0
      %v6194 = vmax.f32 %v6162, 0.0
      %v6195 = vmax.f32 %v6163, 0.0
      %v6196 = vmax.f32 %v6164, 0.0
      %v6197 = vmax.f32 %v6165, 0.0
      %v6198 = vmax.f32 %v6166, 0.0
      %v6199 = vmax.f32 %v6167, 0.0
      %v6200 = vmax.f32 %v6168, 0.0
      %v6201 = vmax.f32 %v6169, 0.0
      %v6202 = vmax.f32 %v6170, 0.0
      %v6203 = vmax.f32 %v6171, 0.0
      %v6204 = vmax.f32 %v6172, 0.0
      %v6205 = vmax.f32 %v6173, 0.0
      %v6206 = vmax.f32 %v6174, 0.0
      %v6207 = vmax.f32 %v6175, 0.0
      %v6208 = vpack.c.bf16 %v6177, %v6176
      %v6209 = vpack.c.bf16 %v6179, %v6178
      %v6210 = vpack.c.bf16 %v6181, %v6180
      %v6211 = vpack.c.bf16 %v6183, %v6182
      %v6212 = vpack.c.bf16 %v6185, %v6184
      %v6213 = vpack.c.bf16 %v6187, %v6186
      %v6214 = vpack.c.bf16 %v6189, %v6188
      %v6215 = vpack.c.bf16 %v6191, %v6190
      %v6216 = vpack.c.bf16 %v6193, %v6192
      %v6217 = vpack.c.bf16 %v6195, %v6194
      %v6218 = vpack.c.bf16 %v6197, %v6196
      %v6219 = vpack.c.bf16 %v6199, %v6198
      %v6220 = vpack.c.bf16 %v6201, %v6200
      %v6221 = vpack.c.bf16 %v6203, %v6202
      %v6222 = vpack.c.bf16 %v6205, %v6204
      %v6223 = vpack.c.bf16 %v6207, %v6206
      %v6240 = vunpack.c.l.b16 %v6208
      %v6241 = vunpack.c.h.b16 %v6208
      %v6242 = vunpack.c.l.b16 %v6209
      %v6243 = vunpack.c.h.b16 %v6209
      %v6244 = vunpack.c.l.b16 %v6210
      %v6245 = vunpack.c.h.b16 %v6210
      %v6246 = vunpack.c.l.b16 %v6211
      %v6247 = vunpack.c.h.b16 %v6211
      %v6248 = vunpack.c.l.b16 %v6212
      %v6249 = vunpack.c.h.b16 %v6212
      %v6250 = vunpack.c.l.b16 %v6213
      %v6251 = vunpack.c.h.b16 %v6213
      %v6252 = vunpack.c.l.b16 %v6214
      %v6253 = vunpack.c.h.b16 %v6214
      %v6254 = vunpack.c.l.b16 %v6215
      %v6255 = vunpack.c.h.b16 %v6215
      %v6256 = vunpack.c.l.b16 %v6216
      %v6257 = vunpack.c.h.b16 %v6216
      %v6258 = vunpack.c.l.b16 %v6217
      %v6259 = vunpack.c.h.b16 %v6217
      %v6260 = vunpack.c.l.b16 %v6218
      %v6261 = vunpack.c.h.b16 %v6218
      %v6262 = vunpack.c.l.b16 %v6219
      %v6263 = vunpack.c.h.b16 %v6219
      %v6264 = vunpack.c.l.b16 %v6220
      %v6265 = vunpack.c.h.b16 %v6220
      %v6266 = vunpack.c.l.b16 %v6221
      %v6267 = vunpack.c.h.b16 %v6221
      %v6268 = vunpack.c.l.b16 %v6222
      %v6269 = vunpack.c.h.b16 %v6222
      %v6270 = vunpack.c.l.b16 %v6223
      %v6271 = vunpack.c.h.b16 %v6223
      %v6272 = vpack.c.b16 %v6240, %v6240
      %v6273 = vpack.c.b16 %v6241, %v6241
      %v6274 = vpack.c.b16 %v6242, %v6242
      %v6275 = vpack.c.b16 %v6243, %v6243
      %v6276 = vpack.c.b16 %v6244, %v6244
      %v6277 = vpack.c.b16 %v6245, %v6245
      %v6278 = vpack.c.b16 %v6246, %v6246
      %v6279 = vpack.c.b16 %v6247, %v6247
      %v6280 = vpack.c.b16 %v6248, %v6248
      %v6281 = vpack.c.b16 %v6249, %v6249
      %v6282 = vpack.c.b16 %v6250, %v6250
      %v6283 = vpack.c.b16 %v6251, %v6251
      %v6284 = vpack.c.b16 %v6252, %v6252
      %v6285 = vpack.c.b16 %v6253, %v6253
      %v6286 = vpack.c.b16 %v6254, %v6254
      %v6287 = vpack.c.b16 %v6255, %v6255
      %v6288 = vpack.c.b16 %v6256, %v6256
      %v6289 = vpack.c.b16 %v6257, %v6257
      %v6290 = vpack.c.b16 %v6258, %v6258
      %v6291 = vpack.c.b16 %v6259, %v6259
      %v6292 = vpack.c.b16 %v6260, %v6260
      %v6293 = vpack.c.b16 %v6261, %v6261
      %v6294 = vpack.c.b16 %v6262, %v6262
      %v6295 = vpack.c.b16 %v6263, %v6263
      %v6296 = vpack.c.b16 %v6264, %v6264
      %v6297 = vpack.c.b16 %v6265, %v6265
      %v6298 = vpack.c.b16 %v6266, %v6266
      %v6299 = vpack.c.b16 %v6267, %v6267
      %v6300 = vpack.c.b16 %v6268, %v6268
      %v6301 = vpack.c.b16 %v6269, %v6269
      %v6302 = vpack.c.b16 %v6270, %v6270
      %v6303 = vpack.c.b16 %v6271, %v6271
      %6336 = vst [vmem:[%s224] sm:$0xf] %v6272
      %6337 = vst [vmem:[%s224 + $0x4] sm:$0xf] %v6273
      %6338 = vst [vmem:[%s224 + $0x8] sm:$0xf] %v6274
      %6339 = vst [vmem:[%s224 + $0xc] sm:$0xf] %v6275
      %6340 = vst [vmem:[%s224 + $0x10] sm:$0xf] %v6276
      %6341 = vst [vmem:[%s224 + $0x14] sm:$0xf] %v6277
      %6342 = vst [vmem:[%s224 + $0x18] sm:$0xf] %v6278
      %6343 = vst [vmem:[%s224 + $0x1c] sm:$0xf] %v6279
      %6344 = vst [vmem:[%s224 + $0x20] sm:$0xf] %v6280
      %6345 = vst [vmem:[%s224 + $0x24] sm:$0xf] %v6281
      %6346 = vst [vmem:[%s224 + $0x28] sm:$0xf] %v6282
      %6347 = vst [vmem:[%s224 + $0x2c] sm:$0xf] %v6283
      %6348 = vst [vmem:[%s224 + $0x30] sm:$0xf] %v6284
      %6349 = vst [vmem:[%s224 + $0x34] sm:$0xf] %v6285
      %6350 = vst [vmem:[%s224 + $0x38] sm:$0xf] %v6286
      %6351 = vst [vmem:[%s224 + $0x3c] sm:$0xf] %v6287
      %6352 = vst [vmem:[%s224 + $0x40] sm:$0xf] %v6288
      %6353 = vst [vmem:[%s224 + $0x44] sm:$0xf] %v6289
      %6354 = vst [vmem:[%s224 + $0x48] sm:$0xf] %v6290
      %6355 = vst [vmem:[%s224 + $0x4c] sm:$0xf] %v6291
      %6356 = vst [vmem:[%s224 + $0x50] sm:$0xf] %v6292
      %6357 = vst [vmem:[%s224 + $0x54] sm:$0xf] %v6293
      %6358 = vst [vmem:[%s224 + $0x58] sm:$0xf] %v6294
      %6359 = vst [vmem:[%s224 + $0x5c] sm:$0xf] %v6295
      %6360 = vst [vmem:[%s224 + $0x60] sm:$0xf] %v6296
      %6361 = vst [vmem:[%s224 + $0x64] sm:$0xf] %v6297
      %6362 = vst [vmem:[%s224 + $0x68] sm:$0xf] %v6298
      %6363 = vst [vmem:[%s224 + $0x6c] sm:$0xf] %v6299
      %6364 = vst [vmem:[%s224 + $0x70] sm:$0xf] %v6300
      %6365 = vst [vmem:[%s224 + $0x74] sm:$0xf] %v6301
      %6366 = vst [vmem:[%s224 + $0x78] sm:$0xf] %v6302
      %6367 = vst [vmem:[%s224 + $0x7c] sm:$0xf] %v6303
      %p6368 = scmp.lt.s32.totalorder %s16, 1
      %s6369 = scalar_select %p6368, %s16, 1
      %s6370 = smul.addr %s6369, 32
      %s6371 = smul.addr %s6370, 4
      %s6372 = scalar_lea.vmem %s5, %s6371
      // Predicated region
      $region41: #{bottleneck_forward.2} parent=39 // pred_check
        %p6373 = pneg %p144
      $region42: #{bottleneck_forward.2} parent=39 // pred_check_branch
        %6375 = sbr.rel (%p6373) target = $region44
      $region43: #{bottleneck_forward.2} parent=39 // pred_region
        _
      $region44: #{bottleneck_forward.2} parent=39 // pred_fallthru
        _
    $region40: #{bottleneck_forward.2} parent=5 // pred_fallthru
      _
    %p6376 = scmp.le.s32.totalorder 2, %s11
    // Predicated region
    $region45: #{bottleneck_forward.2} parent=5 // pred_check
      %p6377 = pneg %p6376
    $region46: #{bottleneck_forward.2} parent=5 // pred_check_branch
      %6379 = sbr.rel (%p6377) target = $region48
    $region47: #{bottleneck_forward.2} parent=5 // pred_region
      %s6380 = ssub.s32 %s11, 2
      // Predicated region
      $region49: #{bottleneck_forward.2} parent=47 // pred_check
        %p6381 = pneg %p150
      $region50: #{bottleneck_forward.2} parent=47 // pred_check_branch
        %6383 = sbr.rel (%p6381) target = $region52
      $region51: #{bottleneck_forward.2} parent=47 // pred_region
        %p6384 = scmp.lt.s32.totalorder %s17, 1
        %s6385 = scalar_select %p6384, %s17, 1
        %s6386 = smul.addr %s6385, 32
        %s6387 = smul.addr %s6386, 4
        %s6388 = scalar_lea.vmem %s5, %s6387
      $region52: #{bottleneck_forward.2} parent=47 // pred_fallthru
        _
    $region48: #{bottleneck_forward.2} parent=5 // pred_fallthru
      _
  $region6: #{bottleneck_forward.2} parent=0 // loop_footer
    %s15 = sadd.s32 1, %s11
  $region7: #{bottleneck_forward.2} parent=0 // loop_footer_branch
    %10 = sbr.rel target = $region3
  $region8: #{bottleneck_forward.2} parent=0 // loop_exit
    _

</llo_original>
